<compile_context>
chip_gen: v7x
topology: tpu7x:2x2x1
jax: 0.10.0
libtpu: 0.0.40
codegen_flags: <defaults>
</compile_context>

<pallas_src>
from functools import partial

import jax
import jax.numpy as jnp
from jax.experimental import pallas as pl
from jax.experimental.pallas import tpu as pltpu


def _round_up(x, m):
    return ((x + m - 1) // m) * m


def _pad_last(a, n):
    pad = n - a.shape[-1]
    if pad == 0:
        return a
    width = [(0, 0)] * (a.ndim - 1) + [(0, pad)]
    return jnp.pad(a, width)


def _pick_row_tile(H, W, max_m):
    """Largest divisor TH of H with TH*W <= max_m (bounds the MLP activation)."""
    if H * W <= max_m:
        return H
    best = 1
    for d in range(1, H + 1):
        if H % d == 0 and d * W <= max_m:
            best = d
    return best


def _tpu_budget():
    """(vmem_limit_bytes, bf16_conv) picked per TPU generation.

    128-MiB-VMEM generations (v4/v5e/v5p/v6e) get a high scoped-VMEM limit;
    bf16 VPU taps only where the VPU actually has bf16 (v6e/v7x).  Anything
    unrecognised (including v7x's 64 MiB) stays at a conservative 48 MiB.
    """
    kind = ""
    try:
        dev = jax.devices()[0]
        if dev.platform == "tpu":
            kind = dev.device_kind.lower()
    except Exception:
        pass
    bf16_conv = ("v6" in kind) or ("v7" in kind) or ("tpu7" in kind)
    big_vmem = (("v4" in kind) or ("v5" in kind) or ("v6" in kind)) and ("v7" not in kind)
    vmem_limit = (100 if big_vmem else 48) * 1024 * 1024
    return vmem_limit, bf16_conv


def cnblock_kernel(x_ref, dw_w_ref, dw_b_ref, ln_g_ref, ln_b_ref,
                   w1_ref, b1_ref, w2_ref, b2_ref, ls_ref,
                   o_ref, xp_ref, *,
                   H, W, Wa, Wp, C, Cp, TH, eps, conv_dtype, gelu_approx):
    f32 = jnp.float32
    LP = 8                                  # sublane-aligned left pad (conv halo lives at cols 5..7)
    t = pl.program_id(1)
    r0 = t * TH

    # ---- stage 0: per-chunk zero-halo slab (TH+6, Wp, Cp) in VMEM ----------
    # Only the halo strips are zeroed (no full-buffer memset); the big image
    # copy is stored at a sublane-aligned column offset of 8.
    xp_ref[:, 0:LP, :] = jnp.zeros((TH + 6, LP, Cp), f32)
    xp_ref[:, LP + W:Wp, :] = jnp.zeros((TH + 6, Wp - LP - W, Cp), f32)
    xp_ref[0:3, LP:LP + W, :] = jnp.zeros((3, W, Cp), f32)
    xp_ref[3 + TH:TH + 6, LP:LP + W, :] = jnp.zeros((3, W, Cp), f32)
    xp_ref[3:3 + TH, LP:LP + W, :] = x_ref[pl.ds(r0, TH), :, :]
    # halo rows that come from the neighbouring chunks (zero padding otherwise)
    for dr in range(3):
        @pl.when(r0 - 3 + dr >= 0)
        def _top(dr=dr):
            xp_ref[dr, LP:LP + W, :] = x_ref[r0 - 3 + dr, :, :]

        @pl.when(r0 + TH + dr <= H - 1)
        def _bot(dr=dr):
            xp_ref[3 + TH + dr, LP:LP + W, :] = x_ref[r0 + TH + dr, :, :]

    # ---- stage 1: depthwise 7x7 conv (VPU), fused into the chunk ------------
    # kw-outer / kh-inner: one sublane-shifted slab read per kw (7 shifts in
    # total instead of 49, handled by the load/XLU path), kh taps are free
    # leading-axis slices.  Taps run in bf16 on v6e/v7x, f32 elsewhere; the
    # accumulator is f32 with the depthwise bias folded into its init.
    dwb = dw_b_ref[0]                                   # (Cp,) f32, padded lanes = 0
    acc = jnp.broadcast_to(dwb, (TH, Wa, Cp))           # bias folded into init
    for kw in range(7):
        cols = xp_ref[:, 5 + kw:5 + kw + Wa, :].astype(conv_dtype)   # (TH+6, Wa, Cp)
        wcol = dw_w_ref[kw]                                           # (7, Cp), kw-major layout
        part = cols[0:TH] * wcol[0]
        for kh in range(1, 7):
            part = part + cols[kh:kh + TH] * wcol[kh]
        acc = acc + part.astype(f32)

    # ---- stage 2: LayerNorm + MLP (bf16 MXU, f32 accum) + residual ----------
    gamma = ln_g_ref[0]
    beta = ln_b_ref[0]
    b1 = b1_ref[0]
    b2 = b2_ref[0]
    ls = ls_ref[0]

    y2 = acc.reshape(TH * Wa, Cp)                       # Wa multiple of 8 -> clean reshape
    inv_c = 1.0 / C                                     # true-C divisor (padded lanes are 0)
    s1 = jnp.sum(y2, axis=-1, keepdims=True)
    s2 = jnp.sum(y2 * y2, axis=-1, keepdims=True)
    mean = s1 * inv_c
    var = jnp.maximum(s2 * inv_c - mean * mean, 0.0)    # clamp: single-pass var can round < 0
    scale = jax.lax.rsqrt(var + eps) * gamma            # gamma folded into the scale
    yn = y2 * scale + (beta - mean * scale)             # padded lanes -> 0 (gamma padded with 0)

    h = jnp.dot(yn.astype(jnp.bfloat16), w1_ref[...],
                preferred_element_type=jnp.float32) + b1
    h = jax.nn.gelu(h, approximate=gelu_approx)         # tanh approx -> EUP, frees VALU
    z = jnp.dot(h.astype(jnp.bfloat16), w2_ref[...],
                preferred_element_type=jnp.float32) + b2
    z = z.reshape(TH, Wa, Cp)

    # layer scale + residual (stochastic depth == identity in eval mode)
    o_ref[...] = x_ref[pl.ds(r0, TH), :, :] + ls * z[:, 0:W, :]


def cnblock_forward(x_nchw, params, *, eps=1e-6, gelu_approx=True):
    B, C, H, W = x_nchw.shape
    Cp = _round_up(C, 128)          # lane-dense channel padding
    Hd = _round_up(4 * C, 128)      # lane-dense hidden dim
    Wa = _round_up(W, 8)            # sublane-aligned conv accumulation width
    Wp = Wa + 16                    # padded slab width (left pad 8, right halo + slack)

    vmem_limit, bf16_conv = _tpu_budget()
    conv_dtype = jnp.bfloat16 if bf16_conv else jnp.float32
    # Bound the (M, Hd) f32 GELU intermediate to ~1/6 of the VMEM budget.
    max_m = int(max(512, min(2048, vmem_limit // (6 * Hd * 4))))
    TH = _pick_row_tile(H, W, max_m)
    nh = H // TH

    # NCHW -> NHWC + zero channel pad (single fused XLA op under jit).
    x = jnp.transpose(x_nchw, (0, 2, 3, 1)).astype(jnp.float32)
    x = _pad_last(x, Cp)

    # Depthwise weight is stored kw-major (kw, kh, Cp) so the kernel indexes
    # it along the leading axis.
    dw_w = jnp.transpose(params["dw_w"].astype(jnp.float32), (1, 0, 2))
    dw_w = _pad_last(dw_w, Cp).astype(conv_dtype)                         # (7,7,Cp)
    dw_b = _pad_last(params["dw_b"].astype(jnp.float32), Cp)[None, :]     # (1,Cp)
    ln_g = _pad_last(params["ln_g"].astype(jnp.float32), Cp)[None, :]
    ln_b = _pad_last(params["ln_b"].astype(jnp.float32), Cp)[None, :]
    w1 = jnp.pad(params["w1"].astype(jnp.float32),
                 ((0, Cp - C), (0, Hd - 4 * C))).astype(jnp.bfloat16)     # (Cp,Hd)
    b1 = _pad_last(params["b1"].astype(jnp.float32), Hd)[None, :]         # (1,Hd)
    w2 = jnp.pad(params["w2"].astype(jnp.float32),
                 ((0, Hd - 4 * C), (0, Cp - C))).astype(jnp.bfloat16)     # (Hd,Cp)
    b2 = _pad_last(params["b2"].astype(jnp.float32), Cp)[None, :]
    ls = _pad_last(params["ls"].astype(jnp.float32), Cp)[None, :]

    kernel = partial(cnblock_kernel, H=H, W=W, Wa=Wa, Wp=Wp, C=C, Cp=Cp,
                     TH=TH, eps=eps, conv_dtype=conv_dtype,
                     gelu_approx=gelu_approx)

    out = pl.pallas_call(
        kernel,
        out_shape=jax.ShapeDtypeStruct((B, H, W, Cp), jnp.float32),
        grid_spec=pltpu.PrefetchScalarGridSpec(
            num_scalar_prefetch=0,
            grid=(B, nh),
            in_specs=[
                pl.BlockSpec((None, H, W, Cp), lambda b, t: (b, 0, 0, 0)),   # x (per-batch resident)
                pl.BlockSpec((7, 7, Cp), lambda b, t: (0, 0, 0)),            # dw_w (kw, kh, Cp)
                pl.BlockSpec((1, Cp), lambda b, t: (0, 0)),                  # dw_b
                pl.BlockSpec((1, Cp), lambda b, t: (0, 0)),                  # ln_g
                pl.BlockSpec((1, Cp), lambda b, t: (0, 0)),                  # ln_b
                pl.BlockSpec((Cp, Hd), lambda b, t: (0, 0)),                 # w1 (bf16)
                pl.BlockSpec((1, Hd), lambda b, t: (0, 0)),                  # b1
                pl.BlockSpec((Hd, Cp), lambda b, t: (0, 0)),                 # w2 (bf16)
                pl.BlockSpec((1, Cp), lambda b, t: (0, 0)),                  # b2
                pl.BlockSpec((1, Cp), lambda b, t: (0, 0)),                  # layer scale
            ],
            out_specs=pl.BlockSpec((None, TH, W, Cp), lambda b, t: (b, t, 0, 0)),
            scratch_shapes=[
                pltpu.VMEM((TH + 6, Wp, Cp), jnp.float32),   # per-chunk zero-halo slab
            ],
        ),
        compiler_params=pltpu.CompilerParams(
            # batch and row-chunk are independent -> megacore-shardable,
            # and nh > 1 gives the BlockSpec pipeline steps to overlap DMA.
            dimension_semantics=("parallel", "parallel"),
            vmem_limit_bytes=vmem_limit,
        ),
    )(x, dw_w, dw_b, ln_g, ln_b, w1, b1, w2, b2, ls)

    out = out[..., :C]                                          # drop channel pad
    return jnp.transpose(out, (0, 3, 1, 2))                     # back to NCHW


def reference_forward(x_nchw, params, *, eps=1e-6):
    """Pure-JAX f32 reference (exact-erf GELU) for correctness checking."""
    B, C, H, W = x_nchw.shape
    x = jnp.transpose(x_nchw, (0, 2, 3, 1)).astype(jnp.float32)
    w = params["dw_w"][:, :, None, :]                            # HWIO, I/group=1
    y = jax.lax.conv_general_dilated(
        x, w, window_strides=(1, 1), padding=[(3, 3), (3, 3)],
        dimension_numbers=("NHWC", "HWIO", "NHWC"), feature_group_count=C)
    y = y + params["dw_b"]
    mean = y.mean(-1, keepdims=True)
    var = ((y - mean) ** 2).mean(-1, keepdims=True)
    y = (y - mean) / jnp.sqrt(var + eps) * params["ln_g"] + params["ln_b"]
    h = jax.nn.gelu(y @ params["w1"] + params["b1"], approximate=False)
    z = h @ params["w2"] + params["b2"]
    out = x + params["ls"] * z
    return jnp.transpose(out, (0, 3, 1, 2))


def init_params(key, dim, layer_scale=1e-6):
    ks = jax.random.split(key, 8)
    return {
        "dw_w": jax.random.normal(ks[0], (7, 7, dim), jnp.float32) * 0.05,
        "dw_b": jax.random.normal(ks[1], (dim,), jnp.float32) * 0.01,
        "ln_g": jnp.ones((dim,), jnp.float32),
        "ln_b": jnp.zeros((dim,), jnp.float32),
        "w1": jax.random.normal(ks[2], (dim, 4 * dim), jnp.float32) * 0.05,
        "b1": jax.random.normal(ks[3], (4 * dim,), jnp.float32) * 0.01,
        "w2": jax.random.normal(ks[4], (4 * dim, dim), jnp.float32) * 0.05,
        "b2": jax.random.normal(ks[5], (dim,), jnp.float32) * 0.01,
        "ls": jnp.full((dim,), layer_scale, jnp.float32),
    }


if __name__ == "__main__":
    B, C, H, W = 2, 32, 16, 16
    key = jax.random.PRNGKey(0)
    kx, kp = jax.random.split(key)
    x = jax.random.normal(kx, (B, C, H, W), jnp.float32)
    # layer_scale raised from the ConvNeXt default (1e-6) so the bf16
    # conv/MLP branch actually contributes to the checked output.
    params = init_params(kp, C, layer_scale=1.0)

    out = jax.block_until_ready(jax.jit(cnblock_forward)(x, params))
    ref = jax.block_until_ready(jax.jit(reference_forward)(x, params))

    assert out.shape == (B, C, H, W)
    max_err = float(jnp.max(jnp.abs(out - ref)))
    # bf16 taps/MXU inputs with f32 accumulation -> loosened tolerance.
    assert jnp.allclose(out, ref, atol=2e-2, rtol=2e-2), max_err

    # Branch-only check (review concern: layer_scale must not mask regressions
    # in the conv/LN/MLP path).  With layer_scale=1.0 the branch is fully
    # visible; its absolute error must stay small on its own.
    branch_k = out - x
    branch_r = ref - x
    branch_err = float(jnp.max(jnp.abs(branch_k - branch_r)))
    assert branch_err <= 2e-2, branch_err

    print("KERNEL_OK")
</pallas_src>

<mosaic_0001>
module attributes {stable_mosaic.version = 11 : i64} {
  func.func @cnblock_kernel(%arg0: i32, %arg1: i32, %arg2: memref<1x16x16x128xf32, #tpu.memory_space<vmem>>, %arg3: memref<7x7x128xf32, #tpu.memory_space<vmem>>, %arg4: memref<1x128xf32, #tpu.memory_space<vmem>>, %arg5: memref<1x128xf32, #tpu.memory_space<vmem>>, %arg6: memref<1x128xf32, #tpu.memory_space<vmem>>, %arg7: memref<128x128xbf16, #tpu.memory_space<vmem>>, %arg8: memref<1x128xf32, #tpu.memory_space<vmem>>, %arg9: memref<128x128xbf16, #tpu.memory_space<vmem>>, %arg10: memref<1x128xf32, #tpu.memory_space<vmem>>, %arg11: memref<1x128xf32, #tpu.memory_space<vmem>>, %arg12: memref<1x16x16x128xf32, #tpu.memory_space<vmem>>, %arg13: memref<22x32x128xf32, #tpu.memory_space<vmem>>) attributes {dimension_semantics = [#tpu.dimension_semantics<parallel>, #tpu.dimension_semantics<parallel>], iteration_bounds = array<i64: 2, 1>, scalar_prefetch = 0 : i64, scratch_operands = 1 : i64, tpu.core_type = #tpu.core_type<tc>, window_params = [{transform_indices = @transform_0, window_bounds = array<i64: 1, 16, 16, 128>}, {pipeline_mode = #tpu.pipeline_mode<synchronous>, transform_indices = @transform_1, window_bounds = array<i64: 7, 7, 128>}, {pipeline_mode = #tpu.pipeline_mode<synchronous>, transform_indices = @transform_2, window_bounds = array<i64: 1, 128>}, {pipeline_mode = #tpu.pipeline_mode<synchronous>, transform_indices = @transform_3, window_bounds = array<i64: 1, 128>}, {pipeline_mode = #tpu.pipeline_mode<synchronous>, transform_indices = @transform_4, window_bounds = array<i64: 1, 128>}, {pipeline_mode = #tpu.pipeline_mode<synchronous>, transform_indices = @transform_5, window_bounds = array<i64: 128, 128>}, {pipeline_mode = #tpu.pipeline_mode<synchronous>, transform_indices = @transform_6, window_bounds = array<i64: 1, 128>}, {pipeline_mode = #tpu.pipeline_mode<synchronous>, transform_indices = @transform_7, window_bounds = array<i64: 128, 128>}, {pipeline_mode = #tpu.pipeline_mode<synchronous>, transform_indices = @transform_8, window_bounds = array<i64: 1, 128>}, {pipeline_mode = #tpu.pipeline_mode<synchronous>, transform_indices = @transform_9, window_bounds = array<i64: 1, 128>}, {transform_indices = @transform_10, window_bounds = array<i64: 1, 16, 16, 128>}]} {
    %c16_i32 = arith.constant 16 : i32
    %0 = arith.muli %arg1, %c16_i32 : i32
    %cst = arith.constant 0.000000e+00 : f32
    %1 = vector.broadcast %cst : f32 to vector<22x8x128xf32>
    %c0 = arith.constant 0 : index
    %c0_0 = arith.constant 0 : index
    %c0_1 = arith.constant 0 : index
    %2 = vector.load %arg13[%c0, %c0_0, %c0_1] : memref<22x32x128xf32, #tpu.memory_space<vmem>>, vector<22x8x128xf32>
    tpu.vector_store %arg13[%c0, %c0_0, %c0_1], %1 {strides = array<i32>} : memref<22x32x128xf32, #tpu.memory_space<vmem>>, vector<22x8x128xf32>,
    %cst_2 = arith.constant 0.000000e+00 : f32
    %3 = vector.broadcast %cst_2 : f32 to vector<22x8x128xf32>
    %c0_3 = arith.constant 0 : index
    %c24 = arith.constant 24 : index
    %c0_4 = arith.constant 0 : index
    %4 = vector.load %arg13[%c0_3, %c24, %c0_4] : memref<22x32x128xf32, #tpu.memory_space<vmem>>, vector<22x8x128xf32>
    tpu.vector_store %arg13[%c0_3, %c24, %c0_4], %3 {strides = array<i32>} : memref<22x32x128xf32, #tpu.memory_space<vmem>>, vector<22x8x128xf32>,
    %cst_5 = arith.constant 0.000000e+00 : f32
    %5 = vector.broadcast %cst_5 : f32 to vector<3x16x128xf32>
    %c0_6 = arith.constant 0 : index
    %c8 = arith.constant 8 : index
    %c0_7 = arith.constant 0 : index
    %6 = vector.load %arg13[%c0_6, %c8, %c0_7] : memref<22x32x128xf32, #tpu.memory_space<vmem>>, vector<3x16x128xf32>
    tpu.vector_store %arg13[%c0_6, %c8, %c0_7], %5 {strides = array<i32>} : memref<22x32x128xf32, #tpu.memory_space<vmem>>, vector<3x16x128xf32>,
    %cst_8 = arith.constant 0.000000e+00 : f32
    %7 = vector.broadcast %cst_8 : f32 to vector<3x16x128xf32>
    %c19 = arith.constant 19 : index
    %c8_9 = arith.constant 8 : index
    %c0_10 = arith.constant 0 : index
    %8 = vector.load %arg13[%c19, %c8_9, %c0_10] : memref<22x32x128xf32, #tpu.memory_space<vmem>>, vector<3x16x128xf32>
    tpu.vector_store %arg13[%c19, %c8_9, %c0_10], %7 {strides = array<i32>} : memref<22x32x128xf32, #tpu.memory_space<vmem>>, vector<3x16x128xf32>,
    %c0_11 = arith.constant 0 : index
    %9 = arith.index_cast %0 : i32 to index
    %c0_12 = arith.constant 0 : index
    %c0_13 = arith.constant 0 : index
    %10 = vector.load %arg2[%c0_11, %9, %c0_12, %c0_13] : memref<1x16x16x128xf32, #tpu.memory_space<vmem>>, vector<1x16x16x128xf32>
    %11 = vector.shape_cast %10 : vector<1x16x16x128xf32> to vector<16x16x128xf32>
    %c3 = arith.constant 3 : index
    %c8_14 = arith.constant 8 : index
    %c0_15 = arith.constant 0 : index
    %12 = vector.load %arg13[%c3, %c8_14, %c0_15] : memref<22x32x128xf32, #tpu.memory_space<vmem>>, vector<16x16x128xf32>
    tpu.vector_store %arg13[%c3, %c8_14, %c0_15], %11 {strides = array<i32>} : memref<22x32x128xf32, #tpu.memory_space<vmem>>, vector<16x16x128xf32>,
    %c3_i32 = arith.constant 3 : i32
    %13 = arith.subi %0, %c3_i32 : i32
    %c0_i32 = arith.constant 0 : i32
    %14 = arith.addi %13, %c0_i32 : i32
    %c0_i32_16 = arith.constant 0 : i32
    %15 = arith.cmpi sge, %14, %c0_i32_16 : i32
    %16 = arith.extui %15 : i1 to i32
    %c0_i32_17 = arith.constant 0 : i32
    %17 = arith.cmpi ne, %16, %c0_i32_17 : i32
    scf.if %17 {
      %c3_i32_103 = arith.constant 3 : i32
      %485 = arith.subi %0, %c3_i32_103 : i32
      %c0_i32_104 = arith.constant 0 : i32
      %486 = arith.addi %485, %c0_i32_104 : i32
      %c0_105 = arith.constant 0 : index
      %487 = arith.index_cast %486 : i32 to index
      %c0_106 = arith.constant 0 : index
      %c0_107 = arith.constant 0 : index
      %488 = vector.load %arg2[%c0_105, %487, %c0_106, %c0_107] : memref<1x16x16x128xf32, #tpu.memory_space<vmem>>, vector<1x1x16x128xf32>
      %489 = vector.shape_cast %488 : vector<1x1x16x128xf32> to vector<16x128xf32>
      %c0_108 = arith.constant 0 : index
      %c8_109 = arith.constant 8 : index
      %c0_110 = arith.constant 0 : index
      %490 = vector.load %arg13[%c0_108, %c8_109, %c0_110] : memref<22x32x128xf32, #tpu.memory_space<vmem>>, vector<1x16x128xf32>
      %491 = vector.shape_cast %490 : vector<1x16x128xf32> to vector<16x128xf32>
      %492 = vector.shape_cast %489 : vector<16x128xf32> to vector<1x16x128xf32>
      tpu.vector_store %arg13[%c0_108, %c8_109, %c0_110], %492 {strides = array<i32>} : memref<22x32x128xf32, #tpu.memory_space<vmem>>, vector<1x16x128xf32>,
    } else {
    }
    %c16_i32_18 = arith.constant 16 : i32
    %18 = arith.addi %0, %c16_i32_18 : i32
    %c0_i32_19 = arith.constant 0 : i32
    %19 = arith.addi %18, %c0_i32_19 : i32
    %c15_i32 = arith.constant 15 : i32
    %20 = arith.cmpi sle, %19, %c15_i32 : i32
    %21 = arith.extui %20 : i1 to i32
    %c0_i32_20 = arith.constant 0 : i32
    %22 = arith.cmpi ne, %21, %c0_i32_20 : i32
    scf.if %22 {
      %c16_i32_103 = arith.constant 16 : i32
      %485 = arith.addi %0, %c16_i32_103 : i32
      %c0_i32_104 = arith.constant 0 : i32
      %486 = arith.addi %485, %c0_i32_104 : i32
      %c0_105 = arith.constant 0 : index
      %487 = arith.index_cast %486 : i32 to index
      %c0_106 = arith.constant 0 : index
      %c0_107 = arith.constant 0 : index
      %488 = vector.load %arg2[%c0_105, %487, %c0_106, %c0_107] : memref<1x16x16x128xf32, #tpu.memory_space<vmem>>, vector<1x1x16x128xf32>
      %489 = vector.shape_cast %488 : vector<1x1x16x128xf32> to vector<16x128xf32>
      %c19_108 = arith.constant 19 : index
      %c8_109 = arith.constant 8 : index
      %c0_110 = arith.constant 0 : index
      %490 = vector.load %arg13[%c19_108, %c8_109, %c0_110] : memref<22x32x128xf32, #tpu.memory_space<vmem>>, vector<1x16x128xf32>
      %491 = vector.shape_cast %490 : vector<1x16x128xf32> to vector<16x128xf32>
      %492 = vector.shape_cast %489 : vector<16x128xf32> to vector<1x16x128xf32>
      tpu.vector_store %arg13[%c19_108, %c8_109, %c0_110], %492 {strides = array<i32>} : memref<22x32x128xf32, #tpu.memory_space<vmem>>, vector<1x16x128xf32>,
    } else {
    }
    %c3_i32_21 = arith.constant 3 : i32
    %23 = arith.subi %0, %c3_i32_21 : i32
    %c1_i32 = arith.constant 1 : i32
    %24 = arith.addi %23, %c1_i32 : i32
    %c0_i32_22 = arith.constant 0 : i32
    %25 = arith.cmpi sge, %24, %c0_i32_22 : i32
    %26 = arith.extui %25 : i1 to i32
    %c0_i32_23 = arith.constant 0 : i32
    %27 = arith.cmpi ne, %26, %c0_i32_23 : i32
    scf.if %27 {
      %c3_i32_103 = arith.constant 3 : i32
      %485 = arith.subi %0, %c3_i32_103 : i32
      %c1_i32_104 = arith.constant 1 : i32
      %486 = arith.addi %485, %c1_i32_104 : i32
      %c0_105 = arith.constant 0 : index
      %487 = arith.index_cast %486 : i32 to index
      %c0_106 = arith.constant 0 : index
      %c0_107 = arith.constant 0 : index
      %488 = vector.load %arg2[%c0_105, %487, %c0_106, %c0_107] : memref<1x16x16x128xf32, #tpu.memory_space<vmem>>, vector<1x1x16x128xf32>
      %489 = vector.shape_cast %488 : vector<1x1x16x128xf32> to vector<16x128xf32>
      %c1_108 = arith.constant 1 : index
      %c8_109 = arith.constant 8 : index
      %c0_110 = arith.constant 0 : index
      %490 = vector.load %arg13[%c1_108, %c8_109, %c0_110] : memref<22x32x128xf32, #tpu.memory_space<vmem>>, vector<1x16x128xf32>
      %491 = vector.shape_cast %490 : vector<1x16x128xf32> to vector<16x128xf32>
      %492 = vector.shape_cast %489 : vector<16x128xf32> to vector<1x16x128xf32>
      tpu.vector_store %arg13[%c1_108, %c8_109, %c0_110], %492 {strides = array<i32>} : memref<22x32x128xf32, #tpu.memory_space<vmem>>, vector<1x16x128xf32>,
    } else {
    }
    %c16_i32_24 = arith.constant 16 : i32
    %28 = arith.addi %0, %c16_i32_24 : i32
    %c1_i32_25 = arith.constant 1 : i32
    %29 = arith.addi %28, %c1_i32_25 : i32
    %c15_i32_26 = arith.constant 15 : i32
    %30 = arith.cmpi sle, %29, %c15_i32_26 : i32
    %31 = arith.extui %30 : i1 to i32
    %c0_i32_27 = arith.constant 0 : i32
    %32 = arith.cmpi ne, %31, %c0_i32_27 : i32
    scf.if %32 {
      %c16_i32_103 = arith.constant 16 : i32
      %485 = arith.addi %0, %c16_i32_103 : i32
      %c1_i32_104 = arith.constant 1 : i32
      %486 = arith.addi %485, %c1_i32_104 : i32
      %c0_105 = arith.constant 0 : index
      %487 = arith.index_cast %486 : i32 to index
      %c0_106 = arith.constant 0 : index
      %c0_107 = arith.constant 0 : index
      %488 = vector.load %arg2[%c0_105, %487, %c0_106, %c0_107] : memref<1x16x16x128xf32, #tpu.memory_space<vmem>>, vector<1x1x16x128xf32>
      %489 = vector.shape_cast %488 : vector<1x1x16x128xf32> to vector<16x128xf32>
      %c20 = arith.constant 20 : index
      %c8_108 = arith.constant 8 : index
      %c0_109 = arith.constant 0 : index
      %490 = vector.load %arg13[%c20, %c8_108, %c0_109] : memref<22x32x128xf32, #tpu.memory_space<vmem>>, vector<1x16x128xf32>
      %491 = vector.shape_cast %490 : vector<1x16x128xf32> to vector<16x128xf32>
      %492 = vector.shape_cast %489 : vector<16x128xf32> to vector<1x16x128xf32>
      tpu.vector_store %arg13[%c20, %c8_108, %c0_109], %492 {strides = array<i32>} : memref<22x32x128xf32, #tpu.memory_space<vmem>>, vector<1x16x128xf32>,
    } else {
    }
    %c3_i32_28 = arith.constant 3 : i32
    %33 = arith.subi %0, %c3_i32_28 : i32
    %c2_i32 = arith.constant 2 : i32
    %34 = arith.addi %33, %c2_i32 : i32
    %c0_i32_29 = arith.constant 0 : i32
    %35 = arith.cmpi sge, %34, %c0_i32_29 : i32
    %36 = arith.extui %35 : i1 to i32
    %c0_i32_30 = arith.constant 0 : i32
    %37 = arith.cmpi ne, %36, %c0_i32_30 : i32
    scf.if %37 {
      %c3_i32_103 = arith.constant 3 : i32
      %485 = arith.subi %0, %c3_i32_103 : i32
      %c2_i32_104 = arith.constant 2 : i32
      %486 = arith.addi %485, %c2_i32_104 : i32
      %c0_105 = arith.constant 0 : index
      %487 = arith.index_cast %486 : i32 to index
      %c0_106 = arith.constant 0 : index
      %c0_107 = arith.constant 0 : index
      %488 = vector.load %arg2[%c0_105, %487, %c0_106, %c0_107] : memref<1x16x16x128xf32, #tpu.memory_space<vmem>>, vector<1x1x16x128xf32>
      %489 = vector.shape_cast %488 : vector<1x1x16x128xf32> to vector<16x128xf32>
      %c2_108 = arith.constant 2 : index
      %c8_109 = arith.constant 8 : index
      %c0_110 = arith.constant 0 : index
      %490 = vector.load %arg13[%c2_108, %c8_109, %c0_110] : memref<22x32x128xf32, #tpu.memory_space<vmem>>, vector<1x16x128xf32>
      %491 = vector.shape_cast %490 : vector<1x16x128xf32> to vector<16x128xf32>
      %492 = vector.shape_cast %489 : vector<16x128xf32> to vector<1x16x128xf32>
      tpu.vector_store %arg13[%c2_108, %c8_109, %c0_110], %492 {strides = array<i32>} : memref<22x32x128xf32, #tpu.memory_space<vmem>>, vector<1x16x128xf32>,
    } else {
    }
    %c16_i32_31 = arith.constant 16 : i32
    %38 = arith.addi %0, %c16_i32_31 : i32
    %c2_i32_32 = arith.constant 2 : i32
    %39 = arith.addi %38, %c2_i32_32 : i32
    %c15_i32_33 = arith.constant 15 : i32
    %40 = arith.cmpi sle, %39, %c15_i32_33 : i32
    %41 = arith.extui %40 : i1 to i32
    %c0_i32_34 = arith.constant 0 : i32
    %42 = arith.cmpi ne, %41, %c0_i32_34 : i32
    scf.if %42 {
      %c16_i32_103 = arith.constant 16 : i32
      %485 = arith.addi %0, %c16_i32_103 : i32
      %c2_i32_104 = arith.constant 2 : i32
      %486 = arith.addi %485, %c2_i32_104 : i32
      %c0_105 = arith.constant 0 : index
      %487 = arith.index_cast %486 : i32 to index
      %c0_106 = arith.constant 0 : index
      %c0_107 = arith.constant 0 : index
      %488 = vector.load %arg2[%c0_105, %487, %c0_106, %c0_107] : memref<1x16x16x128xf32, #tpu.memory_space<vmem>>, vector<1x1x16x128xf32>
      %489 = vector.shape_cast %488 : vector<1x1x16x128xf32> to vector<16x128xf32>
      %c21 = arith.constant 21 : index
      %c8_108 = arith.constant 8 : index
      %c0_109 = arith.constant 0 : index
      %490 = vector.load %arg13[%c21, %c8_108, %c0_109] : memref<22x32x128xf32, #tpu.memory_space<vmem>>, vector<1x16x128xf32>
      %491 = vector.shape_cast %490 : vector<1x16x128xf32> to vector<16x128xf32>
      %492 = vector.shape_cast %489 : vector<16x128xf32> to vector<1x16x128xf32>
      tpu.vector_store %arg13[%c21, %c8_108, %c0_109], %492 {strides = array<i32>} : memref<22x32x128xf32, #tpu.memory_space<vmem>>, vector<1x16x128xf32>,
    } else {
    }
    %c0_35 = arith.constant 0 : index
    %c0_36 = arith.constant 0 : index
    %43 = vector.load %arg4[%c0_35, %c0_36] : memref<1x128xf32, #tpu.memory_space<vmem>>, vector<1x128xf32>
    %44 = vector.shape_cast %43 : vector<1x128xf32> to vector<128xf32>
    %45 = vector.shape_cast %44 : vector<128xf32> to vector<1x1x128xf32>
    %46 = vector.broadcast %45 : vector<1x1x128xf32> to vector<16x16x128xf32>
    %c0_37 = arith.constant 0 : index
    %c5 = arith.constant 5 : index
    %c0_38 = arith.constant 0 : index
    %47 = vector.load %arg13[%c0_37, %c5, %c0_38] : memref<22x32x128xf32, #tpu.memory_space<vmem>>, vector<22x16x128xf32>
    %c0_39 = arith.constant 0 : index
    %c0_40 = arith.constant 0 : index
    %c0_41 = arith.constant 0 : index
    %48 = vector.load %arg3[%c0_39, %c0_40, %c0_41] : memref<7x7x128xf32, #tpu.memory_space<vmem>>, vector<1x7x128xf32>
    %49 = vector.shape_cast %48 : vector<1x7x128xf32> to vector<7x128xf32>
    %50 = vector.extract_strided_slice %47 {offsets = [0, 0, 0], sizes = [16, 16, 128], strides = [1, 1, 1]} : vector<22x16x128xf32> to vector<16x16x128xf32>
    %51 = vector.extract_strided_slice %49 {offsets = [0, 0], sizes = [1, 128], strides = [1, 1]} : vector<7x128xf32> to vector<1x128xf32>
    %52 = vector.shape_cast %51 : vector<1x128xf32> to vector<128xf32>
    %53 = vector.shape_cast %52 : vector<128xf32> to vector<1x1x128xf32>
    %54 = vector.broadcast %53 : vector<1x1x128xf32> to vector<16x16x128xf32>
    %55 = arith.mulf %50, %54 : vector<16x16x128xf32>
    %56 = vector.extract_strided_slice %47 {offsets = [1, 0, 0], sizes = [16, 16, 128], strides = [1, 1, 1]} : vector<22x16x128xf32> to vector<16x16x128xf32>
    %57 = vector.extract_strided_slice %49 {offsets = [1, 0], sizes = [1, 128], strides = [1, 1]} : vector<7x128xf32> to vector<1x128xf32>
    %58 = vector.shape_cast %57 : vector<1x128xf32> to vector<128xf32>
    %59 = vector.shape_cast %58 : vector<128xf32> to vector<1x1x128xf32>
    %60 = vector.broadcast %59 : vector<1x1x128xf32> to vector<16x16x128xf32>
    %61 = arith.mulf %56, %60 : vector<16x16x128xf32>
    %62 = arith.addf %55, %61 : vector<16x16x128xf32>
    %63 = vector.extract_strided_slice %47 {offsets = [2, 0, 0], sizes = [16, 16, 128], strides = [1, 1, 1]} : vector<22x16x128xf32> to vector<16x16x128xf32>
    %64 = vector.extract_strided_slice %49 {offsets = [2, 0], sizes = [1, 128], strides = [1, 1]} : vector<7x128xf32> to vector<1x128xf32>
    %65 = vector.shape_cast %64 : vector<1x128xf32> to vector<128xf32>
    %66 = vector.shape_cast %65 : vector<128xf32> to vector<1x1x128xf32>
    %67 = vector.broadcast %66 : vector<1x1x128xf32> to vector<16x16x128xf32>
    %68 = arith.mulf %63, %67 : vector<16x16x128xf32>
    %69 = arith.addf %62, %68 : vector<16x16x128xf32>
    %70 = vector.extract_strided_slice %47 {offsets = [3, 0, 0], sizes = [16, 16, 128], strides = [1, 1, 1]} : vector<22x16x128xf32> to vector<16x16x128xf32>
    %71 = vector.extract_strided_slice %49 {offsets = [3, 0], sizes = [1, 128], strides = [1, 1]} : vector<7x128xf32> to vector<1x128xf32>
    %72 = vector.shape_cast %71 : vector<1x128xf32> to vector<128xf32>
    %73 = vector.shape_cast %72 : vector<128xf32> to vector<1x1x128xf32>
    %74 = vector.broadcast %73 : vector<1x1x128xf32> to vector<16x16x128xf32>
    %75 = arith.mulf %70, %74 : vector<16x16x128xf32>
    %76 = arith.addf %69, %75 : vector<16x16x128xf32>
    %77 = vector.extract_strided_slice %47 {offsets = [4, 0, 0], sizes = [16, 16, 128], strides = [1, 1, 1]} : vector<22x16x128xf32> to vector<16x16x128xf32>
    %78 = vector.extract_strided_slice %49 {offsets = [4, 0], sizes = [1, 128], strides = [1, 1]} : vector<7x128xf32> to vector<1x128xf32>
    %79 = vector.shape_cast %78 : vector<1x128xf32> to vector<128xf32>
    %80 = vector.shape_cast %79 : vector<128xf32> to vector<1x1x128xf32>
    %81 = vector.broadcast %80 : vector<1x1x128xf32> to vector<16x16x128xf32>
    %82 = arith.mulf %77, %81 : vector<16x16x128xf32>
    %83 = arith.addf %76, %82 : vector<16x16x128xf32>
    %84 = vector.extract_strided_slice %47 {offsets = [5, 0, 0], sizes = [16, 16, 128], strides = [1, 1, 1]} : vector<22x16x128xf32> to vector<16x16x128xf32>
    %85 = vector.extract_strided_slice %49 {offsets = [5, 0], sizes = [1, 128], strides = [1, 1]} : vector<7x128xf32> to vector<1x128xf32>
    %86 = vector.shape_cast %85 : vector<1x128xf32> to vector<128xf32>
    %87 = vector.shape_cast %86 : vector<128xf32> to vector<1x1x128xf32>
    %88 = vector.broadcast %87 : vector<1x1x128xf32> to vector<16x16x128xf32>
    %89 = arith.mulf %84, %88 : vector<16x16x128xf32>
    %90 = arith.addf %83, %89 : vector<16x16x128xf32>
    %91 = vector.extract_strided_slice %47 {offsets = [6, 0, 0], sizes = [16, 16, 128], strides = [1, 1, 1]} : vector<22x16x128xf32> to vector<16x16x128xf32>
    %92 = vector.extract_strided_slice %49 {offsets = [6, 0], sizes = [1, 128], strides = [1, 1]} : vector<7x128xf32> to vector<1x128xf32>
    %93 = vector.shape_cast %92 : vector<1x128xf32> to vector<128xf32>
    %94 = vector.shape_cast %93 : vector<128xf32> to vector<1x1x128xf32>
    %95 = vector.broadcast %94 : vector<1x1x128xf32> to vector<16x16x128xf32>
    %96 = arith.mulf %91, %95 : vector<16x16x128xf32>
    %97 = arith.addf %90, %96 : vector<16x16x128xf32>
    %98 = arith.addf %46, %97 : vector<16x16x128xf32>
    %c0_42 = arith.constant 0 : index
    %c6 = arith.constant 6 : index
    %c0_43 = arith.constant 0 : index
    %99 = vector.load %arg13[%c0_42, %c6, %c0_43] : memref<22x32x128xf32, #tpu.memory_space<vmem>>, vector<22x16x128xf32>
    %c1 = arith.constant 1 : index
    %c0_44 = arith.constant 0 : index
    %c0_45 = arith.constant 0 : index
    %100 = vector.load %arg3[%c1, %c0_44, %c0_45] : memref<7x7x128xf32, #tpu.memory_space<vmem>>, vector<1x7x128xf32>
    %101 = vector.shape_cast %100 : vector<1x7x128xf32> to vector<7x128xf32>
    %102 = vector.extract_strided_slice %99 {offsets = [0, 0, 0], sizes = [16, 16, 128], strides = [1, 1, 1]} : vector<22x16x128xf32> to vector<16x16x128xf32>
    %103 = vector.extract_strided_slice %101 {offsets = [0, 0], sizes = [1, 128], strides = [1, 1]} : vector<7x128xf32> to vector<1x128xf32>
    %104 = vector.shape_cast %103 : vector<1x128xf32> to vector<128xf32>
    %105 = vector.shape_cast %104 : vector<128xf32> to vector<1x1x128xf32>
    %106 = vector.broadcast %105 : vector<1x1x128xf32> to vector<16x16x128xf32>
    %107 = arith.mulf %102, %106 : vector<16x16x128xf32>
    %108 = vector.extract_strided_slice %99 {offsets = [1, 0, 0], sizes = [16, 16, 128], strides = [1, 1, 1]} : vector<22x16x128xf32> to vector<16x16x128xf32>
    %109 = vector.extract_strided_slice %101 {offsets = [1, 0], sizes = [1, 128], strides = [1, 1]} : vector<7x128xf32> to vector<1x128xf32>
    %110 = vector.shape_cast %109 : vector<1x128xf32> to vector<128xf32>
    %111 = vector.shape_cast %110 : vector<128xf32> to vector<1x1x128xf32>
    %112 = vector.broadcast %111 : vector<1x1x128xf32> to vector<16x16x128xf32>
    %113 = arith.mulf %108, %112 : vector<16x16x128xf32>
    %114 = arith.addf %107, %113 : vector<16x16x128xf32>
    %115 = vector.extract_strided_slice %99 {offsets = [2, 0, 0], sizes = [16, 16, 128], strides = [1, 1, 1]} : vector<22x16x128xf32> to vector<16x16x128xf32>
    %116 = vector.extract_strided_slice %101 {offsets = [2, 0], sizes = [1, 128], strides = [1, 1]} : vector<7x128xf32> to vector<1x128xf32>
    %117 = vector.shape_cast %116 : vector<1x128xf32> to vector<128xf32>
    %118 = vector.shape_cast %117 : vector<128xf32> to vector<1x1x128xf32>
    %119 = vector.broadcast %118 : vector<1x1x128xf32> to vector<16x16x128xf32>
    %120 = arith.mulf %115, %119 : vector<16x16x128xf32>
    %121 = arith.addf %114, %120 : vector<16x16x128xf32>
    %122 = vector.extract_strided_slice %99 {offsets = [3, 0, 0], sizes = [16, 16, 128], strides = [1, 1, 1]} : vector<22x16x128xf32> to vector<16x16x128xf32>
    %123 = vector.extract_strided_slice %101 {offsets = [3, 0], sizes = [1, 128], strides = [1, 1]} : vector<7x128xf32> to vector<1x128xf32>
    %124 = vector.shape_cast %123 : vector<1x128xf32> to vector<128xf32>
    %125 = vector.shape_cast %124 : vector<128xf32> to vector<1x1x128xf32>
    %126 = vector.broadcast %125 : vector<1x1x128xf32> to vector<16x16x128xf32>
    %127 = arith.mulf %122, %126 : vector<16x16x128xf32>
    %128 = arith.addf %121, %127 : vector<16x16x128xf32>
    %129 = vector.extract_strided_slice %99 {offsets = [4, 0, 0], sizes = [16, 16, 128], strides = [1, 1, 1]} : vector<22x16x128xf32> to vector<16x16x128xf32>
    %130 = vector.extract_strided_slice %101 {offsets = [4, 0], sizes = [1, 128], strides = [1, 1]} : vector<7x128xf32> to vector<1x128xf32>
    %131 = vector.shape_cast %130 : vector<1x128xf32> to vector<128xf32>
    %132 = vector.shape_cast %131 : vector<128xf32> to vector<1x1x128xf32>
    %133 = vector.broadcast %132 : vector<1x1x128xf32> to vector<16x16x128xf32>
    %134 = arith.mulf %129, %133 : vector<16x16x128xf32>
    %135 = arith.addf %128, %134 : vector<16x16x128xf32>
    %136 = vector.extract_strided_slice %99 {offsets = [5, 0, 0], sizes = [16, 16, 128], strides = [1, 1, 1]} : vector<22x16x128xf32> to vector<16x16x128xf32>
    %137 = vector.extract_strided_slice %101 {offsets = [5, 0], sizes = [1, 128], strides = [1, 1]} : vector<7x128xf32> to vector<1x128xf32>
    %138 = vector.shape_cast %137 : vector<1x128xf32> to vector<128xf32>
    %139 = vector.shape_cast %138 : vector<128xf32> to vector<1x1x128xf32>
    %140 = vector.broadcast %139 : vector<1x1x128xf32> to vector<16x16x128xf32>
    %141 = arith.mulf %136, %140 : vector<16x16x128xf32>
    %142 = arith.addf %135, %141 : vector<16x16x128xf32>
    %143 = vector.extract_strided_slice %99 {offsets = [6, 0, 0], sizes = [16, 16, 128], strides = [1, 1, 1]} : vector<22x16x128xf32> to vector<16x16x128xf32>
    %144 = vector.extract_strided_slice %101 {offsets = [6, 0], sizes = [1, 128], strides = [1, 1]} : vector<7x128xf32> to vector<1x128xf32>
    %145 = vector.shape_cast %144 : vector<1x128xf32> to vector<128xf32>
    %146 = vector.shape_cast %145 : vector<128xf32> to vector<1x1x128xf32>
    %147 = vector.broadcast %146 : vector<1x1x128xf32> to vector<16x16x128xf32>
    %148 = arith.mulf %143, %147 : vector<16x16x128xf32>
    %149 = arith.addf %142, %148 : vector<16x16x128xf32>
    %150 = arith.addf %98, %149 : vector<16x16x128xf32>
    %c0_46 = arith.constant 0 : index
    %c7 = arith.constant 7 : index
    %c0_47 = arith.constant 0 : index
    %151 = vector.load %arg13[%c0_46, %c7, %c0_47] : memref<22x32x128xf32, #tpu.memory_space<vmem>>, vector<22x16x128xf32>
    %c2 = arith.constant 2 : index
    %c0_48 = arith.constant 0 : index
    %c0_49 = arith.constant 0 : index
    %152 = vector.load %arg3[%c2, %c0_48, %c0_49] : memref<7x7x128xf32, #tpu.memory_space<vmem>>, vector<1x7x128xf32>
    %153 = vector.shape_cast %152 : vector<1x7x128xf32> to vector<7x128xf32>
    %154 = vector.extract_strided_slice %151 {offsets = [0, 0, 0], sizes = [16, 16, 128], strides = [1, 1, 1]} : vector<22x16x128xf32> to vector<16x16x128xf32>
    %155 = vector.extract_strided_slice %153 {offsets = [0, 0], sizes = [1, 128], strides = [1, 1]} : vector<7x128xf32> to vector<1x128xf32>
    %156 = vector.shape_cast %155 : vector<1x128xf32> to vector<128xf32>
    %157 = vector.shape_cast %156 : vector<128xf32> to vector<1x1x128xf32>
    %158 = vector.broadcast %157 : vector<1x1x128xf32> to vector<16x16x128xf32>
    %159 = arith.mulf %154, %158 : vector<16x16x128xf32>
    %160 = vector.extract_strided_slice %151 {offsets = [1, 0, 0], sizes = [16, 16, 128], strides = [1, 1, 1]} : vector<22x16x128xf32> to vector<16x16x128xf32>
    %161 = vector.extract_strided_slice %153 {offsets = [1, 0], sizes = [1, 128], strides = [1, 1]} : vector<7x128xf32> to vector<1x128xf32>
    %162 = vector.shape_cast %161 : vector<1x128xf32> to vector<128xf32>
    %163 = vector.shape_cast %162 : vector<128xf32> to vector<1x1x128xf32>
    %164 = vector.broadcast %163 : vector<1x1x128xf32> to vector<16x16x128xf32>
    %165 = arith.mulf %160, %164 : vector<16x16x128xf32>
    %166 = arith.addf %159, %165 : vector<16x16x128xf32>
    %167 = vector.extract_strided_slice %151 {offsets = [2, 0, 0], sizes = [16, 16, 128], strides = [1, 1, 1]} : vector<22x16x128xf32> to vector<16x16x128xf32>
    %168 = vector.extract_strided_slice %153 {offsets = [2, 0], sizes = [1, 128], strides = [1, 1]} : vector<7x128xf32> to vector<1x128xf32>
    %169 = vector.shape_cast %168 : vector<1x128xf32> to vector<128xf32>
    %170 = vector.shape_cast %169 : vector<128xf32> to vector<1x1x128xf32>
    %171 = vector.broadcast %170 : vector<1x1x128xf32> to vector<16x16x128xf32>
    %172 = arith.mulf %167, %171 : vector<16x16x128xf32>
    %173 = arith.addf %166, %172 : vector<16x16x128xf32>
    %174 = vector.extract_strided_slice %151 {offsets = [3, 0, 0], sizes = [16, 16, 128], strides = [1, 1, 1]} : vector<22x16x128xf32> to vector<16x16x128xf32>
    %175 = vector.extract_strided_slice %153 {offsets = [3, 0], sizes = [1, 128], strides = [1, 1]} : vector<7x128xf32> to vector<1x128xf32>
    %176 = vector.shape_cast %175 : vector<1x128xf32> to vector<128xf32>
    %177 = vector.shape_cast %176 : vector<128xf32> to vector<1x1x128xf32>
    %178 = vector.broadcast %177 : vector<1x1x128xf32> to vector<16x16x128xf32>
    %179 = arith.mulf %174, %178 : vector<16x16x128xf32>
    %180 = arith.addf %173, %179 : vector<16x16x128xf32>
    %181 = vector.extract_strided_slice %151 {offsets = [4, 0, 0], sizes = [16, 16, 128], strides = [1, 1, 1]} : vector<22x16x128xf32> to vector<16x16x128xf32>
    %182 = vector.extract_strided_slice %153 {offsets = [4, 0], sizes = [1, 128], strides = [1, 1]} : vector<7x128xf32> to vector<1x128xf32>
    %183 = vector.shape_cast %182 : vector<1x128xf32> to vector<128xf32>
    %184 = vector.shape_cast %183 : vector<128xf32> to vector<1x1x128xf32>
    %185 = vector.broadcast %184 : vector<1x1x128xf32> to vector<16x16x128xf32>
    %186 = arith.mulf %181, %185 : vector<16x16x128xf32>
    %187 = arith.addf %180, %186 : vector<16x16x128xf32>
    %188 = vector.extract_strided_slice %151 {offsets = [5, 0, 0], sizes = [16, 16, 128], strides = [1, 1, 1]} : vector<22x16x128xf32> to vector<16x16x128xf32>
    %189 = vector.extract_strided_slice %153 {offsets = [5, 0], sizes = [1, 128], strides = [1, 1]} : vector<7x128xf32> to vector<1x128xf32>
    %190 = vector.shape_cast %189 : vector<1x128xf32> to vector<128xf32>
    %191 = vector.shape_cast %190 : vector<128xf32> to vector<1x1x128xf32>
    %192 = vector.broadcast %191 : vector<1x1x128xf32> to vector<16x16x128xf32>
    %193 = arith.mulf %188, %192 : vector<16x16x128xf32>
    %194 = arith.addf %187, %193 : vector<16x16x128xf32>
    %195 = vector.extract_strided_slice %151 {offsets = [6, 0, 0], sizes = [16, 16, 128], strides = [1, 1, 1]} : vector<22x16x128xf32> to vector<16x16x128xf32>
    %196 = vector.extract_strided_slice %153 {offsets = [6, 0], sizes = [1, 128], strides = [1, 1]} : vector<7x128xf32> to vector<1x128xf32>
    %197 = vector.shape_cast %196 : vector<1x128xf32> to vector<128xf32>
    %198 = vector.shape_cast %197 : vector<128xf32> to vector<1x1x128xf32>
    %199 = vector.broadcast %198 : vector<1x1x128xf32> to vector<16x16x128xf32>
    %200 = arith.mulf %195, %199 : vector<16x16x128xf32>
    %201 = arith.addf %194, %200 : vector<16x16x128xf32>
    %202 = arith.addf %150, %201 : vector<16x16x128xf32>
    %c0_50 = arith.constant 0 : index
    %c8_51 = arith.constant 8 : index
    %c0_52 = arith.constant 0 : index
    %203 = vector.load %arg13[%c0_50, %c8_51, %c0_52] : memref<22x32x128xf32, #tpu.memory_space<vmem>>, vector<22x16x128xf32>
    %c3_53 = arith.constant 3 : index
    %c0_54 = arith.constant 0 : index
    %c0_55 = arith.constant 0 : index
    %204 = vector.load %arg3[%c3_53, %c0_54, %c0_55] : memref<7x7x128xf32, #tpu.memory_space<vmem>>, vector<1x7x128xf32>
    %205 = vector.shape_cast %204 : vector<1x7x128xf32> to vector<7x128xf32>
    %206 = vector.extract_strided_slice %203 {offsets = [0, 0, 0], sizes = [16, 16, 128], strides = [1, 1, 1]} : vector<22x16x128xf32> to vector<16x16x128xf32>
    %207 = vector.extract_strided_slice %205 {offsets = [0, 0], sizes = [1, 128], strides = [1, 1]} : vector<7x128xf32> to vector<1x128xf32>
    %208 = vector.shape_cast %207 : vector<1x128xf32> to vector<128xf32>
    %209 = vector.shape_cast %208 : vector<128xf32> to vector<1x1x128xf32>
    %210 = vector.broadcast %209 : vector<1x1x128xf32> to vector<16x16x128xf32>
    %211 = arith.mulf %206, %210 : vector<16x16x128xf32>
    %212 = vector.extract_strided_slice %203 {offsets = [1, 0, 0], sizes = [16, 16, 128], strides = [1, 1, 1]} : vector<22x16x128xf32> to vector<16x16x128xf32>
    %213 = vector.extract_strided_slice %205 {offsets = [1, 0], sizes = [1, 128], strides = [1, 1]} : vector<7x128xf32> to vector<1x128xf32>
    %214 = vector.shape_cast %213 : vector<1x128xf32> to vector<128xf32>
    %215 = vector.shape_cast %214 : vector<128xf32> to vector<1x1x128xf32>
    %216 = vector.broadcast %215 : vector<1x1x128xf32> to vector<16x16x128xf32>
    %217 = arith.mulf %212, %216 : vector<16x16x128xf32>
    %218 = arith.addf %211, %217 : vector<16x16x128xf32>
    %219 = vector.extract_strided_slice %203 {offsets = [2, 0, 0], sizes = [16, 16, 128], strides = [1, 1, 1]} : vector<22x16x128xf32> to vector<16x16x128xf32>
    %220 = vector.extract_strided_slice %205 {offsets = [2, 0], sizes = [1, 128], strides = [1, 1]} : vector<7x128xf32> to vector<1x128xf32>
    %221 = vector.shape_cast %220 : vector<1x128xf32> to vector<128xf32>
    %222 = vector.shape_cast %221 : vector<128xf32> to vector<1x1x128xf32>
    %223 = vector.broadcast %222 : vector<1x1x128xf32> to vector<16x16x128xf32>
    %224 = arith.mulf %219, %223 : vector<16x16x128xf32>
    %225 = arith.addf %218, %224 : vector<16x16x128xf32>
    %226 = vector.extract_strided_slice %203 {offsets = [3, 0, 0], sizes = [16, 16, 128], strides = [1, 1, 1]} : vector<22x16x128xf32> to vector<16x16x128xf32>
    %227 = vector.extract_strided_slice %205 {offsets = [3, 0], sizes = [1, 128], strides = [1, 1]} : vector<7x128xf32> to vector<1x128xf32>
    %228 = vector.shape_cast %227 : vector<1x128xf32> to vector<128xf32>
    %229 = vector.shape_cast %228 : vector<128xf32> to vector<1x1x128xf32>
    %230 = vector.broadcast %229 : vector<1x1x128xf32> to vector<16x16x128xf32>
    %231 = arith.mulf %226, %230 : vector<16x16x128xf32>
    %232 = arith.addf %225, %231 : vector<16x16x128xf32>
    %233 = vector.extract_strided_slice %203 {offsets = [4, 0, 0], sizes = [16, 16, 128], strides = [1, 1, 1]} : vector<22x16x128xf32> to vector<16x16x128xf32>
    %234 = vector.extract_strided_slice %205 {offsets = [4, 0], sizes = [1, 128], strides = [1, 1]} : vector<7x128xf32> to vector<1x128xf32>
    %235 = vector.shape_cast %234 : vector<1x128xf32> to vector<128xf32>
    %236 = vector.shape_cast %235 : vector<128xf32> to vector<1x1x128xf32>
    %237 = vector.broadcast %236 : vector<1x1x128xf32> to vector<16x16x128xf32>
    %238 = arith.mulf %233, %237 : vector<16x16x128xf32>
    %239 = arith.addf %232, %238 : vector<16x16x128xf32>
    %240 = vector.extract_strided_slice %203 {offsets = [5, 0, 0], sizes = [16, 16, 128], strides = [1, 1, 1]} : vector<22x16x128xf32> to vector<16x16x128xf32>
    %241 = vector.extract_strided_slice %205 {offsets = [5, 0], sizes = [1, 128], strides = [1, 1]} : vector<7x128xf32> to vector<1x128xf32>
    %242 = vector.shape_cast %241 : vector<1x128xf32> to vector<128xf32>
    %243 = vector.shape_cast %242 : vector<128xf32> to vector<1x1x128xf32>
    %244 = vector.broadcast %243 : vector<1x1x128xf32> to vector<16x16x128xf32>
    %245 = arith.mulf %240, %244 : vector<16x16x128xf32>
    %246 = arith.addf %239, %245 : vector<16x16x128xf32>
    %247 = vector.extract_strided_slice %203 {offsets = [6, 0, 0], sizes = [16, 16, 128], strides = [1, 1, 1]} : vector<22x16x128xf32> to vector<16x16x128xf32>
    %248 = vector.extract_strided_slice %205 {offsets = [6, 0], sizes = [1, 128], strides = [1, 1]} : vector<7x128xf32> to vector<1x128xf32>
    %249 = vector.shape_cast %248 : vector<1x128xf32> to vector<128xf32>
    %250 = vector.shape_cast %249 : vector<128xf32> to vector<1x1x128xf32>
    %251 = vector.broadcast %250 : vector<1x1x128xf32> to vector<16x16x128xf32>
    %252 = arith.mulf %247, %251 : vector<16x16x128xf32>
    %253 = arith.addf %246, %252 : vector<16x16x128xf32>
    %254 = arith.addf %202, %253 : vector<16x16x128xf32>
    %c0_56 = arith.constant 0 : index
    %c9 = arith.constant 9 : index
    %c0_57 = arith.constant 0 : index
    %255 = vector.load %arg13[%c0_56, %c9, %c0_57] : memref<22x32x128xf32, #tpu.memory_space<vmem>>, vector<22x16x128xf32>
    %c4 = arith.constant 4 : index
    %c0_58 = arith.constant 0 : index
    %c0_59 = arith.constant 0 : index
    %256 = vector.load %arg3[%c4, %c0_58, %c0_59] : memref<7x7x128xf32, #tpu.memory_space<vmem>>, vector<1x7x128xf32>
    %257 = vector.shape_cast %256 : vector<1x7x128xf32> to vector<7x128xf32>
    %258 = vector.extract_strided_slice %255 {offsets = [0, 0, 0], sizes = [16, 16, 128], strides = [1, 1, 1]} : vector<22x16x128xf32> to vector<16x16x128xf32>
    %259 = vector.extract_strided_slice %257 {offsets = [0, 0], sizes = [1, 128], strides = [1, 1]} : vector<7x128xf32> to vector<1x128xf32>
    %260 = vector.shape_cast %259 : vector<1x128xf32> to vector<128xf32>
    %261 = vector.shape_cast %260 : vector<128xf32> to vector<1x1x128xf32>
    %262 = vector.broadcast %261 : vector<1x1x128xf32> to vector<16x16x128xf32>
    %263 = arith.mulf %258, %262 : vector<16x16x128xf32>
    %264 = vector.extract_strided_slice %255 {offsets = [1, 0, 0], sizes = [16, 16, 128], strides = [1, 1, 1]} : vector<22x16x128xf32> to vector<16x16x128xf32>
    %265 = vector.extract_strided_slice %257 {offsets = [1, 0], sizes = [1, 128], strides = [1, 1]} : vector<7x128xf32> to vector<1x128xf32>
    %266 = vector.shape_cast %265 : vector<1x128xf32> to vector<128xf32>
    %267 = vector.shape_cast %266 : vector<128xf32> to vector<1x1x128xf32>
    %268 = vector.broadcast %267 : vector<1x1x128xf32> to vector<16x16x128xf32>
    %269 = arith.mulf %264, %268 : vector<16x16x128xf32>
    %270 = arith.addf %263, %269 : vector<16x16x128xf32>
    %271 = vector.extract_strided_slice %255 {offsets = [2, 0, 0], sizes = [16, 16, 128], strides = [1, 1, 1]} : vector<22x16x128xf32> to vector<16x16x128xf32>
    %272 = vector.extract_strided_slice %257 {offsets = [2, 0], sizes = [1, 128], strides = [1, 1]} : vector<7x128xf32> to vector<1x128xf32>
    %273 = vector.shape_cast %272 : vector<1x128xf32> to vector<128xf32>
    %274 = vector.shape_cast %273 : vector<128xf32> to vector<1x1x128xf32>
    %275 = vector.broadcast %274 : vector<1x1x128xf32> to vector<16x16x128xf32>
    %276 = arith.mulf %271, %275 : vector<16x16x128xf32>
    %277 = arith.addf %270, %276 : vector<16x16x128xf32>
    %278 = vector.extract_strided_slice %255 {offsets = [3, 0, 0], sizes = [16, 16, 128], strides = [1, 1, 1]} : vector<22x16x128xf32> to vector<16x16x128xf32>
    %279 = vector.extract_strided_slice %257 {offsets = [3, 0], sizes = [1, 128], strides = [1, 1]} : vector<7x128xf32> to vector<1x128xf32>
    %280 = vector.shape_cast %279 : vector<1x128xf32> to vector<128xf32>
    %281 = vector.shape_cast %280 : vector<128xf32> to vector<1x1x128xf32>
    %282 = vector.broadcast %281 : vector<1x1x128xf32> to vector<16x16x128xf32>
    %283 = arith.mulf %278, %282 : vector<16x16x128xf32>
    %284 = arith.addf %277, %283 : vector<16x16x128xf32>
    %285 = vector.extract_strided_slice %255 {offsets = [4, 0, 0], sizes = [16, 16, 128], strides = [1, 1, 1]} : vector<22x16x128xf32> to vector<16x16x128xf32>
    %286 = vector.extract_strided_slice %257 {offsets = [4, 0], sizes = [1, 128], strides = [1, 1]} : vector<7x128xf32> to vector<1x128xf32>
    %287 = vector.shape_cast %286 : vector<1x128xf32> to vector<128xf32>
    %288 = vector.shape_cast %287 : vector<128xf32> to vector<1x1x128xf32>
    %289 = vector.broadcast %288 : vector<1x1x128xf32> to vector<16x16x128xf32>
    %290 = arith.mulf %285, %289 : vector<16x16x128xf32>
    %291 = arith.addf %284, %290 : vector<16x16x128xf32>
    %292 = vector.extract_strided_slice %255 {offsets = [5, 0, 0], sizes = [16, 16, 128], strides = [1, 1, 1]} : vector<22x16x128xf32> to vector<16x16x128xf32>
    %293 = vector.extract_strided_slice %257 {offsets = [5, 0], sizes = [1, 128], strides = [1, 1]} : vector<7x128xf32> to vector<1x128xf32>
    %294 = vector.shape_cast %293 : vector<1x128xf32> to vector<128xf32>
    %295 = vector.shape_cast %294 : vector<128xf32> to vector<1x1x128xf32>
    %296 = vector.broadcast %295 : vector<1x1x128xf32> to vector<16x16x128xf32>
    %297 = arith.mulf %292, %296 : vector<16x16x128xf32>
    %298 = arith.addf %291, %297 : vector<16x16x128xf32>
    %299 = vector.extract_strided_slice %255 {offsets = [6, 0, 0], sizes = [16, 16, 128], strides = [1, 1, 1]} : vector<22x16x128xf32> to vector<16x16x128xf32>
    %300 = vector.extract_strided_slice %257 {offsets = [6, 0], sizes = [1, 128], strides = [1, 1]} : vector<7x128xf32> to vector<1x128xf32>
    %301 = vector.shape_cast %300 : vector<1x128xf32> to vector<128xf32>
    %302 = vector.shape_cast %301 : vector<128xf32> to vector<1x1x128xf32>
    %303 = vector.broadcast %302 : vector<1x1x128xf32> to vector<16x16x128xf32>
    %304 = arith.mulf %299, %303 : vector<16x16x128xf32>
    %305 = arith.addf %298, %304 : vector<16x16x128xf32>
    %306 = arith.addf %254, %305 : vector<16x16x128xf32>
    %c0_60 = arith.constant 0 : index
    %c10 = arith.constant 10 : index
    %c0_61 = arith.constant 0 : index
    %307 = vector.load %arg13[%c0_60, %c10, %c0_61] : memref<22x32x128xf32, #tpu.memory_space<vmem>>, vector<22x16x128xf32>
    %c5_62 = arith.constant 5 : index
    %c0_63 = arith.constant 0 : index
    %c0_64 = arith.constant 0 : index
    %308 = vector.load %arg3[%c5_62, %c0_63, %c0_64] : memref<7x7x128xf32, #tpu.memory_space<vmem>>, vector<1x7x128xf32>
    %309 = vector.shape_cast %308 : vector<1x7x128xf32> to vector<7x128xf32>
    %310 = vector.extract_strided_slice %307 {offsets = [0, 0, 0], sizes = [16, 16, 128], strides = [1, 1, 1]} : vector<22x16x128xf32> to vector<16x16x128xf32>
    %311 = vector.extract_strided_slice %309 {offsets = [0, 0], sizes = [1, 128], strides = [1, 1]} : vector<7x128xf32> to vector<1x128xf32>
    %312 = vector.shape_cast %311 : vector<1x128xf32> to vector<128xf32>
    %313 = vector.shape_cast %312 : vector<128xf32> to vector<1x1x128xf32>
    %314 = vector.broadcast %313 : vector<1x1x128xf32> to vector<16x16x128xf32>
    %315 = arith.mulf %310, %314 : vector<16x16x128xf32>
    %316 = vector.extract_strided_slice %307 {offsets = [1, 0, 0], sizes = [16, 16, 128], strides = [1, 1, 1]} : vector<22x16x128xf32> to vector<16x16x128xf32>
    %317 = vector.extract_strided_slice %309 {offsets = [1, 0], sizes = [1, 128], strides = [1, 1]} : vector<7x128xf32> to vector<1x128xf32>
    %318 = vector.shape_cast %317 : vector<1x128xf32> to vector<128xf32>
    %319 = vector.shape_cast %318 : vector<128xf32> to vector<1x1x128xf32>
    %320 = vector.broadcast %319 : vector<1x1x128xf32> to vector<16x16x128xf32>
    %321 = arith.mulf %316, %320 : vector<16x16x128xf32>
    %322 = arith.addf %315, %321 : vector<16x16x128xf32>
    %323 = vector.extract_strided_slice %307 {offsets = [2, 0, 0], sizes = [16, 16, 128], strides = [1, 1, 1]} : vector<22x16x128xf32> to vector<16x16x128xf32>
    %324 = vector.extract_strided_slice %309 {offsets = [2, 0], sizes = [1, 128], strides = [1, 1]} : vector<7x128xf32> to vector<1x128xf32>
    %325 = vector.shape_cast %324 : vector<1x128xf32> to vector<128xf32>
    %326 = vector.shape_cast %325 : vector<128xf32> to vector<1x1x128xf32>
    %327 = vector.broadcast %326 : vector<1x1x128xf32> to vector<16x16x128xf32>
    %328 = arith.mulf %323, %327 : vector<16x16x128xf32>
    %329 = arith.addf %322, %328 : vector<16x16x128xf32>
    %330 = vector.extract_strided_slice %307 {offsets = [3, 0, 0], sizes = [16, 16, 128], strides = [1, 1, 1]} : vector<22x16x128xf32> to vector<16x16x128xf32>
    %331 = vector.extract_strided_slice %309 {offsets = [3, 0], sizes = [1, 128], strides = [1, 1]} : vector<7x128xf32> to vector<1x128xf32>
    %332 = vector.shape_cast %331 : vector<1x128xf32> to vector<128xf32>
    %333 = vector.shape_cast %332 : vector<128xf32> to vector<1x1x128xf32>
    %334 = vector.broadcast %333 : vector<1x1x128xf32> to vector<16x16x128xf32>
    %335 = arith.mulf %330, %334 : vector<16x16x128xf32>
    %336 = arith.addf %329, %335 : vector<16x16x128xf32>
    %337 = vector.extract_strided_slice %307 {offsets = [4, 0, 0], sizes = [16, 16, 128], strides = [1, 1, 1]} : vector<22x16x128xf32> to vector<16x16x128xf32>
    %338 = vector.extract_strided_slice %309 {offsets = [4, 0], sizes = [1, 128], strides = [1, 1]} : vector<7x128xf32> to vector<1x128xf32>
    %339 = vector.shape_cast %338 : vector<1x128xf32> to vector<128xf32>
    %340 = vector.shape_cast %339 : vector<128xf32> to vector<1x1x128xf32>
    %341 = vector.broadcast %340 : vector<1x1x128xf32> to vector<16x16x128xf32>
    %342 = arith.mulf %337, %341 : vector<16x16x128xf32>
    %343 = arith.addf %336, %342 : vector<16x16x128xf32>
    %344 = vector.extract_strided_slice %307 {offsets = [5, 0, 0], sizes = [16, 16, 128], strides = [1, 1, 1]} : vector<22x16x128xf32> to vector<16x16x128xf32>
    %345 = vector.extract_strided_slice %309 {offsets = [5, 0], sizes = [1, 128], strides = [1, 1]} : vector<7x128xf32> to vector<1x128xf32>
    %346 = vector.shape_cast %345 : vector<1x128xf32> to vector<128xf32>
    %347 = vector.shape_cast %346 : vector<128xf32> to vector<1x1x128xf32>
    %348 = vector.broadcast %347 : vector<1x1x128xf32> to vector<16x16x128xf32>
    %349 = arith.mulf %344, %348 : vector<16x16x128xf32>
    %350 = arith.addf %343, %349 : vector<16x16x128xf32>
    %351 = vector.extract_strided_slice %307 {offsets = [6, 0, 0], sizes = [16, 16, 128], strides = [1, 1, 1]} : vector<22x16x128xf32> to vector<16x16x128xf32>
    %352 = vector.extract_strided_slice %309 {offsets = [6, 0], sizes = [1, 128], strides = [1, 1]} : vector<7x128xf32> to vector<1x128xf32>
    %353 = vector.shape_cast %352 : vector<1x128xf32> to vector<128xf32>
    %354 = vector.shape_cast %353 : vector<128xf32> to vector<1x1x128xf32>
    %355 = vector.broadcast %354 : vector<1x1x128xf32> to vector<16x16x128xf32>
    %356 = arith.mulf %351, %355 : vector<16x16x128xf32>
    %357 = arith.addf %350, %356 : vector<16x16x128xf32>
    %358 = arith.addf %306, %357 : vector<16x16x128xf32>
    %c0_65 = arith.constant 0 : index
    %c11 = arith.constant 11 : index
    %c0_66 = arith.constant 0 : index
    %359 = vector.load %arg13[%c0_65, %c11, %c0_66] : memref<22x32x128xf32, #tpu.memory_space<vmem>>, vector<22x16x128xf32>
    %c6_67 = arith.constant 6 : index
    %c0_68 = arith.constant 0 : index
    %c0_69 = arith.constant 0 : index
    %360 = vector.load %arg3[%c6_67, %c0_68, %c0_69] : memref<7x7x128xf32, #tpu.memory_space<vmem>>, vector<1x7x128xf32>
    %361 = vector.shape_cast %360 : vector<1x7x128xf32> to vector<7x128xf32>
    %362 = vector.extract_strided_slice %359 {offsets = [0, 0, 0], sizes = [16, 16, 128], strides = [1, 1, 1]} : vector<22x16x128xf32> to vector<16x16x128xf32>
    %363 = vector.extract_strided_slice %361 {offsets = [0, 0], sizes = [1, 128], strides = [1, 1]} : vector<7x128xf32> to vector<1x128xf32>
    %364 = vector.shape_cast %363 : vector<1x128xf32> to vector<128xf32>
    %365 = vector.shape_cast %364 : vector<128xf32> to vector<1x1x128xf32>
    %366 = vector.broadcast %365 : vector<1x1x128xf32> to vector<16x16x128xf32>
    %367 = arith.mulf %362, %366 : vector<16x16x128xf32>
    %368 = vector.extract_strided_slice %359 {offsets = [1, 0, 0], sizes = [16, 16, 128], strides = [1, 1, 1]} : vector<22x16x128xf32> to vector<16x16x128xf32>
    %369 = vector.extract_strided_slice %361 {offsets = [1, 0], sizes = [1, 128], strides = [1, 1]} : vector<7x128xf32> to vector<1x128xf32>
    %370 = vector.shape_cast %369 : vector<1x128xf32> to vector<128xf32>
    %371 = vector.shape_cast %370 : vector<128xf32> to vector<1x1x128xf32>
    %372 = vector.broadcast %371 : vector<1x1x128xf32> to vector<16x16x128xf32>
    %373 = arith.mulf %368, %372 : vector<16x16x128xf32>
    %374 = arith.addf %367, %373 : vector<16x16x128xf32>
    %375 = vector.extract_strided_slice %359 {offsets = [2, 0, 0], sizes = [16, 16, 128], strides = [1, 1, 1]} : vector<22x16x128xf32> to vector<16x16x128xf32>
    %376 = vector.extract_strided_slice %361 {offsets = [2, 0], sizes = [1, 128], strides = [1, 1]} : vector<7x128xf32> to vector<1x128xf32>
    %377 = vector.shape_cast %376 : vector<1x128xf32> to vector<128xf32>
    %378 = vector.shape_cast %377 : vector<128xf32> to vector<1x1x128xf32>
    %379 = vector.broadcast %378 : vector<1x1x128xf32> to vector<16x16x128xf32>
    %380 = arith.mulf %375, %379 : vector<16x16x128xf32>
    %381 = arith.addf %374, %380 : vector<16x16x128xf32>
    %382 = vector.extract_strided_slice %359 {offsets = [3, 0, 0], sizes = [16, 16, 128], strides = [1, 1, 1]} : vector<22x16x128xf32> to vector<16x16x128xf32>
    %383 = vector.extract_strided_slice %361 {offsets = [3, 0], sizes = [1, 128], strides = [1, 1]} : vector<7x128xf32> to vector<1x128xf32>
    %384 = vector.shape_cast %383 : vector<1x128xf32> to vector<128xf32>
    %385 = vector.shape_cast %384 : vector<128xf32> to vector<1x1x128xf32>
    %386 = vector.broadcast %385 : vector<1x1x128xf32> to vector<16x16x128xf32>
    %387 = arith.mulf %382, %386 : vector<16x16x128xf32>
    %388 = arith.addf %381, %387 : vector<16x16x128xf32>
    %389 = vector.extract_strided_slice %359 {offsets = [4, 0, 0], sizes = [16, 16, 128], strides = [1, 1, 1]} : vector<22x16x128xf32> to vector<16x16x128xf32>
    %390 = vector.extract_strided_slice %361 {offsets = [4, 0], sizes = [1, 128], strides = [1, 1]} : vector<7x128xf32> to vector<1x128xf32>
    %391 = vector.shape_cast %390 : vector<1x128xf32> to vector<128xf32>
    %392 = vector.shape_cast %391 : vector<128xf32> to vector<1x1x128xf32>
    %393 = vector.broadcast %392 : vector<1x1x128xf32> to vector<16x16x128xf32>
    %394 = arith.mulf %389, %393 : vector<16x16x128xf32>
    %395 = arith.addf %388, %394 : vector<16x16x128xf32>
    %396 = vector.extract_strided_slice %359 {offsets = [5, 0, 0], sizes = [16, 16, 128], strides = [1, 1, 1]} : vector<22x16x128xf32> to vector<16x16x128xf32>
    %397 = vector.extract_strided_slice %361 {offsets = [5, 0], sizes = [1, 128], strides = [1, 1]} : vector<7x128xf32> to vector<1x128xf32>
    %398 = vector.shape_cast %397 : vector<1x128xf32> to vector<128xf32>
    %399 = vector.shape_cast %398 : vector<128xf32> to vector<1x1x128xf32>
    %400 = vector.broadcast %399 : vector<1x1x128xf32> to vector<16x16x128xf32>
    %401 = arith.mulf %396, %400 : vector<16x16x128xf32>
    %402 = arith.addf %395, %401 : vector<16x16x128xf32>
    %403 = vector.extract_strided_slice %359 {offsets = [6, 0, 0], sizes = [16, 16, 128], strides = [1, 1, 1]} : vector<22x16x128xf32> to vector<16x16x128xf32>
    %404 = vector.extract_strided_slice %361 {offsets = [6, 0], sizes = [1, 128], strides = [1, 1]} : vector<7x128xf32> to vector<1x128xf32>
    %405 = vector.shape_cast %404 : vector<1x128xf32> to vector<128xf32>
    %406 = vector.shape_cast %405 : vector<128xf32> to vector<1x1x128xf32>
    %407 = vector.broadcast %406 : vector<1x1x128xf32> to vector<16x16x128xf32>
    %408 = arith.mulf %403, %407 : vector<16x16x128xf32>
    %409 = arith.addf %402, %408 : vector<16x16x128xf32>
    %410 = arith.addf %358, %409 : vector<16x16x128xf32>
    %c0_70 = arith.constant 0 : index
    %c0_71 = arith.constant 0 : index
    %411 = vector.load %arg5[%c0_70, %c0_71] : memref<1x128xf32, #tpu.memory_space<vmem>>, vector<1x128xf32>
    %412 = vector.shape_cast %411 : vector<1x128xf32> to vector<128xf32>
    %c0_72 = arith.constant 0 : index
    %c0_73 = arith.constant 0 : index
    %413 = vector.load %arg6[%c0_72, %c0_73] : memref<1x128xf32, #tpu.memory_space<vmem>>, vector<1x128xf32>
    %414 = vector.shape_cast %413 : vector<1x128xf32> to vector<128xf32>
    %c0_74 = arith.constant 0 : index
    %c0_75 = arith.constant 0 : index
    %415 = vector.load %arg8[%c0_74, %c0_75] : memref<1x128xf32, #tpu.memory_space<vmem>>, vector<1x128xf32>
    %416 = vector.shape_cast %415 : vector<1x128xf32> to vector<128xf32>
    %c0_76 = arith.constant 0 : index
    %c0_77 = arith.constant 0 : index
    %417 = vector.load %arg10[%c0_76, %c0_77] : memref<1x128xf32, #tpu.memory_space<vmem>>, vector<1x128xf32>
    %418 = vector.shape_cast %417 : vector<1x128xf32> to vector<128xf32>
    %c0_78 = arith.constant 0 : index
    %c0_79 = arith.constant 0 : index
    %419 = vector.load %arg11[%c0_78, %c0_79] : memref<1x128xf32, #tpu.memory_space<vmem>>, vector<1x128xf32>
    %420 = vector.shape_cast %419 : vector<1x128xf32> to vector<128xf32>
    %421 = vector.shape_cast %410 : vector<16x16x128xf32> to vector<256x128xf32>
    %cst_80 = arith.constant dense<0.000000e+00> : vector<256xf32>
    %422 = vector.multi_reduction <add>, %421, %cst_80 [1] : vector<256x128xf32> to vector<256xf32>
    %423 = vector.shape_cast %422 : vector<256xf32> to vector<256x1xf32>
    %424 = arith.mulf %421, %421 : vector<256x128xf32>
    %cst_81 = arith.constant dense<0.000000e+00> : vector<256xf32>
    %425 = vector.multi_reduction <add>, %424, %cst_81 [1] : vector<256x128xf32> to vector<256xf32>
    %426 = vector.shape_cast %425 : vector<256xf32> to vector<256x1xf32>
    %cst_82 = arith.constant 3.125000e-02 : f32
    %427 = vector.broadcast %cst_82 : f32 to vector<256x1xf32>
    %428 = arith.mulf %423, %427 : vector<256x1xf32>
    %cst_83 = arith.constant 3.125000e-02 : f32
    %429 = vector.broadcast %cst_83 : f32 to vector<256x1xf32>
    %430 = arith.mulf %426, %429 : vector<256x1xf32>
    %431 = arith.mulf %428, %428 : vector<256x1xf32>
    %432 = arith.subf %430, %431 : vector<256x1xf32>
    %cst_84 = arith.constant 0.000000e+00 : f32
    %433 = vector.broadcast %cst_84 : f32 to vector<256x1xf32>
    %434 = arith.maximumf %432, %433 : vector<256x1xf32>
    %cst_85 = arith.constant 9.99999997E-7 : f32
    %435 = vector.broadcast %cst_85 : f32 to vector<256x1xf32>
    %436 = arith.addf %434, %435 : vector<256x1xf32>
    %437 = math.rsqrt %436 : vector<256x1xf32>
    %438 = vector.shape_cast %412 : vector<128xf32> to vector<1x128xf32>
    %439 = vector.broadcast %437 : vector<256x1xf32> to vector<256x128xf32>
    %440 = vector.broadcast %438 : vector<1x128xf32> to vector<256x128xf32>
    %441 = arith.mulf %439, %440 : vector<256x128xf32>
    %442 = arith.mulf %421, %441 : vector<256x128xf32>
    %443 = vector.broadcast %428 : vector<256x1xf32> to vector<256x128xf32>
    %444 = arith.mulf %443, %441 : vector<256x128xf32>
    %445 = vector.shape_cast %414 : vector<128xf32> to vector<1x128xf32>
    %446 = vector.broadcast %445 : vector<1x128xf32> to vector<256x128xf32>
    %447 = arith.subf %446, %444 : vector<256x128xf32>
    %448 = arith.addf %442, %447 : vector<256x128xf32>
    %449 = arith.truncf %448 : vector<256x128xf32> to vector<256x128xbf16>
    %c0_86 = arith.constant 0 : index
    %c0_87 = arith.constant 0 : index
    %450 = vector.load %arg7[%c0_86, %c0_87] : memref<128x128xbf16, #tpu.memory_space<vmem>>, vector<128x128xbf16>
    %cst_88 = arith.constant dense<0.000000e+00> : vector<256x128xf32>
    %451 = tpu.matmul %449, %450, %cst_88 {dimension_numbers = #tpu.dot_dimension_numbers<[1], [0], [0], [1], [0, 0, 1, 1], [], []>} : vector<256x128xbf16>, vector<128x128xbf16>, vector<256x128xf32> -> vector<256x128xf32>
    %452 = vector.shape_cast %416 : vector<128xf32> to vector<1x128xf32>
    %453 = vector.broadcast %452 : vector<1x128xf32> to vector<256x128xf32>
    %454 = arith.addf %451, %453 : vector<256x128xf32>
    %455 = arith.mulf %454, %454 : vector<256x128xf32>
    %456 = arith.mulf %454, %455 : vector<256x128xf32>
    %cst_89 = arith.constant 4.471500e-02 : f32
    %457 = vector.broadcast %cst_89 : f32 to vector<256x128xf32>
    %458 = arith.mulf %457, %456 : vector<256x128xf32>
    %459 = arith.addf %454, %458 : vector<256x128xf32>
    %cst_90 = arith.constant 0.797884583 : f32
    %460 = vector.broadcast %cst_90 : f32 to vector<256x128xf32>
    %461 = arith.mulf %460, %459 : vector<256x128xf32>
    %462 = math.tanh %461 : vector<256x128xf32>
    %cst_91 = arith.constant 1.000000e+00 : f32
    %463 = vector.broadcast %cst_91 : f32 to vector<256x128xf32>
    %464 = arith.addf %463, %462 : vector<256x128xf32>
    %cst_92 = arith.constant 5.000000e-01 : f32
    %465 = vector.broadcast %cst_92 : f32 to vector<256x128xf32>
    %466 = arith.mulf %465, %464 : vector<256x128xf32>
    %467 = arith.mulf %454, %466 : vector<256x128xf32>
    %468 = arith.truncf %467 : vector<256x128xf32> to vector<256x128xbf16>
    %c0_93 = arith.constant 0 : index
    %c0_94 = arith.constant 0 : index
    %469 = vector.load %arg9[%c0_93, %c0_94] : memref<128x128xbf16, #tpu.memory_space<vmem>>, vector<128x128xbf16>
    %cst_95 = arith.constant dense<0.000000e+00> : vector<256x128xf32>
    %470 = tpu.matmul %468, %469, %cst_95 {dimension_numbers = #tpu.dot_dimension_numbers<[1], [0], [0], [1], [0, 0, 1, 1], [], []>} : vector<256x128xbf16>, vector<128x128xbf16>, vector<256x128xf32> -> vector<256x128xf32>
    %471 = vector.shape_cast %418 : vector<128xf32> to vector<1x128xf32>
    %472 = vector.broadcast %471 : vector<1x128xf32> to vector<256x128xf32>
    %473 = arith.addf %470, %472 : vector<256x128xf32>
    %474 = vector.shape_cast %473 : vector<256x128xf32> to vector<16x16x128xf32>
    %c0_96 = arith.constant 0 : index
    %475 = arith.index_cast %0 : i32 to index
    %c0_97 = arith.constant 0 : index
    %c0_98 = arith.constant 0 : index
    %476 = vector.load %arg2[%c0_96, %475, %c0_97, %c0_98] : memref<1x16x16x128xf32, #tpu.memory_space<vmem>>, vector<1x16x16x128xf32>
    %477 = vector.shape_cast %476 : vector<1x16x16x128xf32> to vector<16x16x128xf32>
    %478 = vector.shape_cast %420 : vector<128xf32> to vector<1x1x128xf32>
    %479 = vector.broadcast %478 : vector<1x1x128xf32> to vector<16x16x128xf32>
    %480 = arith.mulf %479, %474 : vector<16x16x128xf32>
    %481 = arith.addf %477, %480 : vector<16x16x128xf32>
    %c0_99 = arith.constant 0 : index
    %c0_100 = arith.constant 0 : index
    %c0_101 = arith.constant 0 : index
    %c0_102 = arith.constant 0 : index
    %482 = vector.load %arg12[%c0_99, %c0_100, %c0_101, %c0_102] : memref<1x16x16x128xf32, #tpu.memory_space<vmem>>, vector<1x16x16x128xf32>
    %483 = vector.shape_cast %482 : vector<1x16x16x128xf32> to vector<16x16x128xf32>
    %484 = vector.shape_cast %481 : vector<16x16x128xf32> to vector<1x16x16x128xf32>
    tpu.vector_store %arg12[%c0_99, %c0_100, %c0_101, %c0_102], %484 {strides = array<i32>} : memref<1x16x16x128xf32, #tpu.memory_space<vmem>>, vector<1x16x16x128xf32>,
    return
  }
  func.func @transform_0(%arg0: i32, %arg1: i32) -> (i32, i32, i32, i32) {
    %c0_i32 = arith.constant 0 : i32
    %c0_i32_0 = arith.constant 0 : i32
    %c0_i32_1 = arith.constant 0 : i32
    %c0_i32_2 = arith.constant 0 : i32
    return %arg0, %c0_i32, %c0_i32_0, %c0_i32_1 : i32, i32, i32, i32
  }
  func.func @transform_1(%arg0: i32, %arg1: i32) -> (i32, i32, i32) {
    %c0_i32 = arith.constant 0 : i32
    %c0_i32_0 = arith.constant 0 : i32
    %c0_i32_1 = arith.constant 0 : i32
    %c0_i32_2 = arith.constant 0 : i32
    return %c0_i32, %c0_i32_0, %c0_i32_1 : i32, i32, i32
  }
  func.func @transform_2(%arg0: i32, %arg1: i32) -> (i32, i32) {
    %c0_i32 = arith.constant 0 : i32
    %c0_i32_0 = arith.constant 0 : i32
    %c0_i32_1 = arith.constant 0 : i32
    return %c0_i32, %c0_i32_0 : i32, i32
  }
  func.func @transform_3(%arg0: i32, %arg1: i32) -> (i32, i32) {
    %c0_i32 = arith.constant 0 : i32
    %c0_i32_0 = arith.constant 0 : i32
    %c0_i32_1 = arith.constant 0 : i32
    return %c0_i32, %c0_i32_0 : i32, i32
  }
  func.func @transform_4(%arg0: i32, %arg1: i32) -> (i32, i32) {
    %c0_i32 = arith.constant 0 : i32
    %c0_i32_0 = arith.constant 0 : i32
    %c0_i32_1 = arith.constant 0 : i32
    return %c0_i32, %c0_i32_0 : i32, i32
  }
  func.func @transform_5(%arg0: i32, %arg1: i32) -> (i32, i32) {
    %c0_i32 = arith.constant 0 : i32
    %c0_i32_0 = arith.constant 0 : i32
    %c0_i32_1 = arith.constant 0 : i32
    return %c0_i32, %c0_i32_0 : i32, i32
  }
  func.func @transform_6(%arg0: i32, %arg1: i32) -> (i32, i32) {
    %c0_i32 = arith.constant 0 : i32
    %c0_i32_0 = arith.constant 0 : i32
    %c0_i32_1 = arith.constant 0 : i32
    return %c0_i32, %c0_i32_0 : i32, i32
  }
  func.func @transform_7(%arg0: i32, %arg1: i32) -> (i32, i32) {
    %c0_i32 = arith.constant 0 : i32
    %c0_i32_0 = arith.constant 0 : i32
    %c0_i32_1 = arith.constant 0 : i32
    return %c0_i32, %c0_i32_0 : i32, i32
  }
  func.func @transform_8(%arg0: i32, %arg1: i32) -> (i32, i32) {
    %c0_i32 = arith.constant 0 : i32
    %c0_i32_0 = arith.constant 0 : i32
    %c0_i32_1 = arith.constant 0 : i32
    return %c0_i32, %c0_i32_0 : i32, i32
  }
  func.func @transform_9(%arg0: i32, %arg1: i32) -> (i32, i32) {
    %c0_i32 = arith.constant 0 : i32
    %c0_i32_0 = arith.constant 0 : i32
    %c0_i32_1 = arith.constant 0 : i32
    return %c0_i32, %c0_i32_0 : i32, i32
  }
  func.func @transform_10(%arg0: i32, %arg1: i32) -> (i32, i32, i32, i32) {
    %c0_i32 = arith.constant 0 : i32
    %c0_i32_0 = arith.constant 0 : i32
    %c0_i32_1 = arith.constant 0 : i32
    return %arg0, %arg1, %c0_i32, %c0_i32_0 : i32, i32, i32, i32
  }
}

</mosaic_0001>

<llo_original>
// kernel: cnblock_forward.1
$region0: #{cnblock_forward.1}
  #allocation0 [shape = 'u32[]', space=smem, size = 0x4, offset = 0x4, fixed_abs, tag = 'smem constant byte address 0x4 - core index']
  #allocation1 [shape = 'u32[144,128]{1,0:T(1,128)}', space=vmem, size = 0x12000, scoped, tag = 'internal scratch']
  #allocation2 [shape = 'f32[22,32,128]{2,1,0:T(8,128)}', space=vmem, size = 0x58000, scoped, tag = 'scratch operand']
  %s0 = inlined_call_operand.vmem [shape: f32[2,16,16,128], index: 0, kind: input, shape index: {}]
  %s1 = inlined_call_operand.vmem [shape: f32[7,7,128], index: 1, kind: input, shape index: {}]
  %s2 = inlined_call_operand.vmem [shape: f32[1,128], index: 2, kind: input, shape index: {}]
  %s3 = inlined_call_operand.vmem [shape: f32[1,128], index: 3, kind: input, shape index: {}]
  %s4 = inlined_call_operand.vmem [shape: f32[1,128], index: 4, kind: input, shape index: {}]
  %s5 = inlined_call_operand.vmem [shape: bf16[128,128], index: 5, kind: input, shape index: {}]
  %s6 = inlined_call_operand.vmem [shape: f32[1,128], index: 6, kind: input, shape index: {}]
  %s7 = inlined_call_operand.vmem [shape: bf16[128,128], index: 7, kind: input, shape index: {}]
  %s8 = inlined_call_operand.vmem [shape: f32[1,128], index: 8, kind: input, shape index: {}]
  %s9 = inlined_call_operand.vmem [shape: f32[1,128], index: 9, kind: input, shape index: {}]
  %s10 = inlined_call_operand.vmem [shape: f32[2,16,16,128], index: 10, kind: output, shape index: {}]
  %s11 = sld [smem:[#allocation0]]
  $region97: #{cnblock_forward.1} parent=0
    _
  %s13 = ssub.s32 1, %s11
  %s14 = scalar_select 0, %s13, %s11
  loop: start=0, step=1, limit=4
  $region2: #{cnblock_forward.1} parent=0 // loop_pre_header
    _
  $region3: #{cnblock_forward.1} parent=0 // loop_header
    %s16 = sphi 0, %s20
    %p17 = scmp.ge.s32.totalorder %s16, 4
    %s23 = sphi 0, %s35
    %s24 = sphi 0, %s31
    %s25 = sphi 0, %s23
    %s26 = sphi 0, %s24
    %s27 = sphi 0, %s25
    %s28 = sphi 0, %s26
    %s38 = sphi 0, %s40
    %s41 = sphi 0, %s38
    %s42 = sphi 0, %s41
    %s58 = sphi 0, %s42
    %s62 = sphi 0, %s62
    %s64 = sphi 0, %s62
    %s65 = sphi 0, %s64
    %s79 = sphi 0, %s65
    %s83 = sphi 0, %s83
    %s85 = sphi 0, %s83
    %s86 = sphi 0, %s85
    %s100 = sphi 0, %s86
    %s104 = sphi 0, %s104
    %s106 = sphi 0, %s104
    %s107 = sphi 0, %s106
    %s121 = sphi 0, %s107
    %s125 = sphi 0, %s125
    %s127 = sphi 0, %s125
    %s128 = sphi 0, %s127
    %s142 = sphi 0, %s128
    %s146 = sphi 0, %s146
    %s148 = sphi 0, %s146
    %s149 = sphi 0, %s148
    %s163 = sphi 0, %s149
    %s167 = sphi 0, %s167
    %s169 = sphi 0, %s167
    %s170 = sphi 0, %s169
    %s184 = sphi 0, %s170
    %s188 = sphi 0, %s188
    %s190 = sphi 0, %s188
    %s191 = sphi 0, %s190
    %s205 = sphi 0, %s191
    %s209 = sphi 0, %s209
    %s211 = sphi 0, %s209
    %s212 = sphi 0, %s211
    %s226 = sphi 0, %s212
    %s230 = sphi 0, %s230
    %s232 = sphi 0, %s230
    %s233 = sphi 0, %s232
    %s247 = sphi 0, %s233
    %s255 = sphi 0, %s257
    %s258 = sphi 0, %s255
    %s259 = sphi 0, %s258
    %s275 = sphi 0, %s259
  $region4: #{cnblock_forward.1} parent=0 // loop_header_branch
    %19 = sbr.rel (%p17) target = $region8
  $region5: #{cnblock_forward.1} parent=0 // loop_body
    %s21 = ssub.s32 %s16, 1
    %s22 = ssub.s32 %s16, 2
    %s29 = sadd.s32 1, %s24
    %p30 = scmp.ge.s32.totalorder %s29, 1
    %s31 = scalar_select %p30, 0, %s29
    %s32 = sadd.s32 1, %s23
    %s33 = scalar_select %p30, %s32, %s23
    %p34 = scmp.ge.s32.totalorder %s33, 2
    %s35 = scalar_select %p34, 0, %s33
    %s36 = ssub.s32 %s23, %s35
    %p37 = scmp.eq.s32.totalorder %s36, 0
    %s39 = sadd.s32 %s38, 1
    %s40 = scalar_select %p37, %s38, %s39
    %p43 = pneg %p37
    %p44 = scmp.eq.s32.totalorder %s16, 1
    %p45 = por %p43, %p44
    %p46 = scmp.ne.s32.totalorder %s38, %s41
    %p47 = scmp.eq.s32.totalorder %s16, 0
    %p48 = por %p46, %p47
    %p49 = scmp.ne.s32.totalorder %s38, %s41
    %p50 = scmp.eq.s32.totalorder %s21, 1
    %p51 = por %p49, %p50
    %p52 = scmp.ne.s32.totalorder %s41, %s42
    %p53 = scmp.eq.s32.totalorder %s21, 0
    %p54 = por %p52, %p53
    %p55 = scmp.ne.s32.totalorder %s41, %s42
    %p56 = scmp.eq.s32.totalorder %s22, 1
    %p57 = por %p55, %p56
    %p59 = scmp.ne.s32.totalorder %s42, %s58
    %p60 = scmp.eq.s32.totalorder %s22, 0
    %p61 = por %p59, %p60
    %s63 = sadd.s32 %s62, 1
    %p66 = scmp.eq.s32.totalorder %s16, 1
    %p67 = scmp.ne.s32.totalorder %s62, %s64
    %p68 = scmp.eq.s32.totalorder %s16, 0
    %p69 = por %p67, %p68
    %p70 = scmp.ne.s32.totalorder %s62, %s64
    %p71 = scmp.eq.s32.totalorder %s21, 1
    %p72 = por %p70, %p71
    %p73 = scmp.ne.s32.totalorder %s64, %s65
    %p74 = scmp.eq.s32.totalorder %s21, 0
    %p75 = por %p73, %p74
    %p76 = scmp.ne.s32.totalorder %s64, %s65
    %p77 = scmp.eq.s32.totalorder %s22, 1
    %p78 = por %p76, %p77
    %p80 = scmp.ne.s32.totalorder %s65, %s79
    %p81 = scmp.eq.s32.totalorder %s22, 0
    %p82 = por %p80, %p81
    %s84 = sadd.s32 %s83, 1
    %p87 = scmp.eq.s32.totalorder %s16, 1
    %p88 = scmp.ne.s32.totalorder %s83, %s85
    %p89 = scmp.eq.s32.totalorder %s16, 0
    %p90 = por %p88, %p89
    %p91 = scmp.ne.s32.totalorder %s83, %s85
    %p92 = scmp.eq.s32.totalorder %s21, 1
    %p93 = por %p91, %p92
    %p94 = scmp.ne.s32.totalorder %s85, %s86
    %p95 = scmp.eq.s32.totalorder %s21, 0
    %p96 = por %p94, %p95
    %p97 = scmp.ne.s32.totalorder %s85, %s86
    %p98 = scmp.eq.s32.totalorder %s22, 1
    %p99 = por %p97, %p98
    %p101 = scmp.ne.s32.totalorder %s86, %s100
    %p102 = scmp.eq.s32.totalorder %s22, 0
    %p103 = por %p101, %p102
    %s105 = sadd.s32 %s104, 1
    %p108 = scmp.eq.s32.totalorder %s16, 1
    %p109 = scmp.ne.s32.totalorder %s104, %s106
    %p110 = scmp.eq.s32.totalorder %s16, 0
    %p111 = por %p109, %p110
    %p112 = scmp.ne.s32.totalorder %s104, %s106
    %p113 = scmp.eq.s32.totalorder %s21, 1
    %p114 = por %p112, %p113
    %p115 = scmp.ne.s32.totalorder %s106, %s107
    %p116 = scmp.eq.s32.totalorder %s21, 0
    %p117 = por %p115, %p116
    %p118 = scmp.ne.s32.totalorder %s106, %s107
    %p119 = scmp.eq.s32.totalorder %s22, 1
    %p120 = por %p118, %p119
    %p122 = scmp.ne.s32.totalorder %s107, %s121
    %p123 = scmp.eq.s32.totalorder %s22, 0
    %p124 = por %p122, %p123
    %s126 = sadd.s32 %s125, 1
    %p129 = scmp.eq.s32.totalorder %s16, 1
    %p130 = scmp.ne.s32.totalorder %s125, %s127
    %p131 = scmp.eq.s32.totalorder %s16, 0
    %p132 = por %p130, %p131
    %p133 = scmp.ne.s32.totalorder %s125, %s127
    %p134 = scmp.eq.s32.totalorder %s21, 1
    %p135 = por %p133, %p134
    %p136 = scmp.ne.s32.totalorder %s127, %s128
    %p137 = scmp.eq.s32.totalorder %s21, 0
    %p138 = por %p136, %p137
    %p139 = scmp.ne.s32.totalorder %s127, %s128
    %p140 = scmp.eq.s32.totalorder %s22, 1
    %p141 = por %p139, %p140
    %p143 = scmp.ne.s32.totalorder %s128, %s142
    %p144 = scmp.eq.s32.totalorder %s22, 0
    %p145 = por %p143, %p144
    %s147 = sadd.s32 %s146, 1
    %p150 = scmp.eq.s32.totalorder %s16, 1
    %p151 = scmp.ne.s32.totalorder %s146, %s148
    %p152 = scmp.eq.s32.totalorder %s16, 0
    %p153 = por %p151, %p152
    %p154 = scmp.ne.s32.totalorder %s146, %s148
    %p155 = scmp.eq.s32.totalorder %s21, 1
    %p156 = por %p154, %p155
    %p157 = scmp.ne.s32.totalorder %s148, %s149
    %p158 = scmp.eq.s32.totalorder %s21, 0
    %p159 = por %p157, %p158
    %p160 = scmp.ne.s32.totalorder %s148, %s149
    %p161 = scmp.eq.s32.totalorder %s22, 1
    %p162 = por %p160, %p161
    %p164 = scmp.ne.s32.totalorder %s149, %s163
    %p165 = scmp.eq.s32.totalorder %s22, 0
    %p166 = por %p164, %p165
    %s168 = sadd.s32 %s167, 1
    %p171 = scmp.eq.s32.totalorder %s16, 1
    %p172 = scmp.ne.s32.totalorder %s167, %s169
    %p173 = scmp.eq.s32.totalorder %s16, 0
    %p174 = por %p172, %p173
    %p175 = scmp.ne.s32.totalorder %s167, %s169
    %p176 = scmp.eq.s32.totalorder %s21, 1
    %p177 = por %p175, %p176
    %p178 = scmp.ne.s32.totalorder %s169, %s170
    %p179 = scmp.eq.s32.totalorder %s21, 0
    %p180 = por %p178, %p179
    %p181 = scmp.ne.s32.totalorder %s169, %s170
    %p182 = scmp.eq.s32.totalorder %s22, 1
    %p183 = por %p181, %p182
    %p185 = scmp.ne.s32.totalorder %s170, %s184
    %p186 = scmp.eq.s32.totalorder %s22, 0
    %p187 = por %p185, %p186
    %s189 = sadd.s32 %s188, 1
    %p192 = scmp.eq.s32.totalorder %s16, 1
    %p193 = scmp.ne.s32.totalorder %s188, %s190
    %p194 = scmp.eq.s32.totalorder %s16, 0
    %p195 = por %p193, %p194
    %p196 = scmp.ne.s32.totalorder %s188, %s190
    %p197 = scmp.eq.s32.totalorder %s21, 1
    %p198 = por %p196, %p197
    %p199 = scmp.ne.s32.totalorder %s190, %s191
    %p200 = scmp.eq.s32.totalorder %s21, 0
    %p201 = por %p199, %p200
    %p202 = scmp.ne.s32.totalorder %s190, %s191
    %p203 = scmp.eq.s32.totalorder %s22, 1
    %p204 = por %p202, %p203
    %p206 = scmp.ne.s32.totalorder %s191, %s205
    %p207 = scmp.eq.s32.totalorder %s22, 0
    %p208 = por %p206, %p207
    %s210 = sadd.s32 %s209, 1
    %p213 = scmp.eq.s32.totalorder %s16, 1
    %p214 = scmp.ne.s32.totalorder %s209, %s211
    %p215 = scmp.eq.s32.totalorder %s16, 0
    %p216 = por %p214, %p215
    %p217 = scmp.ne.s32.totalorder %s209, %s211
    %p218 = scmp.eq.s32.totalorder %s21, 1
    %p219 = por %p217, %p218
    %p220 = scmp.ne.s32.totalorder %s211, %s212
    %p221 = scmp.eq.s32.totalorder %s21, 0
    %p222 = por %p220, %p221
    %p223 = scmp.ne.s32.totalorder %s211, %s212
    %p224 = scmp.eq.s32.totalorder %s22, 1
    %p225 = por %p223, %p224
    %p227 = scmp.ne.s32.totalorder %s212, %s226
    %p228 = scmp.eq.s32.totalorder %s22, 0
    %p229 = por %p227, %p228
    %s231 = sadd.s32 %s230, 1
    %p234 = scmp.eq.s32.totalorder %s16, 1
    %p235 = scmp.ne.s32.totalorder %s230, %s232
    %p236 = scmp.eq.s32.totalorder %s16, 0
    %p237 = por %p235, %p236
    %p238 = scmp.ne.s32.totalorder %s230, %s232
    %p239 = scmp.eq.s32.totalorder %s21, 1
    %p240 = por %p238, %p239
    %p241 = scmp.ne.s32.totalorder %s232, %s233
    %p242 = scmp.eq.s32.totalorder %s21, 0
    %p243 = por %p241, %p242
    %p244 = scmp.ne.s32.totalorder %s232, %s233
    %p245 = scmp.eq.s32.totalorder %s22, 1
    %p246 = por %p244, %p245
    %p248 = scmp.ne.s32.totalorder %s233, %s247
    %p249 = scmp.eq.s32.totalorder %s22, 0
    %p250 = por %p248, %p249
    %s251 = ssub.s32 %s23, %s35
    %s252 = ssub.s32 %s24, %s31
    %s253 = sor.u32 %s251, %s252
    %p254 = scmp.eq.s32.totalorder %s253, 0
    %s256 = sadd.s32 %s255, 1
    %s257 = scalar_select %p254, %s255, %s256
    %p260 = pneg %p254
    %p261 = scmp.eq.s32.totalorder %s16, 1
    %p262 = por %p260, %p261
    %p263 = scmp.ne.s32.totalorder %s255, %s258
    %p264 = scmp.eq.s32.totalorder %s16, 0
    %p265 = por %p263, %p264
    %p266 = scmp.ne.s32.totalorder %s255, %s258
    %p267 = scmp.eq.s32.totalorder %s21, 1
    %p268 = por %p266, %p267
    %p269 = scmp.ne.s32.totalorder %s258, %s259
    %p270 = scmp.eq.s32.totalorder %s21, 0
    %p271 = por %p269, %p270
    %p272 = scmp.ne.s32.totalorder %s258, %s259
    %p273 = scmp.eq.s32.totalorder %s22, 1
    %p274 = por %p272, %p273
    %p276 = scmp.ne.s32.totalorder %s259, %s275
    %p277 = scmp.eq.s32.totalorder %s22, 0
    %p278 = por %p276, %p277
    %p279 = scmp.le.s32.totalorder 1, %s16
    %p280 = scmp.lt.s32.totalorder %s16, 3
    %p281 = pnand %p279, %p280
    %p282 = pneg %p281
    // Predicated region
    $region9: #{cnblock_forward.1} parent=5 // pred_check
      _
    $region10: #{cnblock_forward.1} parent=5 // pred_check_branch
      %284 = sbr.rel (%p281) target = $region12
    $region11: #{cnblock_forward.1} parent=5 // pred_region
      %s285 = ssub.s32 %s16, 1
      // Predicated region
      $region13: #{cnblock_forward.1} parent=11 // pred_check
        %p286 = pneg %p75
      $region14: #{cnblock_forward.1} parent=11 // pred_check_branch
        %288 = sbr.rel (%p286) target = $region16
      $region15: #{cnblock_forward.1} parent=11 // pred_region
        _
      $region16: #{cnblock_forward.1} parent=11 // pred_fallthru
        _
      // Predicated region
      $region17: #{cnblock_forward.1} parent=11 // pred_check
        %p289 = pneg %p96
      $region18: #{cnblock_forward.1} parent=11 // pred_check_branch
        %291 = sbr.rel (%p289) target = $region20
      $region19: #{cnblock_forward.1} parent=11 // pred_region
        _
      $region20: #{cnblock_forward.1} parent=11 // pred_fallthru
        _
      // Predicated region
      $region21: #{cnblock_forward.1} parent=11 // pred_check
        %p292 = pneg %p117
      $region22: #{cnblock_forward.1} parent=11 // pred_check_branch
        %294 = sbr.rel (%p292) target = $region24
      $region23: #{cnblock_forward.1} parent=11 // pred_region
        _
      $region24: #{cnblock_forward.1} parent=11 // pred_fallthru
        _
      // Predicated region
      $region25: #{cnblock_forward.1} parent=11 // pred_check
        %p295 = pneg %p138
      $region26: #{cnblock_forward.1} parent=11 // pred_check_branch
        %297 = sbr.rel (%p295) target = $region28
      $region27: #{cnblock_forward.1} parent=11 // pred_region
        _
      $region28: #{cnblock_forward.1} parent=11 // pred_fallthru
        _
      // Predicated region
      $region29: #{cnblock_forward.1} parent=11 // pred_check
        %p298 = pneg %p159
      $region30: #{cnblock_forward.1} parent=11 // pred_check_branch
        %300 = sbr.rel (%p298) target = $region32
      $region31: #{cnblock_forward.1} parent=11 // pred_region
        _
      $region32: #{cnblock_forward.1} parent=11 // pred_fallthru
        _
      // Predicated region
      $region33: #{cnblock_forward.1} parent=11 // pred_check
        %p301 = pneg %p180
      $region34: #{cnblock_forward.1} parent=11 // pred_check_branch
        %303 = sbr.rel (%p301) target = $region36
      $region35: #{cnblock_forward.1} parent=11 // pred_region
        _
      $region36: #{cnblock_forward.1} parent=11 // pred_fallthru
        _
      // Predicated region
      $region37: #{cnblock_forward.1} parent=11 // pred_check
        %p304 = pneg %p201
      $region38: #{cnblock_forward.1} parent=11 // pred_check_branch
        %306 = sbr.rel (%p304) target = $region40
      $region39: #{cnblock_forward.1} parent=11 // pred_region
        _
      $region40: #{cnblock_forward.1} parent=11 // pred_fallthru
        _
      // Predicated region
      $region41: #{cnblock_forward.1} parent=11 // pred_check
        %p307 = pneg %p222
      $region42: #{cnblock_forward.1} parent=11 // pred_check_branch
        %309 = sbr.rel (%p307) target = $region44
      $region43: #{cnblock_forward.1} parent=11 // pred_region
        _
      $region44: #{cnblock_forward.1} parent=11 // pred_fallthru
        _
      // Predicated region
      $region45: #{cnblock_forward.1} parent=11 // pred_check
        %p310 = pneg %p243
      $region46: #{cnblock_forward.1} parent=11 // pred_check_branch
        %312 = sbr.rel (%p310) target = $region48
      $region47: #{cnblock_forward.1} parent=11 // pred_region
        _
      $region48: #{cnblock_forward.1} parent=11 // pred_fallthru
        _
    $region12: #{cnblock_forward.1} parent=5 // pred_fallthru
      _
    %p313 = scmp.lt.s32.totalorder %s16, 2
    // Predicated region
    $region49: #{cnblock_forward.1} parent=5 // pred_check
      %p314 = pneg %p313
    $region50: #{cnblock_forward.1} parent=5 // pred_check_branch
      %316 = sbr.rel (%p314) target = $region52
    $region51: #{cnblock_forward.1} parent=5 // pred_region
      // Predicated region
      $region53: #{cnblock_forward.1} parent=51 // pred_check
        %p317 = pneg %p48
      $region54: #{cnblock_forward.1} parent=51 // pred_check_branch
        %319 = sbr.rel (%p317) target = $region56
      $region55: #{cnblock_forward.1} parent=51 // pred_region
        %p320 = scmp.lt.s32.totalorder %s23, 1
        %s321 = scalar_select %p320, %s23, 1
        %s322 = smul.addr %s321, 32
        %s323 = smul.addr %s322, 8
        %s324 = scalar_lea.vmem %s0, %s323
      $region56: #{cnblock_forward.1} parent=51 // pred_fallthru
        _
    $region52: #{cnblock_forward.1} parent=5 // pred_fallthru
      _
    %p325 = scmp.le.s32.totalorder 1, %s16
    %p326 = scmp.lt.s32.totalorder %s16, 3
    %p327 = pnand %p325, %p326
    %p328 = pneg %p327
    // Predicated region
    $region57: #{cnblock_forward.1} parent=5 // pred_check
      _
    $region58: #{cnblock_forward.1} parent=5 // pred_check_branch
      %330 = sbr.rel (%p327) target = $region60
    $region59: #{cnblock_forward.1} parent=5 // pred_region
      %s331 = ssub.s32 %s16, 1
      %p332 = scmp.lt.s32.totalorder %s25, 1
      %s333 = scalar_select %p332, %s25, 1
      %s334 = smul.addr %s333, 32
      %s335 = smul.addr %s334, 8
      %s336 = scalar_lea.vmem %s0, %s335
      %p337 = pneg %p54
      %p338 = pneg %p51
      %p339 = pneg %p75
      %p340 = pneg %p72
      %p341 = pneg %p96
      %p342 = pneg %p93
      %p343 = pneg %p117
      %p344 = pneg %p114
      %p345 = pneg %p138
      %p346 = pneg %p135
      %p347 = pneg %p159
      %p348 = pneg %p156
      %p349 = pneg %p180
      %p350 = pneg %p177
      %p351 = pneg %p201
      %p352 = pneg %p198
      %p353 = pneg %p222
      %p354 = pneg %p219
      %p355 = pneg %p243
      %p356 = pneg %p240
      %p357 = pneg %p271
      %p358 = pneg %p268
      %s359 = smul.u32 16, %s26
      %p360 = scmp.lt.s32.totalorder %s25, 1
      %s361 = scalar_select %p360, %s25, 1
      %p362 = scmp.lt.s32.totalorder %s359, 15
      %s363 = scalar_select %p362, %s359, 15
      %s364 = smul.addr %s363, 2
      %s365 = smul.addr %s361, 32
      %s366 = sadd.s32 %s364, %s365
      %s367 = smul.addr %s366, 8
      %s368 = scalar_lea.vmem %s10, %s367
      %p369 = scmp.lt.s32.totalorder %s25, 1
      %s370 = scalar_select %p369, %s25, 1
      %s371 = smul.addr %s370, 32
      %s372 = smul.addr %s371, 8
      %s373 = scalar_lea.vmem %s0, %s372
      %s374 = smul.u32 16, %s26
      %p375 = scmp.lt.s32.totalorder %s25, 1
      %s376 = scalar_select %p375, %s25, 1
      %p377 = scmp.lt.s32.totalorder %s374, 15
      %s378 = scalar_select %p377, %s374, 15
      %s379 = smul.addr %s378, 2
      %s380 = smul.addr %s376, 32
      %s381 = sadd.s32 %s379, %s380
      %s382 = smul.addr %s381, 8
      %s383 = scalar_lea.vmem %s10, %s382
      %s384 = smul.u32 16, %s26
      %s386 = smul.u32 %s26, 16
      %387 = vst [vmem:[#allocation2] sm:$0xff] 0.0
      %388 = vst [vmem:[#allocation2 + $0x20] sm:$0xff] 0.0
      %389 = vst [vmem:[#allocation2 + $0x40] sm:$0xff] 0.0
      %390 = vst [vmem:[#allocation2 + $0x60] sm:$0xff] 0.0
      %391 = vst [vmem:[#allocation2 + $0x80] sm:$0xff] 0.0
      %392 = vst [vmem:[#allocation2 + $0xa0] sm:$0xff] 0.0
      %393 = vst [vmem:[#allocation2 + $0xc0] sm:$0xff] 0.0
      %394 = vst [vmem:[#allocation2 + $0xe0] sm:$0xff] 0.0
      %395 = vst [vmem:[#allocation2 + $0x100] sm:$0xff] 0.0
      %396 = vst [vmem:[#allocation2 + $0x120] sm:$0xff] 0.0
      %397 = vst [vmem:[#allocation2 + $0x140] sm:$0xff] 0.0
      %398 = vst [vmem:[#allocation2 + $0x160] sm:$0xff] 0.0
      %399 = vst [vmem:[#allocation2 + $0x180] sm:$0xff] 0.0
      %400 = vst [vmem:[#allocation2 + $0x1a0] sm:$0xff] 0.0
      %401 = vst [vmem:[#allocation2 + $0x1c0] sm:$0xff] 0.0
      %402 = vst [vmem:[#allocation2 + $0x1e0] sm:$0xff] 0.0
      %403 = vst [vmem:[#allocation2 + $0x200] sm:$0xff] 0.0
      %404 = vst [vmem:[#allocation2 + $0x220] sm:$0xff] 0.0
      %405 = vst [vmem:[#allocation2 + $0x240] sm:$0xff] 0.0
      %406 = vst [vmem:[#allocation2 + $0x260] sm:$0xff] 0.0
      %407 = vst [vmem:[#allocation2 + $0x280] sm:$0xff] 0.0
      %408 = vst [vmem:[#allocation2 + $0x2a0] sm:$0xff] 0.0
      %409 = vst [vmem:[#allocation2 + $0x18] sm:$0xff] 0.0
      %410 = vst [vmem:[#allocation2 + $0x38] sm:$0xff] 0.0
      %411 = vst [vmem:[#allocation2 + $0x58] sm:$0xff] 0.0
      %412 = vst [vmem:[#allocation2 + $0x78] sm:$0xff] 0.0
      %413 = vst [vmem:[#allocation2 + $0x98] sm:$0xff] 0.0
      %414 = vst [vmem:[#allocation2 + $0xb8] sm:$0xff] 0.0
      %415 = vst [vmem:[#allocation2 + $0xd8] sm:$0xff] 0.0
      %416 = vst [vmem:[#allocation2 + $0xf8] sm:$0xff] 0.0
      %417 = vst [vmem:[#allocation2 + $0x118] sm:$0xff] 0.0
      %418 = vst [vmem:[#allocation2 + $0x138] sm:$0xff] 0.0
      %419 = vst [vmem:[#allocation2 + $0x158] sm:$0xff] 0.0
      %420 = vst [vmem:[#allocation2 + $0x178] sm:$0xff] 0.0
      %421 = vst [vmem:[#allocation2 + $0x198] sm:$0xff] 0.0
      %422 = vst [vmem:[#allocation2 + $0x1b8] sm:$0xff] 0.0
      %423 = vst [vmem:[#allocation2 + $0x1d8] sm:$0xff] 0.0
      %424 = vst [vmem:[#allocation2 + $0x1f8] sm:$0xff] 0.0
      %425 = vst [vmem:[#allocation2 + $0x218] sm:$0xff] 0.0
      %426 = vst [vmem:[#allocation2 + $0x238] sm:$0xff] 0.0
      %427 = vst [vmem:[#allocation2 + $0x258] sm:$0xff] 0.0
      %428 = vst [vmem:[#allocation2 + $0x278] sm:$0xff] 0.0
      %429 = vst [vmem:[#allocation2 + $0x298] sm:$0xff] 0.0
      %430 = vst [vmem:[#allocation2 + $0x2b8] sm:$0xff] 0.0
      %431 = vst [vmem:[#allocation2 + $0x8] sm:$0xff] 0.0
      %432 = vst [vmem:[#allocation2 + $0x10] sm:$0xff] 0.0
      %433 = vst [vmem:[#allocation2 + $0x28] sm:$0xff] 0.0
      %434 = vst [vmem:[#allocation2 + $0x30] sm:$0xff] 0.0
      %435 = vst [vmem:[#allocation2 + $0x48] sm:$0xff] 0.0
      %436 = vst [vmem:[#allocation2 + $0x50] sm:$0xff] 0.0
      %s437 = scalar_lea.vmem [#allocation2], 608
      %438 = vst [vmem:[%s437 + $0x8] sm:$0xff] 0.0
      %439 = vst [vmem:[%s437 + $0x10] sm:$0xff] 0.0
      %440 = vst [vmem:[%s437 + $0x28] sm:$0xff] 0.0
      %441 = vst [vmem:[%s437 + $0x30] sm:$0xff] 0.0
      %442 = vst [vmem:[%s437 + $0x48] sm:$0xff] 0.0
      %443 = vst [vmem:[%s437 + $0x50] sm:$0xff] 0.0
      %s444 = smul.u32 %s386, 16
      %s445 = scalar_lea.vmem %s373, %s444
      %v446 = vld [vmem:[%s445] sm:$0xff]
      %v447 = vld [vmem:[%s445 + $0x8] sm:$0xff]
      %v448 = vld [vmem:[%s445 + $0x10] sm:$0xff]
      %v449 = vld [vmem:[%s445 + $0x18] sm:$0xff]
      %v450 = vld [vmem:[%s445 + $0x20] sm:$0xff]
      %v451 = vld [vmem:[%s445 + $0x28] sm:$0xff]
      %v452 = vld [vmem:[%s445 + $0x30] sm:$0xff]
      %v453 = vld [vmem:[%s445 + $0x38] sm:$0xff]
      %v454 = vld [vmem:[%s445 + $0x40] sm:$0xff]
      %v455 = vld [vmem:[%s445 + $0x48] sm:$0xff]
      %v456 = vld [vmem:[%s445 + $0x50] sm:$0xff]
      %v457 = vld [vmem:[%s445 + $0x58] sm:$0xff]
      %v458 = vld [vmem:[%s445 + $0x60] sm:$0xff]
      %v459 = vld [vmem:[%s445 + $0x68] sm:$0xff]
      %v460 = vld [vmem:[%s445 + $0x70] sm:$0xff]
      %v461 = vld [vmem:[%s445 + $0x78] sm:$0xff]
      %v462 = vld [vmem:[%s445 + $0x80] sm:$0xff]
      %v463 = vld [vmem:[%s445 + $0x88] sm:$0xff]
      %v464 = vld [vmem:[%s445 + $0x90] sm:$0xff]
      %v465 = vld [vmem:[%s445 + $0x98] sm:$0xff]
      %v466 = vld [vmem:[%s445 + $0xa0] sm:$0xff]
      %v467 = vld [vmem:[%s445 + $0xa8] sm:$0xff]
      %v468 = vld [vmem:[%s445 + $0xb0] sm:$0xff]
      %v469 = vld [vmem:[%s445 + $0xb8] sm:$0xff]
      %v470 = vld [vmem:[%s445 + $0xc0] sm:$0xff]
      %v471 = vld [vmem:[%s445 + $0xc8] sm:$0xff]
      %v472 = vld [vmem:[%s445 + $0xd0] sm:$0xff]
      %v473 = vld [vmem:[%s445 + $0xd8] sm:$0xff]
      %v474 = vld [vmem:[%s445 + $0xe0] sm:$0xff]
      %v475 = vld [vmem:[%s445 + $0xe8] sm:$0xff]
      %v476 = vld [vmem:[%s445 + $0xf0] sm:$0xff]
      %v477 = vld [vmem:[%s445 + $0xf8] sm:$0xff]
      %s478 = scalar_lea.vmem [#allocation2], 96
      %479 = vst [vmem:[%s478 + $0x8] sm:$0xff] %v446
      %480 = vst [vmem:[%s478 + $0x10] sm:$0xff] %v447
      %481 = vst [vmem:[%s478 + $0x28] sm:$0xff] %v448
      %482 = vst [vmem:[%s478 + $0x30] sm:$0xff] %v449
      %483 = vst [vmem:[%s478 + $0x48] sm:$0xff] %v450
      %484 = vst [vmem:[%s478 + $0x50] sm:$0xff] %v451
      %485 = vst [vmem:[%s478 + $0x68] sm:$0xff] %v452
      %486 = vst [vmem:[%s478 + $0x70] sm:$0xff] %v453
      %487 = vst [vmem:[%s478 + $0x88] sm:$0xff] %v454
      %488 = vst [vmem:[%s478 + $0x90] sm:$0xff] %v455
      %489 = vst [vmem:[%s478 + $0xa8] sm:$0xff] %v456
      %490 = vst [vmem:[%s478 + $0xb0] sm:$0xff] %v457
      %491 = vst [vmem:[%s478 + $0xc8] sm:$0xff] %v458
      %492 = vst [vmem:[%s478 + $0xd0] sm:$0xff] %v459
      %493 = vst [vmem:[%s478 + $0xe8] sm:$0xff] %v460
      %494 = vst [vmem:[%s478 + $0xf0] sm:$0xff] %v461
      %495 = vst [vmem:[%s478 + $0x108] sm:$0xff] %v462
      %496 = vst [vmem:[%s478 + $0x110] sm:$0xff] %v463
      %497 = vst [vmem:[%s478 + $0x128] sm:$0xff] %v464
      %498 = vst [vmem:[%s478 + $0x130] sm:$0xff] %v465
      %499 = vst [vmem:[%s478 + $0x148] sm:$0xff] %v466
      %500 = vst [vmem:[%s478 + $0x150] sm:$0xff] %v467
      %501 = vst [vmem:[%s478 + $0x168] sm:$0xff] %v468
      %502 = vst [vmem:[%s478 + $0x170] sm:$0xff] %v469
      %503 = vst [vmem:[%s478 + $0x188] sm:$0xff] %v470
      %504 = vst [vmem:[%s478 + $0x190] sm:$0xff] %v471
      %505 = vst [vmem:[%s478 + $0x1a8] sm:$0xff] %v472
      %506 = vst [vmem:[%s478 + $0x1b0] sm:$0xff] %v473
      %507 = vst [vmem:[%s478 + $0x1c8] sm:$0xff] %v474
      %508 = vst [vmem:[%s478 + $0x1d0] sm:$0xff] %v475
      %509 = vst [vmem:[%s478 + $0x1e8] sm:$0xff] %v476
      %510 = vst [vmem:[%s478 + $0x1f0] sm:$0xff] %v477
      %s511 = ssub.s32 %s386, 3
      %p512 = scmp.ge.s32.totalorder %s511, 0
      // Predicated region
      $region61: #{cnblock_forward.1} parent=59 // pred_check
        %p513 = pneg %p512
      $region62: #{cnblock_forward.1} parent=59 // pred_check_branch
        %515 = sbr.rel (%p513) target = $region64
      $region63: #{cnblock_forward.1} parent=59 // pred_region
        %s516 = smul.u32 %s511, 16
        %s517 = scalar_lea.vmem %s373, %s516
        %v518 = vld [vmem:[%s517] sm:$0xff]
        %v519 = vld [vmem:[%s517 + $0x8] sm:$0xff]
        %520 = vst [vmem:[#allocation2 + $0x8] sm:$0xff] %v518
        %521 = vst [vmem:[#allocation2 + $0x10] sm:$0xff] %v519
      $region64: #{cnblock_forward.1} parent=59 // pred_fallthru
        _
      %s522 = sadd.s32 %s386, 16
      %p523 = scmp.le.s32.totalorder %s522, 15
      // Predicated region
      $region65: #{cnblock_forward.1} parent=59 // pred_check
        %p524 = pneg %p523
      $region66: #{cnblock_forward.1} parent=59 // pred_check_branch
        %526 = sbr.rel (%p524) target = $region68
      $region67: #{cnblock_forward.1} parent=59 // pred_region
        %s527 = smul.u32 %s522, 16
        %s528 = scalar_lea.vmem %s373, %s527
        %v529 = vld [vmem:[%s528] sm:$0xff]
        %v530 = vld [vmem:[%s528 + $0x8] sm:$0xff]
        %531 = vst [vmem:[%s437 + $0x8] sm:$0xff] %v529
        %532 = vst [vmem:[%s437 + $0x10] sm:$0xff] %v530
      $region68: #{cnblock_forward.1} parent=59 // pred_fallthru
        _
      %s533 = sadd.s32 %s386, 4294967294
      %p534 = scmp.ge.s32.totalorder %s533, 0
      // Predicated region
      $region69: #{cnblock_forward.1} parent=59 // pred_check
        %p535 = pneg %p534
      $region70: #{cnblock_forward.1} parent=59 // pred_check_branch
        %537 = sbr.rel (%p535) target = $region72
      $region71: #{cnblock_forward.1} parent=59 // pred_region
        %s538 = smul.u32 %s533, 16
        %s539 = scalar_lea.vmem %s373, %s538
        %v540 = vld [vmem:[%s539] sm:$0xff]
        %v541 = vld [vmem:[%s539 + $0x8] sm:$0xff]
        %s542 = scalar_lea.vmem [#allocation2], 32
        %543 = vst [vmem:[%s542 + $0x8] sm:$0xff] %v540
        %544 = vst [vmem:[%s542 + $0x10] sm:$0xff] %v541
      $region72: #{cnblock_forward.1} parent=59 // pred_fallthru
        _
      %s545 = sadd.s32 %s386, 17
      %p546 = scmp.le.s32.totalorder %s545, 15
      // Predicated region
      $region73: #{cnblock_forward.1} parent=59 // pred_check
        %p547 = pneg %p546
      $region74: #{cnblock_forward.1} parent=59 // pred_check_branch
        %549 = sbr.rel (%p547) target = $region76
      $region75: #{cnblock_forward.1} parent=59 // pred_region
        %s550 = smul.u32 %s545, 16
        %s551 = scalar_lea.vmem %s373, %s550
        %v552 = vld [vmem:[%s551] sm:$0xff]
        %v553 = vld [vmem:[%s551 + $0x8] sm:$0xff]
        %s554 = scalar_lea.vmem [#allocation2], 640
        %555 = vst [vmem:[%s554 + $0x8] sm:$0xff] %v552
        %556 = vst [vmem:[%s554 + $0x10] sm:$0xff] %v553
      $region76: #{cnblock_forward.1} parent=59 // pred_fallthru
        _
      %s557 = sadd.s32 %s386, 4294967295
      %p558 = scmp.ge.s32.totalorder %s557, 0
      // Predicated region
      $region77: #{cnblock_forward.1} parent=59 // pred_check
        %p559 = pneg %p558
      $region78: #{cnblock_forward.1} parent=59 // pred_check_branch
        %561 = sbr.rel (%p559) target = $region80
      $region79: #{cnblock_forward.1} parent=59 // pred_region
        %s562 = smul.u32 %s557, 16
        %s563 = scalar_lea.vmem %s373, %s562
        %v564 = vld [vmem:[%s563] sm:$0xff]
        %v565 = vld [vmem:[%s563 + $0x8] sm:$0xff]
        %s566 = scalar_lea.vmem [#allocation2], 64
        %567 = vst [vmem:[%s566 + $0x8] sm:$0xff] %v564
        %568 = vst [vmem:[%s566 + $0x10] sm:$0xff] %v565
      $region80: #{cnblock_forward.1} parent=59 // pred_fallthru
        _
      %s569 = sadd.s32 %s386, 18
      %p570 = scmp.le.s32.totalorder %s569, 15
      // Predicated region
      $region81: #{cnblock_forward.1} parent=59 // pred_check
        %p571 = pneg %p570
      $region82: #{cnblock_forward.1} parent=59 // pred_check_branch
        %573 = sbr.rel (%p571) target = $region84
      $region83: #{cnblock_forward.1} parent=59 // pred_region
        %s574 = smul.u32 %s569, 16
        %s575 = scalar_lea.vmem %s373, %s574
        %v576 = vld [vmem:[%s575] sm:$0xff]
        %v577 = vld [vmem:[%s575 + $0x8] sm:$0xff]
        %s578 = scalar_lea.vmem [#allocation2], 672
        %579 = vst [vmem:[%s578 + $0x8] sm:$0xff] %v576
        %580 = vst [vmem:[%s578 + $0x10] sm:$0xff] %v577
      $region84: #{cnblock_forward.1} parent=59 // pred_fallthru
        _
      %v581 = vld [vmem:[%s2] sm:$0x1]
      %v583 = vlaneseq
      %v584 = vshrl.u32 %v583, 7
      %v585 = vsub.s32 0, %v584
      %v586 = vrot.slane %v581, %v585
      %v588 = vld [vmem:[#allocation2 + $0x5] sm:$0xff]
      %v589 = vld [vmem:[#allocation2 + $0xd] sm:$0xff]
      %v590 = vld [vmem:[#allocation2 + $0x25] sm:$0xff]
      %v591 = vld [vmem:[#allocation2 + $0x2d] sm:$0xff]
      %v592 = vld [vmem:[#allocation2 + $0x45] sm:$0xff]
      %v593 = vld [vmem:[#allocation2 + $0x4d] sm:$0xff]
      %v594 = vld [vmem:[#allocation2 + $0x65] sm:$0xff]
      %v595 = vld [vmem:[#allocation2 + $0x6d] sm:$0xff]
      %v596 = vld [vmem:[#allocation2 + $0x85] sm:$0xff]
      %v597 = vld [vmem:[#allocation2 + $0x8d] sm:$0xff]
      %v598 = vld [vmem:[#allocation2 + $0xa5] sm:$0xff]
      %v599 = vld [vmem:[#allocation2 + $0xad] sm:$0xff]
      %v600 = vld [vmem:[#allocation2 + $0xc5] sm:$0xff]
      %v601 = vld [vmem:[#allocation2 + $0xcd] sm:$0xff]
      %v602 = vld [vmem:[#allocation2 + $0xe5] sm:$0xff]
      %v603 = vld [vmem:[#allocation2 + $0xed] sm:$0xff]
      %v604 = vld [vmem:[#allocation2 + $0x105] sm:$0xff]
      %v605 = vld [vmem:[#allocation2 + $0x10d] sm:$0xff]
      %v606 = vld [vmem:[#allocation2 + $0x125] sm:$0xff]
      %v607 = vld [vmem:[#allocation2 + $0x12d] sm:$0xff]
      %v608 = vld [vmem:[#allocation2 + $0x145] sm:$0xff]
      %v609 = vld [vmem:[#allocation2 + $0x14d] sm:$0xff]
      %v610 = vld [vmem:[#allocation2 + $0x165] sm:$0xff]
      %v611 = vld [vmem:[#allocation2 + $0x16d] sm:$0xff]
      %v612 = vld [vmem:[#allocation2 + $0x185] sm:$0xff]
      %v613 = vld [vmem:[#allocation2 + $0x18d] sm:$0xff]
      %v614 = vld [vmem:[#allocation2 + $0x1a5] sm:$0xff]
      %v615 = vld [vmem:[#allocation2 + $0x1ad] sm:$0xff]
      %v616 = vld [vmem:[#allocation2 + $0x1c5] sm:$0xff]
      %v617 = vld [vmem:[#allocation2 + $0x1cd] sm:$0xff]
      %v618 = vld [vmem:[#allocation2 + $0x1e5] sm:$0xff]
      %v619 = vld [vmem:[#allocation2 + $0x1ed] sm:$0xff]
      %v620 = vld [vmem:[#allocation2 + $0x205] sm:$0xff]
      %v621 = vld [vmem:[#allocation2 + $0x20d] sm:$0xff]
      %v622 = vld [vmem:[#allocation2 + $0x225] sm:$0xff]
      %v623 = vld [vmem:[#allocation2 + $0x22d] sm:$0xff]
      %v624 = vld [vmem:[#allocation2 + $0x245] sm:$0xff]
      %v625 = vld [vmem:[#allocation2 + $0x24d] sm:$0xff]
      %v626 = vld [vmem:[#allocation2 + $0x265] sm:$0xff]
      %v627 = vld [vmem:[#allocation2 + $0x26d] sm:$0xff]
      %v628 = vld [vmem:[#allocation2 + $0x285] sm:$0xff]
      %v629 = vld [vmem:[#allocation2 + $0x28d] sm:$0xff]
      %v630 = vld [vmem:[#allocation2 + $0x2a5] sm:$0xff]
      %v631 = vld [vmem:[#allocation2 + $0x2ad] sm:$0xff]
      %v632 = vld [vmem:[%s1] sm:$0x7f]
      %v633 = vlaneseq
      %v634 = vshrl.u32 %v633, 7
      %v635 = vsub.s32 0, %v634
      %v636 = vrot.slane %v632, %v635
      %v637 = vmul.f32 %v588, %v636
      %v638 = vmul.f32 %v589, %v636
      %v639 = vmul.f32 %v590, %v636
      %v640 = vmul.f32 %v591, %v636
      %v641 = vmul.f32 %v592, %v636
      %v642 = vmul.f32 %v593, %v636
      %v643 = vmul.f32 %v594, %v636
      %v644 = vmul.f32 %v595, %v636
      %v645 = vmul.f32 %v596, %v636
      %v646 = vmul.f32 %v597, %v636
      %v647 = vmul.f32 %v598, %v636
      %v648 = vmul.f32 %v599, %v636
      %v649 = vmul.f32 %v600, %v636
      %v650 = vmul.f32 %v601, %v636
      %v651 = vmul.f32 %v602, %v636
      %v652 = vmul.f32 %v603, %v636
      %v653 = vmul.f32 %v604, %v636
      %v654 = vmul.f32 %v605, %v636
      %v655 = vmul.f32 %v606, %v636
      %v656 = vmul.f32 %v607, %v636
      %v657 = vmul.f32 %v608, %v636
      %v658 = vmul.f32 %v609, %v636
      %v659 = vmul.f32 %v610, %v636
      %v660 = vmul.f32 %v611, %v636
      %v661 = vmul.f32 %v612, %v636
      %v662 = vmul.f32 %v613, %v636
      %v663 = vmul.f32 %v614, %v636
      %v664 = vmul.f32 %v615, %v636
      %v665 = vmul.f32 %v616, %v636
      %v666 = vmul.f32 %v617, %v636
      %v667 = vmul.f32 %v618, %v636
      %v668 = vmul.f32 %v619, %v636
      %v669 = vlaneseq
      %v670 = vshrl.u32 %v669, 7
      %v671 = vsub.s32 1, %v670
      %v672 = vrot.slane %v632, %v671
      %v673 = vmul.f32 %v590, %v672
      %v674 = vmul.f32 %v591, %v672
      %v675 = vmul.f32 %v592, %v672
      %v676 = vmul.f32 %v593, %v672
      %v677 = vmul.f32 %v594, %v672
      %v678 = vmul.f32 %v595, %v672
      %v679 = vmul.f32 %v596, %v672
      %v680 = vmul.f32 %v597, %v672
      %v681 = vmul.f32 %v598, %v672
      %v682 = vmul.f32 %v599, %v672
      %v683 = vmul.f32 %v600, %v672
      %v684 = vmul.f32 %v601, %v672
      %v685 = vmul.f32 %v602, %v672
      %v686 = vmul.f32 %v603, %v672
      %v687 = vmul.f32 %v604, %v672
      %v688 = vmul.f32 %v605, %v672
      %v689 = vmul.f32 %v606, %v672
      %v690 = vmul.f32 %v607, %v672
      %v691 = vmul.f32 %v608, %v672
      %v692 = vmul.f32 %v609, %v672
      %v693 = vmul.f32 %v610, %v672
      %v694 = vmul.f32 %v611, %v672
      %v695 = vmul.f32 %v612, %v672
      %v696 = vmul.f32 %v613, %v672
      %v697 = vmul.f32 %v614, %v672
      %v698 = vmul.f32 %v615, %v672
      %v699 = vmul.f32 %v616, %v672
      %v700 = vmul.f32 %v617, %v672
      %v701 = vmul.f32 %v618, %v672
      %v702 = vmul.f32 %v619, %v672
      %v703 = vmul.f32 %v620, %v672
      %v704 = vmul.f32 %v621, %v672
      %v705 = vadd.f32 %v637, %v673
      %v706 = vadd.f32 %v638, %v674
      %v707 = vadd.f32 %v639, %v675
      %v708 = vadd.f32 %v640, %v676
      %v709 = vadd.f32 %v641, %v677
      %v710 = vadd.f32 %v642, %v678
      %v711 = vadd.f32 %v643, %v679
      %v712 = vadd.f32 %v644, %v680
      %v713 = vadd.f32 %v645, %v681
      %v714 = vadd.f32 %v646, %v682
      %v715 = vadd.f32 %v647, %v683
      %v716 = vadd.f32 %v648, %v684
      %v717 = vadd.f32 %v649, %v685
      %v718 = vadd.f32 %v650, %v686
      %v719 = vadd.f32 %v651, %v687
      %v720 = vadd.f32 %v652, %v688
      %v721 = vadd.f32 %v653, %v689
      %v722 = vadd.f32 %v654, %v690
      %v723 = vadd.f32 %v655, %v691
      %v724 = vadd.f32 %v656, %v692
      %v725 = vadd.f32 %v657, %v693
      %v726 = vadd.f32 %v658, %v694
      %v727 = vadd.f32 %v659, %v695
      %v728 = vadd.f32 %v660, %v696
      %v729 = vadd.f32 %v661, %v697
      %v730 = vadd.f32 %v662, %v698
      %v731 = vadd.f32 %v663, %v699
      %v732 = vadd.f32 %v664, %v700
      %v733 = vadd.f32 %v665, %v701
      %v734 = vadd.f32 %v666, %v702
      %v735 = vadd.f32 %v667, %v703
      %v736 = vadd.f32 %v668, %v704
      %v737 = vlaneseq
      %v738 = vshrl.u32 %v737, 7
      %v739 = vsub.s32 2, %v738
      %v740 = vrot.slane %v632, %v739
      %v741 = vmul.f32 %v592, %v740
      %v742 = vmul.f32 %v593, %v740
      %v743 = vmul.f32 %v594, %v740
      %v744 = vmul.f32 %v595, %v740
      %v745 = vmul.f32 %v596, %v740
      %v746 = vmul.f32 %v597, %v740
      %v747 = vmul.f32 %v598, %v740
      %v748 = vmul.f32 %v599, %v740
      %v749 = vmul.f32 %v600, %v740
      %v750 = vmul.f32 %v601, %v740
      %v751 = vmul.f32 %v602, %v740
      %v752 = vmul.f32 %v603, %v740
      %v753 = vmul.f32 %v604, %v740
      %v754 = vmul.f32 %v605, %v740
      %v755 = vmul.f32 %v606, %v740
      %v756 = vmul.f32 %v607, %v740
      %v757 = vmul.f32 %v608, %v740
      %v758 = vmul.f32 %v609, %v740
      %v759 = vmul.f32 %v610, %v740
      %v760 = vmul.f32 %v611, %v740
      %v761 = vmul.f32 %v612, %v740
      %v762 = vmul.f32 %v613, %v740
      %v763 = vmul.f32 %v614, %v740
      %v764 = vmul.f32 %v615, %v740
      %v765 = vmul.f32 %v616, %v740
      %v766 = vmul.f32 %v617, %v740
      %v767 = vmul.f32 %v618, %v740
      %v768 = vmul.f32 %v619, %v740
      %v769 = vmul.f32 %v620, %v740
      %v770 = vmul.f32 %v621, %v740
      %v771 = vmul.f32 %v622, %v740
      %v772 = vmul.f32 %v623, %v740
      %v773 = vadd.f32 %v705, %v741
      %v774 = vadd.f32 %v706, %v742
      %v775 = vadd.f32 %v707, %v743
      %v776 = vadd.f32 %v708, %v744
      %v777 = vadd.f32 %v709, %v745
      %v778 = vadd.f32 %v710, %v746
      %v779 = vadd.f32 %v711, %v747
      %v780 = vadd.f32 %v712, %v748
      %v781 = vadd.f32 %v713, %v749
      %v782 = vadd.f32 %v714, %v750
      %v783 = vadd.f32 %v715, %v751
      %v784 = vadd.f32 %v716, %v752
      %v785 = vadd.f32 %v717, %v753
      %v786 = vadd.f32 %v718, %v754
      %v787 = vadd.f32 %v719, %v755
      %v788 = vadd.f32 %v720, %v756
      %v789 = vadd.f32 %v721, %v757
      %v790 = vadd.f32 %v722, %v758
      %v791 = vadd.f32 %v723, %v759
      %v792 = vadd.f32 %v724, %v760
      %v793 = vadd.f32 %v725, %v761
      %v794 = vadd.f32 %v726, %v762
      %v795 = vadd.f32 %v727, %v763
      %v796 = vadd.f32 %v728, %v764
      %v797 = vadd.f32 %v729, %v765
      %v798 = vadd.f32 %v730, %v766
      %v799 = vadd.f32 %v731, %v767
      %v800 = vadd.f32 %v732, %v768
      %v801 = vadd.f32 %v733, %v769
      %v802 = vadd.f32 %v734, %v770
      %v803 = vadd.f32 %v735, %v771
      %v804 = vadd.f32 %v736, %v772
      %v805 = vlaneseq
      %v806 = vshrl.u32 %v805, 7
      %v807 = vsub.s32 3, %v806
      %v808 = vrot.slane %v632, %v807
      %v809 = vmul.f32 %v594, %v808
      %v810 = vmul.f32 %v595, %v808
      %v811 = vmul.f32 %v596, %v808
      %v812 = vmul.f32 %v597, %v808
      %v813 = vmul.f32 %v598, %v808
      %v814 = vmul.f32 %v599, %v808
      %v815 = vmul.f32 %v600, %v808
      %v816 = vmul.f32 %v601, %v808
      %v817 = vmul.f32 %v602, %v808
      %v818 = vmul.f32 %v603, %v808
      %v819 = vmul.f32 %v604, %v808
      %v820 = vmul.f32 %v605, %v808
      %v821 = vmul.f32 %v606, %v808
      %v822 = vmul.f32 %v607, %v808
      %v823 = vmul.f32 %v608, %v808
      %v824 = vmul.f32 %v609, %v808
      %v825 = vmul.f32 %v610, %v808
      %v826 = vmul.f32 %v611, %v808
      %v827 = vmul.f32 %v612, %v808
      %v828 = vmul.f32 %v613, %v808
      %v829 = vmul.f32 %v614, %v808
      %v830 = vmul.f32 %v615, %v808
      %v831 = vmul.f32 %v616, %v808
      %v832 = vmul.f32 %v617, %v808
      %v833 = vmul.f32 %v618, %v808
      %v834 = vmul.f32 %v619, %v808
      %v835 = vmul.f32 %v620, %v808
      %v836 = vmul.f32 %v621, %v808
      %v837 = vmul.f32 %v622, %v808
      %v838 = vmul.f32 %v623, %v808
      %v839 = vmul.f32 %v624, %v808
      %v840 = vmul.f32 %v625, %v808
      %v841 = vadd.f32 %v773, %v809
      %v842 = vadd.f32 %v774, %v810
      %v843 = vadd.f32 %v775, %v811
      %v844 = vadd.f32 %v776, %v812
      %v845 = vadd.f32 %v777, %v813
      %v846 = vadd.f32 %v778, %v814
      %v847 = vadd.f32 %v779, %v815
      %v848 = vadd.f32 %v780, %v816
      %v849 = vadd.f32 %v781, %v817
      %v850 = vadd.f32 %v782, %v818
      %v851 = vadd.f32 %v783, %v819
      %v852 = vadd.f32 %v784, %v820
      %v853 = vadd.f32 %v785, %v821
      %v854 = vadd.f32 %v786, %v822
      %v855 = vadd.f32 %v787, %v823
      %v856 = vadd.f32 %v788, %v824
      %v857 = vadd.f32 %v789, %v825
      %v858 = vadd.f32 %v790, %v826
      %v859 = vadd.f32 %v791, %v827
      %v860 = vadd.f32 %v792, %v828
      %v861 = vadd.f32 %v793, %v829
      %v862 = vadd.f32 %v794, %v830
      %v863 = vadd.f32 %v795, %v831
      %v864 = vadd.f32 %v796, %v832
      %v865 = vadd.f32 %v797, %v833
      %v866 = vadd.f32 %v798, %v834
      %v867 = vadd.f32 %v799, %v835
      %v868 = vadd.f32 %v800, %v836
      %v869 = vadd.f32 %v801, %v837
      %v870 = vadd.f32 %v802, %v838
      %v871 = vadd.f32 %v803, %v839
      %v872 = vadd.f32 %v804, %v840
      %v873 = vlaneseq
      %v874 = vshrl.u32 %v873, 7
      %v875 = vsub.s32 4, %v874
      %v876 = vrot.slane %v632, %v875
      %v877 = vmul.f32 %v596, %v876
      %v878 = vmul.f32 %v597, %v876
      %v879 = vmul.f32 %v598, %v876
      %v880 = vmul.f32 %v599, %v876
      %v881 = vmul.f32 %v600, %v876
      %v882 = vmul.f32 %v601, %v876
      %v883 = vmul.f32 %v602, %v876
      %v884 = vmul.f32 %v603, %v876
      %v885 = vmul.f32 %v604, %v876
      %v886 = vmul.f32 %v605, %v876
      %v887 = vmul.f32 %v606, %v876
      %v888 = vmul.f32 %v607, %v876
      %v889 = vmul.f32 %v608, %v876
      %v890 = vmul.f32 %v609, %v876
      %v891 = vmul.f32 %v610, %v876
      %v892 = vmul.f32 %v611, %v876
      %v893 = vmul.f32 %v612, %v876
      %v894 = vmul.f32 %v613, %v876
      %v895 = vmul.f32 %v614, %v876
      %v896 = vmul.f32 %v615, %v876
      %v897 = vmul.f32 %v616, %v876
      %v898 = vmul.f32 %v617, %v876
      %v899 = vmul.f32 %v618, %v876
      %v900 = vmul.f32 %v619, %v876
      %v901 = vmul.f32 %v620, %v876
      %v902 = vmul.f32 %v621, %v876
      %v903 = vmul.f32 %v622, %v876
      %v904 = vmul.f32 %v623, %v876
      %v905 = vmul.f32 %v624, %v876
      %v906 = vmul.f32 %v625, %v876
      %v907 = vmul.f32 %v626, %v876
      %v908 = vmul.f32 %v627, %v876
      %v909 = vadd.f32 %v841, %v877
      %v910 = vadd.f32 %v842, %v878
      %v911 = vadd.f32 %v843, %v879
      %v912 = vadd.f32 %v844, %v880
      %v913 = vadd.f32 %v845, %v881
      %v914 = vadd.f32 %v846, %v882
      %v915 = vadd.f32 %v847, %v883
      %v916 = vadd.f32 %v848, %v884
      %v917 = vadd.f32 %v849, %v885
      %v918 = vadd.f32 %v850, %v886
      %v919 = vadd.f32 %v851, %v887
      %v920 = vadd.f32 %v852, %v888
      %v921 = vadd.f32 %v853, %v889
      %v922 = vadd.f32 %v854, %v890
      %v923 = vadd.f32 %v855, %v891
      %v924 = vadd.f32 %v856, %v892
      %v925 = vadd.f32 %v857, %v893
      %v926 = vadd.f32 %v858, %v894
      %v927 = vadd.f32 %v859, %v895
      %v928 = vadd.f32 %v860, %v896
      %v929 = vadd.f32 %v861, %v897
      %v930 = vadd.f32 %v862, %v898
      %v931 = vadd.f32 %v863, %v899
      %v932 = vadd.f32 %v864, %v900
      %v933 = vadd.f32 %v865, %v901
      %v934 = vadd.f32 %v866, %v902
      %v935 = vadd.f32 %v867, %v903
      %v936 = vadd.f32 %v868, %v904
      %v937 = vadd.f32 %v869, %v905
      %v938 = vadd.f32 %v870, %v906
      %v939 = vadd.f32 %v871, %v907
      %v940 = vadd.f32 %v872, %v908
      %v941 = vlaneseq
      %v942 = vshrl.u32 %v941, 7
      %v943 = vsub.s32 5, %v942
      %v944 = vrot.slane %v632, %v943
      %v945 = vmul.f32 %v598, %v944
      %v946 = vmul.f32 %v599, %v944
      %v947 = vmul.f32 %v600, %v944
      %v948 = vmul.f32 %v601, %v944
      %v949 = vmul.f32 %v602, %v944
      %v950 = vmul.f32 %v603, %v944
      %v951 = vmul.f32 %v604, %v944
      %v952 = vmul.f32 %v605, %v944
      %v953 = vmul.f32 %v606, %v944
      %v954 = vmul.f32 %v607, %v944
      %v955 = vmul.f32 %v608, %v944
      %v956 = vmul.f32 %v609, %v944
      %v957 = vmul.f32 %v610, %v944
      %v958 = vmul.f32 %v611, %v944
      %v959 = vmul.f32 %v612, %v944
      %v960 = vmul.f32 %v613, %v944
      %v961 = vmul.f32 %v614, %v944
      %v962 = vmul.f32 %v615, %v944
      %v963 = vmul.f32 %v616, %v944
      %v964 = vmul.f32 %v617, %v944
      %v965 = vmul.f32 %v618, %v944
      %v966 = vmul.f32 %v619, %v944
      %v967 = vmul.f32 %v620, %v944
      %v968 = vmul.f32 %v621, %v944
      %v969 = vmul.f32 %v622, %v944
      %v970 = vmul.f32 %v623, %v944
      %v971 = vmul.f32 %v624, %v944
      %v972 = vmul.f32 %v625, %v944
      %v973 = vmul.f32 %v626, %v944
      %v974 = vmul.f32 %v627, %v944
      %v975 = vmul.f32 %v628, %v944
      %v976 = vmul.f32 %v629, %v944
      %v977 = vadd.f32 %v909, %v945
      %v978 = vadd.f32 %v910, %v946
      %v979 = vadd.f32 %v911, %v947
      %v980 = vadd.f32 %v912, %v948
      %v981 = vadd.f32 %v913, %v949
      %v982 = vadd.f32 %v914, %v950
      %v983 = vadd.f32 %v915, %v951
      %v984 = vadd.f32 %v916, %v952
      %v985 = vadd.f32 %v917, %v953
      %v986 = vadd.f32 %v918, %v954
      %v987 = vadd.f32 %v919, %v955
      %v988 = vadd.f32 %v920, %v956
      %v989 = vadd.f32 %v921, %v957
      %v990 = vadd.f32 %v922, %v958
      %v991 = vadd.f32 %v923, %v959
      %v992 = vadd.f32 %v924, %v960
      %v993 = vadd.f32 %v925, %v961
      %v994 = vadd.f32 %v926, %v962
      %v995 = vadd.f32 %v927, %v963
      %v996 = vadd.f32 %v928, %v964
      %v997 = vadd.f32 %v929, %v965
      %v998 = vadd.f32 %v930, %v966
      %v999 = vadd.f32 %v931, %v967
      %v1000 = vadd.f32 %v932, %v968
      %v1001 = vadd.f32 %v933, %v969
      %v1002 = vadd.f32 %v934, %v970
      %v1003 = vadd.f32 %v935, %v971
      %v1004 = vadd.f32 %v936, %v972
      %v1005 = vadd.f32 %v937, %v973
      %v1006 = vadd.f32 %v938, %v974
      %v1007 = vadd.f32 %v939, %v975
      %v1008 = vadd.f32 %v940, %v976
      %v1009 = vlaneseq
      %v1010 = vshrl.u32 %v1009, 7
      %v1011 = vsub.s32 6, %v1010
      %v1012 = vrot.slane %v632, %v1011
      %v1013 = vmul.f32 %v600, %v1012
      %v1014 = vmul.f32 %v601, %v1012
      %v1015 = vmul.f32 %v602, %v1012
      %v1016 = vmul.f32 %v603, %v1012
      %v1017 = vmul.f32 %v604, %v1012
      %v1018 = vmul.f32 %v605, %v1012
      %v1019 = vmul.f32 %v606, %v1012
      %v1020 = vmul.f32 %v607, %v1012
      %v1021 = vmul.f32 %v608, %v1012
      %v1022 = vmul.f32 %v609, %v1012
      %v1023 = vmul.f32 %v610, %v1012
      %v1024 = vmul.f32 %v611, %v1012
      %v1025 = vmul.f32 %v612, %v1012
      %v1026 = vmul.f32 %v613, %v1012
      %v1027 = vmul.f32 %v614, %v1012
      %v1028 = vmul.f32 %v615, %v1012
      %v1029 = vmul.f32 %v616, %v1012
      %v1030 = vmul.f32 %v617, %v1012
      %v1031 = vmul.f32 %v618, %v1012
      %v1032 = vmul.f32 %v619, %v1012
      %v1033 = vmul.f32 %v620, %v1012
      %v1034 = vmul.f32 %v621, %v1012
      %v1035 = vmul.f32 %v622, %v1012
      %v1036 = vmul.f32 %v623, %v1012
      %v1037 = vmul.f32 %v624, %v1012
      %v1038 = vmul.f32 %v625, %v1012
      %v1039 = vmul.f32 %v626, %v1012
      %v1040 = vmul.f32 %v627, %v1012
      %v1041 = vmul.f32 %v628, %v1012
      %v1042 = vmul.f32 %v629, %v1012
      %v1043 = vmul.f32 %v630, %v1012
      %v1044 = vmul.f32 %v631, %v1012
      %v1045 = vadd.f32 %v977, %v1013
      %v1046 = vadd.f32 %v978, %v1014
      %v1047 = vadd.f32 %v979, %v1015
      %v1048 = vadd.f32 %v980, %v1016
      %v1049 = vadd.f32 %v981, %v1017
      %v1050 = vadd.f32 %v982, %v1018
      %v1051 = vadd.f32 %v983, %v1019
      %v1052 = vadd.f32 %v984, %v1020
      %v1053 = vadd.f32 %v985, %v1021
      %v1054 = vadd.f32 %v986, %v1022
      %v1055 = vadd.f32 %v987, %v1023
      %v1056 = vadd.f32 %v988, %v1024
      %v1057 = vadd.f32 %v989, %v1025
      %v1058 = vadd.f32 %v990, %v1026
      %v1059 = vadd.f32 %v991, %v1027
      %v1060 = vadd.f32 %v992, %v1028
      %v1061 = vadd.f32 %v993, %v1029
      %v1062 = vadd.f32 %v994, %v1030
      %v1063 = vadd.f32 %v995, %v1031
      %v1064 = vadd.f32 %v996, %v1032
      %v1065 = vadd.f32 %v997, %v1033
      %v1066 = vadd.f32 %v998, %v1034
      %v1067 = vadd.f32 %v999, %v1035
      %v1068 = vadd.f32 %v1000, %v1036
      %v1069 = vadd.f32 %v1001, %v1037
      %v1070 = vadd.f32 %v1002, %v1038
      %v1071 = vadd.f32 %v1003, %v1039
      %v1072 = vadd.f32 %v1004, %v1040
      %v1073 = vadd.f32 %v1005, %v1041
      %v1074 = vadd.f32 %v1006, %v1042
      %v1075 = vadd.f32 %v1007, %v1043
      %v1076 = vadd.f32 %v1008, %v1044
      %v1077 = vadd.f32 %v586, %v1045
      %v1078 = vadd.f32 %v586, %v1046
      %v1079 = vadd.f32 %v586, %v1047
      %v1080 = vadd.f32 %v586, %v1048
      %v1081 = vadd.f32 %v586, %v1049
      %v1082 = vadd.f32 %v586, %v1050
      %v1083 = vadd.f32 %v586, %v1051
      %v1084 = vadd.f32 %v586, %v1052
      %v1085 = vadd.f32 %v586, %v1053
      %v1086 = vadd.f32 %v586, %v1054
      %v1087 = vadd.f32 %v586, %v1055
      %v1088 = vadd.f32 %v586, %v1056
      %v1089 = vadd.f32 %v586, %v1057
      %v1090 = vadd.f32 %v586, %v1058
      %v1091 = vadd.f32 %v586, %v1059
      %v1092 = vadd.f32 %v586, %v1060
      %v1093 = vadd.f32 %v586, %v1061
      %v1094 = vadd.f32 %v586, %v1062
      %v1095 = vadd.f32 %v586, %v1063
      %v1096 = vadd.f32 %v586, %v1064
      %v1097 = vadd.f32 %v586, %v1065
      %v1098 = vadd.f32 %v586, %v1066
      %v1099 = vadd.f32 %v586, %v1067
      %v1100 = vadd.f32 %v586, %v1068
      %v1101 = vadd.f32 %v586, %v1069
      %v1102 = vadd.f32 %v586, %v1070
      %v1103 = vadd.f32 %v586, %v1071
      %v1104 = vadd.f32 %v586, %v1072
      %v1105 = vadd.f32 %v586, %v1073
      %v1106 = vadd.f32 %v586, %v1074
      %v1107 = vadd.f32 %v586, %v1075
      %v1108 = vadd.f32 %v586, %v1076
      %v1109 = vld [vmem:[#allocation2 + $0x6] sm:$0xff]
      %v1110 = vld [vmem:[#allocation2 + $0xe] sm:$0xff]
      %v1111 = vld [vmem:[#allocation2 + $0x26] sm:$0xff]
      %v1112 = vld [vmem:[#allocation2 + $0x2e] sm:$0xff]
      %v1113 = vld [vmem:[#allocation2 + $0x46] sm:$0xff]
      %v1114 = vld [vmem:[#allocation2 + $0x4e] sm:$0xff]
      %v1115 = vld [vmem:[#allocation2 + $0x66] sm:$0xff]
      %v1116 = vld [vmem:[#allocation2 + $0x6e] sm:$0xff]
      %v1117 = vld [vmem:[#allocation2 + $0x86] sm:$0xff]
      %v1118 = vld [vmem:[#allocation2 + $0x8e] sm:$0xff]
      %v1119 = vld [vmem:[#allocation2 + $0xa6] sm:$0xff]
      %v1120 = vld [vmem:[#allocation2 + $0xae] sm:$0xff]
      %v1121 = vld [vmem:[#allocation2 + $0xc6] sm:$0xff]
      %v1122 = vld [vmem:[#allocation2 + $0xce] sm:$0xff]
      %v1123 = vld [vmem:[#allocation2 + $0xe6] sm:$0xff]
      %v1124 = vld [vmem:[#allocation2 + $0xee] sm:$0xff]
      %v1125 = vld [vmem:[#allocation2 + $0x106] sm:$0xff]
      %v1126 = vld [vmem:[#allocation2 + $0x10e] sm:$0xff]
      %v1127 = vld [vmem:[#allocation2 + $0x126] sm:$0xff]
      %v1128 = vld [vmem:[#allocation2 + $0x12e] sm:$0xff]
      %v1129 = vld [vmem:[#allocation2 + $0x146] sm:$0xff]
      %v1130 = vld [vmem:[#allocation2 + $0x14e] sm:$0xff]
      %v1131 = vld [vmem:[#allocation2 + $0x166] sm:$0xff]
      %v1132 = vld [vmem:[#allocation2 + $0x16e] sm:$0xff]
      %v1133 = vld [vmem:[#allocation2 + $0x186] sm:$0xff]
      %v1134 = vld [vmem:[#allocation2 + $0x18e] sm:$0xff]
      %v1135 = vld [vmem:[#allocation2 + $0x1a6] sm:$0xff]
      %v1136 = vld [vmem:[#allocation2 + $0x1ae] sm:$0xff]
      %v1137 = vld [vmem:[#allocation2 + $0x1c6] sm:$0xff]
      %v1138 = vld [vmem:[#allocation2 + $0x1ce] sm:$0xff]
      %v1139 = vld [vmem:[#allocation2 + $0x1e6] sm:$0xff]
      %v1140 = vld [vmem:[#allocation2 + $0x1ee] sm:$0xff]
      %v1141 = vld [vmem:[#allocation2 + $0x206] sm:$0xff]
      %v1142 = vld [vmem:[#allocation2 + $0x20e] sm:$0xff]
      %v1143 = vld [vmem:[#allocation2 + $0x226] sm:$0xff]
      %v1144 = vld [vmem:[#allocation2 + $0x22e] sm:$0xff]
      %v1145 = vld [vmem:[#allocation2 + $0x246] sm:$0xff]
      %v1146 = vld [vmem:[#allocation2 + $0x24e] sm:$0xff]
      %v1147 = vld [vmem:[#allocation2 + $0x266] sm:$0xff]
      %v1148 = vld [vmem:[#allocation2 + $0x26e] sm:$0xff]
      %v1149 = vld [vmem:[#allocation2 + $0x286] sm:$0xff]
      %v1150 = vld [vmem:[#allocation2 + $0x28e] sm:$0xff]
      %v1151 = vld [vmem:[#allocation2 + $0x2a6] sm:$0xff]
      %v1152 = vld [vmem:[#allocation2 + $0x2ae] sm:$0xff]
      %s1153 = scalar_lea.vmem %s1, 8
      %v1154 = vld [vmem:[%s1153] sm:$0x7f]
      %v1155 = vlaneseq
      %v1156 = vshrl.u32 %v1155, 7
      %v1157 = vsub.s32 0, %v1156
      %v1158 = vrot.slane %v1154, %v1157
      %v1159 = vmul.f32 %v1109, %v1158
      %v1160 = vmul.f32 %v1110, %v1158
      %v1161 = vmul.f32 %v1111, %v1158
      %v1162 = vmul.f32 %v1112, %v1158
      %v1163 = vmul.f32 %v1113, %v1158
      %v1164 = vmul.f32 %v1114, %v1158
      %v1165 = vmul.f32 %v1115, %v1158
      %v1166 = vmul.f32 %v1116, %v1158
      %v1167 = vmul.f32 %v1117, %v1158
      %v1168 = vmul.f32 %v1118, %v1158
      %v1169 = vmul.f32 %v1119, %v1158
      %v1170 = vmul.f32 %v1120, %v1158
      %v1171 = vmul.f32 %v1121, %v1158
      %v1172 = vmul.f32 %v1122, %v1158
      %v1173 = vmul.f32 %v1123, %v1158
      %v1174 = vmul.f32 %v1124, %v1158
      %v1175 = vmul.f32 %v1125, %v1158
      %v1176 = vmul.f32 %v1126, %v1158
      %v1177 = vmul.f32 %v1127, %v1158
      %v1178 = vmul.f32 %v1128, %v1158
      %v1179 = vmul.f32 %v1129, %v1158
      %v1180 = vmul.f32 %v1130, %v1158
      %v1181 = vmul.f32 %v1131, %v1158
      %v1182 = vmul.f32 %v1132, %v1158
      %v1183 = vmul.f32 %v1133, %v1158
      %v1184 = vmul.f32 %v1134, %v1158
      %v1185 = vmul.f32 %v1135, %v1158
      %v1186 = vmul.f32 %v1136, %v1158
      %v1187 = vmul.f32 %v1137, %v1158
      %v1188 = vmul.f32 %v1138, %v1158
      %v1189 = vmul.f32 %v1139, %v1158
      %v1190 = vmul.f32 %v1140, %v1158
      %v1191 = vlaneseq
      %v1192 = vshrl.u32 %v1191, 7
      %v1193 = vsub.s32 1, %v1192
      %v1194 = vrot.slane %v1154, %v1193
      %v1195 = vmul.f32 %v1111, %v1194
      %v1196 = vmul.f32 %v1112, %v1194
      %v1197 = vmul.f32 %v1113, %v1194
      %v1198 = vmul.f32 %v1114, %v1194
      %v1199 = vmul.f32 %v1115, %v1194
      %v1200 = vmul.f32 %v1116, %v1194
      %v1201 = vmul.f32 %v1117, %v1194
      %v1202 = vmul.f32 %v1118, %v1194
      %v1203 = vmul.f32 %v1119, %v1194
      %v1204 = vmul.f32 %v1120, %v1194
      %v1205 = vmul.f32 %v1121, %v1194
      %v1206 = vmul.f32 %v1122, %v1194
      %v1207 = vmul.f32 %v1123, %v1194
      %v1208 = vmul.f32 %v1124, %v1194
      %v1209 = vmul.f32 %v1125, %v1194
      %v1210 = vmul.f32 %v1126, %v1194
      %v1211 = vmul.f32 %v1127, %v1194
      %v1212 = vmul.f32 %v1128, %v1194
      %v1213 = vmul.f32 %v1129, %v1194
      %v1214 = vmul.f32 %v1130, %v1194
      %v1215 = vmul.f32 %v1131, %v1194
      %v1216 = vmul.f32 %v1132, %v1194
      %v1217 = vmul.f32 %v1133, %v1194
      %v1218 = vmul.f32 %v1134, %v1194
      %v1219 = vmul.f32 %v1135, %v1194
      %v1220 = vmul.f32 %v1136, %v1194
      %v1221 = vmul.f32 %v1137, %v1194
      %v1222 = vmul.f32 %v1138, %v1194
      %v1223 = vmul.f32 %v1139, %v1194
      %v1224 = vmul.f32 %v1140, %v1194
      %v1225 = vmul.f32 %v1141, %v1194
      %v1226 = vmul.f32 %v1142, %v1194
      %v1227 = vadd.f32 %v1159, %v1195
      %v1228 = vadd.f32 %v1160, %v1196
      %v1229 = vadd.f32 %v1161, %v1197
      %v1230 = vadd.f32 %v1162, %v1198
      %v1231 = vadd.f32 %v1163, %v1199
      %v1232 = vadd.f32 %v1164, %v1200
      %v1233 = vadd.f32 %v1165, %v1201
      %v1234 = vadd.f32 %v1166, %v1202
      %v1235 = vadd.f32 %v1167, %v1203
      %v1236 = vadd.f32 %v1168, %v1204
      %v1237 = vadd.f32 %v1169, %v1205
      %v1238 = vadd.f32 %v1170, %v1206
      %v1239 = vadd.f32 %v1171, %v1207
      %v1240 = vadd.f32 %v1172, %v1208
      %v1241 = vadd.f32 %v1173, %v1209
      %v1242 = vadd.f32 %v1174, %v1210
      %v1243 = vadd.f32 %v1175, %v1211
      %v1244 = vadd.f32 %v1176, %v1212
      %v1245 = vadd.f32 %v1177, %v1213
      %v1246 = vadd.f32 %v1178, %v1214
      %v1247 = vadd.f32 %v1179, %v1215
      %v1248 = vadd.f32 %v1180, %v1216
      %v1249 = vadd.f32 %v1181, %v1217
      %v1250 = vadd.f32 %v1182, %v1218
      %v1251 = vadd.f32 %v1183, %v1219
      %v1252 = vadd.f32 %v1184, %v1220
      %v1253 = vadd.f32 %v1185, %v1221
      %v1254 = vadd.f32 %v1186, %v1222
      %v1255 = vadd.f32 %v1187, %v1223
      %v1256 = vadd.f32 %v1188, %v1224
      %v1257 = vadd.f32 %v1189, %v1225
      %v1258 = vadd.f32 %v1190, %v1226
      %v1259 = vlaneseq
      %v1260 = vshrl.u32 %v1259, 7
      %v1261 = vsub.s32 2, %v1260
      %v1262 = vrot.slane %v1154, %v1261
      %v1263 = vmul.f32 %v1113, %v1262
      %v1264 = vmul.f32 %v1114, %v1262
      %v1265 = vmul.f32 %v1115, %v1262
      %v1266 = vmul.f32 %v1116, %v1262
      %v1267 = vmul.f32 %v1117, %v1262
      %v1268 = vmul.f32 %v1118, %v1262
      %v1269 = vmul.f32 %v1119, %v1262
      %v1270 = vmul.f32 %v1120, %v1262
      %v1271 = vmul.f32 %v1121, %v1262
      %v1272 = vmul.f32 %v1122, %v1262
      %v1273 = vmul.f32 %v1123, %v1262
      %v1274 = vmul.f32 %v1124, %v1262
      %v1275 = vmul.f32 %v1125, %v1262
      %v1276 = vmul.f32 %v1126, %v1262
      %v1277 = vmul.f32 %v1127, %v1262
      %v1278 = vmul.f32 %v1128, %v1262
      %v1279 = vmul.f32 %v1129, %v1262
      %v1280 = vmul.f32 %v1130, %v1262
      %v1281 = vmul.f32 %v1131, %v1262
      %v1282 = vmul.f32 %v1132, %v1262
      %v1283 = vmul.f32 %v1133, %v1262
      %v1284 = vmul.f32 %v1134, %v1262
      %v1285 = vmul.f32 %v1135, %v1262
      %v1286 = vmul.f32 %v1136, %v1262
      %v1287 = vmul.f32 %v1137, %v1262
      %v1288 = vmul.f32 %v1138, %v1262
      %v1289 = vmul.f32 %v1139, %v1262
      %v1290 = vmul.f32 %v1140, %v1262
      %v1291 = vmul.f32 %v1141, %v1262
      %v1292 = vmul.f32 %v1142, %v1262
      %v1293 = vmul.f32 %v1143, %v1262
      %v1294 = vmul.f32 %v1144, %v1262
      %v1295 = vadd.f32 %v1227, %v1263
      %v1296 = vadd.f32 %v1228, %v1264
      %v1297 = vadd.f32 %v1229, %v1265
      %v1298 = vadd.f32 %v1230, %v1266
      %v1299 = vadd.f32 %v1231, %v1267
      %v1300 = vadd.f32 %v1232, %v1268
      %v1301 = vadd.f32 %v1233, %v1269
      %v1302 = vadd.f32 %v1234, %v1270
      %v1303 = vadd.f32 %v1235, %v1271
      %v1304 = vadd.f32 %v1236, %v1272
      %v1305 = vadd.f32 %v1237, %v1273
      %v1306 = vadd.f32 %v1238, %v1274
      %v1307 = vadd.f32 %v1239, %v1275
      %v1308 = vadd.f32 %v1240, %v1276
      %v1309 = vadd.f32 %v1241, %v1277
      %v1310 = vadd.f32 %v1242, %v1278
      %v1311 = vadd.f32 %v1243, %v1279
      %v1312 = vadd.f32 %v1244, %v1280
      %v1313 = vadd.f32 %v1245, %v1281
      %v1314 = vadd.f32 %v1246, %v1282
      %v1315 = vadd.f32 %v1247, %v1283
      %v1316 = vadd.f32 %v1248, %v1284
      %v1317 = vadd.f32 %v1249, %v1285
      %v1318 = vadd.f32 %v1250, %v1286
      %v1319 = vadd.f32 %v1251, %v1287
      %v1320 = vadd.f32 %v1252, %v1288
      %v1321 = vadd.f32 %v1253, %v1289
      %v1322 = vadd.f32 %v1254, %v1290
      %v1323 = vadd.f32 %v1255, %v1291
      %v1324 = vadd.f32 %v1256, %v1292
      %v1325 = vadd.f32 %v1257, %v1293
      %v1326 = vadd.f32 %v1258, %v1294
      %v1327 = vlaneseq
      %v1328 = vshrl.u32 %v1327, 7
      %v1329 = vsub.s32 3, %v1328
      %v1330 = vrot.slane %v1154, %v1329
      %v1331 = vmul.f32 %v1115, %v1330
      %v1332 = vmul.f32 %v1116, %v1330
      %v1333 = vmul.f32 %v1117, %v1330
      %v1334 = vmul.f32 %v1118, %v1330
      %v1335 = vmul.f32 %v1119, %v1330
      %v1336 = vmul.f32 %v1120, %v1330
      %v1337 = vmul.f32 %v1121, %v1330
      %v1338 = vmul.f32 %v1122, %v1330
      %v1339 = vmul.f32 %v1123, %v1330
      %v1340 = vmul.f32 %v1124, %v1330
      %v1341 = vmul.f32 %v1125, %v1330
      %v1342 = vmul.f32 %v1126, %v1330
      %v1343 = vmul.f32 %v1127, %v1330
      %v1344 = vmul.f32 %v1128, %v1330
      %v1345 = vmul.f32 %v1129, %v1330
      %v1346 = vmul.f32 %v1130, %v1330
      %v1347 = vmul.f32 %v1131, %v1330
      %v1348 = vmul.f32 %v1132, %v1330
      %v1349 = vmul.f32 %v1133, %v1330
      %v1350 = vmul.f32 %v1134, %v1330
      %v1351 = vmul.f32 %v1135, %v1330
      %v1352 = vmul.f32 %v1136, %v1330
      %v1353 = vmul.f32 %v1137, %v1330
      %v1354 = vmul.f32 %v1138, %v1330
      %v1355 = vmul.f32 %v1139, %v1330
      %v1356 = vmul.f32 %v1140, %v1330
      %v1357 = vmul.f32 %v1141, %v1330
      %v1358 = vmul.f32 %v1142, %v1330
      %v1359 = vmul.f32 %v1143, %v1330
      %v1360 = vmul.f32 %v1144, %v1330
      %v1361 = vmul.f32 %v1145, %v1330
      %v1362 = vmul.f32 %v1146, %v1330
      %v1363 = vadd.f32 %v1295, %v1331
      %v1364 = vadd.f32 %v1296, %v1332
      %v1365 = vadd.f32 %v1297, %v1333
      %v1366 = vadd.f32 %v1298, %v1334
      %v1367 = vadd.f32 %v1299, %v1335
      %v1368 = vadd.f32 %v1300, %v1336
      %v1369 = vadd.f32 %v1301, %v1337
      %v1370 = vadd.f32 %v1302, %v1338
      %v1371 = vadd.f32 %v1303, %v1339
      %v1372 = vadd.f32 %v1304, %v1340
      %v1373 = vadd.f32 %v1305, %v1341
      %v1374 = vadd.f32 %v1306, %v1342
      %v1375 = vadd.f32 %v1307, %v1343
      %v1376 = vadd.f32 %v1308, %v1344
      %v1377 = vadd.f32 %v1309, %v1345
      %v1378 = vadd.f32 %v1310, %v1346
      %v1379 = vadd.f32 %v1311, %v1347
      %v1380 = vadd.f32 %v1312, %v1348
      %v1381 = vadd.f32 %v1313, %v1349
      %v1382 = vadd.f32 %v1314, %v1350
      %v1383 = vadd.f32 %v1315, %v1351
      %v1384 = vadd.f32 %v1316, %v1352
      %v1385 = vadd.f32 %v1317, %v1353
      %v1386 = vadd.f32 %v1318, %v1354
      %v1387 = vadd.f32 %v1319, %v1355
      %v1388 = vadd.f32 %v1320, %v1356
      %v1389 = vadd.f32 %v1321, %v1357
      %v1390 = vadd.f32 %v1322, %v1358
      %v1391 = vadd.f32 %v1323, %v1359
      %v1392 = vadd.f32 %v1324, %v1360
      %v1393 = vadd.f32 %v1325, %v1361
      %v1394 = vadd.f32 %v1326, %v1362
      %v1395 = vlaneseq
      %v1396 = vshrl.u32 %v1395, 7
      %v1397 = vsub.s32 4, %v1396
      %v1398 = vrot.slane %v1154, %v1397
      %v1399 = vmul.f32 %v1117, %v1398
      %v1400 = vmul.f32 %v1118, %v1398
      %v1401 = vmul.f32 %v1119, %v1398
      %v1402 = vmul.f32 %v1120, %v1398
      %v1403 = vmul.f32 %v1121, %v1398
      %v1404 = vmul.f32 %v1122, %v1398
      %v1405 = vmul.f32 %v1123, %v1398
      %v1406 = vmul.f32 %v1124, %v1398
      %v1407 = vmul.f32 %v1125, %v1398
      %v1408 = vmul.f32 %v1126, %v1398
      %v1409 = vmul.f32 %v1127, %v1398
      %v1410 = vmul.f32 %v1128, %v1398
      %v1411 = vmul.f32 %v1129, %v1398
      %v1412 = vmul.f32 %v1130, %v1398
      %v1413 = vmul.f32 %v1131, %v1398
      %v1414 = vmul.f32 %v1132, %v1398
      %v1415 = vmul.f32 %v1133, %v1398
      %v1416 = vmul.f32 %v1134, %v1398
      %v1417 = vmul.f32 %v1135, %v1398
      %v1418 = vmul.f32 %v1136, %v1398
      %v1419 = vmul.f32 %v1137, %v1398
      %v1420 = vmul.f32 %v1138, %v1398
      %v1421 = vmul.f32 %v1139, %v1398
      %v1422 = vmul.f32 %v1140, %v1398
      %v1423 = vmul.f32 %v1141, %v1398
      %v1424 = vmul.f32 %v1142, %v1398
      %v1425 = vmul.f32 %v1143, %v1398
      %v1426 = vmul.f32 %v1144, %v1398
      %v1427 = vmul.f32 %v1145, %v1398
      %v1428 = vmul.f32 %v1146, %v1398
      %v1429 = vmul.f32 %v1147, %v1398
      %v1430 = vmul.f32 %v1148, %v1398
      %v1431 = vadd.f32 %v1363, %v1399
      %v1432 = vadd.f32 %v1364, %v1400
      %v1433 = vadd.f32 %v1365, %v1401
      %v1434 = vadd.f32 %v1366, %v1402
      %v1435 = vadd.f32 %v1367, %v1403
      %v1436 = vadd.f32 %v1368, %v1404
      %v1437 = vadd.f32 %v1369, %v1405
      %v1438 = vadd.f32 %v1370, %v1406
      %v1439 = vadd.f32 %v1371, %v1407
      %v1440 = vadd.f32 %v1372, %v1408
      %v1441 = vadd.f32 %v1373, %v1409
      %v1442 = vadd.f32 %v1374, %v1410
      %v1443 = vadd.f32 %v1375, %v1411
      %v1444 = vadd.f32 %v1376, %v1412
      %v1445 = vadd.f32 %v1377, %v1413
      %v1446 = vadd.f32 %v1378, %v1414
      %v1447 = vadd.f32 %v1379, %v1415
      %v1448 = vadd.f32 %v1380, %v1416
      %v1449 = vadd.f32 %v1381, %v1417
      %v1450 = vadd.f32 %v1382, %v1418
      %v1451 = vadd.f32 %v1383, %v1419
      %v1452 = vadd.f32 %v1384, %v1420
      %v1453 = vadd.f32 %v1385, %v1421
      %v1454 = vadd.f32 %v1386, %v1422
      %v1455 = vadd.f32 %v1387, %v1423
      %v1456 = vadd.f32 %v1388, %v1424
      %v1457 = vadd.f32 %v1389, %v1425
      %v1458 = vadd.f32 %v1390, %v1426
      %v1459 = vadd.f32 %v1391, %v1427
      %v1460 = vadd.f32 %v1392, %v1428
      %v1461 = vadd.f32 %v1393, %v1429
      %v1462 = vadd.f32 %v1394, %v1430
      %v1463 = vlaneseq
      %v1464 = vshrl.u32 %v1463, 7
      %v1465 = vsub.s32 5, %v1464
      %v1466 = vrot.slane %v1154, %v1465
      %v1467 = vmul.f32 %v1119, %v1466
      %v1468 = vmul.f32 %v1120, %v1466
      %v1469 = vmul.f32 %v1121, %v1466
      %v1470 = vmul.f32 %v1122, %v1466
      %v1471 = vmul.f32 %v1123, %v1466
      %v1472 = vmul.f32 %v1124, %v1466
      %v1473 = vmul.f32 %v1125, %v1466
      %v1474 = vmul.f32 %v1126, %v1466
      %v1475 = vmul.f32 %v1127, %v1466
      %v1476 = vmul.f32 %v1128, %v1466
      %v1477 = vmul.f32 %v1129, %v1466
      %v1478 = vmul.f32 %v1130, %v1466
      %v1479 = vmul.f32 %v1131, %v1466
      %v1480 = vmul.f32 %v1132, %v1466
      %v1481 = vmul.f32 %v1133, %v1466
      %v1482 = vmul.f32 %v1134, %v1466
      %v1483 = vmul.f32 %v1135, %v1466
      %v1484 = vmul.f32 %v1136, %v1466
      %v1485 = vmul.f32 %v1137, %v1466
      %v1486 = vmul.f32 %v1138, %v1466
      %v1487 = vmul.f32 %v1139, %v1466
      %v1488 = vmul.f32 %v1140, %v1466
      %v1489 = vmul.f32 %v1141, %v1466
      %v1490 = vmul.f32 %v1142, %v1466
      %v1491 = vmul.f32 %v1143, %v1466
      %v1492 = vmul.f32 %v1144, %v1466
      %v1493 = vmul.f32 %v1145, %v1466
      %v1494 = vmul.f32 %v1146, %v1466
      %v1495 = vmul.f32 %v1147, %v1466
      %v1496 = vmul.f32 %v1148, %v1466
      %v1497 = vmul.f32 %v1149, %v1466
      %v1498 = vmul.f32 %v1150, %v1466
      %v1499 = vadd.f32 %v1431, %v1467
      %v1500 = vadd.f32 %v1432, %v1468
      %v1501 = vadd.f32 %v1433, %v1469
      %v1502 = vadd.f32 %v1434, %v1470
      %v1503 = vadd.f32 %v1435, %v1471
      %v1504 = vadd.f32 %v1436, %v1472
      %v1505 = vadd.f32 %v1437, %v1473
      %v1506 = vadd.f32 %v1438, %v1474
      %v1507 = vadd.f32 %v1439, %v1475
      %v1508 = vadd.f32 %v1440, %v1476
      %v1509 = vadd.f32 %v1441, %v1477
      %v1510 = vadd.f32 %v1442, %v1478
      %v1511 = vadd.f32 %v1443, %v1479
      %v1512 = vadd.f32 %v1444, %v1480
      %v1513 = vadd.f32 %v1445, %v1481
      %v1514 = vadd.f32 %v1446, %v1482
      %v1515 = vadd.f32 %v1447, %v1483
      %v1516 = vadd.f32 %v1448, %v1484
      %v1517 = vadd.f32 %v1449, %v1485
      %v1518 = vadd.f32 %v1450, %v1486
      %v1519 = vadd.f32 %v1451, %v1487
      %v1520 = vadd.f32 %v1452, %v1488
      %v1521 = vadd.f32 %v1453, %v1489
      %v1522 = vadd.f32 %v1454, %v1490
      %v1523 = vadd.f32 %v1455, %v1491
      %v1524 = vadd.f32 %v1456, %v1492
      %v1525 = vadd.f32 %v1457, %v1493
      %v1526 = vadd.f32 %v1458, %v1494
      %v1527 = vadd.f32 %v1459, %v1495
      %v1528 = vadd.f32 %v1460, %v1496
      %v1529 = vadd.f32 %v1461, %v1497
      %v1530 = vadd.f32 %v1462, %v1498
      %v1531 = vlaneseq
      %v1532 = vshrl.u32 %v1531, 7
      %v1533 = vsub.s32 6, %v1532
      %v1534 = vrot.slane %v1154, %v1533
      %v1535 = vmul.f32 %v1121, %v1534
      %v1536 = vmul.f32 %v1122, %v1534
      %v1537 = vmul.f32 %v1123, %v1534
      %v1538 = vmul.f32 %v1124, %v1534
      %v1539 = vmul.f32 %v1125, %v1534
      %v1540 = vmul.f32 %v1126, %v1534
      %v1541 = vmul.f32 %v1127, %v1534
      %v1542 = vmul.f32 %v1128, %v1534
      %v1543 = vmul.f32 %v1129, %v1534
      %v1544 = vmul.f32 %v1130, %v1534
      %v1545 = vmul.f32 %v1131, %v1534
      %v1546 = vmul.f32 %v1132, %v1534
      %v1547 = vmul.f32 %v1133, %v1534
      %v1548 = vmul.f32 %v1134, %v1534
      %v1549 = vmul.f32 %v1135, %v1534
      %v1550 = vmul.f32 %v1136, %v1534
      %v1551 = vmul.f32 %v1137, %v1534
      %v1552 = vmul.f32 %v1138, %v1534
      %v1553 = vmul.f32 %v1139, %v1534
      %v1554 = vmul.f32 %v1140, %v1534
      %v1555 = vmul.f32 %v1141, %v1534
      %v1556 = vmul.f32 %v1142, %v1534
      %v1557 = vmul.f32 %v1143, %v1534
      %v1558 = vmul.f32 %v1144, %v1534
      %v1559 = vmul.f32 %v1145, %v1534
      %v1560 = vmul.f32 %v1146, %v1534
      %v1561 = vmul.f32 %v1147, %v1534
      %v1562 = vmul.f32 %v1148, %v1534
      %v1563 = vmul.f32 %v1149, %v1534
      %v1564 = vmul.f32 %v1150, %v1534
      %v1565 = vmul.f32 %v1151, %v1534
      %v1566 = vmul.f32 %v1152, %v1534
      %v1567 = vadd.f32 %v1499, %v1535
      %v1568 = vadd.f32 %v1500, %v1536
      %v1569 = vadd.f32 %v1501, %v1537
      %v1570 = vadd.f32 %v1502, %v1538
      %v1571 = vadd.f32 %v1503, %v1539
      %v1572 = vadd.f32 %v1504, %v1540
      %v1573 = vadd.f32 %v1505, %v1541
      %v1574 = vadd.f32 %v1506, %v1542
      %v1575 = vadd.f32 %v1507, %v1543
      %v1576 = vadd.f32 %v1508, %v1544
      %v1577 = vadd.f32 %v1509, %v1545
      %v1578 = vadd.f32 %v1510, %v1546
      %v1579 = vadd.f32 %v1511, %v1547
      %v1580 = vadd.f32 %v1512, %v1548
      %v1581 = vadd.f32 %v1513, %v1549
      %v1582 = vadd.f32 %v1514, %v1550
      %v1583 = vadd.f32 %v1515, %v1551
      %v1584 = vadd.f32 %v1516, %v1552
      %v1585 = vadd.f32 %v1517, %v1553
      %v1586 = vadd.f32 %v1518, %v1554
      %v1587 = vadd.f32 %v1519, %v1555
      %v1588 = vadd.f32 %v1520, %v1556
      %v1589 = vadd.f32 %v1521, %v1557
      %v1590 = vadd.f32 %v1522, %v1558
      %v1591 = vadd.f32 %v1523, %v1559
      %v1592 = vadd.f32 %v1524, %v1560
      %v1593 = vadd.f32 %v1525, %v1561
      %v1594 = vadd.f32 %v1526, %v1562
      %v1595 = vadd.f32 %v1527, %v1563
      %v1596 = vadd.f32 %v1528, %v1564
      %v1597 = vadd.f32 %v1529, %v1565
      %v1598 = vadd.f32 %v1530, %v1566
      %v1599 = vadd.f32 %v1077, %v1567
      %v1600 = vadd.f32 %v1078, %v1568
      %v1601 = vadd.f32 %v1079, %v1569
      %v1602 = vadd.f32 %v1080, %v1570
      %v1603 = vadd.f32 %v1081, %v1571
      %v1604 = vadd.f32 %v1082, %v1572
      %v1605 = vadd.f32 %v1083, %v1573
      %v1606 = vadd.f32 %v1084, %v1574
      %v1607 = vadd.f32 %v1085, %v1575
      %v1608 = vadd.f32 %v1086, %v1576
      %v1609 = vadd.f32 %v1087, %v1577
      %v1610 = vadd.f32 %v1088, %v1578
      %v1611 = vadd.f32 %v1089, %v1579
      %v1612 = vadd.f32 %v1090, %v1580
      %v1613 = vadd.f32 %v1091, %v1581
      %v1614 = vadd.f32 %v1092, %v1582
      %v1615 = vadd.f32 %v1093, %v1583
      %v1616 = vadd.f32 %v1094, %v1584
      %v1617 = vadd.f32 %v1095, %v1585
      %v1618 = vadd.f32 %v1096, %v1586
      %v1619 = vadd.f32 %v1097, %v1587
      %v1620 = vadd.f32 %v1098, %v1588
      %v1621 = vadd.f32 %v1099, %v1589
      %v1622 = vadd.f32 %v1100, %v1590
      %v1623 = vadd.f32 %v1101, %v1591
      %v1624 = vadd.f32 %v1102, %v1592
      %v1625 = vadd.f32 %v1103, %v1593
      %v1626 = vadd.f32 %v1104, %v1594
      %v1627 = vadd.f32 %v1105, %v1595
      %v1628 = vadd.f32 %v1106, %v1596
      %v1629 = vadd.f32 %v1107, %v1597
      %v1630 = vadd.f32 %v1108, %v1598
      %v1631 = vld [vmem:[#allocation2 + $0x7] sm:$0xff]
      %v1632 = vld [vmem:[#allocation2 + $0xf] sm:$0xff]
      %v1633 = vld [vmem:[#allocation2 + $0x27] sm:$0xff]
      %v1634 = vld [vmem:[#allocation2 + $0x2f] sm:$0xff]
      %v1635 = vld [vmem:[#allocation2 + $0x47] sm:$0xff]
      %v1636 = vld [vmem:[#allocation2 + $0x4f] sm:$0xff]
      %v1637 = vld [vmem:[#allocation2 + $0x67] sm:$0xff]
      %v1638 = vld [vmem:[#allocation2 + $0x6f] sm:$0xff]
      %v1639 = vld [vmem:[#allocation2 + $0x87] sm:$0xff]
      %v1640 = vld [vmem:[#allocation2 + $0x8f] sm:$0xff]
      %v1641 = vld [vmem:[#allocation2 + $0xa7] sm:$0xff]
      %v1642 = vld [vmem:[#allocation2 + $0xaf] sm:$0xff]
      %v1643 = vld [vmem:[#allocation2 + $0xc7] sm:$0xff]
      %v1644 = vld [vmem:[#allocation2 + $0xcf] sm:$0xff]
      %v1645 = vld [vmem:[#allocation2 + $0xe7] sm:$0xff]
      %v1646 = vld [vmem:[#allocation2 + $0xef] sm:$0xff]
      %v1647 = vld [vmem:[#allocation2 + $0x107] sm:$0xff]
      %v1648 = vld [vmem:[#allocation2 + $0x10f] sm:$0xff]
      %v1649 = vld [vmem:[#allocation2 + $0x127] sm:$0xff]
      %v1650 = vld [vmem:[#allocation2 + $0x12f] sm:$0xff]
      %v1651 = vld [vmem:[#allocation2 + $0x147] sm:$0xff]
      %v1652 = vld [vmem:[#allocation2 + $0x14f] sm:$0xff]
      %v1653 = vld [vmem:[#allocation2 + $0x167] sm:$0xff]
      %v1654 = vld [vmem:[#allocation2 + $0x16f] sm:$0xff]
      %v1655 = vld [vmem:[#allocation2 + $0x187] sm:$0xff]
      %v1656 = vld [vmem:[#allocation2 + $0x18f] sm:$0xff]
      %v1657 = vld [vmem:[#allocation2 + $0x1a7] sm:$0xff]
      %v1658 = vld [vmem:[#allocation2 + $0x1af] sm:$0xff]
      %v1659 = vld [vmem:[#allocation2 + $0x1c7] sm:$0xff]
      %v1660 = vld [vmem:[#allocation2 + $0x1cf] sm:$0xff]
      %v1661 = vld [vmem:[#allocation2 + $0x1e7] sm:$0xff]
      %v1662 = vld [vmem:[#allocation2 + $0x1ef] sm:$0xff]
      %v1663 = vld [vmem:[#allocation2 + $0x207] sm:$0xff]
      %v1664 = vld [vmem:[#allocation2 + $0x20f] sm:$0xff]
      %v1665 = vld [vmem:[#allocation2 + $0x227] sm:$0xff]
      %v1666 = vld [vmem:[#allocation2 + $0x22f] sm:$0xff]
      %v1667 = vld [vmem:[#allocation2 + $0x247] sm:$0xff]
      %v1668 = vld [vmem:[#allocation2 + $0x24f] sm:$0xff]
      %v1669 = vld [vmem:[#allocation2 + $0x267] sm:$0xff]
      %v1670 = vld [vmem:[#allocation2 + $0x26f] sm:$0xff]
      %v1671 = vld [vmem:[#allocation2 + $0x287] sm:$0xff]
      %v1672 = vld [vmem:[#allocation2 + $0x28f] sm:$0xff]
      %v1673 = vld [vmem:[#allocation2 + $0x2a7] sm:$0xff]
      %v1674 = vld [vmem:[#allocation2 + $0x2af] sm:$0xff]
      %s1675 = scalar_lea.vmem %s1, 16
      %v1676 = vld [vmem:[%s1675] sm:$0x7f]
      %v1677 = vlaneseq
      %v1678 = vshrl.u32 %v1677, 7
      %v1679 = vsub.s32 0, %v1678
      %v1680 = vrot.slane %v1676, %v1679
      %v1681 = vmul.f32 %v1631, %v1680
      %v1682 = vmul.f32 %v1632, %v1680
      %v1683 = vmul.f32 %v1633, %v1680
      %v1684 = vmul.f32 %v1634, %v1680
      %v1685 = vmul.f32 %v1635, %v1680
      %v1686 = vmul.f32 %v1636, %v1680
      %v1687 = vmul.f32 %v1637, %v1680
      %v1688 = vmul.f32 %v1638, %v1680
      %v1689 = vmul.f32 %v1639, %v1680
      %v1690 = vmul.f32 %v1640, %v1680
      %v1691 = vmul.f32 %v1641, %v1680
      %v1692 = vmul.f32 %v1642, %v1680
      %v1693 = vmul.f32 %v1643, %v1680
      %v1694 = vmul.f32 %v1644, %v1680
      %v1695 = vmul.f32 %v1645, %v1680
      %v1696 = vmul.f32 %v1646, %v1680
      %v1697 = vmul.f32 %v1647, %v1680
      %v1698 = vmul.f32 %v1648, %v1680
      %v1699 = vmul.f32 %v1649, %v1680
      %v1700 = vmul.f32 %v1650, %v1680
      %v1701 = vmul.f32 %v1651, %v1680
      %v1702 = vmul.f32 %v1652, %v1680
      %v1703 = vmul.f32 %v1653, %v1680
      %v1704 = vmul.f32 %v1654, %v1680
      %v1705 = vmul.f32 %v1655, %v1680
      %v1706 = vmul.f32 %v1656, %v1680
      %v1707 = vmul.f32 %v1657, %v1680
      %v1708 = vmul.f32 %v1658, %v1680
      %v1709 = vmul.f32 %v1659, %v1680
      %v1710 = vmul.f32 %v1660, %v1680
      %v1711 = vmul.f32 %v1661, %v1680
      %v1712 = vmul.f32 %v1662, %v1680
      %v1713 = vlaneseq
      %v1714 = vshrl.u32 %v1713, 7
      %v1715 = vsub.s32 1, %v1714
      %v1716 = vrot.slane %v1676, %v1715
      %v1717 = vmul.f32 %v1633, %v1716
      %v1718 = vmul.f32 %v1634, %v1716
      %v1719 = vmul.f32 %v1635, %v1716
      %v1720 = vmul.f32 %v1636, %v1716
      %v1721 = vmul.f32 %v1637, %v1716
      %v1722 = vmul.f32 %v1638, %v1716
      %v1723 = vmul.f32 %v1639, %v1716
      %v1724 = vmul.f32 %v1640, %v1716
      %v1725 = vmul.f32 %v1641, %v1716
      %v1726 = vmul.f32 %v1642, %v1716
      %v1727 = vmul.f32 %v1643, %v1716
      %v1728 = vmul.f32 %v1644, %v1716
      %v1729 = vmul.f32 %v1645, %v1716
      %v1730 = vmul.f32 %v1646, %v1716
      %v1731 = vmul.f32 %v1647, %v1716
      %v1732 = vmul.f32 %v1648, %v1716
      %v1733 = vmul.f32 %v1649, %v1716
      %v1734 = vmul.f32 %v1650, %v1716
      %v1735 = vmul.f32 %v1651, %v1716
      %v1736 = vmul.f32 %v1652, %v1716
      %v1737 = vmul.f32 %v1653, %v1716
      %v1738 = vmul.f32 %v1654, %v1716
      %v1739 = vmul.f32 %v1655, %v1716
      %v1740 = vmul.f32 %v1656, %v1716
      %v1741 = vmul.f32 %v1657, %v1716
      %v1742 = vmul.f32 %v1658, %v1716
      %v1743 = vmul.f32 %v1659, %v1716
      %v1744 = vmul.f32 %v1660, %v1716
      %v1745 = vmul.f32 %v1661, %v1716
      %v1746 = vmul.f32 %v1662, %v1716
      %v1747 = vmul.f32 %v1663, %v1716
      %v1748 = vmul.f32 %v1664, %v1716
      %v1749 = vadd.f32 %v1681, %v1717
      %v1750 = vadd.f32 %v1682, %v1718
      %v1751 = vadd.f32 %v1683, %v1719
      %v1752 = vadd.f32 %v1684, %v1720
      %v1753 = vadd.f32 %v1685, %v1721
      %v1754 = vadd.f32 %v1686, %v1722
      %v1755 = vadd.f32 %v1687, %v1723
      %v1756 = vadd.f32 %v1688, %v1724
      %v1757 = vadd.f32 %v1689, %v1725
      %v1758 = vadd.f32 %v1690, %v1726
      %v1759 = vadd.f32 %v1691, %v1727
      %v1760 = vadd.f32 %v1692, %v1728
      %v1761 = vadd.f32 %v1693, %v1729
      %v1762 = vadd.f32 %v1694, %v1730
      %v1763 = vadd.f32 %v1695, %v1731
      %v1764 = vadd.f32 %v1696, %v1732
      %v1765 = vadd.f32 %v1697, %v1733
      %v1766 = vadd.f32 %v1698, %v1734
      %v1767 = vadd.f32 %v1699, %v1735
      %v1768 = vadd.f32 %v1700, %v1736
      %v1769 = vadd.f32 %v1701, %v1737
      %v1770 = vadd.f32 %v1702, %v1738
      %v1771 = vadd.f32 %v1703, %v1739
      %v1772 = vadd.f32 %v1704, %v1740
      %v1773 = vadd.f32 %v1705, %v1741
      %v1774 = vadd.f32 %v1706, %v1742
      %v1775 = vadd.f32 %v1707, %v1743
      %v1776 = vadd.f32 %v1708, %v1744
      %v1777 = vadd.f32 %v1709, %v1745
      %v1778 = vadd.f32 %v1710, %v1746
      %v1779 = vadd.f32 %v1711, %v1747
      %v1780 = vadd.f32 %v1712, %v1748
      %v1781 = vlaneseq
      %v1782 = vshrl.u32 %v1781, 7
      %v1783 = vsub.s32 2, %v1782
      %v1784 = vrot.slane %v1676, %v1783
      %v1785 = vmul.f32 %v1635, %v1784
      %v1786 = vmul.f32 %v1636, %v1784
      %v1787 = vmul.f32 %v1637, %v1784
      %v1788 = vmul.f32 %v1638, %v1784
      %v1789 = vmul.f32 %v1639, %v1784
      %v1790 = vmul.f32 %v1640, %v1784
      %v1791 = vmul.f32 %v1641, %v1784
      %v1792 = vmul.f32 %v1642, %v1784
      %v1793 = vmul.f32 %v1643, %v1784
      %v1794 = vmul.f32 %v1644, %v1784
      %v1795 = vmul.f32 %v1645, %v1784
      %v1796 = vmul.f32 %v1646, %v1784
      %v1797 = vmul.f32 %v1647, %v1784
      %v1798 = vmul.f32 %v1648, %v1784
      %v1799 = vmul.f32 %v1649, %v1784
      %v1800 = vmul.f32 %v1650, %v1784
      %v1801 = vmul.f32 %v1651, %v1784
      %v1802 = vmul.f32 %v1652, %v1784
      %v1803 = vmul.f32 %v1653, %v1784
      %v1804 = vmul.f32 %v1654, %v1784
      %v1805 = vmul.f32 %v1655, %v1784
      %v1806 = vmul.f32 %v1656, %v1784
      %v1807 = vmul.f32 %v1657, %v1784
      %v1808 = vmul.f32 %v1658, %v1784
      %v1809 = vmul.f32 %v1659, %v1784
      %v1810 = vmul.f32 %v1660, %v1784
      %v1811 = vmul.f32 %v1661, %v1784
      %v1812 = vmul.f32 %v1662, %v1784
      %v1813 = vmul.f32 %v1663, %v1784
      %v1814 = vmul.f32 %v1664, %v1784
      %v1815 = vmul.f32 %v1665, %v1784
      %v1816 = vmul.f32 %v1666, %v1784
      %v1817 = vadd.f32 %v1749, %v1785
      %v1818 = vadd.f32 %v1750, %v1786
      %v1819 = vadd.f32 %v1751, %v1787
      %v1820 = vadd.f32 %v1752, %v1788
      %v1821 = vadd.f32 %v1753, %v1789
      %v1822 = vadd.f32 %v1754, %v1790
      %v1823 = vadd.f32 %v1755, %v1791
      %v1824 = vadd.f32 %v1756, %v1792
      %v1825 = vadd.f32 %v1757, %v1793
      %v1826 = vadd.f32 %v1758, %v1794
      %v1827 = vadd.f32 %v1759, %v1795
      %v1828 = vadd.f32 %v1760, %v1796
      %v1829 = vadd.f32 %v1761, %v1797
      %v1830 = vadd.f32 %v1762, %v1798
      %v1831 = vadd.f32 %v1763, %v1799
      %v1832 = vadd.f32 %v1764, %v1800
      %v1833 = vadd.f32 %v1765, %v1801
      %v1834 = vadd.f32 %v1766, %v1802
      %v1835 = vadd.f32 %v1767, %v1803
      %v1836 = vadd.f32 %v1768, %v1804
      %v1837 = vadd.f32 %v1769, %v1805
      %v1838 = vadd.f32 %v1770, %v1806
      %v1839 = vadd.f32 %v1771, %v1807
      %v1840 = vadd.f32 %v1772, %v1808
      %v1841 = vadd.f32 %v1773, %v1809
      %v1842 = vadd.f32 %v1774, %v1810
      %v1843 = vadd.f32 %v1775, %v1811
      %v1844 = vadd.f32 %v1776, %v1812
      %v1845 = vadd.f32 %v1777, %v1813
      %v1846 = vadd.f32 %v1778, %v1814
      %v1847 = vadd.f32 %v1779, %v1815
      %v1848 = vadd.f32 %v1780, %v1816
      %v1849 = vlaneseq
      %v1850 = vshrl.u32 %v1849, 7
      %v1851 = vsub.s32 3, %v1850
      %v1852 = vrot.slane %v1676, %v1851
      %v1853 = vmul.f32 %v1637, %v1852
      %v1854 = vmul.f32 %v1638, %v1852
      %v1855 = vmul.f32 %v1639, %v1852
      %v1856 = vmul.f32 %v1640, %v1852
      %v1857 = vmul.f32 %v1641, %v1852
      %v1858 = vmul.f32 %v1642, %v1852
      %v1859 = vmul.f32 %v1643, %v1852
      %v1860 = vmul.f32 %v1644, %v1852
      %v1861 = vmul.f32 %v1645, %v1852
      %v1862 = vmul.f32 %v1646, %v1852
      %v1863 = vmul.f32 %v1647, %v1852
      %v1864 = vmul.f32 %v1648, %v1852
      %v1865 = vmul.f32 %v1649, %v1852
      %v1866 = vmul.f32 %v1650, %v1852
      %v1867 = vmul.f32 %v1651, %v1852
      %v1868 = vmul.f32 %v1652, %v1852
      %v1869 = vmul.f32 %v1653, %v1852
      %v1870 = vmul.f32 %v1654, %v1852
      %v1871 = vmul.f32 %v1655, %v1852
      %v1872 = vmul.f32 %v1656, %v1852
      %v1873 = vmul.f32 %v1657, %v1852
      %v1874 = vmul.f32 %v1658, %v1852
      %v1875 = vmul.f32 %v1659, %v1852
      %v1876 = vmul.f32 %v1660, %v1852
      %v1877 = vmul.f32 %v1661, %v1852
      %v1878 = vmul.f32 %v1662, %v1852
      %v1879 = vmul.f32 %v1663, %v1852
      %v1880 = vmul.f32 %v1664, %v1852
      %v1881 = vmul.f32 %v1665, %v1852
      %v1882 = vmul.f32 %v1666, %v1852
      %v1883 = vmul.f32 %v1667, %v1852
      %v1884 = vmul.f32 %v1668, %v1852
      %v1885 = vadd.f32 %v1817, %v1853
      %v1886 = vadd.f32 %v1818, %v1854
      %v1887 = vadd.f32 %v1819, %v1855
      %v1888 = vadd.f32 %v1820, %v1856
      %v1889 = vadd.f32 %v1821, %v1857
      %v1890 = vadd.f32 %v1822, %v1858
      %v1891 = vadd.f32 %v1823, %v1859
      %v1892 = vadd.f32 %v1824, %v1860
      %v1893 = vadd.f32 %v1825, %v1861
      %v1894 = vadd.f32 %v1826, %v1862
      %v1895 = vadd.f32 %v1827, %v1863
      %v1896 = vadd.f32 %v1828, %v1864
      %v1897 = vadd.f32 %v1829, %v1865
      %v1898 = vadd.f32 %v1830, %v1866
      %v1899 = vadd.f32 %v1831, %v1867
      %v1900 = vadd.f32 %v1832, %v1868
      %v1901 = vadd.f32 %v1833, %v1869
      %v1902 = vadd.f32 %v1834, %v1870
      %v1903 = vadd.f32 %v1835, %v1871
      %v1904 = vadd.f32 %v1836, %v1872
      %v1905 = vadd.f32 %v1837, %v1873
      %v1906 = vadd.f32 %v1838, %v1874
      %v1907 = vadd.f32 %v1839, %v1875
      %v1908 = vadd.f32 %v1840, %v1876
      %v1909 = vadd.f32 %v1841, %v1877
      %v1910 = vadd.f32 %v1842, %v1878
      %v1911 = vadd.f32 %v1843, %v1879
      %v1912 = vadd.f32 %v1844, %v1880
      %v1913 = vadd.f32 %v1845, %v1881
      %v1914 = vadd.f32 %v1846, %v1882
      %v1915 = vadd.f32 %v1847, %v1883
      %v1916 = vadd.f32 %v1848, %v1884
      %v1917 = vlaneseq
      %v1918 = vshrl.u32 %v1917, 7
      %v1919 = vsub.s32 4, %v1918
      %v1920 = vrot.slane %v1676, %v1919
      %v1921 = vmul.f32 %v1639, %v1920
      %v1922 = vmul.f32 %v1640, %v1920
      %v1923 = vmul.f32 %v1641, %v1920
      %v1924 = vmul.f32 %v1642, %v1920
      %v1925 = vmul.f32 %v1643, %v1920
      %v1926 = vmul.f32 %v1644, %v1920
      %v1927 = vmul.f32 %v1645, %v1920
      %v1928 = vmul.f32 %v1646, %v1920
      %v1929 = vmul.f32 %v1647, %v1920
      %v1930 = vmul.f32 %v1648, %v1920
      %v1931 = vmul.f32 %v1649, %v1920
      %v1932 = vmul.f32 %v1650, %v1920
      %v1933 = vmul.f32 %v1651, %v1920
      %v1934 = vmul.f32 %v1652, %v1920
      %v1935 = vmul.f32 %v1653, %v1920
      %v1936 = vmul.f32 %v1654, %v1920
      %v1937 = vmul.f32 %v1655, %v1920
      %v1938 = vmul.f32 %v1656, %v1920
      %v1939 = vmul.f32 %v1657, %v1920
      %v1940 = vmul.f32 %v1658, %v1920
      %v1941 = vmul.f32 %v1659, %v1920
      %v1942 = vmul.f32 %v1660, %v1920
      %v1943 = vmul.f32 %v1661, %v1920
      %v1944 = vmul.f32 %v1662, %v1920
      %v1945 = vmul.f32 %v1663, %v1920
      %v1946 = vmul.f32 %v1664, %v1920
      %v1947 = vmul.f32 %v1665, %v1920
      %v1948 = vmul.f32 %v1666, %v1920
      %v1949 = vmul.f32 %v1667, %v1920
      %v1950 = vmul.f32 %v1668, %v1920
      %v1951 = vmul.f32 %v1669, %v1920
      %v1952 = vmul.f32 %v1670, %v1920
      %v1953 = vadd.f32 %v1885, %v1921
      %v1954 = vadd.f32 %v1886, %v1922
      %v1955 = vadd.f32 %v1887, %v1923
      %v1956 = vadd.f32 %v1888, %v1924
      %v1957 = vadd.f32 %v1889, %v1925
      %v1958 = vadd.f32 %v1890, %v1926
      %v1959 = vadd.f32 %v1891, %v1927
      %v1960 = vadd.f32 %v1892, %v1928
      %v1961 = vadd.f32 %v1893, %v1929
      %v1962 = vadd.f32 %v1894, %v1930
      %v1963 = vadd.f32 %v1895, %v1931
      %v1964 = vadd.f32 %v1896, %v1932
      %v1965 = vadd.f32 %v1897, %v1933
      %v1966 = vadd.f32 %v1898, %v1934
      %v1967 = vadd.f32 %v1899, %v1935
      %v1968 = vadd.f32 %v1900, %v1936
      %v1969 = vadd.f32 %v1901, %v1937
      %v1970 = vadd.f32 %v1902, %v1938
      %v1971 = vadd.f32 %v1903, %v1939
      %v1972 = vadd.f32 %v1904, %v1940
      %v1973 = vadd.f32 %v1905, %v1941
      %v1974 = vadd.f32 %v1906, %v1942
      %v1975 = vadd.f32 %v1907, %v1943
      %v1976 = vadd.f32 %v1908, %v1944
      %v1977 = vadd.f32 %v1909, %v1945
      %v1978 = vadd.f32 %v1910, %v1946
      %v1979 = vadd.f32 %v1911, %v1947
      %v1980 = vadd.f32 %v1912, %v1948
      %v1981 = vadd.f32 %v1913, %v1949
      %v1982 = vadd.f32 %v1914, %v1950
      %v1983 = vadd.f32 %v1915, %v1951
      %v1984 = vadd.f32 %v1916, %v1952
      %v1985 = vlaneseq
      %v1986 = vshrl.u32 %v1985, 7
      %v1987 = vsub.s32 5, %v1986
      %v1988 = vrot.slane %v1676, %v1987
      %v1989 = vmul.f32 %v1641, %v1988
      %v1990 = vmul.f32 %v1642, %v1988
      %v1991 = vmul.f32 %v1643, %v1988
      %v1992 = vmul.f32 %v1644, %v1988
      %v1993 = vmul.f32 %v1645, %v1988
      %v1994 = vmul.f32 %v1646, %v1988
      %v1995 = vmul.f32 %v1647, %v1988
      %v1996 = vmul.f32 %v1648, %v1988
      %v1997 = vmul.f32 %v1649, %v1988
      %v1998 = vmul.f32 %v1650, %v1988
      %v1999 = vmul.f32 %v1651, %v1988
      %v2000 = vmul.f32 %v1652, %v1988
      %v2001 = vmul.f32 %v1653, %v1988
      %v2002 = vmul.f32 %v1654, %v1988
      %v2003 = vmul.f32 %v1655, %v1988
      %v2004 = vmul.f32 %v1656, %v1988
      %v2005 = vmul.f32 %v1657, %v1988
      %v2006 = vmul.f32 %v1658, %v1988
      %v2007 = vmul.f32 %v1659, %v1988
      %v2008 = vmul.f32 %v1660, %v1988
      %v2009 = vmul.f32 %v1661, %v1988
      %v2010 = vmul.f32 %v1662, %v1988
      %v2011 = vmul.f32 %v1663, %v1988
      %v2012 = vmul.f32 %v1664, %v1988
      %v2013 = vmul.f32 %v1665, %v1988
      %v2014 = vmul.f32 %v1666, %v1988
      %v2015 = vmul.f32 %v1667, %v1988
      %v2016 = vmul.f32 %v1668, %v1988
      %v2017 = vmul.f32 %v1669, %v1988
      %v2018 = vmul.f32 %v1670, %v1988
      %v2019 = vmul.f32 %v1671, %v1988
      %v2020 = vmul.f32 %v1672, %v1988
      %v2021 = vadd.f32 %v1953, %v1989
      %v2022 = vadd.f32 %v1954, %v1990
      %v2023 = vadd.f32 %v1955, %v1991
      %v2024 = vadd.f32 %v1956, %v1992
      %v2025 = vadd.f32 %v1957, %v1993
      %v2026 = vadd.f32 %v1958, %v1994
      %v2027 = vadd.f32 %v1959, %v1995
      %v2028 = vadd.f32 %v1960, %v1996
      %v2029 = vadd.f32 %v1961, %v1997
      %v2030 = vadd.f32 %v1962, %v1998
      %v2031 = vadd.f32 %v1963, %v1999
      %v2032 = vadd.f32 %v1964, %v2000
      %v2033 = vadd.f32 %v1965, %v2001
      %v2034 = vadd.f32 %v1966, %v2002
      %v2035 = vadd.f32 %v1967, %v2003
      %v2036 = vadd.f32 %v1968, %v2004
      %v2037 = vadd.f32 %v1969, %v2005
      %v2038 = vadd.f32 %v1970, %v2006
      %v2039 = vadd.f32 %v1971, %v2007
      %v2040 = vadd.f32 %v1972, %v2008
      %v2041 = vadd.f32 %v1973, %v2009
      %v2042 = vadd.f32 %v1974, %v2010
      %v2043 = vadd.f32 %v1975, %v2011
      %v2044 = vadd.f32 %v1976, %v2012
      %v2045 = vadd.f32 %v1977, %v2013
      %v2046 = vadd.f32 %v1978, %v2014
      %v2047 = vadd.f32 %v1979, %v2015
      %v2048 = vadd.f32 %v1980, %v2016
      %v2049 = vadd.f32 %v1981, %v2017
      %v2050 = vadd.f32 %v1982, %v2018
      %v2051 = vadd.f32 %v1983, %v2019
      %v2052 = vadd.f32 %v1984, %v2020
      %v2053 = vlaneseq
      %v2054 = vshrl.u32 %v2053, 7
      %v2055 = vsub.s32 6, %v2054
      %v2056 = vrot.slane %v1676, %v2055
      %v2057 = vmul.f32 %v1643, %v2056
      %v2058 = vmul.f32 %v1644, %v2056
      %v2059 = vmul.f32 %v1645, %v2056
      %v2060 = vmul.f32 %v1646, %v2056
      %v2061 = vmul.f32 %v1647, %v2056
      %v2062 = vmul.f32 %v1648, %v2056
      %v2063 = vmul.f32 %v1649, %v2056
      %v2064 = vmul.f32 %v1650, %v2056
      %v2065 = vmul.f32 %v1651, %v2056
      %v2066 = vmul.f32 %v1652, %v2056
      %v2067 = vmul.f32 %v1653, %v2056
      %v2068 = vmul.f32 %v1654, %v2056
      %v2069 = vmul.f32 %v1655, %v2056
      %v2070 = vmul.f32 %v1656, %v2056
      %v2071 = vmul.f32 %v1657, %v2056
      %v2072 = vmul.f32 %v1658, %v2056
      %v2073 = vmul.f32 %v1659, %v2056
      %v2074 = vmul.f32 %v1660, %v2056
      %v2075 = vmul.f32 %v1661, %v2056
      %v2076 = vmul.f32 %v1662, %v2056
      %v2077 = vmul.f32 %v1663, %v2056
      %v2078 = vmul.f32 %v1664, %v2056
      %v2079 = vmul.f32 %v1665, %v2056
      %v2080 = vmul.f32 %v1666, %v2056
      %v2081 = vmul.f32 %v1667, %v2056
      %v2082 = vmul.f32 %v1668, %v2056
      %v2083 = vmul.f32 %v1669, %v2056
      %v2084 = vmul.f32 %v1670, %v2056
      %v2085 = vmul.f32 %v1671, %v2056
      %v2086 = vmul.f32 %v1672, %v2056
      %v2087 = vmul.f32 %v1673, %v2056
      %v2088 = vmul.f32 %v1674, %v2056
      %v2089 = vadd.f32 %v2021, %v2057
      %v2090 = vadd.f32 %v2022, %v2058
      %v2091 = vadd.f32 %v2023, %v2059
      %v2092 = vadd.f32 %v2024, %v2060
      %v2093 = vadd.f32 %v2025, %v2061
      %v2094 = vadd.f32 %v2026, %v2062
      %v2095 = vadd.f32 %v2027, %v2063
      %v2096 = vadd.f32 %v2028, %v2064
      %v2097 = vadd.f32 %v2029, %v2065
      %v2098 = vadd.f32 %v2030, %v2066
      %v2099 = vadd.f32 %v2031, %v2067
      %v2100 = vadd.f32 %v2032, %v2068
      %v2101 = vadd.f32 %v2033, %v2069
      %v2102 = vadd.f32 %v2034, %v2070
      %v2103 = vadd.f32 %v2035, %v2071
      %v2104 = vadd.f32 %v2036, %v2072
      %v2105 = vadd.f32 %v2037, %v2073
      %v2106 = vadd.f32 %v2038, %v2074
      %v2107 = vadd.f32 %v2039, %v2075
      %v2108 = vadd.f32 %v2040, %v2076
      %v2109 = vadd.f32 %v2041, %v2077
      %v2110 = vadd.f32 %v2042, %v2078
      %v2111 = vadd.f32 %v2043, %v2079
      %v2112 = vadd.f32 %v2044, %v2080
      %v2113 = vadd.f32 %v2045, %v2081
      %v2114 = vadd.f32 %v2046, %v2082
      %v2115 = vadd.f32 %v2047, %v2083
      %v2116 = vadd.f32 %v2048, %v2084
      %v2117 = vadd.f32 %v2049, %v2085
      %v2118 = vadd.f32 %v2050, %v2086
      %v2119 = vadd.f32 %v2051, %v2087
      %v2120 = vadd.f32 %v2052, %v2088
      %v2121 = vadd.f32 %v1599, %v2089
      %v2122 = vadd.f32 %v1600, %v2090
      %v2123 = vadd.f32 %v1601, %v2091
      %v2124 = vadd.f32 %v1602, %v2092
      %v2125 = vadd.f32 %v1603, %v2093
      %v2126 = vadd.f32 %v1604, %v2094
      %v2127 = vadd.f32 %v1605, %v2095
      %v2128 = vadd.f32 %v1606, %v2096
      %v2129 = vadd.f32 %v1607, %v2097
      %v2130 = vadd.f32 %v1608, %v2098
      %v2131 = vadd.f32 %v1609, %v2099
      %v2132 = vadd.f32 %v1610, %v2100
      %v2133 = vadd.f32 %v1611, %v2101
      %v2134 = vadd.f32 %v1612, %v2102
      %v2135 = vadd.f32 %v1613, %v2103
      %v2136 = vadd.f32 %v1614, %v2104
      %v2137 = vadd.f32 %v1615, %v2105
      %v2138 = vadd.f32 %v1616, %v2106
      %v2139 = vadd.f32 %v1617, %v2107
      %v2140 = vadd.f32 %v1618, %v2108
      %v2141 = vadd.f32 %v1619, %v2109
      %v2142 = vadd.f32 %v1620, %v2110
      %v2143 = vadd.f32 %v1621, %v2111
      %v2144 = vadd.f32 %v1622, %v2112
      %v2145 = vadd.f32 %v1623, %v2113
      %v2146 = vadd.f32 %v1624, %v2114
      %v2147 = vadd.f32 %v1625, %v2115
      %v2148 = vadd.f32 %v1626, %v2116
      %v2149 = vadd.f32 %v1627, %v2117
      %v2150 = vadd.f32 %v1628, %v2118
      %v2151 = vadd.f32 %v1629, %v2119
      %v2152 = vadd.f32 %v1630, %v2120
      %v2153 = vld [vmem:[#allocation2 + $0x8] sm:$0xff]
      %v2154 = vld [vmem:[#allocation2 + $0x10] sm:$0xff]
      %v2155 = vld [vmem:[#allocation2 + $0x28] sm:$0xff]
      %v2156 = vld [vmem:[#allocation2 + $0x30] sm:$0xff]
      %v2157 = vld [vmem:[#allocation2 + $0x48] sm:$0xff]
      %v2158 = vld [vmem:[#allocation2 + $0x50] sm:$0xff]
      %v2159 = vld [vmem:[#allocation2 + $0x68] sm:$0xff]
      %v2160 = vld [vmem:[#allocation2 + $0x70] sm:$0xff]
      %v2161 = vld [vmem:[#allocation2 + $0x88] sm:$0xff]
      %v2162 = vld [vmem:[#allocation2 + $0x90] sm:$0xff]
      %v2163 = vld [vmem:[#allocation2 + $0xa8] sm:$0xff]
      %v2164 = vld [vmem:[#allocation2 + $0xb0] sm:$0xff]
      %v2165 = vld [vmem:[#allocation2 + $0xc8] sm:$0xff]
      %v2166 = vld [vmem:[#allocation2 + $0xd0] sm:$0xff]
      %v2167 = vld [vmem:[#allocation2 + $0xe8] sm:$0xff]
      %v2168 = vld [vmem:[#allocation2 + $0xf0] sm:$0xff]
      %v2169 = vld [vmem:[#allocation2 + $0x108] sm:$0xff]
      %v2170 = vld [vmem:[#allocation2 + $0x110] sm:$0xff]
      %v2171 = vld [vmem:[#allocation2 + $0x128] sm:$0xff]
      %v2172 = vld [vmem:[#allocation2 + $0x130] sm:$0xff]
      %v2173 = vld [vmem:[#allocation2 + $0x148] sm:$0xff]
      %v2174 = vld [vmem:[#allocation2 + $0x150] sm:$0xff]
      %v2175 = vld [vmem:[#allocation2 + $0x168] sm:$0xff]
      %v2176 = vld [vmem:[#allocation2 + $0x170] sm:$0xff]
      %v2177 = vld [vmem:[#allocation2 + $0x188] sm:$0xff]
      %v2178 = vld [vmem:[#allocation2 + $0x190] sm:$0xff]
      %v2179 = vld [vmem:[#allocation2 + $0x1a8] sm:$0xff]
      %v2180 = vld [vmem:[#allocation2 + $0x1b0] sm:$0xff]
      %v2181 = vld [vmem:[#allocation2 + $0x1c8] sm:$0xff]
      %v2182 = vld [vmem:[#allocation2 + $0x1d0] sm:$0xff]
      %v2183 = vld [vmem:[#allocation2 + $0x1e8] sm:$0xff]
      %v2184 = vld [vmem:[#allocation2 + $0x1f0] sm:$0xff]
      %v2185 = vld [vmem:[#allocation2 + $0x208] sm:$0xff]
      %v2186 = vld [vmem:[#allocation2 + $0x210] sm:$0xff]
      %v2187 = vld [vmem:[#allocation2 + $0x228] sm:$0xff]
      %v2188 = vld [vmem:[#allocation2 + $0x230] sm:$0xff]
      %v2189 = vld [vmem:[#allocation2 + $0x248] sm:$0xff]
      %v2190 = vld [vmem:[#allocation2 + $0x250] sm:$0xff]
      %v2191 = vld [vmem:[#allocation2 + $0x268] sm:$0xff]
      %v2192 = vld [vmem:[#allocation2 + $0x270] sm:$0xff]
      %v2193 = vld [vmem:[#allocation2 + $0x288] sm:$0xff]
      %v2194 = vld [vmem:[#allocation2 + $0x290] sm:$0xff]
      %v2195 = vld [vmem:[#allocation2 + $0x2a8] sm:$0xff]
      %v2196 = vld [vmem:[#allocation2 + $0x2b0] sm:$0xff]
      %s2197 = scalar_lea.vmem %s1, 24
      %v2198 = vld [vmem:[%s2197] sm:$0x7f]
      %v2199 = vlaneseq
      %v2200 = vshrl.u32 %v2199, 7
      %v2201 = vsub.s32 0, %v2200
      %v2202 = vrot.slane %v2198, %v2201
      %v2203 = vmul.f32 %v2153, %v2202
      %v2204 = vmul.f32 %v2154, %v2202
      %v2205 = vmul.f32 %v2155, %v2202
      %v2206 = vmul.f32 %v2156, %v2202
      %v2207 = vmul.f32 %v2157, %v2202
      %v2208 = vmul.f32 %v2158, %v2202
      %v2209 = vmul.f32 %v2159, %v2202
      %v2210 = vmul.f32 %v2160, %v2202
      %v2211 = vmul.f32 %v2161, %v2202
      %v2212 = vmul.f32 %v2162, %v2202
      %v2213 = vmul.f32 %v2163, %v2202
      %v2214 = vmul.f32 %v2164, %v2202
      %v2215 = vmul.f32 %v2165, %v2202
      %v2216 = vmul.f32 %v2166, %v2202
      %v2217 = vmul.f32 %v2167, %v2202
      %v2218 = vmul.f32 %v2168, %v2202
      %v2219 = vmul.f32 %v2169, %v2202
      %v2220 = vmul.f32 %v2170, %v2202
      %v2221 = vmul.f32 %v2171, %v2202
      %v2222 = vmul.f32 %v2172, %v2202
      %v2223 = vmul.f32 %v2173, %v2202
      %v2224 = vmul.f32 %v2174, %v2202
      %v2225 = vmul.f32 %v2175, %v2202
      %v2226 = vmul.f32 %v2176, %v2202
      %v2227 = vmul.f32 %v2177, %v2202
      %v2228 = vmul.f32 %v2178, %v2202
      %v2229 = vmul.f32 %v2179, %v2202
      %v2230 = vmul.f32 %v2180, %v2202
      %v2231 = vmul.f32 %v2181, %v2202
      %v2232 = vmul.f32 %v2182, %v2202
      %v2233 = vmul.f32 %v2183, %v2202
      %v2234 = vmul.f32 %v2184, %v2202
      %v2235 = vlaneseq
      %v2236 = vshrl.u32 %v2235, 7
      %v2237 = vsub.s32 1, %v2236
      %v2238 = vrot.slane %v2198, %v2237
      %v2239 = vmul.f32 %v2155, %v2238
      %v2240 = vmul.f32 %v2156, %v2238
      %v2241 = vmul.f32 %v2157, %v2238
      %v2242 = vmul.f32 %v2158, %v2238
      %v2243 = vmul.f32 %v2159, %v2238
      %v2244 = vmul.f32 %v2160, %v2238
      %v2245 = vmul.f32 %v2161, %v2238
      %v2246 = vmul.f32 %v2162, %v2238
      %v2247 = vmul.f32 %v2163, %v2238
      %v2248 = vmul.f32 %v2164, %v2238
      %v2249 = vmul.f32 %v2165, %v2238
      %v2250 = vmul.f32 %v2166, %v2238
      %v2251 = vmul.f32 %v2167, %v2238
      %v2252 = vmul.f32 %v2168, %v2238
      %v2253 = vmul.f32 %v2169, %v2238
      %v2254 = vmul.f32 %v2170, %v2238
      %v2255 = vmul.f32 %v2171, %v2238
      %v2256 = vmul.f32 %v2172, %v2238
      %v2257 = vmul.f32 %v2173, %v2238
      %v2258 = vmul.f32 %v2174, %v2238
      %v2259 = vmul.f32 %v2175, %v2238
      %v2260 = vmul.f32 %v2176, %v2238
      %v2261 = vmul.f32 %v2177, %v2238
      %v2262 = vmul.f32 %v2178, %v2238
      %v2263 = vmul.f32 %v2179, %v2238
      %v2264 = vmul.f32 %v2180, %v2238
      %v2265 = vmul.f32 %v2181, %v2238
      %v2266 = vmul.f32 %v2182, %v2238
      %v2267 = vmul.f32 %v2183, %v2238
      %v2268 = vmul.f32 %v2184, %v2238
      %v2269 = vmul.f32 %v2185, %v2238
      %v2270 = vmul.f32 %v2186, %v2238
      %v2271 = vadd.f32 %v2203, %v2239
      %v2272 = vadd.f32 %v2204, %v2240
      %v2273 = vadd.f32 %v2205, %v2241
      %v2274 = vadd.f32 %v2206, %v2242
      %v2275 = vadd.f32 %v2207, %v2243
      %v2276 = vadd.f32 %v2208, %v2244
      %v2277 = vadd.f32 %v2209, %v2245
      %v2278 = vadd.f32 %v2210, %v2246
      %v2279 = vadd.f32 %v2211, %v2247
      %v2280 = vadd.f32 %v2212, %v2248
      %v2281 = vadd.f32 %v2213, %v2249
      %v2282 = vadd.f32 %v2214, %v2250
      %v2283 = vadd.f32 %v2215, %v2251
      %v2284 = vadd.f32 %v2216, %v2252
      %v2285 = vadd.f32 %v2217, %v2253
      %v2286 = vadd.f32 %v2218, %v2254
      %v2287 = vadd.f32 %v2219, %v2255
      %v2288 = vadd.f32 %v2220, %v2256
      %v2289 = vadd.f32 %v2221, %v2257
      %v2290 = vadd.f32 %v2222, %v2258
      %v2291 = vadd.f32 %v2223, %v2259
      %v2292 = vadd.f32 %v2224, %v2260
      %v2293 = vadd.f32 %v2225, %v2261
      %v2294 = vadd.f32 %v2226, %v2262
      %v2295 = vadd.f32 %v2227, %v2263
      %v2296 = vadd.f32 %v2228, %v2264
      %v2297 = vadd.f32 %v2229, %v2265
      %v2298 = vadd.f32 %v2230, %v2266
      %v2299 = vadd.f32 %v2231, %v2267
      %v2300 = vadd.f32 %v2232, %v2268
      %v2301 = vadd.f32 %v2233, %v2269
      %v2302 = vadd.f32 %v2234, %v2270
      %v2303 = vlaneseq
      %v2304 = vshrl.u32 %v2303, 7
      %v2305 = vsub.s32 2, %v2304
      %v2306 = vrot.slane %v2198, %v2305
      %v2307 = vmul.f32 %v2157, %v2306
      %v2308 = vmul.f32 %v2158, %v2306
      %v2309 = vmul.f32 %v2159, %v2306
      %v2310 = vmul.f32 %v2160, %v2306
      %v2311 = vmul.f32 %v2161, %v2306
      %v2312 = vmul.f32 %v2162, %v2306
      %v2313 = vmul.f32 %v2163, %v2306
      %v2314 = vmul.f32 %v2164, %v2306
      %v2315 = vmul.f32 %v2165, %v2306
      %v2316 = vmul.f32 %v2166, %v2306
      %v2317 = vmul.f32 %v2167, %v2306
      %v2318 = vmul.f32 %v2168, %v2306
      %v2319 = vmul.f32 %v2169, %v2306
      %v2320 = vmul.f32 %v2170, %v2306
      %v2321 = vmul.f32 %v2171, %v2306
      %v2322 = vmul.f32 %v2172, %v2306
      %v2323 = vmul.f32 %v2173, %v2306
      %v2324 = vmul.f32 %v2174, %v2306
      %v2325 = vmul.f32 %v2175, %v2306
      %v2326 = vmul.f32 %v2176, %v2306
      %v2327 = vmul.f32 %v2177, %v2306
      %v2328 = vmul.f32 %v2178, %v2306
      %v2329 = vmul.f32 %v2179, %v2306
      %v2330 = vmul.f32 %v2180, %v2306
      %v2331 = vmul.f32 %v2181, %v2306
      %v2332 = vmul.f32 %v2182, %v2306
      %v2333 = vmul.f32 %v2183, %v2306
      %v2334 = vmul.f32 %v2184, %v2306
      %v2335 = vmul.f32 %v2185, %v2306
      %v2336 = vmul.f32 %v2186, %v2306
      %v2337 = vmul.f32 %v2187, %v2306
      %v2338 = vmul.f32 %v2188, %v2306
      %v2339 = vadd.f32 %v2271, %v2307
      %v2340 = vadd.f32 %v2272, %v2308
      %v2341 = vadd.f32 %v2273, %v2309
      %v2342 = vadd.f32 %v2274, %v2310
      %v2343 = vadd.f32 %v2275, %v2311
      %v2344 = vadd.f32 %v2276, %v2312
      %v2345 = vadd.f32 %v2277, %v2313
      %v2346 = vadd.f32 %v2278, %v2314
      %v2347 = vadd.f32 %v2279, %v2315
      %v2348 = vadd.f32 %v2280, %v2316
      %v2349 = vadd.f32 %v2281, %v2317
      %v2350 = vadd.f32 %v2282, %v2318
      %v2351 = vadd.f32 %v2283, %v2319
      %v2352 = vadd.f32 %v2284, %v2320
      %v2353 = vadd.f32 %v2285, %v2321
      %v2354 = vadd.f32 %v2286, %v2322
      %v2355 = vadd.f32 %v2287, %v2323
      %v2356 = vadd.f32 %v2288, %v2324
      %v2357 = vadd.f32 %v2289, %v2325
      %v2358 = vadd.f32 %v2290, %v2326
      %v2359 = vadd.f32 %v2291, %v2327
      %v2360 = vadd.f32 %v2292, %v2328
      %v2361 = vadd.f32 %v2293, %v2329
      %v2362 = vadd.f32 %v2294, %v2330
      %v2363 = vadd.f32 %v2295, %v2331
      %v2364 = vadd.f32 %v2296, %v2332
      %v2365 = vadd.f32 %v2297, %v2333
      %v2366 = vadd.f32 %v2298, %v2334
      %v2367 = vadd.f32 %v2299, %v2335
      %v2368 = vadd.f32 %v2300, %v2336
      %v2369 = vadd.f32 %v2301, %v2337
      %v2370 = vadd.f32 %v2302, %v2338
      %v2371 = vlaneseq
      %v2372 = vshrl.u32 %v2371, 7
      %v2373 = vsub.s32 3, %v2372
      %v2374 = vrot.slane %v2198, %v2373
      %v2375 = vmul.f32 %v2159, %v2374
      %v2376 = vmul.f32 %v2160, %v2374
      %v2377 = vmul.f32 %v2161, %v2374
      %v2378 = vmul.f32 %v2162, %v2374
      %v2379 = vmul.f32 %v2163, %v2374
      %v2380 = vmul.f32 %v2164, %v2374
      %v2381 = vmul.f32 %v2165, %v2374
      %v2382 = vmul.f32 %v2166, %v2374
      %v2383 = vmul.f32 %v2167, %v2374
      %v2384 = vmul.f32 %v2168, %v2374
      %v2385 = vmul.f32 %v2169, %v2374
      %v2386 = vmul.f32 %v2170, %v2374
      %v2387 = vmul.f32 %v2171, %v2374
      %v2388 = vmul.f32 %v2172, %v2374
      %v2389 = vmul.f32 %v2173, %v2374
      %v2390 = vmul.f32 %v2174, %v2374
      %v2391 = vmul.f32 %v2175, %v2374
      %v2392 = vmul.f32 %v2176, %v2374
      %v2393 = vmul.f32 %v2177, %v2374
      %v2394 = vmul.f32 %v2178, %v2374
      %v2395 = vmul.f32 %v2179, %v2374
      %v2396 = vmul.f32 %v2180, %v2374
      %v2397 = vmul.f32 %v2181, %v2374
      %v2398 = vmul.f32 %v2182, %v2374
      %v2399 = vmul.f32 %v2183, %v2374
      %v2400 = vmul.f32 %v2184, %v2374
      %v2401 = vmul.f32 %v2185, %v2374
      %v2402 = vmul.f32 %v2186, %v2374
      %v2403 = vmul.f32 %v2187, %v2374
      %v2404 = vmul.f32 %v2188, %v2374
      %v2405 = vmul.f32 %v2189, %v2374
      %v2406 = vmul.f32 %v2190, %v2374
      %v2407 = vadd.f32 %v2339, %v2375
      %v2408 = vadd.f32 %v2340, %v2376
      %v2409 = vadd.f32 %v2341, %v2377
      %v2410 = vadd.f32 %v2342, %v2378
      %v2411 = vadd.f32 %v2343, %v2379
      %v2412 = vadd.f32 %v2344, %v2380
      %v2413 = vadd.f32 %v2345, %v2381
      %v2414 = vadd.f32 %v2346, %v2382
      %v2415 = vadd.f32 %v2347, %v2383
      %v2416 = vadd.f32 %v2348, %v2384
      %v2417 = vadd.f32 %v2349, %v2385
      %v2418 = vadd.f32 %v2350, %v2386
      %v2419 = vadd.f32 %v2351, %v2387
      %v2420 = vadd.f32 %v2352, %v2388
      %v2421 = vadd.f32 %v2353, %v2389
      %v2422 = vadd.f32 %v2354, %v2390
      %v2423 = vadd.f32 %v2355, %v2391
      %v2424 = vadd.f32 %v2356, %v2392
      %v2425 = vadd.f32 %v2357, %v2393
      %v2426 = vadd.f32 %v2358, %v2394
      %v2427 = vadd.f32 %v2359, %v2395
      %v2428 = vadd.f32 %v2360, %v2396
      %v2429 = vadd.f32 %v2361, %v2397
      %v2430 = vadd.f32 %v2362, %v2398
      %v2431 = vadd.f32 %v2363, %v2399
      %v2432 = vadd.f32 %v2364, %v2400
      %v2433 = vadd.f32 %v2365, %v2401
      %v2434 = vadd.f32 %v2366, %v2402
      %v2435 = vadd.f32 %v2367, %v2403
      %v2436 = vadd.f32 %v2368, %v2404
      %v2437 = vadd.f32 %v2369, %v2405
      %v2438 = vadd.f32 %v2370, %v2406
      %v2439 = vlaneseq
      %v2440 = vshrl.u32 %v2439, 7
      %v2441 = vsub.s32 4, %v2440
      %v2442 = vrot.slane %v2198, %v2441
      %v2443 = vmul.f32 %v2161, %v2442
      %v2444 = vmul.f32 %v2162, %v2442
      %v2445 = vmul.f32 %v2163, %v2442
      %v2446 = vmul.f32 %v2164, %v2442
      %v2447 = vmul.f32 %v2165, %v2442
      %v2448 = vmul.f32 %v2166, %v2442
      %v2449 = vmul.f32 %v2167, %v2442
      %v2450 = vmul.f32 %v2168, %v2442
      %v2451 = vmul.f32 %v2169, %v2442
      %v2452 = vmul.f32 %v2170, %v2442
      %v2453 = vmul.f32 %v2171, %v2442
      %v2454 = vmul.f32 %v2172, %v2442
      %v2455 = vmul.f32 %v2173, %v2442
      %v2456 = vmul.f32 %v2174, %v2442
      %v2457 = vmul.f32 %v2175, %v2442
      %v2458 = vmul.f32 %v2176, %v2442
      %v2459 = vmul.f32 %v2177, %v2442
      %v2460 = vmul.f32 %v2178, %v2442
      %v2461 = vmul.f32 %v2179, %v2442
      %v2462 = vmul.f32 %v2180, %v2442
      %v2463 = vmul.f32 %v2181, %v2442
      %v2464 = vmul.f32 %v2182, %v2442
      %v2465 = vmul.f32 %v2183, %v2442
      %v2466 = vmul.f32 %v2184, %v2442
      %v2467 = vmul.f32 %v2185, %v2442
      %v2468 = vmul.f32 %v2186, %v2442
      %v2469 = vmul.f32 %v2187, %v2442
      %v2470 = vmul.f32 %v2188, %v2442
      %v2471 = vmul.f32 %v2189, %v2442
      %v2472 = vmul.f32 %v2190, %v2442
      %v2473 = vmul.f32 %v2191, %v2442
      %v2474 = vmul.f32 %v2192, %v2442
      %v2475 = vadd.f32 %v2407, %v2443
      %v2476 = vadd.f32 %v2408, %v2444
      %v2477 = vadd.f32 %v2409, %v2445
      %v2478 = vadd.f32 %v2410, %v2446
      %v2479 = vadd.f32 %v2411, %v2447
      %v2480 = vadd.f32 %v2412, %v2448
      %v2481 = vadd.f32 %v2413, %v2449
      %v2482 = vadd.f32 %v2414, %v2450
      %v2483 = vadd.f32 %v2415, %v2451
      %v2484 = vadd.f32 %v2416, %v2452
      %v2485 = vadd.f32 %v2417, %v2453
      %v2486 = vadd.f32 %v2418, %v2454
      %v2487 = vadd.f32 %v2419, %v2455
      %v2488 = vadd.f32 %v2420, %v2456
      %v2489 = vadd.f32 %v2421, %v2457
      %v2490 = vadd.f32 %v2422, %v2458
      %v2491 = vadd.f32 %v2423, %v2459
      %v2492 = vadd.f32 %v2424, %v2460
      %v2493 = vadd.f32 %v2425, %v2461
      %v2494 = vadd.f32 %v2426, %v2462
      %v2495 = vadd.f32 %v2427, %v2463
      %v2496 = vadd.f32 %v2428, %v2464
      %v2497 = vadd.f32 %v2429, %v2465
      %v2498 = vadd.f32 %v2430, %v2466
      %v2499 = vadd.f32 %v2431, %v2467
      %v2500 = vadd.f32 %v2432, %v2468
      %v2501 = vadd.f32 %v2433, %v2469
      %v2502 = vadd.f32 %v2434, %v2470
      %v2503 = vadd.f32 %v2435, %v2471
      %v2504 = vadd.f32 %v2436, %v2472
      %v2505 = vadd.f32 %v2437, %v2473
      %v2506 = vadd.f32 %v2438, %v2474
      %v2507 = vlaneseq
      %v2508 = vshrl.u32 %v2507, 7
      %v2509 = vsub.s32 5, %v2508
      %v2510 = vrot.slane %v2198, %v2509
      %v2511 = vmul.f32 %v2163, %v2510
      %v2512 = vmul.f32 %v2164, %v2510
      %v2513 = vmul.f32 %v2165, %v2510
      %v2514 = vmul.f32 %v2166, %v2510
      %v2515 = vmul.f32 %v2167, %v2510
      %v2516 = vmul.f32 %v2168, %v2510
      %v2517 = vmul.f32 %v2169, %v2510
      %v2518 = vmul.f32 %v2170, %v2510
      %v2519 = vmul.f32 %v2171, %v2510
      %v2520 = vmul.f32 %v2172, %v2510
      %v2521 = vmul.f32 %v2173, %v2510
      %v2522 = vmul.f32 %v2174, %v2510
      %v2523 = vmul.f32 %v2175, %v2510
      %v2524 = vmul.f32 %v2176, %v2510
      %v2525 = vmul.f32 %v2177, %v2510
      %v2526 = vmul.f32 %v2178, %v2510
      %v2527 = vmul.f32 %v2179, %v2510
      %v2528 = vmul.f32 %v2180, %v2510
      %v2529 = vmul.f32 %v2181, %v2510
      %v2530 = vmul.f32 %v2182, %v2510
      %v2531 = vmul.f32 %v2183, %v2510
      %v2532 = vmul.f32 %v2184, %v2510
      %v2533 = vmul.f32 %v2185, %v2510
      %v2534 = vmul.f32 %v2186, %v2510
      %v2535 = vmul.f32 %v2187, %v2510
      %v2536 = vmul.f32 %v2188, %v2510
      %v2537 = vmul.f32 %v2189, %v2510
      %v2538 = vmul.f32 %v2190, %v2510
      %v2539 = vmul.f32 %v2191, %v2510
      %v2540 = vmul.f32 %v2192, %v2510
      %v2541 = vmul.f32 %v2193, %v2510
      %v2542 = vmul.f32 %v2194, %v2510
      %v2543 = vadd.f32 %v2475, %v2511
      %v2544 = vadd.f32 %v2476, %v2512
      %v2545 = vadd.f32 %v2477, %v2513
      %v2546 = vadd.f32 %v2478, %v2514
      %v2547 = vadd.f32 %v2479, %v2515
      %v2548 = vadd.f32 %v2480, %v2516
      %v2549 = vadd.f32 %v2481, %v2517
      %v2550 = vadd.f32 %v2482, %v2518
      %v2551 = vadd.f32 %v2483, %v2519
      %v2552 = vadd.f32 %v2484, %v2520
      %v2553 = vadd.f32 %v2485, %v2521
      %v2554 = vadd.f32 %v2486, %v2522
      %v2555 = vadd.f32 %v2487, %v2523
      %v2556 = vadd.f32 %v2488, %v2524
      %v2557 = vadd.f32 %v2489, %v2525
      %v2558 = vadd.f32 %v2490, %v2526
      %v2559 = vadd.f32 %v2491, %v2527
      %v2560 = vadd.f32 %v2492, %v2528
      %v2561 = vadd.f32 %v2493, %v2529
      %v2562 = vadd.f32 %v2494, %v2530
      %v2563 = vadd.f32 %v2495, %v2531
      %v2564 = vadd.f32 %v2496, %v2532
      %v2565 = vadd.f32 %v2497, %v2533
      %v2566 = vadd.f32 %v2498, %v2534
      %v2567 = vadd.f32 %v2499, %v2535
      %v2568 = vadd.f32 %v2500, %v2536
      %v2569 = vadd.f32 %v2501, %v2537
      %v2570 = vadd.f32 %v2502, %v2538
      %v2571 = vadd.f32 %v2503, %v2539
      %v2572 = vadd.f32 %v2504, %v2540
      %v2573 = vadd.f32 %v2505, %v2541
      %v2574 = vadd.f32 %v2506, %v2542
      %v2575 = vlaneseq
      %v2576 = vshrl.u32 %v2575, 7
      %v2577 = vsub.s32 6, %v2576
      %v2578 = vrot.slane %v2198, %v2577
      %v2579 = vmul.f32 %v2165, %v2578
      %v2580 = vmul.f32 %v2166, %v2578
      %v2581 = vmul.f32 %v2167, %v2578
      %v2582 = vmul.f32 %v2168, %v2578
      %v2583 = vmul.f32 %v2169, %v2578
      %v2584 = vmul.f32 %v2170, %v2578
      %v2585 = vmul.f32 %v2171, %v2578
      %v2586 = vmul.f32 %v2172, %v2578
      %v2587 = vmul.f32 %v2173, %v2578
      %v2588 = vmul.f32 %v2174, %v2578
      %v2589 = vmul.f32 %v2175, %v2578
      %v2590 = vmul.f32 %v2176, %v2578
      %v2591 = vmul.f32 %v2177, %v2578
      %v2592 = vmul.f32 %v2178, %v2578
      %v2593 = vmul.f32 %v2179, %v2578
      %v2594 = vmul.f32 %v2180, %v2578
      %v2595 = vmul.f32 %v2181, %v2578
      %v2596 = vmul.f32 %v2182, %v2578
      %v2597 = vmul.f32 %v2183, %v2578
      %v2598 = vmul.f32 %v2184, %v2578
      %v2599 = vmul.f32 %v2185, %v2578
      %v2600 = vmul.f32 %v2186, %v2578
      %v2601 = vmul.f32 %v2187, %v2578
      %v2602 = vmul.f32 %v2188, %v2578
      %v2603 = vmul.f32 %v2189, %v2578
      %v2604 = vmul.f32 %v2190, %v2578
      %v2605 = vmul.f32 %v2191, %v2578
      %v2606 = vmul.f32 %v2192, %v2578
      %v2607 = vmul.f32 %v2193, %v2578
      %v2608 = vmul.f32 %v2194, %v2578
      %v2609 = vmul.f32 %v2195, %v2578
      %v2610 = vmul.f32 %v2196, %v2578
      %v2611 = vadd.f32 %v2543, %v2579
      %v2612 = vadd.f32 %v2544, %v2580
      %v2613 = vadd.f32 %v2545, %v2581
      %v2614 = vadd.f32 %v2546, %v2582
      %v2615 = vadd.f32 %v2547, %v2583
      %v2616 = vadd.f32 %v2548, %v2584
      %v2617 = vadd.f32 %v2549, %v2585
      %v2618 = vadd.f32 %v2550, %v2586
      %v2619 = vadd.f32 %v2551, %v2587
      %v2620 = vadd.f32 %v2552, %v2588
      %v2621 = vadd.f32 %v2553, %v2589
      %v2622 = vadd.f32 %v2554, %v2590
      %v2623 = vadd.f32 %v2555, %v2591
      %v2624 = vadd.f32 %v2556, %v2592
      %v2625 = vadd.f32 %v2557, %v2593
      %v2626 = vadd.f32 %v2558, %v2594
      %v2627 = vadd.f32 %v2559, %v2595
      %v2628 = vadd.f32 %v2560, %v2596
      %v2629 = vadd.f32 %v2561, %v2597
      %v2630 = vadd.f32 %v2562, %v2598
      %v2631 = vadd.f32 %v2563, %v2599
      %v2632 = vadd.f32 %v2564, %v2600
      %v2633 = vadd.f32 %v2565, %v2601
      %v2634 = vadd.f32 %v2566, %v2602
      %v2635 = vadd.f32 %v2567, %v2603
      %v2636 = vadd.f32 %v2568, %v2604
      %v2637 = vadd.f32 %v2569, %v2605
      %v2638 = vadd.f32 %v2570, %v2606
      %v2639 = vadd.f32 %v2571, %v2607
      %v2640 = vadd.f32 %v2572, %v2608
      %v2641 = vadd.f32 %v2573, %v2609
      %v2642 = vadd.f32 %v2574, %v2610
      %v2643 = vadd.f32 %v2121, %v2611
      %v2644 = vadd.f32 %v2122, %v2612
      %v2645 = vadd.f32 %v2123, %v2613
      %v2646 = vadd.f32 %v2124, %v2614
      %v2647 = vadd.f32 %v2125, %v2615
      %v2648 = vadd.f32 %v2126, %v2616
      %v2649 = vadd.f32 %v2127, %v2617
      %v2650 = vadd.f32 %v2128, %v2618
      %v2651 = vadd.f32 %v2129, %v2619
      %v2652 = vadd.f32 %v2130, %v2620
      %v2653 = vadd.f32 %v2131, %v2621
      %v2654 = vadd.f32 %v2132, %v2622
      %v2655 = vadd.f32 %v2133, %v2623
      %v2656 = vadd.f32 %v2134, %v2624
      %v2657 = vadd.f32 %v2135, %v2625
      %v2658 = vadd.f32 %v2136, %v2626
      %v2659 = vadd.f32 %v2137, %v2627
      %v2660 = vadd.f32 %v2138, %v2628
      %v2661 = vadd.f32 %v2139, %v2629
      %v2662 = vadd.f32 %v2140, %v2630
      %v2663 = vadd.f32 %v2141, %v2631
      %v2664 = vadd.f32 %v2142, %v2632
      %v2665 = vadd.f32 %v2143, %v2633
      %v2666 = vadd.f32 %v2144, %v2634
      %v2667 = vadd.f32 %v2145, %v2635
      %v2668 = vadd.f32 %v2146, %v2636
      %v2669 = vadd.f32 %v2147, %v2637
      %v2670 = vadd.f32 %v2148, %v2638
      %v2671 = vadd.f32 %v2149, %v2639
      %v2672 = vadd.f32 %v2150, %v2640
      %v2673 = vadd.f32 %v2151, %v2641
      %v2674 = vadd.f32 %v2152, %v2642
      %v2675 = vld [vmem:[#allocation2 + $0x9] sm:$0xff]
      %v2676 = vld [vmem:[#allocation2 + $0x11] sm:$0xff]
      %v2677 = vld [vmem:[#allocation2 + $0x29] sm:$0xff]
      %v2678 = vld [vmem:[#allocation2 + $0x31] sm:$0xff]
      %v2679 = vld [vmem:[#allocation2 + $0x49] sm:$0xff]
      %v2680 = vld [vmem:[#allocation2 + $0x51] sm:$0xff]
      %v2681 = vld [vmem:[#allocation2 + $0x69] sm:$0xff]
      %v2682 = vld [vmem:[#allocation2 + $0x71] sm:$0xff]
      %v2683 = vld [vmem:[#allocation2 + $0x89] sm:$0xff]
      %v2684 = vld [vmem:[#allocation2 + $0x91] sm:$0xff]
      %v2685 = vld [vmem:[#allocation2 + $0xa9] sm:$0xff]
      %v2686 = vld [vmem:[#allocation2 + $0xb1] sm:$0xff]
      %v2687 = vld [vmem:[#allocation2 + $0xc9] sm:$0xff]
      %v2688 = vld [vmem:[#allocation2 + $0xd1] sm:$0xff]
      %v2689 = vld [vmem:[#allocation2 + $0xe9] sm:$0xff]
      %v2690 = vld [vmem:[#allocation2 + $0xf1] sm:$0xff]
      %v2691 = vld [vmem:[#allocation2 + $0x109] sm:$0xff]
      %v2692 = vld [vmem:[#allocation2 + $0x111] sm:$0xff]
      %v2693 = vld [vmem:[#allocation2 + $0x129] sm:$0xff]
      %v2694 = vld [vmem:[#allocation2 + $0x131] sm:$0xff]
      %v2695 = vld [vmem:[#allocation2 + $0x149] sm:$0xff]
      %v2696 = vld [vmem:[#allocation2 + $0x151] sm:$0xff]
      %v2697 = vld [vmem:[#allocation2 + $0x169] sm:$0xff]
      %v2698 = vld [vmem:[#allocation2 + $0x171] sm:$0xff]
      %v2699 = vld [vmem:[#allocation2 + $0x189] sm:$0xff]
      %v2700 = vld [vmem:[#allocation2 + $0x191] sm:$0xff]
      %v2701 = vld [vmem:[#allocation2 + $0x1a9] sm:$0xff]
      %v2702 = vld [vmem:[#allocation2 + $0x1b1] sm:$0xff]
      %v2703 = vld [vmem:[#allocation2 + $0x1c9] sm:$0xff]
      %v2704 = vld [vmem:[#allocation2 + $0x1d1] sm:$0xff]
      %v2705 = vld [vmem:[#allocation2 + $0x1e9] sm:$0xff]
      %v2706 = vld [vmem:[#allocation2 + $0x1f1] sm:$0xff]
      %v2707 = vld [vmem:[#allocation2 + $0x209] sm:$0xff]
      %v2708 = vld [vmem:[#allocation2 + $0x211] sm:$0xff]
      %v2709 = vld [vmem:[#allocation2 + $0x229] sm:$0xff]
      %v2710 = vld [vmem:[#allocation2 + $0x231] sm:$0xff]
      %v2711 = vld [vmem:[#allocation2 + $0x249] sm:$0xff]
      %v2712 = vld [vmem:[#allocation2 + $0x251] sm:$0xff]
      %v2713 = vld [vmem:[#allocation2 + $0x269] sm:$0xff]
      %v2714 = vld [vmem:[#allocation2 + $0x271] sm:$0xff]
      %v2715 = vld [vmem:[#allocation2 + $0x289] sm:$0xff]
      %v2716 = vld [vmem:[#allocation2 + $0x291] sm:$0xff]
      %v2717 = vld [vmem:[#allocation2 + $0x2a9] sm:$0xff]
      %v2718 = vld [vmem:[#allocation2 + $0x2b1] sm:$0xff]
      %s2719 = scalar_lea.vmem %s1, 32
      %v2720 = vld [vmem:[%s2719] sm:$0x7f]
      %v2721 = vlaneseq
      %v2722 = vshrl.u32 %v2721, 7
      %v2723 = vsub.s32 0, %v2722
      %v2724 = vrot.slane %v2720, %v2723
      %v2725 = vmul.f32 %v2675, %v2724
      %v2726 = vmul.f32 %v2676, %v2724
      %v2727 = vmul.f32 %v2677, %v2724
      %v2728 = vmul.f32 %v2678, %v2724
      %v2729 = vmul.f32 %v2679, %v2724
      %v2730 = vmul.f32 %v2680, %v2724
      %v2731 = vmul.f32 %v2681, %v2724
      %v2732 = vmul.f32 %v2682, %v2724
      %v2733 = vmul.f32 %v2683, %v2724
      %v2734 = vmul.f32 %v2684, %v2724
      %v2735 = vmul.f32 %v2685, %v2724
      %v2736 = vmul.f32 %v2686, %v2724
      %v2737 = vmul.f32 %v2687, %v2724
      %v2738 = vmul.f32 %v2688, %v2724
      %v2739 = vmul.f32 %v2689, %v2724
      %v2740 = vmul.f32 %v2690, %v2724
      %v2741 = vmul.f32 %v2691, %v2724
      %v2742 = vmul.f32 %v2692, %v2724
      %v2743 = vmul.f32 %v2693, %v2724
      %v2744 = vmul.f32 %v2694, %v2724
      %v2745 = vmul.f32 %v2695, %v2724
      %v2746 = vmul.f32 %v2696, %v2724
      %v2747 = vmul.f32 %v2697, %v2724
      %v2748 = vmul.f32 %v2698, %v2724
      %v2749 = vmul.f32 %v2699, %v2724
      %v2750 = vmul.f32 %v2700, %v2724
      %v2751 = vmul.f32 %v2701, %v2724
      %v2752 = vmul.f32 %v2702, %v2724
      %v2753 = vmul.f32 %v2703, %v2724
      %v2754 = vmul.f32 %v2704, %v2724
      %v2755 = vmul.f32 %v2705, %v2724
      %v2756 = vmul.f32 %v2706, %v2724
      %v2757 = vlaneseq
      %v2758 = vshrl.u32 %v2757, 7
      %v2759 = vsub.s32 1, %v2758
      %v2760 = vrot.slane %v2720, %v2759
      %v2761 = vmul.f32 %v2677, %v2760
      %v2762 = vmul.f32 %v2678, %v2760
      %v2763 = vmul.f32 %v2679, %v2760
      %v2764 = vmul.f32 %v2680, %v2760
      %v2765 = vmul.f32 %v2681, %v2760
      %v2766 = vmul.f32 %v2682, %v2760
      %v2767 = vmul.f32 %v2683, %v2760
      %v2768 = vmul.f32 %v2684, %v2760
      %v2769 = vmul.f32 %v2685, %v2760
      %v2770 = vmul.f32 %v2686, %v2760
      %v2771 = vmul.f32 %v2687, %v2760
      %v2772 = vmul.f32 %v2688, %v2760
      %v2773 = vmul.f32 %v2689, %v2760
      %v2774 = vmul.f32 %v2690, %v2760
      %v2775 = vmul.f32 %v2691, %v2760
      %v2776 = vmul.f32 %v2692, %v2760
      %v2777 = vmul.f32 %v2693, %v2760
      %v2778 = vmul.f32 %v2694, %v2760
      %v2779 = vmul.f32 %v2695, %v2760
      %v2780 = vmul.f32 %v2696, %v2760
      %v2781 = vmul.f32 %v2697, %v2760
      %v2782 = vmul.f32 %v2698, %v2760
      %v2783 = vmul.f32 %v2699, %v2760
      %v2784 = vmul.f32 %v2700, %v2760
      %v2785 = vmul.f32 %v2701, %v2760
      %v2786 = vmul.f32 %v2702, %v2760
      %v2787 = vmul.f32 %v2703, %v2760
      %v2788 = vmul.f32 %v2704, %v2760
      %v2789 = vmul.f32 %v2705, %v2760
      %v2790 = vmul.f32 %v2706, %v2760
      %v2791 = vmul.f32 %v2707, %v2760
      %v2792 = vmul.f32 %v2708, %v2760
      %v2793 = vadd.f32 %v2725, %v2761
      %v2794 = vadd.f32 %v2726, %v2762
      %v2795 = vadd.f32 %v2727, %v2763
      %v2796 = vadd.f32 %v2728, %v2764
      %v2797 = vadd.f32 %v2729, %v2765
      %v2798 = vadd.f32 %v2730, %v2766
      %v2799 = vadd.f32 %v2731, %v2767
      %v2800 = vadd.f32 %v2732, %v2768
      %v2801 = vadd.f32 %v2733, %v2769
      %v2802 = vadd.f32 %v2734, %v2770
      %v2803 = vadd.f32 %v2735, %v2771
      %v2804 = vadd.f32 %v2736, %v2772
      %v2805 = vadd.f32 %v2737, %v2773
      %v2806 = vadd.f32 %v2738, %v2774
      %v2807 = vadd.f32 %v2739, %v2775
      %v2808 = vadd.f32 %v2740, %v2776
      %v2809 = vadd.f32 %v2741, %v2777
      %v2810 = vadd.f32 %v2742, %v2778
      %v2811 = vadd.f32 %v2743, %v2779
      %v2812 = vadd.f32 %v2744, %v2780
      %v2813 = vadd.f32 %v2745, %v2781
      %v2814 = vadd.f32 %v2746, %v2782
      %v2815 = vadd.f32 %v2747, %v2783
      %v2816 = vadd.f32 %v2748, %v2784
      %v2817 = vadd.f32 %v2749, %v2785
      %v2818 = vadd.f32 %v2750, %v2786
      %v2819 = vadd.f32 %v2751, %v2787
      %v2820 = vadd.f32 %v2752, %v2788
      %v2821 = vadd.f32 %v2753, %v2789
      %v2822 = vadd.f32 %v2754, %v2790
      %v2823 = vadd.f32 %v2755, %v2791
      %v2824 = vadd.f32 %v2756, %v2792
      %v2825 = vlaneseq
      %v2826 = vshrl.u32 %v2825, 7
      %v2827 = vsub.s32 2, %v2826
      %v2828 = vrot.slane %v2720, %v2827
      %v2829 = vmul.f32 %v2679, %v2828
      %v2830 = vmul.f32 %v2680, %v2828
      %v2831 = vmul.f32 %v2681, %v2828
      %v2832 = vmul.f32 %v2682, %v2828
      %v2833 = vmul.f32 %v2683, %v2828
      %v2834 = vmul.f32 %v2684, %v2828
      %v2835 = vmul.f32 %v2685, %v2828
      %v2836 = vmul.f32 %v2686, %v2828
      %v2837 = vmul.f32 %v2687, %v2828
      %v2838 = vmul.f32 %v2688, %v2828
      %v2839 = vmul.f32 %v2689, %v2828
      %v2840 = vmul.f32 %v2690, %v2828
      %v2841 = vmul.f32 %v2691, %v2828
      %v2842 = vmul.f32 %v2692, %v2828
      %v2843 = vmul.f32 %v2693, %v2828
      %v2844 = vmul.f32 %v2694, %v2828
      %v2845 = vmul.f32 %v2695, %v2828
      %v2846 = vmul.f32 %v2696, %v2828
      %v2847 = vmul.f32 %v2697, %v2828
      %v2848 = vmul.f32 %v2698, %v2828
      %v2849 = vmul.f32 %v2699, %v2828
      %v2850 = vmul.f32 %v2700, %v2828
      %v2851 = vmul.f32 %v2701, %v2828
      %v2852 = vmul.f32 %v2702, %v2828
      %v2853 = vmul.f32 %v2703, %v2828
      %v2854 = vmul.f32 %v2704, %v2828
      %v2855 = vmul.f32 %v2705, %v2828
      %v2856 = vmul.f32 %v2706, %v2828
      %v2857 = vmul.f32 %v2707, %v2828
      %v2858 = vmul.f32 %v2708, %v2828
      %v2859 = vmul.f32 %v2709, %v2828
      %v2860 = vmul.f32 %v2710, %v2828
      %v2861 = vadd.f32 %v2793, %v2829
      %v2862 = vadd.f32 %v2794, %v2830
      %v2863 = vadd.f32 %v2795, %v2831
      %v2864 = vadd.f32 %v2796, %v2832
      %v2865 = vadd.f32 %v2797, %v2833
      %v2866 = vadd.f32 %v2798, %v2834
      %v2867 = vadd.f32 %v2799, %v2835
      %v2868 = vadd.f32 %v2800, %v2836
      %v2869 = vadd.f32 %v2801, %v2837
      %v2870 = vadd.f32 %v2802, %v2838
      %v2871 = vadd.f32 %v2803, %v2839
      %v2872 = vadd.f32 %v2804, %v2840
      %v2873 = vadd.f32 %v2805, %v2841
      %v2874 = vadd.f32 %v2806, %v2842
      %v2875 = vadd.f32 %v2807, %v2843
      %v2876 = vadd.f32 %v2808, %v2844
      %v2877 = vadd.f32 %v2809, %v2845
      %v2878 = vadd.f32 %v2810, %v2846
      %v2879 = vadd.f32 %v2811, %v2847
      %v2880 = vadd.f32 %v2812, %v2848
      %v2881 = vadd.f32 %v2813, %v2849
      %v2882 = vadd.f32 %v2814, %v2850
      %v2883 = vadd.f32 %v2815, %v2851
      %v2884 = vadd.f32 %v2816, %v2852
      %v2885 = vadd.f32 %v2817, %v2853
      %v2886 = vadd.f32 %v2818, %v2854
      %v2887 = vadd.f32 %v2819, %v2855
      %v2888 = vadd.f32 %v2820, %v2856
      %v2889 = vadd.f32 %v2821, %v2857
      %v2890 = vadd.f32 %v2822, %v2858
      %v2891 = vadd.f32 %v2823, %v2859
      %v2892 = vadd.f32 %v2824, %v2860
      %v2893 = vlaneseq
      %v2894 = vshrl.u32 %v2893, 7
      %v2895 = vsub.s32 3, %v2894
      %v2896 = vrot.slane %v2720, %v2895
      %v2897 = vmul.f32 %v2681, %v2896
      %v2898 = vmul.f32 %v2682, %v2896
      %v2899 = vmul.f32 %v2683, %v2896
      %v2900 = vmul.f32 %v2684, %v2896
      %v2901 = vmul.f32 %v2685, %v2896
      %v2902 = vmul.f32 %v2686, %v2896
      %v2903 = vmul.f32 %v2687, %v2896
      %v2904 = vmul.f32 %v2688, %v2896
      %v2905 = vmul.f32 %v2689, %v2896
      %v2906 = vmul.f32 %v2690, %v2896
      %v2907 = vmul.f32 %v2691, %v2896
      %v2908 = vmul.f32 %v2692, %v2896
      %v2909 = vmul.f32 %v2693, %v2896
      %v2910 = vmul.f32 %v2694, %v2896
      %v2911 = vmul.f32 %v2695, %v2896
      %v2912 = vmul.f32 %v2696, %v2896
      %v2913 = vmul.f32 %v2697, %v2896
      %v2914 = vmul.f32 %v2698, %v2896
      %v2915 = vmul.f32 %v2699, %v2896
      %v2916 = vmul.f32 %v2700, %v2896
      %v2917 = vmul.f32 %v2701, %v2896
      %v2918 = vmul.f32 %v2702, %v2896
      %v2919 = vmul.f32 %v2703, %v2896
      %v2920 = vmul.f32 %v2704, %v2896
      %v2921 = vmul.f32 %v2705, %v2896
      %v2922 = vmul.f32 %v2706, %v2896
      %v2923 = vmul.f32 %v2707, %v2896
      %v2924 = vmul.f32 %v2708, %v2896
      %v2925 = vmul.f32 %v2709, %v2896
      %v2926 = vmul.f32 %v2710, %v2896
      %v2927 = vmul.f32 %v2711, %v2896
      %v2928 = vmul.f32 %v2712, %v2896
      %v2929 = vadd.f32 %v2861, %v2897
      %v2930 = vadd.f32 %v2862, %v2898
      %v2931 = vadd.f32 %v2863, %v2899
      %v2932 = vadd.f32 %v2864, %v2900
      %v2933 = vadd.f32 %v2865, %v2901
      %v2934 = vadd.f32 %v2866, %v2902
      %v2935 = vadd.f32 %v2867, %v2903
      %v2936 = vadd.f32 %v2868, %v2904
      %v2937 = vadd.f32 %v2869, %v2905
      %v2938 = vadd.f32 %v2870, %v2906
      %v2939 = vadd.f32 %v2871, %v2907
      %v2940 = vadd.f32 %v2872, %v2908
      %v2941 = vadd.f32 %v2873, %v2909
      %v2942 = vadd.f32 %v2874, %v2910
      %v2943 = vadd.f32 %v2875, %v2911
      %v2944 = vadd.f32 %v2876, %v2912
      %v2945 = vadd.f32 %v2877, %v2913
      %v2946 = vadd.f32 %v2878, %v2914
      %v2947 = vadd.f32 %v2879, %v2915
      %v2948 = vadd.f32 %v2880, %v2916
      %v2949 = vadd.f32 %v2881, %v2917
      %v2950 = vadd.f32 %v2882, %v2918
      %v2951 = vadd.f32 %v2883, %v2919
      %v2952 = vadd.f32 %v2884, %v2920
      %v2953 = vadd.f32 %v2885, %v2921
      %v2954 = vadd.f32 %v2886, %v2922
      %v2955 = vadd.f32 %v2887, %v2923
      %v2956 = vadd.f32 %v2888, %v2924
      %v2957 = vadd.f32 %v2889, %v2925
      %v2958 = vadd.f32 %v2890, %v2926
      %v2959 = vadd.f32 %v2891, %v2927
      %v2960 = vadd.f32 %v2892, %v2928
      %v2961 = vlaneseq
      %v2962 = vshrl.u32 %v2961, 7
      %v2963 = vsub.s32 4, %v2962
      %v2964 = vrot.slane %v2720, %v2963
      %v2965 = vmul.f32 %v2683, %v2964
      %v2966 = vmul.f32 %v2684, %v2964
      %v2967 = vmul.f32 %v2685, %v2964
      %v2968 = vmul.f32 %v2686, %v2964
      %v2969 = vmul.f32 %v2687, %v2964
      %v2970 = vmul.f32 %v2688, %v2964
      %v2971 = vmul.f32 %v2689, %v2964
      %v2972 = vmul.f32 %v2690, %v2964
      %v2973 = vmul.f32 %v2691, %v2964
      %v2974 = vmul.f32 %v2692, %v2964
      %v2975 = vmul.f32 %v2693, %v2964
      %v2976 = vmul.f32 %v2694, %v2964
      %v2977 = vmul.f32 %v2695, %v2964
      %v2978 = vmul.f32 %v2696, %v2964
      %v2979 = vmul.f32 %v2697, %v2964
      %v2980 = vmul.f32 %v2698, %v2964
      %v2981 = vmul.f32 %v2699, %v2964
      %v2982 = vmul.f32 %v2700, %v2964
      %v2983 = vmul.f32 %v2701, %v2964
      %v2984 = vmul.f32 %v2702, %v2964
      %v2985 = vmul.f32 %v2703, %v2964
      %v2986 = vmul.f32 %v2704, %v2964
      %v2987 = vmul.f32 %v2705, %v2964
      %v2988 = vmul.f32 %v2706, %v2964
      %v2989 = vmul.f32 %v2707, %v2964
      %v2990 = vmul.f32 %v2708, %v2964
      %v2991 = vmul.f32 %v2709, %v2964
      %v2992 = vmul.f32 %v2710, %v2964
      %v2993 = vmul.f32 %v2711, %v2964
      %v2994 = vmul.f32 %v2712, %v2964
      %v2995 = vmul.f32 %v2713, %v2964
      %v2996 = vmul.f32 %v2714, %v2964
      %v2997 = vadd.f32 %v2929, %v2965
      %v2998 = vadd.f32 %v2930, %v2966
      %v2999 = vadd.f32 %v2931, %v2967
      %v3000 = vadd.f32 %v2932, %v2968
      %v3001 = vadd.f32 %v2933, %v2969
      %v3002 = vadd.f32 %v2934, %v2970
      %v3003 = vadd.f32 %v2935, %v2971
      %v3004 = vadd.f32 %v2936, %v2972
      %v3005 = vadd.f32 %v2937, %v2973
      %v3006 = vadd.f32 %v2938, %v2974
      %v3007 = vadd.f32 %v2939, %v2975
      %v3008 = vadd.f32 %v2940, %v2976
      %v3009 = vadd.f32 %v2941, %v2977
      %v3010 = vadd.f32 %v2942, %v2978
      %v3011 = vadd.f32 %v2943, %v2979
      %v3012 = vadd.f32 %v2944, %v2980
      %v3013 = vadd.f32 %v2945, %v2981
      %v3014 = vadd.f32 %v2946, %v2982
      %v3015 = vadd.f32 %v2947, %v2983
      %v3016 = vadd.f32 %v2948, %v2984
      %v3017 = vadd.f32 %v2949, %v2985
      %v3018 = vadd.f32 %v2950, %v2986
      %v3019 = vadd.f32 %v2951, %v2987
      %v3020 = vadd.f32 %v2952, %v2988
      %v3021 = vadd.f32 %v2953, %v2989
      %v3022 = vadd.f32 %v2954, %v2990
      %v3023 = vadd.f32 %v2955, %v2991
      %v3024 = vadd.f32 %v2956, %v2992
      %v3025 = vadd.f32 %v2957, %v2993
      %v3026 = vadd.f32 %v2958, %v2994
      %v3027 = vadd.f32 %v2959, %v2995
      %v3028 = vadd.f32 %v2960, %v2996
      %v3029 = vlaneseq
      %v3030 = vshrl.u32 %v3029, 7
      %v3031 = vsub.s32 5, %v3030
      %v3032 = vrot.slane %v2720, %v3031
      %v3033 = vmul.f32 %v2685, %v3032
      %v3034 = vmul.f32 %v2686, %v3032
      %v3035 = vmul.f32 %v2687, %v3032
      %v3036 = vmul.f32 %v2688, %v3032
      %v3037 = vmul.f32 %v2689, %v3032
      %v3038 = vmul.f32 %v2690, %v3032
      %v3039 = vmul.f32 %v2691, %v3032
      %v3040 = vmul.f32 %v2692, %v3032
      %v3041 = vmul.f32 %v2693, %v3032
      %v3042 = vmul.f32 %v2694, %v3032
      %v3043 = vmul.f32 %v2695, %v3032
      %v3044 = vmul.f32 %v2696, %v3032
      %v3045 = vmul.f32 %v2697, %v3032
      %v3046 = vmul.f32 %v2698, %v3032
      %v3047 = vmul.f32 %v2699, %v3032
      %v3048 = vmul.f32 %v2700, %v3032
      %v3049 = vmul.f32 %v2701, %v3032
      %v3050 = vmul.f32 %v2702, %v3032
      %v3051 = vmul.f32 %v2703, %v3032
      %v3052 = vmul.f32 %v2704, %v3032
      %v3053 = vmul.f32 %v2705, %v3032
      %v3054 = vmul.f32 %v2706, %v3032
      %v3055 = vmul.f32 %v2707, %v3032
      %v3056 = vmul.f32 %v2708, %v3032
      %v3057 = vmul.f32 %v2709, %v3032
      %v3058 = vmul.f32 %v2710, %v3032
      %v3059 = vmul.f32 %v2711, %v3032
      %v3060 = vmul.f32 %v2712, %v3032
      %v3061 = vmul.f32 %v2713, %v3032
      %v3062 = vmul.f32 %v2714, %v3032
      %v3063 = vmul.f32 %v2715, %v3032
      %v3064 = vmul.f32 %v2716, %v3032
      %v3065 = vadd.f32 %v2997, %v3033
      %v3066 = vadd.f32 %v2998, %v3034
      %v3067 = vadd.f32 %v2999, %v3035
      %v3068 = vadd.f32 %v3000, %v3036
      %v3069 = vadd.f32 %v3001, %v3037
      %v3070 = vadd.f32 %v3002, %v3038
      %v3071 = vadd.f32 %v3003, %v3039
      %v3072 = vadd.f32 %v3004, %v3040
      %v3073 = vadd.f32 %v3005, %v3041
      %v3074 = vadd.f32 %v3006, %v3042
      %v3075 = vadd.f32 %v3007, %v3043
      %v3076 = vadd.f32 %v3008, %v3044
      %v3077 = vadd.f32 %v3009, %v3045
      %v3078 = vadd.f32 %v3010, %v3046
      %v3079 = vadd.f32 %v3011, %v3047
      %v3080 = vadd.f32 %v3012, %v3048
      %v3081 = vadd.f32 %v3013, %v3049
      %v3082 = vadd.f32 %v3014, %v3050
      %v3083 = vadd.f32 %v3015, %v3051
      %v3084 = vadd.f32 %v3016, %v3052
      %v3085 = vadd.f32 %v3017, %v3053
      %v3086 = vadd.f32 %v3018, %v3054
      %v3087 = vadd.f32 %v3019, %v3055
      %v3088 = vadd.f32 %v3020, %v3056
      %v3089 = vadd.f32 %v3021, %v3057
      %v3090 = vadd.f32 %v3022, %v3058
      %v3091 = vadd.f32 %v3023, %v3059
      %v3092 = vadd.f32 %v3024, %v3060
      %v3093 = vadd.f32 %v3025, %v3061
      %v3094 = vadd.f32 %v3026, %v3062
      %v3095 = vadd.f32 %v3027, %v3063
      %v3096 = vadd.f32 %v3028, %v3064
      %v3097 = vlaneseq
      %v3098 = vshrl.u32 %v3097, 7
      %v3099 = vsub.s32 6, %v3098
      %v3100 = vrot.slane %v2720, %v3099
      %v3101 = vmul.f32 %v2687, %v3100
      %v3102 = vmul.f32 %v2688, %v3100
      %v3103 = vmul.f32 %v2689, %v3100
      %v3104 = vmul.f32 %v2690, %v3100
      %v3105 = vmul.f32 %v2691, %v3100
      %v3106 = vmul.f32 %v2692, %v3100
      %v3107 = vmul.f32 %v2693, %v3100
      %v3108 = vmul.f32 %v2694, %v3100
      %v3109 = vmul.f32 %v2695, %v3100
      %v3110 = vmul.f32 %v2696, %v3100
      %v3111 = vmul.f32 %v2697, %v3100
      %v3112 = vmul.f32 %v2698, %v3100
      %v3113 = vmul.f32 %v2699, %v3100
      %v3114 = vmul.f32 %v2700, %v3100
      %v3115 = vmul.f32 %v2701, %v3100
      %v3116 = vmul.f32 %v2702, %v3100
      %v3117 = vmul.f32 %v2703, %v3100
      %v3118 = vmul.f32 %v2704, %v3100
      %v3119 = vmul.f32 %v2705, %v3100
      %v3120 = vmul.f32 %v2706, %v3100
      %v3121 = vmul.f32 %v2707, %v3100
      %v3122 = vmul.f32 %v2708, %v3100
      %v3123 = vmul.f32 %v2709, %v3100
      %v3124 = vmul.f32 %v2710, %v3100
      %v3125 = vmul.f32 %v2711, %v3100
      %v3126 = vmul.f32 %v2712, %v3100
      %v3127 = vmul.f32 %v2713, %v3100
      %v3128 = vmul.f32 %v2714, %v3100
      %v3129 = vmul.f32 %v2715, %v3100
      %v3130 = vmul.f32 %v2716, %v3100
      %v3131 = vmul.f32 %v2717, %v3100
      %v3132 = vmul.f32 %v2718, %v3100
      %v3133 = vadd.f32 %v3065, %v3101
      %v3134 = vadd.f32 %v3066, %v3102
      %v3135 = vadd.f32 %v3067, %v3103
      %v3136 = vadd.f32 %v3068, %v3104
      %v3137 = vadd.f32 %v3069, %v3105
      %v3138 = vadd.f32 %v3070, %v3106
      %v3139 = vadd.f32 %v3071, %v3107
      %v3140 = vadd.f32 %v3072, %v3108
      %v3141 = vadd.f32 %v3073, %v3109
      %v3142 = vadd.f32 %v3074, %v3110
      %v3143 = vadd.f32 %v3075, %v3111
      %v3144 = vadd.f32 %v3076, %v3112
      %v3145 = vadd.f32 %v3077, %v3113
      %v3146 = vadd.f32 %v3078, %v3114
      %v3147 = vadd.f32 %v3079, %v3115
      %v3148 = vadd.f32 %v3080, %v3116
      %v3149 = vadd.f32 %v3081, %v3117
      %v3150 = vadd.f32 %v3082, %v3118
      %v3151 = vadd.f32 %v3083, %v3119
      %v3152 = vadd.f32 %v3084, %v3120
      %v3153 = vadd.f32 %v3085, %v3121
      %v3154 = vadd.f32 %v3086, %v3122
      %v3155 = vadd.f32 %v3087, %v3123
      %v3156 = vadd.f32 %v3088, %v3124
      %v3157 = vadd.f32 %v3089, %v3125
      %v3158 = vadd.f32 %v3090, %v3126
      %v3159 = vadd.f32 %v3091, %v3127
      %v3160 = vadd.f32 %v3092, %v3128
      %v3161 = vadd.f32 %v3093, %v3129
      %v3162 = vadd.f32 %v3094, %v3130
      %v3163 = vadd.f32 %v3095, %v3131
      %v3164 = vadd.f32 %v3096, %v3132
      %v3165 = vadd.f32 %v2643, %v3133
      %v3166 = vadd.f32 %v2644, %v3134
      %v3167 = vadd.f32 %v2645, %v3135
      %v3168 = vadd.f32 %v2646, %v3136
      %v3169 = vadd.f32 %v2647, %v3137
      %v3170 = vadd.f32 %v2648, %v3138
      %v3171 = vadd.f32 %v2649, %v3139
      %v3172 = vadd.f32 %v2650, %v3140
      %v3173 = vadd.f32 %v2651, %v3141
      %v3174 = vadd.f32 %v2652, %v3142
      %v3175 = vadd.f32 %v2653, %v3143
      %v3176 = vadd.f32 %v2654, %v3144
      %v3177 = vadd.f32 %v2655, %v3145
      %v3178 = vadd.f32 %v2656, %v3146
      %v3179 = vadd.f32 %v2657, %v3147
      %v3180 = vadd.f32 %v2658, %v3148
      %v3181 = vadd.f32 %v2659, %v3149
      %v3182 = vadd.f32 %v2660, %v3150
      %v3183 = vadd.f32 %v2661, %v3151
      %v3184 = vadd.f32 %v2662, %v3152
      %v3185 = vadd.f32 %v2663, %v3153
      %v3186 = vadd.f32 %v2664, %v3154
      %v3187 = vadd.f32 %v2665, %v3155
      %v3188 = vadd.f32 %v2666, %v3156
      %v3189 = vadd.f32 %v2667, %v3157
      %v3190 = vadd.f32 %v2668, %v3158
      %v3191 = vadd.f32 %v2669, %v3159
      %v3192 = vadd.f32 %v2670, %v3160
      %v3193 = vadd.f32 %v2671, %v3161
      %v3194 = vadd.f32 %v2672, %v3162
      %v3195 = vadd.f32 %v2673, %v3163
      %v3196 = vadd.f32 %v2674, %v3164
      %v3197 = vld [vmem:[#allocation2 + $0xa] sm:$0xff]
      %v3198 = vld [vmem:[#allocation2 + $0x12] sm:$0xff]
      %v3199 = vld [vmem:[#allocation2 + $0x2a] sm:$0xff]
      %v3200 = vld [vmem:[#allocation2 + $0x32] sm:$0xff]
      %v3201 = vld [vmem:[#allocation2 + $0x4a] sm:$0xff]
      %v3202 = vld [vmem:[#allocation2 + $0x52] sm:$0xff]
      %v3203 = vld [vmem:[#allocation2 + $0x6a] sm:$0xff]
      %v3204 = vld [vmem:[#allocation2 + $0x72] sm:$0xff]
      %v3205 = vld [vmem:[#allocation2 + $0x8a] sm:$0xff]
      %v3206 = vld [vmem:[#allocation2 + $0x92] sm:$0xff]
      %v3207 = vld [vmem:[#allocation2 + $0xaa] sm:$0xff]
      %v3208 = vld [vmem:[#allocation2 + $0xb2] sm:$0xff]
      %v3209 = vld [vmem:[#allocation2 + $0xca] sm:$0xff]
      %v3210 = vld [vmem:[#allocation2 + $0xd2] sm:$0xff]
      %v3211 = vld [vmem:[#allocation2 + $0xea] sm:$0xff]
      %v3212 = vld [vmem:[#allocation2 + $0xf2] sm:$0xff]
      %v3213 = vld [vmem:[#allocation2 + $0x10a] sm:$0xff]
      %v3214 = vld [vmem:[#allocation2 + $0x112] sm:$0xff]
      %v3215 = vld [vmem:[#allocation2 + $0x12a] sm:$0xff]
      %v3216 = vld [vmem:[#allocation2 + $0x132] sm:$0xff]
      %v3217 = vld [vmem:[#allocation2 + $0x14a] sm:$0xff]
      %v3218 = vld [vmem:[#allocation2 + $0x152] sm:$0xff]
      %v3219 = vld [vmem:[#allocation2 + $0x16a] sm:$0xff]
      %v3220 = vld [vmem:[#allocation2 + $0x172] sm:$0xff]
      %v3221 = vld [vmem:[#allocation2 + $0x18a] sm:$0xff]
      %v3222 = vld [vmem:[#allocation2 + $0x192] sm:$0xff]
      %v3223 = vld [vmem:[#allocation2 + $0x1aa] sm:$0xff]
      %v3224 = vld [vmem:[#allocation2 + $0x1b2] sm:$0xff]
      %v3225 = vld [vmem:[#allocation2 + $0x1ca] sm:$0xff]
      %v3226 = vld [vmem:[#allocation2 + $0x1d2] sm:$0xff]
      %v3227 = vld [vmem:[#allocation2 + $0x1ea] sm:$0xff]
      %v3228 = vld [vmem:[#allocation2 + $0x1f2] sm:$0xff]
      %v3229 = vld [vmem:[#allocation2 + $0x20a] sm:$0xff]
      %v3230 = vld [vmem:[#allocation2 + $0x212] sm:$0xff]
      %v3231 = vld [vmem:[#allocation2 + $0x22a] sm:$0xff]
      %v3232 = vld [vmem:[#allocation2 + $0x232] sm:$0xff]
      %v3233 = vld [vmem:[#allocation2 + $0x24a] sm:$0xff]
      %v3234 = vld [vmem:[#allocation2 + $0x252] sm:$0xff]
      %v3235 = vld [vmem:[#allocation2 + $0x26a] sm:$0xff]
      %v3236 = vld [vmem:[#allocation2 + $0x272] sm:$0xff]
      %v3237 = vld [vmem:[#allocation2 + $0x28a] sm:$0xff]
      %v3238 = vld [vmem:[#allocation2 + $0x292] sm:$0xff]
      %v3239 = vld [vmem:[#allocation2 + $0x2aa] sm:$0xff]
      %v3240 = vld [vmem:[#allocation2 + $0x2b2] sm:$0xff]
      %s3241 = scalar_lea.vmem %s1, 40
      %v3242 = vld [vmem:[%s3241] sm:$0x7f]
      %v3243 = vlaneseq
      %v3244 = vshrl.u32 %v3243, 7
      %v3245 = vsub.s32 0, %v3244
      %v3246 = vrot.slane %v3242, %v3245
      %v3247 = vmul.f32 %v3197, %v3246
      %v3248 = vmul.f32 %v3198, %v3246
      %v3249 = vmul.f32 %v3199, %v3246
      %v3250 = vmul.f32 %v3200, %v3246
      %v3251 = vmul.f32 %v3201, %v3246
      %v3252 = vmul.f32 %v3202, %v3246
      %v3253 = vmul.f32 %v3203, %v3246
      %v3254 = vmul.f32 %v3204, %v3246
      %v3255 = vmul.f32 %v3205, %v3246
      %v3256 = vmul.f32 %v3206, %v3246
      %v3257 = vmul.f32 %v3207, %v3246
      %v3258 = vmul.f32 %v3208, %v3246
      %v3259 = vmul.f32 %v3209, %v3246
      %v3260 = vmul.f32 %v3210, %v3246
      %v3261 = vmul.f32 %v3211, %v3246
      %v3262 = vmul.f32 %v3212, %v3246
      %v3263 = vmul.f32 %v3213, %v3246
      %v3264 = vmul.f32 %v3214, %v3246
      %v3265 = vmul.f32 %v3215, %v3246
      %v3266 = vmul.f32 %v3216, %v3246
      %v3267 = vmul.f32 %v3217, %v3246
      %v3268 = vmul.f32 %v3218, %v3246
      %v3269 = vmul.f32 %v3219, %v3246
      %v3270 = vmul.f32 %v3220, %v3246
      %v3271 = vmul.f32 %v3221, %v3246
      %v3272 = vmul.f32 %v3222, %v3246
      %v3273 = vmul.f32 %v3223, %v3246
      %v3274 = vmul.f32 %v3224, %v3246
      %v3275 = vmul.f32 %v3225, %v3246
      %v3276 = vmul.f32 %v3226, %v3246
      %v3277 = vmul.f32 %v3227, %v3246
      %v3278 = vmul.f32 %v3228, %v3246
      %v3279 = vlaneseq
      %v3280 = vshrl.u32 %v3279, 7
      %v3281 = vsub.s32 1, %v3280
      %v3282 = vrot.slane %v3242, %v3281
      %v3283 = vmul.f32 %v3199, %v3282
      %v3284 = vmul.f32 %v3200, %v3282
      %v3285 = vmul.f32 %v3201, %v3282
      %v3286 = vmul.f32 %v3202, %v3282
      %v3287 = vmul.f32 %v3203, %v3282
      %v3288 = vmul.f32 %v3204, %v3282
      %v3289 = vmul.f32 %v3205, %v3282
      %v3290 = vmul.f32 %v3206, %v3282
      %v3291 = vmul.f32 %v3207, %v3282
      %v3292 = vmul.f32 %v3208, %v3282
      %v3293 = vmul.f32 %v3209, %v3282
      %v3294 = vmul.f32 %v3210, %v3282
      %v3295 = vmul.f32 %v3211, %v3282
      %v3296 = vmul.f32 %v3212, %v3282
      %v3297 = vmul.f32 %v3213, %v3282
      %v3298 = vmul.f32 %v3214, %v3282
      %v3299 = vmul.f32 %v3215, %v3282
      %v3300 = vmul.f32 %v3216, %v3282
      %v3301 = vmul.f32 %v3217, %v3282
      %v3302 = vmul.f32 %v3218, %v3282
      %v3303 = vmul.f32 %v3219, %v3282
      %v3304 = vmul.f32 %v3220, %v3282
      %v3305 = vmul.f32 %v3221, %v3282
      %v3306 = vmul.f32 %v3222, %v3282
      %v3307 = vmul.f32 %v3223, %v3282
      %v3308 = vmul.f32 %v3224, %v3282
      %v3309 = vmul.f32 %v3225, %v3282
      %v3310 = vmul.f32 %v3226, %v3282
      %v3311 = vmul.f32 %v3227, %v3282
      %v3312 = vmul.f32 %v3228, %v3282
      %v3313 = vmul.f32 %v3229, %v3282
      %v3314 = vmul.f32 %v3230, %v3282
      %v3315 = vadd.f32 %v3247, %v3283
      %v3316 = vadd.f32 %v3248, %v3284
      %v3317 = vadd.f32 %v3249, %v3285
      %v3318 = vadd.f32 %v3250, %v3286
      %v3319 = vadd.f32 %v3251, %v3287
      %v3320 = vadd.f32 %v3252, %v3288
      %v3321 = vadd.f32 %v3253, %v3289
      %v3322 = vadd.f32 %v3254, %v3290
      %v3323 = vadd.f32 %v3255, %v3291
      %v3324 = vadd.f32 %v3256, %v3292
      %v3325 = vadd.f32 %v3257, %v3293
      %v3326 = vadd.f32 %v3258, %v3294
      %v3327 = vadd.f32 %v3259, %v3295
      %v3328 = vadd.f32 %v3260, %v3296
      %v3329 = vadd.f32 %v3261, %v3297
      %v3330 = vadd.f32 %v3262, %v3298
      %v3331 = vadd.f32 %v3263, %v3299
      %v3332 = vadd.f32 %v3264, %v3300
      %v3333 = vadd.f32 %v3265, %v3301
      %v3334 = vadd.f32 %v3266, %v3302
      %v3335 = vadd.f32 %v3267, %v3303
      %v3336 = vadd.f32 %v3268, %v3304
      %v3337 = vadd.f32 %v3269, %v3305
      %v3338 = vadd.f32 %v3270, %v3306
      %v3339 = vadd.f32 %v3271, %v3307
      %v3340 = vadd.f32 %v3272, %v3308
      %v3341 = vadd.f32 %v3273, %v3309
      %v3342 = vadd.f32 %v3274, %v3310
      %v3343 = vadd.f32 %v3275, %v3311
      %v3344 = vadd.f32 %v3276, %v3312
      %v3345 = vadd.f32 %v3277, %v3313
      %v3346 = vadd.f32 %v3278, %v3314
      %v3347 = vlaneseq
      %v3348 = vshrl.u32 %v3347, 7
      %v3349 = vsub.s32 2, %v3348
      %v3350 = vrot.slane %v3242, %v3349
      %v3351 = vmul.f32 %v3201, %v3350
      %v3352 = vmul.f32 %v3202, %v3350
      %v3353 = vmul.f32 %v3203, %v3350
      %v3354 = vmul.f32 %v3204, %v3350
      %v3355 = vmul.f32 %v3205, %v3350
      %v3356 = vmul.f32 %v3206, %v3350
      %v3357 = vmul.f32 %v3207, %v3350
      %v3358 = vmul.f32 %v3208, %v3350
      %v3359 = vmul.f32 %v3209, %v3350
      %v3360 = vmul.f32 %v3210, %v3350
      %v3361 = vmul.f32 %v3211, %v3350
      %v3362 = vmul.f32 %v3212, %v3350
      %v3363 = vmul.f32 %v3213, %v3350
      %v3364 = vmul.f32 %v3214, %v3350
      %v3365 = vmul.f32 %v3215, %v3350
      %v3366 = vmul.f32 %v3216, %v3350
      %v3367 = vmul.f32 %v3217, %v3350
      %v3368 = vmul.f32 %v3218, %v3350
      %v3369 = vmul.f32 %v3219, %v3350
      %v3370 = vmul.f32 %v3220, %v3350
      %v3371 = vmul.f32 %v3221, %v3350
      %v3372 = vmul.f32 %v3222, %v3350
      %v3373 = vmul.f32 %v3223, %v3350
      %v3374 = vmul.f32 %v3224, %v3350
      %v3375 = vmul.f32 %v3225, %v3350
      %v3376 = vmul.f32 %v3226, %v3350
      %v3377 = vmul.f32 %v3227, %v3350
      %v3378 = vmul.f32 %v3228, %v3350
      %v3379 = vmul.f32 %v3229, %v3350
      %v3380 = vmul.f32 %v3230, %v3350
      %v3381 = vmul.f32 %v3231, %v3350
      %v3382 = vmul.f32 %v3232, %v3350
      %v3383 = vadd.f32 %v3315, %v3351
      %v3384 = vadd.f32 %v3316, %v3352
      %v3385 = vadd.f32 %v3317, %v3353
      %v3386 = vadd.f32 %v3318, %v3354
      %v3387 = vadd.f32 %v3319, %v3355
      %v3388 = vadd.f32 %v3320, %v3356
      %v3389 = vadd.f32 %v3321, %v3357
      %v3390 = vadd.f32 %v3322, %v3358
      %v3391 = vadd.f32 %v3323, %v3359
      %v3392 = vadd.f32 %v3324, %v3360
      %v3393 = vadd.f32 %v3325, %v3361
      %v3394 = vadd.f32 %v3326, %v3362
      %v3395 = vadd.f32 %v3327, %v3363
      %v3396 = vadd.f32 %v3328, %v3364
      %v3397 = vadd.f32 %v3329, %v3365
      %v3398 = vadd.f32 %v3330, %v3366
      %v3399 = vadd.f32 %v3331, %v3367
      %v3400 = vadd.f32 %v3332, %v3368
      %v3401 = vadd.f32 %v3333, %v3369
      %v3402 = vadd.f32 %v3334, %v3370
      %v3403 = vadd.f32 %v3335, %v3371
      %v3404 = vadd.f32 %v3336, %v3372
      %v3405 = vadd.f32 %v3337, %v3373
      %v3406 = vadd.f32 %v3338, %v3374
      %v3407 = vadd.f32 %v3339, %v3375
      %v3408 = vadd.f32 %v3340, %v3376
      %v3409 = vadd.f32 %v3341, %v3377
      %v3410 = vadd.f32 %v3342, %v3378
      %v3411 = vadd.f32 %v3343, %v3379
      %v3412 = vadd.f32 %v3344, %v3380
      %v3413 = vadd.f32 %v3345, %v3381
      %v3414 = vadd.f32 %v3346, %v3382
      %v3415 = vlaneseq
      %v3416 = vshrl.u32 %v3415, 7
      %v3417 = vsub.s32 3, %v3416
      %v3418 = vrot.slane %v3242, %v3417
      %v3419 = vmul.f32 %v3203, %v3418
      %v3420 = vmul.f32 %v3204, %v3418
      %v3421 = vmul.f32 %v3205, %v3418
      %v3422 = vmul.f32 %v3206, %v3418
      %v3423 = vmul.f32 %v3207, %v3418
      %v3424 = vmul.f32 %v3208, %v3418
      %v3425 = vmul.f32 %v3209, %v3418
      %v3426 = vmul.f32 %v3210, %v3418
      %v3427 = vmul.f32 %v3211, %v3418
      %v3428 = vmul.f32 %v3212, %v3418
      %v3429 = vmul.f32 %v3213, %v3418
      %v3430 = vmul.f32 %v3214, %v3418
      %v3431 = vmul.f32 %v3215, %v3418
      %v3432 = vmul.f32 %v3216, %v3418
      %v3433 = vmul.f32 %v3217, %v3418
      %v3434 = vmul.f32 %v3218, %v3418
      %v3435 = vmul.f32 %v3219, %v3418
      %v3436 = vmul.f32 %v3220, %v3418
      %v3437 = vmul.f32 %v3221, %v3418
      %v3438 = vmul.f32 %v3222, %v3418
      %v3439 = vmul.f32 %v3223, %v3418
      %v3440 = vmul.f32 %v3224, %v3418
      %v3441 = vmul.f32 %v3225, %v3418
      %v3442 = vmul.f32 %v3226, %v3418
      %v3443 = vmul.f32 %v3227, %v3418
      %v3444 = vmul.f32 %v3228, %v3418
      %v3445 = vmul.f32 %v3229, %v3418
      %v3446 = vmul.f32 %v3230, %v3418
      %v3447 = vmul.f32 %v3231, %v3418
      %v3448 = vmul.f32 %v3232, %v3418
      %v3449 = vmul.f32 %v3233, %v3418
      %v3450 = vmul.f32 %v3234, %v3418
      %v3451 = vadd.f32 %v3383, %v3419
      %v3452 = vadd.f32 %v3384, %v3420
      %v3453 = vadd.f32 %v3385, %v3421
      %v3454 = vadd.f32 %v3386, %v3422
      %v3455 = vadd.f32 %v3387, %v3423
      %v3456 = vadd.f32 %v3388, %v3424
      %v3457 = vadd.f32 %v3389, %v3425
      %v3458 = vadd.f32 %v3390, %v3426
      %v3459 = vadd.f32 %v3391, %v3427
      %v3460 = vadd.f32 %v3392, %v3428
      %v3461 = vadd.f32 %v3393, %v3429
      %v3462 = vadd.f32 %v3394, %v3430
      %v3463 = vadd.f32 %v3395, %v3431
      %v3464 = vadd.f32 %v3396, %v3432
      %v3465 = vadd.f32 %v3397, %v3433
      %v3466 = vadd.f32 %v3398, %v3434
      %v3467 = vadd.f32 %v3399, %v3435
      %v3468 = vadd.f32 %v3400, %v3436
      %v3469 = vadd.f32 %v3401, %v3437
      %v3470 = vadd.f32 %v3402, %v3438
      %v3471 = vadd.f32 %v3403, %v3439
      %v3472 = vadd.f32 %v3404, %v3440
      %v3473 = vadd.f32 %v3405, %v3441
      %v3474 = vadd.f32 %v3406, %v3442
      %v3475 = vadd.f32 %v3407, %v3443
      %v3476 = vadd.f32 %v3408, %v3444
      %v3477 = vadd.f32 %v3409, %v3445
      %v3478 = vadd.f32 %v3410, %v3446
      %v3479 = vadd.f32 %v3411, %v3447
      %v3480 = vadd.f32 %v3412, %v3448
      %v3481 = vadd.f32 %v3413, %v3449
      %v3482 = vadd.f32 %v3414, %v3450
      %v3483 = vlaneseq
      %v3484 = vshrl.u32 %v3483, 7
      %v3485 = vsub.s32 4, %v3484
      %v3486 = vrot.slane %v3242, %v3485
      %v3487 = vmul.f32 %v3205, %v3486
      %v3488 = vmul.f32 %v3206, %v3486
      %v3489 = vmul.f32 %v3207, %v3486
      %v3490 = vmul.f32 %v3208, %v3486
      %v3491 = vmul.f32 %v3209, %v3486
      %v3492 = vmul.f32 %v3210, %v3486
      %v3493 = vmul.f32 %v3211, %v3486
      %v3494 = vmul.f32 %v3212, %v3486
      %v3495 = vmul.f32 %v3213, %v3486
      %v3496 = vmul.f32 %v3214, %v3486
      %v3497 = vmul.f32 %v3215, %v3486
      %v3498 = vmul.f32 %v3216, %v3486
      %v3499 = vmul.f32 %v3217, %v3486
      %v3500 = vmul.f32 %v3218, %v3486
      %v3501 = vmul.f32 %v3219, %v3486
      %v3502 = vmul.f32 %v3220, %v3486
      %v3503 = vmul.f32 %v3221, %v3486
      %v3504 = vmul.f32 %v3222, %v3486
      %v3505 = vmul.f32 %v3223, %v3486
      %v3506 = vmul.f32 %v3224, %v3486
      %v3507 = vmul.f32 %v3225, %v3486
      %v3508 = vmul.f32 %v3226, %v3486
      %v3509 = vmul.f32 %v3227, %v3486
      %v3510 = vmul.f32 %v3228, %v3486
      %v3511 = vmul.f32 %v3229, %v3486
      %v3512 = vmul.f32 %v3230, %v3486
      %v3513 = vmul.f32 %v3231, %v3486
      %v3514 = vmul.f32 %v3232, %v3486
      %v3515 = vmul.f32 %v3233, %v3486
      %v3516 = vmul.f32 %v3234, %v3486
      %v3517 = vmul.f32 %v3235, %v3486
      %v3518 = vmul.f32 %v3236, %v3486
      %v3519 = vadd.f32 %v3451, %v3487
      %v3520 = vadd.f32 %v3452, %v3488
      %v3521 = vadd.f32 %v3453, %v3489
      %v3522 = vadd.f32 %v3454, %v3490
      %v3523 = vadd.f32 %v3455, %v3491
      %v3524 = vadd.f32 %v3456, %v3492
      %v3525 = vadd.f32 %v3457, %v3493
      %v3526 = vadd.f32 %v3458, %v3494
      %v3527 = vadd.f32 %v3459, %v3495
      %v3528 = vadd.f32 %v3460, %v3496
      %v3529 = vadd.f32 %v3461, %v3497
      %v3530 = vadd.f32 %v3462, %v3498
      %v3531 = vadd.f32 %v3463, %v3499
      %v3532 = vadd.f32 %v3464, %v3500
      %v3533 = vadd.f32 %v3465, %v3501
      %v3534 = vadd.f32 %v3466, %v3502
      %v3535 = vadd.f32 %v3467, %v3503
      %v3536 = vadd.f32 %v3468, %v3504
      %v3537 = vadd.f32 %v3469, %v3505
      %v3538 = vadd.f32 %v3470, %v3506
      %v3539 = vadd.f32 %v3471, %v3507
      %v3540 = vadd.f32 %v3472, %v3508
      %v3541 = vadd.f32 %v3473, %v3509
      %v3542 = vadd.f32 %v3474, %v3510
      %v3543 = vadd.f32 %v3475, %v3511
      %v3544 = vadd.f32 %v3476, %v3512
      %v3545 = vadd.f32 %v3477, %v3513
      %v3546 = vadd.f32 %v3478, %v3514
      %v3547 = vadd.f32 %v3479, %v3515
      %v3548 = vadd.f32 %v3480, %v3516
      %v3549 = vadd.f32 %v3481, %v3517
      %v3550 = vadd.f32 %v3482, %v3518
      %v3551 = vlaneseq
      %v3552 = vshrl.u32 %v3551, 7
      %v3553 = vsub.s32 5, %v3552
      %v3554 = vrot.slane %v3242, %v3553
      %v3555 = vmul.f32 %v3207, %v3554
      %v3556 = vmul.f32 %v3208, %v3554
      %v3557 = vmul.f32 %v3209, %v3554
      %v3558 = vmul.f32 %v3210, %v3554
      %v3559 = vmul.f32 %v3211, %v3554
      %v3560 = vmul.f32 %v3212, %v3554
      %v3561 = vmul.f32 %v3213, %v3554
      %v3562 = vmul.f32 %v3214, %v3554
      %v3563 = vmul.f32 %v3215, %v3554
      %v3564 = vmul.f32 %v3216, %v3554
      %v3565 = vmul.f32 %v3217, %v3554
      %v3566 = vmul.f32 %v3218, %v3554
      %v3567 = vmul.f32 %v3219, %v3554
      %v3568 = vmul.f32 %v3220, %v3554
      %v3569 = vmul.f32 %v3221, %v3554
      %v3570 = vmul.f32 %v3222, %v3554
      %v3571 = vmul.f32 %v3223, %v3554
      %v3572 = vmul.f32 %v3224, %v3554
      %v3573 = vmul.f32 %v3225, %v3554
      %v3574 = vmul.f32 %v3226, %v3554
      %v3575 = vmul.f32 %v3227, %v3554
      %v3576 = vmul.f32 %v3228, %v3554
      %v3577 = vmul.f32 %v3229, %v3554
      %v3578 = vmul.f32 %v3230, %v3554
      %v3579 = vmul.f32 %v3231, %v3554
      %v3580 = vmul.f32 %v3232, %v3554
      %v3581 = vmul.f32 %v3233, %v3554
      %v3582 = vmul.f32 %v3234, %v3554
      %v3583 = vmul.f32 %v3235, %v3554
      %v3584 = vmul.f32 %v3236, %v3554
      %v3585 = vmul.f32 %v3237, %v3554
      %v3586 = vmul.f32 %v3238, %v3554
      %v3587 = vadd.f32 %v3519, %v3555
      %v3588 = vadd.f32 %v3520, %v3556
      %v3589 = vadd.f32 %v3521, %v3557
      %v3590 = vadd.f32 %v3522, %v3558
      %v3591 = vadd.f32 %v3523, %v3559
      %v3592 = vadd.f32 %v3524, %v3560
      %v3593 = vadd.f32 %v3525, %v3561
      %v3594 = vadd.f32 %v3526, %v3562
      %v3595 = vadd.f32 %v3527, %v3563
      %v3596 = vadd.f32 %v3528, %v3564
      %v3597 = vadd.f32 %v3529, %v3565
      %v3598 = vadd.f32 %v3530, %v3566
      %v3599 = vadd.f32 %v3531, %v3567
      %v3600 = vadd.f32 %v3532, %v3568
      %v3601 = vadd.f32 %v3533, %v3569
      %v3602 = vadd.f32 %v3534, %v3570
      %v3603 = vadd.f32 %v3535, %v3571
      %v3604 = vadd.f32 %v3536, %v3572
      %v3605 = vadd.f32 %v3537, %v3573
      %v3606 = vadd.f32 %v3538, %v3574
      %v3607 = vadd.f32 %v3539, %v3575
      %v3608 = vadd.f32 %v3540, %v3576
      %v3609 = vadd.f32 %v3541, %v3577
      %v3610 = vadd.f32 %v3542, %v3578
      %v3611 = vadd.f32 %v3543, %v3579
      %v3612 = vadd.f32 %v3544, %v3580
      %v3613 = vadd.f32 %v3545, %v3581
      %v3614 = vadd.f32 %v3546, %v3582
      %v3615 = vadd.f32 %v3547, %v3583
      %v3616 = vadd.f32 %v3548, %v3584
      %v3617 = vadd.f32 %v3549, %v3585
      %v3618 = vadd.f32 %v3550, %v3586
      %v3619 = vlaneseq
      %v3620 = vshrl.u32 %v3619, 7
      %v3621 = vsub.s32 6, %v3620
      %v3622 = vrot.slane %v3242, %v3621
      %v3623 = vmul.f32 %v3209, %v3622
      %v3624 = vmul.f32 %v3210, %v3622
      %v3625 = vmul.f32 %v3211, %v3622
      %v3626 = vmul.f32 %v3212, %v3622
      %v3627 = vmul.f32 %v3213, %v3622
      %v3628 = vmul.f32 %v3214, %v3622
      %v3629 = vmul.f32 %v3215, %v3622
      %v3630 = vmul.f32 %v3216, %v3622
      %v3631 = vmul.f32 %v3217, %v3622
      %v3632 = vmul.f32 %v3218, %v3622
      %v3633 = vmul.f32 %v3219, %v3622
      %v3634 = vmul.f32 %v3220, %v3622
      %v3635 = vmul.f32 %v3221, %v3622
      %v3636 = vmul.f32 %v3222, %v3622
      %v3637 = vmul.f32 %v3223, %v3622
      %v3638 = vmul.f32 %v3224, %v3622
      %v3639 = vmul.f32 %v3225, %v3622
      %v3640 = vmul.f32 %v3226, %v3622
      %v3641 = vmul.f32 %v3227, %v3622
      %v3642 = vmul.f32 %v3228, %v3622
      %v3643 = vmul.f32 %v3229, %v3622
      %v3644 = vmul.f32 %v3230, %v3622
      %v3645 = vmul.f32 %v3231, %v3622
      %v3646 = vmul.f32 %v3232, %v3622
      %v3647 = vmul.f32 %v3233, %v3622
      %v3648 = vmul.f32 %v3234, %v3622
      %v3649 = vmul.f32 %v3235, %v3622
      %v3650 = vmul.f32 %v3236, %v3622
      %v3651 = vmul.f32 %v3237, %v3622
      %v3652 = vmul.f32 %v3238, %v3622
      %v3653 = vmul.f32 %v3239, %v3622
      %v3654 = vmul.f32 %v3240, %v3622
      %v3655 = vadd.f32 %v3587, %v3623
      %v3656 = vadd.f32 %v3588, %v3624
      %v3657 = vadd.f32 %v3589, %v3625
      %v3658 = vadd.f32 %v3590, %v3626
      %v3659 = vadd.f32 %v3591, %v3627
      %v3660 = vadd.f32 %v3592, %v3628
      %v3661 = vadd.f32 %v3593, %v3629
      %v3662 = vadd.f32 %v3594, %v3630
      %v3663 = vadd.f32 %v3595, %v3631
      %v3664 = vadd.f32 %v3596, %v3632
      %v3665 = vadd.f32 %v3597, %v3633
      %v3666 = vadd.f32 %v3598, %v3634
      %v3667 = vadd.f32 %v3599, %v3635
      %v3668 = vadd.f32 %v3600, %v3636
      %v3669 = vadd.f32 %v3601, %v3637
      %v3670 = vadd.f32 %v3602, %v3638
      %v3671 = vadd.f32 %v3603, %v3639
      %v3672 = vadd.f32 %v3604, %v3640
      %v3673 = vadd.f32 %v3605, %v3641
      %v3674 = vadd.f32 %v3606, %v3642
      %v3675 = vadd.f32 %v3607, %v3643
      %v3676 = vadd.f32 %v3608, %v3644
      %v3677 = vadd.f32 %v3609, %v3645
      %v3678 = vadd.f32 %v3610, %v3646
      %v3679 = vadd.f32 %v3611, %v3647
      %v3680 = vadd.f32 %v3612, %v3648
      %v3681 = vadd.f32 %v3613, %v3649
      %v3682 = vadd.f32 %v3614, %v3650
      %v3683 = vadd.f32 %v3615, %v3651
      %v3684 = vadd.f32 %v3616, %v3652
      %v3685 = vadd.f32 %v3617, %v3653
      %v3686 = vadd.f32 %v3618, %v3654
      %v3687 = vadd.f32 %v3165, %v3655
      %v3688 = vadd.f32 %v3166, %v3656
      %v3689 = vadd.f32 %v3167, %v3657
      %v3690 = vadd.f32 %v3168, %v3658
      %v3691 = vadd.f32 %v3169, %v3659
      %v3692 = vadd.f32 %v3170, %v3660
      %v3693 = vadd.f32 %v3171, %v3661
      %v3694 = vadd.f32 %v3172, %v3662
      %v3695 = vadd.f32 %v3173, %v3663
      %v3696 = vadd.f32 %v3174, %v3664
      %v3697 = vadd.f32 %v3175, %v3665
      %v3698 = vadd.f32 %v3176, %v3666
      %v3699 = vadd.f32 %v3177, %v3667
      %v3700 = vadd.f32 %v3178, %v3668
      %v3701 = vadd.f32 %v3179, %v3669
      %v3702 = vadd.f32 %v3180, %v3670
      %v3703 = vadd.f32 %v3181, %v3671
      %v3704 = vadd.f32 %v3182, %v3672
      %v3705 = vadd.f32 %v3183, %v3673
      %v3706 = vadd.f32 %v3184, %v3674
      %v3707 = vadd.f32 %v3185, %v3675
      %v3708 = vadd.f32 %v3186, %v3676
      %v3709 = vadd.f32 %v3187, %v3677
      %v3710 = vadd.f32 %v3188, %v3678
      %v3711 = vadd.f32 %v3189, %v3679
      %v3712 = vadd.f32 %v3190, %v3680
      %v3713 = vadd.f32 %v3191, %v3681
      %v3714 = vadd.f32 %v3192, %v3682
      %v3715 = vadd.f32 %v3193, %v3683
      %v3716 = vadd.f32 %v3194, %v3684
      %v3717 = vadd.f32 %v3195, %v3685
      %v3718 = vadd.f32 %v3196, %v3686
      %v3719 = vld [vmem:[#allocation2 + $0xb] sm:$0xff]
      %v3720 = vld [vmem:[#allocation2 + $0x13] sm:$0xff]
      %v3721 = vld [vmem:[#allocation2 + $0x2b] sm:$0xff]
      %v3722 = vld [vmem:[#allocation2 + $0x33] sm:$0xff]
      %v3723 = vld [vmem:[#allocation2 + $0x4b] sm:$0xff]
      %v3724 = vld [vmem:[#allocation2 + $0x53] sm:$0xff]
      %v3725 = vld [vmem:[#allocation2 + $0x6b] sm:$0xff]
      %v3726 = vld [vmem:[#allocation2 + $0x73] sm:$0xff]
      %v3727 = vld [vmem:[#allocation2 + $0x8b] sm:$0xff]
      %v3728 = vld [vmem:[#allocation2 + $0x93] sm:$0xff]
      %v3729 = vld [vmem:[#allocation2 + $0xab] sm:$0xff]
      %v3730 = vld [vmem:[#allocation2 + $0xb3] sm:$0xff]
      %v3731 = vld [vmem:[#allocation2 + $0xcb] sm:$0xff]
      %v3732 = vld [vmem:[#allocation2 + $0xd3] sm:$0xff]
      %v3733 = vld [vmem:[#allocation2 + $0xeb] sm:$0xff]
      %v3734 = vld [vmem:[#allocation2 + $0xf3] sm:$0xff]
      %v3735 = vld [vmem:[#allocation2 + $0x10b] sm:$0xff]
      %v3736 = vld [vmem:[#allocation2 + $0x113] sm:$0xff]
      %v3737 = vld [vmem:[#allocation2 + $0x12b] sm:$0xff]
      %v3738 = vld [vmem:[#allocation2 + $0x133] sm:$0xff]
      %v3739 = vld [vmem:[#allocation2 + $0x14b] sm:$0xff]
      %v3740 = vld [vmem:[#allocation2 + $0x153] sm:$0xff]
      %v3741 = vld [vmem:[#allocation2 + $0x16b] sm:$0xff]
      %v3742 = vld [vmem:[#allocation2 + $0x173] sm:$0xff]
      %v3743 = vld [vmem:[#allocation2 + $0x18b] sm:$0xff]
      %v3744 = vld [vmem:[#allocation2 + $0x193] sm:$0xff]
      %v3745 = vld [vmem:[#allocation2 + $0x1ab] sm:$0xff]
      %v3746 = vld [vmem:[#allocation2 + $0x1b3] sm:$0xff]
      %v3747 = vld [vmem:[#allocation2 + $0x1cb] sm:$0xff]
      %v3748 = vld [vmem:[#allocation2 + $0x1d3] sm:$0xff]
      %v3749 = vld [vmem:[#allocation2 + $0x1eb] sm:$0xff]
      %v3750 = vld [vmem:[#allocation2 + $0x1f3] sm:$0xff]
      %v3751 = vld [vmem:[#allocation2 + $0x20b] sm:$0xff]
      %v3752 = vld [vmem:[#allocation2 + $0x213] sm:$0xff]
      %v3753 = vld [vmem:[#allocation2 + $0x22b] sm:$0xff]
      %v3754 = vld [vmem:[#allocation2 + $0x233] sm:$0xff]
      %v3755 = vld [vmem:[#allocation2 + $0x24b] sm:$0xff]
      %v3756 = vld [vmem:[#allocation2 + $0x253] sm:$0xff]
      %v3757 = vld [vmem:[#allocation2 + $0x26b] sm:$0xff]
      %v3758 = vld [vmem:[#allocation2 + $0x273] sm:$0xff]
      %v3759 = vld [vmem:[#allocation2 + $0x28b] sm:$0xff]
      %v3760 = vld [vmem:[#allocation2 + $0x293] sm:$0xff]
      %v3761 = vld [vmem:[#allocation2 + $0x2ab] sm:$0xff]
      %v3762 = vld [vmem:[#allocation2 + $0x2b3] sm:$0xff]
      %s3763 = scalar_lea.vmem %s1, 48
      %v3764 = vld [vmem:[%s3763] sm:$0x7f]
      %v3765 = vlaneseq
      %v3766 = vshrl.u32 %v3765, 7
      %v3767 = vsub.s32 0, %v3766
      %v3768 = vrot.slane %v3764, %v3767
      %v3769 = vmul.f32 %v3719, %v3768
      %v3770 = vmul.f32 %v3720, %v3768
      %v3771 = vmul.f32 %v3721, %v3768
      %v3772 = vmul.f32 %v3722, %v3768
      %v3773 = vmul.f32 %v3723, %v3768
      %v3774 = vmul.f32 %v3724, %v3768
      %v3775 = vmul.f32 %v3725, %v3768
      %v3776 = vmul.f32 %v3726, %v3768
      %v3777 = vmul.f32 %v3727, %v3768
      %v3778 = vmul.f32 %v3728, %v3768
      %v3779 = vmul.f32 %v3729, %v3768
      %v3780 = vmul.f32 %v3730, %v3768
      %v3781 = vmul.f32 %v3731, %v3768
      %v3782 = vmul.f32 %v3732, %v3768
      %v3783 = vmul.f32 %v3733, %v3768
      %v3784 = vmul.f32 %v3734, %v3768
      %v3785 = vmul.f32 %v3735, %v3768
      %v3786 = vmul.f32 %v3736, %v3768
      %v3787 = vmul.f32 %v3737, %v3768
      %v3788 = vmul.f32 %v3738, %v3768
      %v3789 = vmul.f32 %v3739, %v3768
      %v3790 = vmul.f32 %v3740, %v3768
      %v3791 = vmul.f32 %v3741, %v3768
      %v3792 = vmul.f32 %v3742, %v3768
      %v3793 = vmul.f32 %v3743, %v3768
      %v3794 = vmul.f32 %v3744, %v3768
      %v3795 = vmul.f32 %v3745, %v3768
      %v3796 = vmul.f32 %v3746, %v3768
      %v3797 = vmul.f32 %v3747, %v3768
      %v3798 = vmul.f32 %v3748, %v3768
      %v3799 = vmul.f32 %v3749, %v3768
      %v3800 = vmul.f32 %v3750, %v3768
      %v3801 = vlaneseq
      %v3802 = vshrl.u32 %v3801, 7
      %v3803 = vsub.s32 1, %v3802
      %v3804 = vrot.slane %v3764, %v3803
      %v3805 = vmul.f32 %v3721, %v3804
      %v3806 = vmul.f32 %v3722, %v3804
      %v3807 = vmul.f32 %v3723, %v3804
      %v3808 = vmul.f32 %v3724, %v3804
      %v3809 = vmul.f32 %v3725, %v3804
      %v3810 = vmul.f32 %v3726, %v3804
      %v3811 = vmul.f32 %v3727, %v3804
      %v3812 = vmul.f32 %v3728, %v3804
      %v3813 = vmul.f32 %v3729, %v3804
      %v3814 = vmul.f32 %v3730, %v3804
      %v3815 = vmul.f32 %v3731, %v3804
      %v3816 = vmul.f32 %v3732, %v3804
      %v3817 = vmul.f32 %v3733, %v3804
      %v3818 = vmul.f32 %v3734, %v3804
      %v3819 = vmul.f32 %v3735, %v3804
      %v3820 = vmul.f32 %v3736, %v3804
      %v3821 = vmul.f32 %v3737, %v3804
      %v3822 = vmul.f32 %v3738, %v3804
      %v3823 = vmul.f32 %v3739, %v3804
      %v3824 = vmul.f32 %v3740, %v3804
      %v3825 = vmul.f32 %v3741, %v3804
      %v3826 = vmul.f32 %v3742, %v3804
      %v3827 = vmul.f32 %v3743, %v3804
      %v3828 = vmul.f32 %v3744, %v3804
      %v3829 = vmul.f32 %v3745, %v3804
      %v3830 = vmul.f32 %v3746, %v3804
      %v3831 = vmul.f32 %v3747, %v3804
      %v3832 = vmul.f32 %v3748, %v3804
      %v3833 = vmul.f32 %v3749, %v3804
      %v3834 = vmul.f32 %v3750, %v3804
      %v3835 = vmul.f32 %v3751, %v3804
      %v3836 = vmul.f32 %v3752, %v3804
      %v3837 = vadd.f32 %v3769, %v3805
      %v3838 = vadd.f32 %v3770, %v3806
      %v3839 = vadd.f32 %v3771, %v3807
      %v3840 = vadd.f32 %v3772, %v3808
      %v3841 = vadd.f32 %v3773, %v3809
      %v3842 = vadd.f32 %v3774, %v3810
      %v3843 = vadd.f32 %v3775, %v3811
      %v3844 = vadd.f32 %v3776, %v3812
      %v3845 = vadd.f32 %v3777, %v3813
      %v3846 = vadd.f32 %v3778, %v3814
      %v3847 = vadd.f32 %v3779, %v3815
      %v3848 = vadd.f32 %v3780, %v3816
      %v3849 = vadd.f32 %v3781, %v3817
      %v3850 = vadd.f32 %v3782, %v3818
      %v3851 = vadd.f32 %v3783, %v3819
      %v3852 = vadd.f32 %v3784, %v3820
      %v3853 = vadd.f32 %v3785, %v3821
      %v3854 = vadd.f32 %v3786, %v3822
      %v3855 = vadd.f32 %v3787, %v3823
      %v3856 = vadd.f32 %v3788, %v3824
      %v3857 = vadd.f32 %v3789, %v3825
      %v3858 = vadd.f32 %v3790, %v3826
      %v3859 = vadd.f32 %v3791, %v3827
      %v3860 = vadd.f32 %v3792, %v3828
      %v3861 = vadd.f32 %v3793, %v3829
      %v3862 = vadd.f32 %v3794, %v3830
      %v3863 = vadd.f32 %v3795, %v3831
      %v3864 = vadd.f32 %v3796, %v3832
      %v3865 = vadd.f32 %v3797, %v3833
      %v3866 = vadd.f32 %v3798, %v3834
      %v3867 = vadd.f32 %v3799, %v3835
      %v3868 = vadd.f32 %v3800, %v3836
      %v3869 = vlaneseq
      %v3870 = vshrl.u32 %v3869, 7
      %v3871 = vsub.s32 2, %v3870
      %v3872 = vrot.slane %v3764, %v3871
      %v3873 = vmul.f32 %v3723, %v3872
      %v3874 = vmul.f32 %v3724, %v3872
      %v3875 = vmul.f32 %v3725, %v3872
      %v3876 = vmul.f32 %v3726, %v3872
      %v3877 = vmul.f32 %v3727, %v3872
      %v3878 = vmul.f32 %v3728, %v3872
      %v3879 = vmul.f32 %v3729, %v3872
      %v3880 = vmul.f32 %v3730, %v3872
      %v3881 = vmul.f32 %v3731, %v3872
      %v3882 = vmul.f32 %v3732, %v3872
      %v3883 = vmul.f32 %v3733, %v3872
      %v3884 = vmul.f32 %v3734, %v3872
      %v3885 = vmul.f32 %v3735, %v3872
      %v3886 = vmul.f32 %v3736, %v3872
      %v3887 = vmul.f32 %v3737, %v3872
      %v3888 = vmul.f32 %v3738, %v3872
      %v3889 = vmul.f32 %v3739, %v3872
      %v3890 = vmul.f32 %v3740, %v3872
      %v3891 = vmul.f32 %v3741, %v3872
      %v3892 = vmul.f32 %v3742, %v3872
      %v3893 = vmul.f32 %v3743, %v3872
      %v3894 = vmul.f32 %v3744, %v3872
      %v3895 = vmul.f32 %v3745, %v3872
      %v3896 = vmul.f32 %v3746, %v3872
      %v3897 = vmul.f32 %v3747, %v3872
      %v3898 = vmul.f32 %v3748, %v3872
      %v3899 = vmul.f32 %v3749, %v3872
      %v3900 = vmul.f32 %v3750, %v3872
      %v3901 = vmul.f32 %v3751, %v3872
      %v3902 = vmul.f32 %v3752, %v3872
      %v3903 = vmul.f32 %v3753, %v3872
      %v3904 = vmul.f32 %v3754, %v3872
      %v3905 = vadd.f32 %v3837, %v3873
      %v3906 = vadd.f32 %v3838, %v3874
      %v3907 = vadd.f32 %v3839, %v3875
      %v3908 = vadd.f32 %v3840, %v3876
      %v3909 = vadd.f32 %v3841, %v3877
      %v3910 = vadd.f32 %v3842, %v3878
      %v3911 = vadd.f32 %v3843, %v3879
      %v3912 = vadd.f32 %v3844, %v3880
      %v3913 = vadd.f32 %v3845, %v3881
      %v3914 = vadd.f32 %v3846, %v3882
      %v3915 = vadd.f32 %v3847, %v3883
      %v3916 = vadd.f32 %v3848, %v3884
      %v3917 = vadd.f32 %v3849, %v3885
      %v3918 = vadd.f32 %v3850, %v3886
      %v3919 = vadd.f32 %v3851, %v3887
      %v3920 = vadd.f32 %v3852, %v3888
      %v3921 = vadd.f32 %v3853, %v3889
      %v3922 = vadd.f32 %v3854, %v3890
      %v3923 = vadd.f32 %v3855, %v3891
      %v3924 = vadd.f32 %v3856, %v3892
      %v3925 = vadd.f32 %v3857, %v3893
      %v3926 = vadd.f32 %v3858, %v3894
      %v3927 = vadd.f32 %v3859, %v3895
      %v3928 = vadd.f32 %v3860, %v3896
      %v3929 = vadd.f32 %v3861, %v3897
      %v3930 = vadd.f32 %v3862, %v3898
      %v3931 = vadd.f32 %v3863, %v3899
      %v3932 = vadd.f32 %v3864, %v3900
      %v3933 = vadd.f32 %v3865, %v3901
      %v3934 = vadd.f32 %v3866, %v3902
      %v3935 = vadd.f32 %v3867, %v3903
      %v3936 = vadd.f32 %v3868, %v3904
      %v3937 = vlaneseq
      %v3938 = vshrl.u32 %v3937, 7
      %v3939 = vsub.s32 3, %v3938
      %v3940 = vrot.slane %v3764, %v3939
      %v3941 = vmul.f32 %v3725, %v3940
      %v3942 = vmul.f32 %v3726, %v3940
      %v3943 = vmul.f32 %v3727, %v3940
      %v3944 = vmul.f32 %v3728, %v3940
      %v3945 = vmul.f32 %v3729, %v3940
      %v3946 = vmul.f32 %v3730, %v3940
      %v3947 = vmul.f32 %v3731, %v3940
      %v3948 = vmul.f32 %v3732, %v3940
      %v3949 = vmul.f32 %v3733, %v3940
      %v3950 = vmul.f32 %v3734, %v3940
      %v3951 = vmul.f32 %v3735, %v3940
      %v3952 = vmul.f32 %v3736, %v3940
      %v3953 = vmul.f32 %v3737, %v3940
      %v3954 = vmul.f32 %v3738, %v3940
      %v3955 = vmul.f32 %v3739, %v3940
      %v3956 = vmul.f32 %v3740, %v3940
      %v3957 = vmul.f32 %v3741, %v3940
      %v3958 = vmul.f32 %v3742, %v3940
      %v3959 = vmul.f32 %v3743, %v3940
      %v3960 = vmul.f32 %v3744, %v3940
      %v3961 = vmul.f32 %v3745, %v3940
      %v3962 = vmul.f32 %v3746, %v3940
      %v3963 = vmul.f32 %v3747, %v3940
      %v3964 = vmul.f32 %v3748, %v3940
      %v3965 = vmul.f32 %v3749, %v3940
      %v3966 = vmul.f32 %v3750, %v3940
      %v3967 = vmul.f32 %v3751, %v3940
      %v3968 = vmul.f32 %v3752, %v3940
      %v3969 = vmul.f32 %v3753, %v3940
      %v3970 = vmul.f32 %v3754, %v3940
      %v3971 = vmul.f32 %v3755, %v3940
      %v3972 = vmul.f32 %v3756, %v3940
      %v3973 = vadd.f32 %v3905, %v3941
      %v3974 = vadd.f32 %v3906, %v3942
      %v3975 = vadd.f32 %v3907, %v3943
      %v3976 = vadd.f32 %v3908, %v3944
      %v3977 = vadd.f32 %v3909, %v3945
      %v3978 = vadd.f32 %v3910, %v3946
      %v3979 = vadd.f32 %v3911, %v3947
      %v3980 = vadd.f32 %v3912, %v3948
      %v3981 = vadd.f32 %v3913, %v3949
      %v3982 = vadd.f32 %v3914, %v3950
      %v3983 = vadd.f32 %v3915, %v3951
      %v3984 = vadd.f32 %v3916, %v3952
      %v3985 = vadd.f32 %v3917, %v3953
      %v3986 = vadd.f32 %v3918, %v3954
      %v3987 = vadd.f32 %v3919, %v3955
      %v3988 = vadd.f32 %v3920, %v3956
      %v3989 = vadd.f32 %v3921, %v3957
      %v3990 = vadd.f32 %v3922, %v3958
      %v3991 = vadd.f32 %v3923, %v3959
      %v3992 = vadd.f32 %v3924, %v3960
      %v3993 = vadd.f32 %v3925, %v3961
      %v3994 = vadd.f32 %v3926, %v3962
      %v3995 = vadd.f32 %v3927, %v3963
      %v3996 = vadd.f32 %v3928, %v3964
      %v3997 = vadd.f32 %v3929, %v3965
      %v3998 = vadd.f32 %v3930, %v3966
      %v3999 = vadd.f32 %v3931, %v3967
      %v4000 = vadd.f32 %v3932, %v3968
      %v4001 = vadd.f32 %v3933, %v3969
      %v4002 = vadd.f32 %v3934, %v3970
      %v4003 = vadd.f32 %v3935, %v3971
      %v4004 = vadd.f32 %v3936, %v3972
      %v4005 = vlaneseq
      %v4006 = vshrl.u32 %v4005, 7
      %v4007 = vsub.s32 4, %v4006
      %v4008 = vrot.slane %v3764, %v4007
      %v4009 = vmul.f32 %v3727, %v4008
      %v4010 = vmul.f32 %v3728, %v4008
      %v4011 = vmul.f32 %v3729, %v4008
      %v4012 = vmul.f32 %v3730, %v4008
      %v4013 = vmul.f32 %v3731, %v4008
      %v4014 = vmul.f32 %v3732, %v4008
      %v4015 = vmul.f32 %v3733, %v4008
      %v4016 = vmul.f32 %v3734, %v4008
      %v4017 = vmul.f32 %v3735, %v4008
      %v4018 = vmul.f32 %v3736, %v4008
      %v4019 = vmul.f32 %v3737, %v4008
      %v4020 = vmul.f32 %v3738, %v4008
      %v4021 = vmul.f32 %v3739, %v4008
      %v4022 = vmul.f32 %v3740, %v4008
      %v4023 = vmul.f32 %v3741, %v4008
      %v4024 = vmul.f32 %v3742, %v4008
      %v4025 = vmul.f32 %v3743, %v4008
      %v4026 = vmul.f32 %v3744, %v4008
      %v4027 = vmul.f32 %v3745, %v4008
      %v4028 = vmul.f32 %v3746, %v4008
      %v4029 = vmul.f32 %v3747, %v4008
      %v4030 = vmul.f32 %v3748, %v4008
      %v4031 = vmul.f32 %v3749, %v4008
      %v4032 = vmul.f32 %v3750, %v4008
      %v4033 = vmul.f32 %v3751, %v4008
      %v4034 = vmul.f32 %v3752, %v4008
      %v4035 = vmul.f32 %v3753, %v4008
      %v4036 = vmul.f32 %v3754, %v4008
      %v4037 = vmul.f32 %v3755, %v4008
      %v4038 = vmul.f32 %v3756, %v4008
      %v4039 = vmul.f32 %v3757, %v4008
      %v4040 = vmul.f32 %v3758, %v4008
      %v4041 = vadd.f32 %v3973, %v4009
      %v4042 = vadd.f32 %v3974, %v4010
      %v4043 = vadd.f32 %v3975, %v4011
      %v4044 = vadd.f32 %v3976, %v4012
      %v4045 = vadd.f32 %v3977, %v4013
      %v4046 = vadd.f32 %v3978, %v4014
      %v4047 = vadd.f32 %v3979, %v4015
      %v4048 = vadd.f32 %v3980, %v4016
      %v4049 = vadd.f32 %v3981, %v4017
      %v4050 = vadd.f32 %v3982, %v4018
      %v4051 = vadd.f32 %v3983, %v4019
      %v4052 = vadd.f32 %v3984, %v4020
      %v4053 = vadd.f32 %v3985, %v4021
      %v4054 = vadd.f32 %v3986, %v4022
      %v4055 = vadd.f32 %v3987, %v4023
      %v4056 = vadd.f32 %v3988, %v4024
      %v4057 = vadd.f32 %v3989, %v4025
      %v4058 = vadd.f32 %v3990, %v4026
      %v4059 = vadd.f32 %v3991, %v4027
      %v4060 = vadd.f32 %v3992, %v4028
      %v4061 = vadd.f32 %v3993, %v4029
      %v4062 = vadd.f32 %v3994, %v4030
      %v4063 = vadd.f32 %v3995, %v4031
      %v4064 = vadd.f32 %v3996, %v4032
      %v4065 = vadd.f32 %v3997, %v4033
      %v4066 = vadd.f32 %v3998, %v4034
      %v4067 = vadd.f32 %v3999, %v4035
      %v4068 = vadd.f32 %v4000, %v4036
      %v4069 = vadd.f32 %v4001, %v4037
      %v4070 = vadd.f32 %v4002, %v4038
      %v4071 = vadd.f32 %v4003, %v4039
      %v4072 = vadd.f32 %v4004, %v4040
      %v4073 = vlaneseq
      %v4074 = vshrl.u32 %v4073, 7
      %v4075 = vsub.s32 5, %v4074
      %v4076 = vrot.slane %v3764, %v4075
      %v4077 = vmul.f32 %v3729, %v4076
      %v4078 = vmul.f32 %v3730, %v4076
      %v4079 = vmul.f32 %v3731, %v4076
      %v4080 = vmul.f32 %v3732, %v4076
      %v4081 = vmul.f32 %v3733, %v4076
      %v4082 = vmul.f32 %v3734, %v4076
      %v4083 = vmul.f32 %v3735, %v4076
      %v4084 = vmul.f32 %v3736, %v4076
      %v4085 = vmul.f32 %v3737, %v4076
      %v4086 = vmul.f32 %v3738, %v4076
      %v4087 = vmul.f32 %v3739, %v4076
      %v4088 = vmul.f32 %v3740, %v4076
      %v4089 = vmul.f32 %v3741, %v4076
      %v4090 = vmul.f32 %v3742, %v4076
      %v4091 = vmul.f32 %v3743, %v4076
      %v4092 = vmul.f32 %v3744, %v4076
      %v4093 = vmul.f32 %v3745, %v4076
      %v4094 = vmul.f32 %v3746, %v4076
      %v4095 = vmul.f32 %v3747, %v4076
      %v4096 = vmul.f32 %v3748, %v4076
      %v4097 = vmul.f32 %v3749, %v4076
      %v4098 = vmul.f32 %v3750, %v4076
      %v4099 = vmul.f32 %v3751, %v4076
      %v4100 = vmul.f32 %v3752, %v4076
      %v4101 = vmul.f32 %v3753, %v4076
      %v4102 = vmul.f32 %v3754, %v4076
      %v4103 = vmul.f32 %v3755, %v4076
      %v4104 = vmul.f32 %v3756, %v4076
      %v4105 = vmul.f32 %v3757, %v4076
      %v4106 = vmul.f32 %v3758, %v4076
      %v4107 = vmul.f32 %v3759, %v4076
      %v4108 = vmul.f32 %v3760, %v4076
      %v4109 = vadd.f32 %v4041, %v4077
      %v4110 = vadd.f32 %v4042, %v4078
      %v4111 = vadd.f32 %v4043, %v4079
      %v4112 = vadd.f32 %v4044, %v4080
      %v4113 = vadd.f32 %v4045, %v4081
      %v4114 = vadd.f32 %v4046, %v4082
      %v4115 = vadd.f32 %v4047, %v4083
      %v4116 = vadd.f32 %v4048, %v4084
      %v4117 = vadd.f32 %v4049, %v4085
      %v4118 = vadd.f32 %v4050, %v4086
      %v4119 = vadd.f32 %v4051, %v4087
      %v4120 = vadd.f32 %v4052, %v4088
      %v4121 = vadd.f32 %v4053, %v4089
      %v4122 = vadd.f32 %v4054, %v4090
      %v4123 = vadd.f32 %v4055, %v4091
      %v4124 = vadd.f32 %v4056, %v4092
      %v4125 = vadd.f32 %v4057, %v4093
      %v4126 = vadd.f32 %v4058, %v4094
      %v4127 = vadd.f32 %v4059, %v4095
      %v4128 = vadd.f32 %v4060, %v4096
      %v4129 = vadd.f32 %v4061, %v4097
      %v4130 = vadd.f32 %v4062, %v4098
      %v4131 = vadd.f32 %v4063, %v4099
      %v4132 = vadd.f32 %v4064, %v4100
      %v4133 = vadd.f32 %v4065, %v4101
      %v4134 = vadd.f32 %v4066, %v4102
      %v4135 = vadd.f32 %v4067, %v4103
      %v4136 = vadd.f32 %v4068, %v4104
      %v4137 = vadd.f32 %v4069, %v4105
      %v4138 = vadd.f32 %v4070, %v4106
      %v4139 = vadd.f32 %v4071, %v4107
      %v4140 = vadd.f32 %v4072, %v4108
      %v4141 = vlaneseq
      %v4142 = vshrl.u32 %v4141, 7
      %v4143 = vsub.s32 6, %v4142
      %v4144 = vrot.slane %v3764, %v4143
      %v4145 = vmul.f32 %v3731, %v4144
      %v4146 = vmul.f32 %v3732, %v4144
      %v4147 = vmul.f32 %v3733, %v4144
      %v4148 = vmul.f32 %v3734, %v4144
      %v4149 = vmul.f32 %v3735, %v4144
      %v4150 = vmul.f32 %v3736, %v4144
      %v4151 = vmul.f32 %v3737, %v4144
      %v4152 = vmul.f32 %v3738, %v4144
      %v4153 = vmul.f32 %v3739, %v4144
      %v4154 = vmul.f32 %v3740, %v4144
      %v4155 = vmul.f32 %v3741, %v4144
      %v4156 = vmul.f32 %v3742, %v4144
      %v4157 = vmul.f32 %v3743, %v4144
      %v4158 = vmul.f32 %v3744, %v4144
      %v4159 = vmul.f32 %v3745, %v4144
      %v4160 = vmul.f32 %v3746, %v4144
      %v4161 = vmul.f32 %v3747, %v4144
      %v4162 = vmul.f32 %v3748, %v4144
      %v4163 = vmul.f32 %v3749, %v4144
      %v4164 = vmul.f32 %v3750, %v4144
      %v4165 = vmul.f32 %v3751, %v4144
      %v4166 = vmul.f32 %v3752, %v4144
      %v4167 = vmul.f32 %v3753, %v4144
      %v4168 = vmul.f32 %v3754, %v4144
      %v4169 = vmul.f32 %v3755, %v4144
      %v4170 = vmul.f32 %v3756, %v4144
      %v4171 = vmul.f32 %v3757, %v4144
      %v4172 = vmul.f32 %v3758, %v4144
      %v4173 = vmul.f32 %v3759, %v4144
      %v4174 = vmul.f32 %v3760, %v4144
      %v4175 = vmul.f32 %v3761, %v4144
      %v4176 = vmul.f32 %v3762, %v4144
      %v4177 = vadd.f32 %v4109, %v4145
      %v4178 = vadd.f32 %v4110, %v4146
      %v4179 = vadd.f32 %v4111, %v4147
      %v4180 = vadd.f32 %v4112, %v4148
      %v4181 = vadd.f32 %v4113, %v4149
      %v4182 = vadd.f32 %v4114, %v4150
      %v4183 = vadd.f32 %v4115, %v4151
      %v4184 = vadd.f32 %v4116, %v4152
      %v4185 = vadd.f32 %v4117, %v4153
      %v4186 = vadd.f32 %v4118, %v4154
      %v4187 = vadd.f32 %v4119, %v4155
      %v4188 = vadd.f32 %v4120, %v4156
      %v4189 = vadd.f32 %v4121, %v4157
      %v4190 = vadd.f32 %v4122, %v4158
      %v4191 = vadd.f32 %v4123, %v4159
      %v4192 = vadd.f32 %v4124, %v4160
      %v4193 = vadd.f32 %v4125, %v4161
      %v4194 = vadd.f32 %v4126, %v4162
      %v4195 = vadd.f32 %v4127, %v4163
      %v4196 = vadd.f32 %v4128, %v4164
      %v4197 = vadd.f32 %v4129, %v4165
      %v4198 = vadd.f32 %v4130, %v4166
      %v4199 = vadd.f32 %v4131, %v4167
      %v4200 = vadd.f32 %v4132, %v4168
      %v4201 = vadd.f32 %v4133, %v4169
      %v4202 = vadd.f32 %v4134, %v4170
      %v4203 = vadd.f32 %v4135, %v4171
      %v4204 = vadd.f32 %v4136, %v4172
      %v4205 = vadd.f32 %v4137, %v4173
      %v4206 = vadd.f32 %v4138, %v4174
      %v4207 = vadd.f32 %v4139, %v4175
      %v4208 = vadd.f32 %v4140, %v4176
      %v4209 = vadd.f32 %v3687, %v4177
      %v4210 = vadd.f32 %v3688, %v4178
      %v4211 = vadd.f32 %v3689, %v4179
      %v4212 = vadd.f32 %v3690, %v4180
      %v4213 = vadd.f32 %v3691, %v4181
      %v4214 = vadd.f32 %v3692, %v4182
      %v4215 = vadd.f32 %v3693, %v4183
      %v4216 = vadd.f32 %v3694, %v4184
      %v4217 = vadd.f32 %v3695, %v4185
      %v4218 = vadd.f32 %v3696, %v4186
      %v4219 = vadd.f32 %v3697, %v4187
      %v4220 = vadd.f32 %v3698, %v4188
      %v4221 = vadd.f32 %v3699, %v4189
      %v4222 = vadd.f32 %v3700, %v4190
      %v4223 = vadd.f32 %v3701, %v4191
      %v4224 = vadd.f32 %v3702, %v4192
      %v4225 = vadd.f32 %v3703, %v4193
      %v4226 = vadd.f32 %v3704, %v4194
      %v4227 = vadd.f32 %v3705, %v4195
      %v4228 = vadd.f32 %v3706, %v4196
      %v4229 = vadd.f32 %v3707, %v4197
      %v4230 = vadd.f32 %v3708, %v4198
      %v4231 = vadd.f32 %v3709, %v4199
      %v4232 = vadd.f32 %v3710, %v4200
      %v4233 = vadd.f32 %v3711, %v4201
      %v4234 = vadd.f32 %v3712, %v4202
      %v4235 = vadd.f32 %v3713, %v4203
      %v4236 = vadd.f32 %v3714, %v4204
      %v4237 = vadd.f32 %v3715, %v4205
      %v4238 = vadd.f32 %v3716, %v4206
      %v4239 = vadd.f32 %v3717, %v4207
      %v4240 = vadd.f32 %v3718, %v4208
      %v4241 = vld [vmem:[%s3] sm:$0x1]
      %v4242 = vld [vmem:[%s4] sm:$0x1]
      %v4243 = vld [vmem:[%s6] sm:$0x1]
      %v4244 = vld [vmem:[%s8] sm:$0x1]
      %v4245 = vld [vmem:[%s9] sm:$0x1]
      %4246 = vadd.xlane.f32.xlu0 %v4209
      %v4247 = vpop.xlane.xlu0 %4246
      %4248 = vadd.xlane.f32.xlu0 %v4210
      %v4249 = vpop.xlane.xlu0 %4248
      %4250 = vadd.xlane.f32.xlu0 %v4211
      %v4251 = vpop.xlane.xlu0 %4250
      %4252 = vadd.xlane.f32.xlu0 %v4212
      %v4253 = vpop.xlane.xlu0 %4252
      %4254 = vadd.xlane.f32.xlu0 %v4213
      %v4255 = vpop.xlane.xlu0 %4254
      %4256 = vadd.xlane.f32.xlu0 %v4214
      %v4257 = vpop.xlane.xlu0 %4256
      %4258 = vadd.xlane.f32.xlu0 %v4215
      %v4259 = vpop.xlane.xlu0 %4258
      %4260 = vadd.xlane.f32.xlu0 %v4216
      %v4261 = vpop.xlane.xlu0 %4260
      %4262 = vadd.xlane.f32.xlu0 %v4217
      %v4263 = vpop.xlane.xlu0 %4262
      %4264 = vadd.xlane.f32.xlu0 %v4218
      %v4265 = vpop.xlane.xlu0 %4264
      %4266 = vadd.xlane.f32.xlu0 %v4219
      %v4267 = vpop.xlane.xlu0 %4266
      %4268 = vadd.xlane.f32.xlu0 %v4220
      %v4269 = vpop.xlane.xlu0 %4268
      %4270 = vadd.xlane.f32.xlu0 %v4221
      %v4271 = vpop.xlane.xlu0 %4270
      %4272 = vadd.xlane.f32.xlu0 %v4222
      %v4273 = vpop.xlane.xlu0 %4272
      %4274 = vadd.xlane.f32.xlu0 %v4223
      %v4275 = vpop.xlane.xlu0 %4274
      %4276 = vadd.xlane.f32.xlu0 %v4224
      %v4277 = vpop.xlane.xlu0 %4276
      %4278 = vadd.xlane.f32.xlu0 %v4225
      %v4279 = vpop.xlane.xlu0 %4278
      %4280 = vadd.xlane.f32.xlu0 %v4226
      %v4281 = vpop.xlane.xlu0 %4280
      %4282 = vadd.xlane.f32.xlu0 %v4227
      %v4283 = vpop.xlane.xlu0 %4282
      %4284 = vadd.xlane.f32.xlu0 %v4228
      %v4285 = vpop.xlane.xlu0 %4284
      %4286 = vadd.xlane.f32.xlu0 %v4229
      %v4287 = vpop.xlane.xlu0 %4286
      %4288 = vadd.xlane.f32.xlu0 %v4230
      %v4289 = vpop.xlane.xlu0 %4288
      %4290 = vadd.xlane.f32.xlu0 %v4231
      %v4291 = vpop.xlane.xlu0 %4290
      %4292 = vadd.xlane.f32.xlu0 %v4232
      %v4293 = vpop.xlane.xlu0 %4292
      %4294 = vadd.xlane.f32.xlu0 %v4233
      %v4295 = vpop.xlane.xlu0 %4294
      %4296 = vadd.xlane.f32.xlu0 %v4234
      %v4297 = vpop.xlane.xlu0 %4296
      %4298 = vadd.xlane.f32.xlu0 %v4235
      %v4299 = vpop.xlane.xlu0 %4298
      %4300 = vadd.xlane.f32.xlu0 %v4236
      %v4301 = vpop.xlane.xlu0 %4300
      %4302 = vadd.xlane.f32.xlu0 %v4237
      %v4303 = vpop.xlane.xlu0 %4302
      %4304 = vadd.xlane.f32.xlu0 %v4238
      %v4305 = vpop.xlane.xlu0 %4304
      %4306 = vadd.xlane.f32.xlu0 %v4239
      %v4307 = vpop.xlane.xlu0 %4306
      %4308 = vadd.xlane.f32.xlu0 %v4240
      %v4309 = vpop.xlane.xlu0 %4308
      %v4310 = vmul.f32 %v4209, %v4209
      %v4311 = vmul.f32 %v4210, %v4210
      %v4312 = vmul.f32 %v4211, %v4211
      %v4313 = vmul.f32 %v4212, %v4212
      %v4314 = vmul.f32 %v4213, %v4213
      %v4315 = vmul.f32 %v4214, %v4214
      %v4316 = vmul.f32 %v4215, %v4215
      %v4317 = vmul.f32 %v4216, %v4216
      %v4318 = vmul.f32 %v4217, %v4217
      %v4319 = vmul.f32 %v4218, %v4218
      %v4320 = vmul.f32 %v4219, %v4219
      %v4321 = vmul.f32 %v4220, %v4220
      %v4322 = vmul.f32 %v4221, %v4221
      %v4323 = vmul.f32 %v4222, %v4222
      %v4324 = vmul.f32 %v4223, %v4223
      %v4325 = vmul.f32 %v4224, %v4224
      %v4326 = vmul.f32 %v4225, %v4225
      %v4327 = vmul.f32 %v4226, %v4226
      %v4328 = vmul.f32 %v4227, %v4227
      %v4329 = vmul.f32 %v4228, %v4228
      %v4330 = vmul.f32 %v4229, %v4229
      %v4331 = vmul.f32 %v4230, %v4230
      %v4332 = vmul.f32 %v4231, %v4231
      %v4333 = vmul.f32 %v4232, %v4232
      %v4334 = vmul.f32 %v4233, %v4233
      %v4335 = vmul.f32 %v4234, %v4234
      %v4336 = vmul.f32 %v4235, %v4235
      %v4337 = vmul.f32 %v4236, %v4236
      %v4338 = vmul.f32 %v4237, %v4237
      %v4339 = vmul.f32 %v4238, %v4238
      %v4340 = vmul.f32 %v4239, %v4239
      %v4341 = vmul.f32 %v4240, %v4240
      %4342 = vadd.xlane.f32.xlu0 %v4310
      %v4343 = vpop.xlane.xlu0 %4342
      %4344 = vadd.xlane.f32.xlu0 %v4311
      %v4345 = vpop.xlane.xlu0 %4344
      %4346 = vadd.xlane.f32.xlu0 %v4312
      %v4347 = vpop.xlane.xlu0 %4346
      %4348 = vadd.xlane.f32.xlu0 %v4313
      %v4349 = vpop.xlane.xlu0 %4348
      %4350 = vadd.xlane.f32.xlu0 %v4314
      %v4351 = vpop.xlane.xlu0 %4350
      %4352 = vadd.xlane.f32.xlu0 %v4315
      %v4353 = vpop.xlane.xlu0 %4352
      %4354 = vadd.xlane.f32.xlu0 %v4316
      %v4355 = vpop.xlane.xlu0 %4354
      %4356 = vadd.xlane.f32.xlu0 %v4317
      %v4357 = vpop.xlane.xlu0 %4356
      %4358 = vadd.xlane.f32.xlu0 %v4318
      %v4359 = vpop.xlane.xlu0 %4358
      %4360 = vadd.xlane.f32.xlu0 %v4319
      %v4361 = vpop.xlane.xlu0 %4360
      %4362 = vadd.xlane.f32.xlu0 %v4320
      %v4363 = vpop.xlane.xlu0 %4362
      %4364 = vadd.xlane.f32.xlu0 %v4321
      %v4365 = vpop.xlane.xlu0 %4364
      %4366 = vadd.xlane.f32.xlu0 %v4322
      %v4367 = vpop.xlane.xlu0 %4366
      %4368 = vadd.xlane.f32.xlu0 %v4323
      %v4369 = vpop.xlane.xlu0 %4368
      %4370 = vadd.xlane.f32.xlu0 %v4324
      %v4371 = vpop.xlane.xlu0 %4370
      %4372 = vadd.xlane.f32.xlu0 %v4325
      %v4373 = vpop.xlane.xlu0 %4372
      %4374 = vadd.xlane.f32.xlu0 %v4326
      %v4375 = vpop.xlane.xlu0 %4374
      %4376 = vadd.xlane.f32.xlu0 %v4327
      %v4377 = vpop.xlane.xlu0 %4376
      %4378 = vadd.xlane.f32.xlu0 %v4328
      %v4379 = vpop.xlane.xlu0 %4378
      %4380 = vadd.xlane.f32.xlu0 %v4329
      %v4381 = vpop.xlane.xlu0 %4380
      %4382 = vadd.xlane.f32.xlu0 %v4330
      %v4383 = vpop.xlane.xlu0 %4382
      %4384 = vadd.xlane.f32.xlu0 %v4331
      %v4385 = vpop.xlane.xlu0 %4384
      %4386 = vadd.xlane.f32.xlu0 %v4332
      %v4387 = vpop.xlane.xlu0 %4386
      %4388 = vadd.xlane.f32.xlu0 %v4333
      %v4389 = vpop.xlane.xlu0 %4388
      %4390 = vadd.xlane.f32.xlu0 %v4334
      %v4391 = vpop.xlane.xlu0 %4390
      %4392 = vadd.xlane.f32.xlu0 %v4335
      %v4393 = vpop.xlane.xlu0 %4392
      %4394 = vadd.xlane.f32.xlu0 %v4336
      %v4395 = vpop.xlane.xlu0 %4394
      %4396 = vadd.xlane.f32.xlu0 %v4337
      %v4397 = vpop.xlane.xlu0 %4396
      %4398 = vadd.xlane.f32.xlu0 %v4338
      %v4399 = vpop.xlane.xlu0 %4398
      %4400 = vadd.xlane.f32.xlu0 %v4339
      %v4401 = vpop.xlane.xlu0 %4400
      %4402 = vadd.xlane.f32.xlu0 %v4340
      %v4403 = vpop.xlane.xlu0 %4402
      %4404 = vadd.xlane.f32.xlu0 %v4341
      %v4405 = vpop.xlane.xlu0 %4404
      %v4406 = vmul.f32 %v4247, 0.03125
      %v4407 = vmul.f32 %v4249, 0.03125
      %v4408 = vmul.f32 %v4251, 0.03125
      %v4409 = vmul.f32 %v4253, 0.03125
      %v4410 = vmul.f32 %v4255, 0.03125
      %v4411 = vmul.f32 %v4257, 0.03125
      %v4412 = vmul.f32 %v4259, 0.03125
      %v4413 = vmul.f32 %v4261, 0.03125
      %v4414 = vmul.f32 %v4263, 0.03125
      %v4415 = vmul.f32 %v4265, 0.03125
      %v4416 = vmul.f32 %v4267, 0.03125
      %v4417 = vmul.f32 %v4269, 0.03125
      %v4418 = vmul.f32 %v4271, 0.03125
      %v4419 = vmul.f32 %v4273, 0.03125
      %v4420 = vmul.f32 %v4275, 0.03125
      %v4421 = vmul.f32 %v4277, 0.03125
      %v4422 = vmul.f32 %v4279, 0.03125
      %v4423 = vmul.f32 %v4281, 0.03125
      %v4424 = vmul.f32 %v4283, 0.03125
      %v4425 = vmul.f32 %v4285, 0.03125
      %v4426 = vmul.f32 %v4287, 0.03125
      %v4427 = vmul.f32 %v4289, 0.03125
      %v4428 = vmul.f32 %v4291, 0.03125
      %v4429 = vmul.f32 %v4293, 0.03125
      %v4430 = vmul.f32 %v4295, 0.03125
      %v4431 = vmul.f32 %v4297, 0.03125
      %v4432 = vmul.f32 %v4299, 0.03125
      %v4433 = vmul.f32 %v4301, 0.03125
      %v4434 = vmul.f32 %v4303, 0.03125
      %v4435 = vmul.f32 %v4305, 0.03125
      %v4436 = vmul.f32 %v4307, 0.03125
      %v4437 = vmul.f32 %v4309, 0.03125
      %v4438 = vmul.f32 %v4343, 0.03125
      %v4439 = vmul.f32 %v4345, 0.03125
      %v4440 = vmul.f32 %v4347, 0.03125
      %v4441 = vmul.f32 %v4349, 0.03125
      %v4442 = vmul.f32 %v4351, 0.03125
      %v4443 = vmul.f32 %v4353, 0.03125
      %v4444 = vmul.f32 %v4355, 0.03125
      %v4445 = vmul.f32 %v4357, 0.03125
      %v4446 = vmul.f32 %v4359, 0.03125
      %v4447 = vmul.f32 %v4361, 0.03125
      %v4448 = vmul.f32 %v4363, 0.03125
      %v4449 = vmul.f32 %v4365, 0.03125
      %v4450 = vmul.f32 %v4367, 0.03125
      %v4451 = vmul.f32 %v4369, 0.03125
      %v4452 = vmul.f32 %v4371, 0.03125
      %v4453 = vmul.f32 %v4373, 0.03125
      %v4454 = vmul.f32 %v4375, 0.03125
      %v4455 = vmul.f32 %v4377, 0.03125
      %v4456 = vmul.f32 %v4379, 0.03125
      %v4457 = vmul.f32 %v4381, 0.03125
      %v4458 = vmul.f32 %v4383, 0.03125
      %v4459 = vmul.f32 %v4385, 0.03125
      %v4460 = vmul.f32 %v4387, 0.03125
      %v4461 = vmul.f32 %v4389, 0.03125
      %v4462 = vmul.f32 %v4391, 0.03125
      %v4463 = vmul.f32 %v4393, 0.03125
      %v4464 = vmul.f32 %v4395, 0.03125
      %v4465 = vmul.f32 %v4397, 0.03125
      %v4466 = vmul.f32 %v4399, 0.03125
      %v4467 = vmul.f32 %v4401, 0.03125
      %v4468 = vmul.f32 %v4403, 0.03125
      %v4469 = vmul.f32 %v4405, 0.03125
      %v4470 = vmul.f32 %v4406, %v4406
      %v4471 = vmul.f32 %v4407, %v4407
      %v4472 = vmul.f32 %v4408, %v4408
      %v4473 = vmul.f32 %v4409, %v4409
      %v4474 = vmul.f32 %v4410, %v4410
      %v4475 = vmul.f32 %v4411, %v4411
      %v4476 = vmul.f32 %v4412, %v4412
      %v4477 = vmul.f32 %v4413, %v4413
      %v4478 = vmul.f32 %v4414, %v4414
      %v4479 = vmul.f32 %v4415, %v4415
      %v4480 = vmul.f32 %v4416, %v4416
      %v4481 = vmul.f32 %v4417, %v4417
      %v4482 = vmul.f32 %v4418, %v4418
      %v4483 = vmul.f32 %v4419, %v4419
      %v4484 = vmul.f32 %v4420, %v4420
      %v4485 = vmul.f32 %v4421, %v4421
      %v4486 = vmul.f32 %v4422, %v4422
      %v4487 = vmul.f32 %v4423, %v4423
      %v4488 = vmul.f32 %v4424, %v4424
      %v4489 = vmul.f32 %v4425, %v4425
      %v4490 = vmul.f32 %v4426, %v4426
      %v4491 = vmul.f32 %v4427, %v4427
      %v4492 = vmul.f32 %v4428, %v4428
      %v4493 = vmul.f32 %v4429, %v4429
      %v4494 = vmul.f32 %v4430, %v4430
      %v4495 = vmul.f32 %v4431, %v4431
      %v4496 = vmul.f32 %v4432, %v4432
      %v4497 = vmul.f32 %v4433, %v4433
      %v4498 = vmul.f32 %v4434, %v4434
      %v4499 = vmul.f32 %v4435, %v4435
      %v4500 = vmul.f32 %v4436, %v4436
      %v4501 = vmul.f32 %v4437, %v4437
      %v4502 = vsub.f32 %v4438, %v4470
      %v4503 = vsub.f32 %v4439, %v4471
      %v4504 = vsub.f32 %v4440, %v4472
      %v4505 = vsub.f32 %v4441, %v4473
      %v4506 = vsub.f32 %v4442, %v4474
      %v4507 = vsub.f32 %v4443, %v4475
      %v4508 = vsub.f32 %v4444, %v4476
      %v4509 = vsub.f32 %v4445, %v4477
      %v4510 = vsub.f32 %v4446, %v4478
      %v4511 = vsub.f32 %v4447, %v4479
      %v4512 = vsub.f32 %v4448, %v4480
      %v4513 = vsub.f32 %v4449, %v4481
      %v4514 = vsub.f32 %v4450, %v4482
      %v4515 = vsub.f32 %v4451, %v4483
      %v4516 = vsub.f32 %v4452, %v4484
      %v4517 = vsub.f32 %v4453, %v4485
      %v4518 = vsub.f32 %v4454, %v4486
      %v4519 = vsub.f32 %v4455, %v4487
      %v4520 = vsub.f32 %v4456, %v4488
      %v4521 = vsub.f32 %v4457, %v4489
      %v4522 = vsub.f32 %v4458, %v4490
      %v4523 = vsub.f32 %v4459, %v4491
      %v4524 = vsub.f32 %v4460, %v4492
      %v4525 = vsub.f32 %v4461, %v4493
      %v4526 = vsub.f32 %v4462, %v4494
      %v4527 = vsub.f32 %v4463, %v4495
      %v4528 = vsub.f32 %v4464, %v4496
      %v4529 = vsub.f32 %v4465, %v4497
      %v4530 = vsub.f32 %v4466, %v4498
      %v4531 = vsub.f32 %v4467, %v4499
      %v4532 = vsub.f32 %v4468, %v4500
      %v4533 = vsub.f32 %v4469, %v4501
      %v4534 = vmax.f32 %v4502, 0.0
      %v4535 = vmax.f32 %v4503, 0.0
      %v4536 = vmax.f32 %v4504, 0.0
      %v4537 = vmax.f32 %v4505, 0.0
      %v4538 = vmax.f32 %v4506, 0.0
      %v4539 = vmax.f32 %v4507, 0.0
      %v4540 = vmax.f32 %v4508, 0.0
      %v4541 = vmax.f32 %v4509, 0.0
      %v4542 = vmax.f32 %v4510, 0.0
      %v4543 = vmax.f32 %v4511, 0.0
      %v4544 = vmax.f32 %v4512, 0.0
      %v4545 = vmax.f32 %v4513, 0.0
      %v4546 = vmax.f32 %v4514, 0.0
      %v4547 = vmax.f32 %v4515, 0.0
      %v4548 = vmax.f32 %v4516, 0.0
      %v4549 = vmax.f32 %v4517, 0.0
      %v4550 = vmax.f32 %v4518, 0.0
      %v4551 = vmax.f32 %v4519, 0.0
      %v4552 = vmax.f32 %v4520, 0.0
      %v4553 = vmax.f32 %v4521, 0.0
      %v4554 = vmax.f32 %v4522, 0.0
      %v4555 = vmax.f32 %v4523, 0.0
      %v4556 = vmax.f32 %v4524, 0.0
      %v4557 = vmax.f32 %v4525, 0.0
      %v4558 = vmax.f32 %v4526, 0.0
      %v4559 = vmax.f32 %v4527, 0.0
      %v4560 = vmax.f32 %v4528, 0.0
      %v4561 = vmax.f32 %v4529, 0.0
      %v4562 = vmax.f32 %v4530, 0.0
      %v4563 = vmax.f32 %v4531, 0.0
      %v4564 = vmax.f32 %v4532, 0.0
      %v4565 = vmax.f32 %v4533, 0.0
      %v4566 = vadd.f32 %v4534, 1e-06
      %v4567 = vadd.f32 %v4535, 1e-06
      %v4568 = vadd.f32 %v4536, 1e-06
      %v4569 = vadd.f32 %v4537, 1e-06
      %v4570 = vadd.f32 %v4538, 1e-06
      %v4571 = vadd.f32 %v4539, 1e-06
      %v4572 = vadd.f32 %v4540, 1e-06
      %v4573 = vadd.f32 %v4541, 1e-06
      %v4574 = vadd.f32 %v4542, 1e-06
      %v4575 = vadd.f32 %v4543, 1e-06
      %v4576 = vadd.f32 %v4544, 1e-06
      %v4577 = vadd.f32 %v4545, 1e-06
      %v4578 = vadd.f32 %v4546, 1e-06
      %v4579 = vadd.f32 %v4547, 1e-06
      %v4580 = vadd.f32 %v4548, 1e-06
      %v4581 = vadd.f32 %v4549, 1e-06
      %v4582 = vadd.f32 %v4550, 1e-06
      %v4583 = vadd.f32 %v4551, 1e-06
      %v4584 = vadd.f32 %v4552, 1e-06
      %v4585 = vadd.f32 %v4553, 1e-06
      %v4586 = vadd.f32 %v4554, 1e-06
      %v4587 = vadd.f32 %v4555, 1e-06
      %v4588 = vadd.f32 %v4556, 1e-06
      %v4589 = vadd.f32 %v4557, 1e-06
      %v4590 = vadd.f32 %v4558, 1e-06
      %v4591 = vadd.f32 %v4559, 1e-06
      %v4592 = vadd.f32 %v4560, 1e-06
      %v4593 = vadd.f32 %v4561, 1e-06
      %v4594 = vadd.f32 %v4562, 1e-06
      %v4595 = vadd.f32 %v4563, 1e-06
      %v4596 = vadd.f32 %v4564, 1e-06
      %v4597 = vadd.f32 %v4565, 1e-06
      %v4598 = vrsqrt.pop %v4566
      %v4599 = vrsqrt.pop %v4567
      %v4600 = vrsqrt.pop %v4568
      %v4601 = vrsqrt.pop %v4569
      %v4602 = vrsqrt.pop %v4570
      %v4603 = vrsqrt.pop %v4571
      %v4604 = vrsqrt.pop %v4572
      %v4605 = vrsqrt.pop %v4573
      %v4606 = vrsqrt.pop %v4574
      %v4607 = vrsqrt.pop %v4575
      %v4608 = vrsqrt.pop %v4576
      %v4609 = vrsqrt.pop %v4577
      %v4610 = vrsqrt.pop %v4578
      %v4611 = vrsqrt.pop %v4579
      %v4612 = vrsqrt.pop %v4580
      %v4613 = vrsqrt.pop %v4581
      %v4614 = vrsqrt.pop %v4582
      %v4615 = vrsqrt.pop %v4583
      %v4616 = vrsqrt.pop %v4584
      %v4617 = vrsqrt.pop %v4585
      %v4618 = vrsqrt.pop %v4586
      %v4619 = vrsqrt.pop %v4587
      %v4620 = vrsqrt.pop %v4588
      %v4621 = vrsqrt.pop %v4589
      %v4622 = vrsqrt.pop %v4590
      %v4623 = vrsqrt.pop %v4591
      %v4624 = vrsqrt.pop %v4592
      %v4625 = vrsqrt.pop %v4593
      %v4626 = vrsqrt.pop %v4594
      %v4627 = vrsqrt.pop %v4595
      %v4628 = vrsqrt.pop %v4596
      %v4629 = vrsqrt.pop %v4597
      %v4631 = vlaneseq
      %v4632 = vshrl.u32 %v4631, 7
      %v4633 = vsub.s32 0, %v4632
      %v4634 = vrot.slane %v4241, %v4633
      %v4636 = vmul.f32 %v4598, %v4634
      %v4637 = vmul.f32 %v4599, %v4634
      %v4638 = vmul.f32 %v4600, %v4634
      %v4639 = vmul.f32 %v4601, %v4634
      %v4640 = vmul.f32 %v4602, %v4634
      %v4641 = vmul.f32 %v4603, %v4634
      %v4642 = vmul.f32 %v4604, %v4634
      %v4643 = vmul.f32 %v4605, %v4634
      %v4644 = vmul.f32 %v4606, %v4634
      %v4645 = vmul.f32 %v4607, %v4634
      %v4646 = vmul.f32 %v4608, %v4634
      %v4647 = vmul.f32 %v4609, %v4634
      %v4648 = vmul.f32 %v4610, %v4634
      %v4649 = vmul.f32 %v4611, %v4634
      %v4650 = vmul.f32 %v4612, %v4634
      %v4651 = vmul.f32 %v4613, %v4634
      %v4652 = vmul.f32 %v4614, %v4634
      %v4653 = vmul.f32 %v4615, %v4634
      %v4654 = vmul.f32 %v4616, %v4634
      %v4655 = vmul.f32 %v4617, %v4634
      %v4656 = vmul.f32 %v4618, %v4634
      %v4657 = vmul.f32 %v4619, %v4634
      %v4658 = vmul.f32 %v4620, %v4634
      %v4659 = vmul.f32 %v4621, %v4634
      %v4660 = vmul.f32 %v4622, %v4634
      %v4661 = vmul.f32 %v4623, %v4634
      %v4662 = vmul.f32 %v4624, %v4634
      %v4663 = vmul.f32 %v4625, %v4634
      %v4664 = vmul.f32 %v4626, %v4634
      %v4665 = vmul.f32 %v4627, %v4634
      %v4666 = vmul.f32 %v4628, %v4634
      %v4667 = vmul.f32 %v4629, %v4634
      %v4668 = vmul.f32 %v4209, %v4636
      %v4669 = vmul.f32 %v4210, %v4637
      %v4670 = vmul.f32 %v4211, %v4638
      %v4671 = vmul.f32 %v4212, %v4639
      %v4672 = vmul.f32 %v4213, %v4640
      %v4673 = vmul.f32 %v4214, %v4641
      %v4674 = vmul.f32 %v4215, %v4642
      %v4675 = vmul.f32 %v4216, %v4643
      %v4676 = vmul.f32 %v4217, %v4644
      %v4677 = vmul.f32 %v4218, %v4645
      %v4678 = vmul.f32 %v4219, %v4646
      %v4679 = vmul.f32 %v4220, %v4647
      %v4680 = vmul.f32 %v4221, %v4648
      %v4681 = vmul.f32 %v4222, %v4649
      %v4682 = vmul.f32 %v4223, %v4650
      %v4683 = vmul.f32 %v4224, %v4651
      %v4684 = vmul.f32 %v4225, %v4652
      %v4685 = vmul.f32 %v4226, %v4653
      %v4686 = vmul.f32 %v4227, %v4654
      %v4687 = vmul.f32 %v4228, %v4655
      %v4688 = vmul.f32 %v4229, %v4656
      %v4689 = vmul.f32 %v4230, %v4657
      %v4690 = vmul.f32 %v4231, %v4658
      %v4691 = vmul.f32 %v4232, %v4659
      %v4692 = vmul.f32 %v4233, %v4660
      %v4693 = vmul.f32 %v4234, %v4661
      %v4694 = vmul.f32 %v4235, %v4662
      %v4695 = vmul.f32 %v4236, %v4663
      %v4696 = vmul.f32 %v4237, %v4664
      %v4697 = vmul.f32 %v4238, %v4665
      %v4698 = vmul.f32 %v4239, %v4666
      %v4699 = vmul.f32 %v4240, %v4667
      %v4700 = vmul.f32 %v4406, %v4636
      %v4701 = vmul.f32 %v4407, %v4637
      %v4702 = vmul.f32 %v4408, %v4638
      %v4703 = vmul.f32 %v4409, %v4639
      %v4704 = vmul.f32 %v4410, %v4640
      %v4705 = vmul.f32 %v4411, %v4641
      %v4706 = vmul.f32 %v4412, %v4642
      %v4707 = vmul.f32 %v4413, %v4643
      %v4708 = vmul.f32 %v4414, %v4644
      %v4709 = vmul.f32 %v4415, %v4645
      %v4710 = vmul.f32 %v4416, %v4646
      %v4711 = vmul.f32 %v4417, %v4647
      %v4712 = vmul.f32 %v4418, %v4648
      %v4713 = vmul.f32 %v4419, %v4649
      %v4714 = vmul.f32 %v4420, %v4650
      %v4715 = vmul.f32 %v4421, %v4651
      %v4716 = vmul.f32 %v4422, %v4652
      %v4717 = vmul.f32 %v4423, %v4653
      %v4718 = vmul.f32 %v4424, %v4654
      %v4719 = vmul.f32 %v4425, %v4655
      %v4720 = vmul.f32 %v4426, %v4656
      %v4721 = vmul.f32 %v4427, %v4657
      %v4722 = vmul.f32 %v4428, %v4658
      %v4723 = vmul.f32 %v4429, %v4659
      %v4724 = vmul.f32 %v4430, %v4660
      %v4725 = vmul.f32 %v4431, %v4661
      %v4726 = vmul.f32 %v4432, %v4662
      %v4727 = vmul.f32 %v4433, %v4663
      %v4728 = vmul.f32 %v4434, %v4664
      %v4729 = vmul.f32 %v4435, %v4665
      %v4730 = vmul.f32 %v4436, %v4666
      %v4731 = vmul.f32 %v4437, %v4667
      %v4733 = vlaneseq
      %v4734 = vshrl.u32 %v4733, 7
      %v4735 = vsub.s32 0, %v4734
      %v4736 = vrot.slane %v4242, %v4735
      %v4738 = vsub.f32 %v4736, %v4700
      %v4739 = vsub.f32 %v4736, %v4701
      %v4740 = vsub.f32 %v4736, %v4702
      %v4741 = vsub.f32 %v4736, %v4703
      %v4742 = vsub.f32 %v4736, %v4704
      %v4743 = vsub.f32 %v4736, %v4705
      %v4744 = vsub.f32 %v4736, %v4706
      %v4745 = vsub.f32 %v4736, %v4707
      %v4746 = vsub.f32 %v4736, %v4708
      %v4747 = vsub.f32 %v4736, %v4709
      %v4748 = vsub.f32 %v4736, %v4710
      %v4749 = vsub.f32 %v4736, %v4711
      %v4750 = vsub.f32 %v4736, %v4712
      %v4751 = vsub.f32 %v4736, %v4713
      %v4752 = vsub.f32 %v4736, %v4714
      %v4753 = vsub.f32 %v4736, %v4715
      %v4754 = vsub.f32 %v4736, %v4716
      %v4755 = vsub.f32 %v4736, %v4717
      %v4756 = vsub.f32 %v4736, %v4718
      %v4757 = vsub.f32 %v4736, %v4719
      %v4758 = vsub.f32 %v4736, %v4720
      %v4759 = vsub.f32 %v4736, %v4721
      %v4760 = vsub.f32 %v4736, %v4722
      %v4761 = vsub.f32 %v4736, %v4723
      %v4762 = vsub.f32 %v4736, %v4724
      %v4763 = vsub.f32 %v4736, %v4725
      %v4764 = vsub.f32 %v4736, %v4726
      %v4765 = vsub.f32 %v4736, %v4727
      %v4766 = vsub.f32 %v4736, %v4728
      %v4767 = vsub.f32 %v4736, %v4729
      %v4768 = vsub.f32 %v4736, %v4730
      %v4769 = vsub.f32 %v4736, %v4731
      %v4770 = vadd.f32 %v4668, %v4738
      %v4771 = vadd.f32 %v4669, %v4739
      %v4772 = vadd.f32 %v4670, %v4740
      %v4773 = vadd.f32 %v4671, %v4741
      %v4774 = vadd.f32 %v4672, %v4742
      %v4775 = vadd.f32 %v4673, %v4743
      %v4776 = vadd.f32 %v4674, %v4744
      %v4777 = vadd.f32 %v4675, %v4745
      %v4778 = vadd.f32 %v4676, %v4746
      %v4779 = vadd.f32 %v4677, %v4747
      %v4780 = vadd.f32 %v4678, %v4748
      %v4781 = vadd.f32 %v4679, %v4749
      %v4782 = vadd.f32 %v4680, %v4750
      %v4783 = vadd.f32 %v4681, %v4751
      %v4784 = vadd.f32 %v4682, %v4752
      %v4785 = vadd.f32 %v4683, %v4753
      %v4786 = vadd.f32 %v4684, %v4754
      %v4787 = vadd.f32 %v4685, %v4755
      %v4788 = vadd.f32 %v4686, %v4756
      %v4789 = vadd.f32 %v4687, %v4757
      %v4790 = vadd.f32 %v4688, %v4758
      %v4791 = vadd.f32 %v4689, %v4759
      %v4792 = vadd.f32 %v4690, %v4760
      %v4793 = vadd.f32 %v4691, %v4761
      %v4794 = vadd.f32 %v4692, %v4762
      %v4795 = vadd.f32 %v4693, %v4763
      %v4796 = vadd.f32 %v4694, %v4764
      %v4797 = vadd.f32 %v4695, %v4765
      %v4798 = vadd.f32 %v4696, %v4766
      %v4799 = vadd.f32 %v4697, %v4767
      %v4800 = vadd.f32 %v4698, %v4768
      %v4801 = vadd.f32 %v4699, %v4769
      %v4802 = vpack.c.bf16 %v4771, %v4770
      %v4803 = vpack.c.bf16 %v4773, %v4772
      %v4804 = vpack.c.bf16 %v4775, %v4774
      %v4805 = vpack.c.bf16 %v4777, %v4776
      %v4806 = vpack.c.bf16 %v4779, %v4778
      %v4807 = vpack.c.bf16 %v4781, %v4780
      %v4808 = vpack.c.bf16 %v4783, %v4782
      %v4809 = vpack.c.bf16 %v4785, %v4784
      %v4810 = vpack.c.bf16 %v4787, %v4786
      %v4811 = vpack.c.bf16 %v4789, %v4788
      %v4812 = vpack.c.bf16 %v4791, %v4790
      %v4813 = vpack.c.bf16 %v4793, %v4792
      %v4814 = vpack.c.bf16 %v4795, %v4794
      %v4815 = vpack.c.bf16 %v4797, %v4796
      %v4816 = vpack.c.bf16 %v4799, %v4798
      %v4817 = vpack.c.bf16 %v4801, %v4800
      %v4818 = vld [vmem:[%s5] sm:$0xf]
      %v4819 = vld [vmem:[%s5 + $0x4] sm:$0xf]
      %v4820 = vld [vmem:[%s5 + $0x8] sm:$0xf]
      %v4821 = vld [vmem:[%s5 + $0xc] sm:$0xf]
      %v4822 = vld [vmem:[%s5 + $0x10] sm:$0xf]
      %v4823 = vld [vmem:[%s5 + $0x14] sm:$0xf]
      %v4824 = vld [vmem:[%s5 + $0x18] sm:$0xf]
      %v4825 = vld [vmem:[%s5 + $0x1c] sm:$0xf]
      %v4826 = vld [vmem:[%s5 + $0x20] sm:$0xf]
      %v4827 = vld [vmem:[%s5 + $0x24] sm:$0xf]
      %v4828 = vld [vmem:[%s5 + $0x28] sm:$0xf]
      %v4829 = vld [vmem:[%s5 + $0x2c] sm:$0xf]
      %v4830 = vld [vmem:[%s5 + $0x30] sm:$0xf]
      %v4831 = vld [vmem:[%s5 + $0x34] sm:$0xf]
      %v4832 = vld [vmem:[%s5 + $0x38] sm:$0xf]
      %v4833 = vld [vmem:[%s5 + $0x3c] sm:$0xf]
      %v4835 = vlaneseq
      %v4836 = vshrl.u32 %v4835, 7
      %v4837 = vsub.s32 0, %v4836
      %v4838 = vrot.slane %v4243, %v4837
      %v4856 = vunpack.c.l.b16 %v4818
      %v4857 = vunpack.c.l.b16 %v4819
      %v4858 = vunpack.c.l.b16 %v4820
      %v4859 = vunpack.c.l.b16 %v4821
      %v4860 = vunpack.c.l.b16 %v4822
      %v4861 = vunpack.c.l.b16 %v4823
      %v4862 = vunpack.c.l.b16 %v4824
      %v4863 = vunpack.c.l.b16 %v4825
      %v4864 = vunpack.c.l.b16 %v4826
      %v4865 = vunpack.c.l.b16 %v4827
      %v4866 = vunpack.c.l.b16 %v4828
      %v4867 = vunpack.c.l.b16 %v4829
      %v4868 = vunpack.c.l.b16 %v4830
      %v4869 = vunpack.c.l.b16 %v4831
      %v4870 = vunpack.c.l.b16 %v4832
      %v4871 = vunpack.c.l.b16 %v4833
      %v4872 = vpack.c.b16 %v4857, %v4856
      %v4873 = vpack.c.b16 %v4859, %v4858
      %v4874 = vpack.c.b16 %v4861, %v4860
      %v4875 = vpack.c.b16 %v4863, %v4862
      %v4876 = vpack.c.b16 %v4865, %v4864
      %v4877 = vpack.c.b16 %v4867, %v4866
      %v4878 = vpack.c.b16 %v4869, %v4868
      %v4879 = vpack.c.b16 %v4871, %v4870
      %4888 = vmatprep.subr.bf16.mxu0 0
      %4889 = vmatpush1.bf16.msra.mxu0 %v4872
      %4890 = vmatprep.subr.bf16.mxu0 0
      %4891 = vmatpush1.bf16.msra.mxu0 %v4873
      %4892 = vmatprep.subr.bf16.mxu0 0
      %4893 = vmatpush1.bf16.msra.mxu0 %v4874
      %4894 = vmatprep.subr.bf16.mxu0 0
      %4895 = vmatpush1.bf16.msra.mxu0 %v4875
      %4896 = vmatprep.subr.bf16.mxu0 0
      %4897 = vmatpush1.bf16.msra.mxu0 %v4876
      %4898 = vmatprep.subr.bf16.mxu0 0
      %4899 = vmatpush1.bf16.msra.mxu0 %v4877
      %4900 = vmatprep.subr.bf16.mxu0 0
      %4901 = vmatpush1.bf16.msra.mxu0 %v4878
      %4902 = vmatprep.subr.bf16.mxu0 0
      %4903 = vmatpush1.bf16.msra.mxu0 %v4879
      %4904 = vmatprep.subr.bf16.mxu0 0
      %4905 = vmatpush1.bf16.msra.mxu0 0
      %4906 = vmatprep.subr.bf16.mxu0 0
      %4907 = vmatpush1.bf16.msra.mxu0 0
      %4908 = vmatprep.subr.bf16.mxu0 0
      %4909 = vmatpush1.bf16.msra.mxu0 0
      %4910 = vmatprep.subr.bf16.mxu0 0
      %4911 = vmatpush1.bf16.msra.mxu0 0
      %4912 = vmatprep.subr.bf16.mxu0 0
      %4913 = vmatpush1.bf16.msra.mxu0 0
      %4914 = vmatprep.subr.bf16.mxu0 0
      %4915 = vmatpush1.bf16.msra.mxu0 0
      %4916 = vmatprep.subr.bf16.mxu0 0
      %4917 = vmatpush1.bf16.msra.mxu0 0
      %4918 = vmatprep.subr.bf16.mxu0 0
      %4919 = vmatpush1.bf16.msra.mxu0 0
      %4920 = vmatprep.mubr.bf16.mxu0 0
      %4921 = vmatmul.mubr.bf16.gmra.mrb[0].mxu0 %v4802
      %v4922 = vpop.f32.mrb[0].mxu0
      %v4923 = vadd.f32 %v4838, %v4922
      %v4924 = vpop.f32.mrb[0].mxu0
      %v4925 = vpop.f32.mrb[0].mxu0
      %v4926 = vadd.f32 %v4838, %v4925
      %v4927 = vpop.f32.mrb[0].mxu0
      %4928 = vmatprep.mubr.bf16.mxu0 0
      %4929 = vmatmul.mubr.bf16.gmra.mrb[0].mxu0 %v4803
      %v4930 = vpop.f32.mrb[0].mxu0
      %v4931 = vadd.f32 %v4838, %v4930
      %v4932 = vpop.f32.mrb[0].mxu0
      %v4933 = vpop.f32.mrb[0].mxu0
      %v4934 = vadd.f32 %v4838, %v4933
      %v4935 = vpop.f32.mrb[0].mxu0
      %4936 = vmatprep.mubr.bf16.mxu0 0
      %4937 = vmatmul.mubr.bf16.gmra.mrb[0].mxu0 %v4804
      %v4938 = vpop.f32.mrb[0].mxu0
      %v4939 = vadd.f32 %v4838, %v4938
      %v4940 = vpop.f32.mrb[0].mxu0
      %v4941 = vpop.f32.mrb[0].mxu0
      %v4942 = vadd.f32 %v4838, %v4941
      %v4943 = vpop.f32.mrb[0].mxu0
      %4944 = vmatprep.mubr.bf16.mxu0 0
      %4945 = vmatmul.mubr.bf16.gmra.mrb[0].mxu0 %v4805
      %v4946 = vpop.f32.mrb[0].mxu0
      %v4947 = vadd.f32 %v4838, %v4946
      %v4948 = vpop.f32.mrb[0].mxu0
      %v4949 = vpop.f32.mrb[0].mxu0
      %v4950 = vadd.f32 %v4838, %v4949
      %v4951 = vpop.f32.mrb[0].mxu0
      %4952 = vmatprep.mubr.bf16.mxu0 0
      %4953 = vmatmul.mubr.bf16.gmra.mrb[0].mxu0 %v4806
      %v4954 = vpop.f32.mrb[0].mxu0
      %v4955 = vadd.f32 %v4838, %v4954
      %v4956 = vpop.f32.mrb[0].mxu0
      %v4957 = vpop.f32.mrb[0].mxu0
      %v4958 = vadd.f32 %v4838, %v4957
      %v4959 = vpop.f32.mrb[0].mxu0
      %4960 = vmatprep.mubr.bf16.mxu0 0
      %4961 = vmatmul.mubr.bf16.gmra.mrb[0].mxu0 %v4807
      %v4962 = vpop.f32.mrb[0].mxu0
      %v4963 = vadd.f32 %v4838, %v4962
      %v4964 = vpop.f32.mrb[0].mxu0
      %v4965 = vpop.f32.mrb[0].mxu0
      %v4966 = vadd.f32 %v4838, %v4965
      %v4967 = vpop.f32.mrb[0].mxu0
      %4968 = vmatprep.mubr.bf16.mxu0 0
      %4969 = vmatmul.mubr.bf16.gmra.mrb[0].mxu0 %v4808
      %v4970 = vpop.f32.mrb[0].mxu0
      %v4971 = vadd.f32 %v4838, %v4970
      %v4972 = vpop.f32.mrb[0].mxu0
      %v4973 = vpop.f32.mrb[0].mxu0
      %v4974 = vadd.f32 %v4838, %v4973
      %v4975 = vpop.f32.mrb[0].mxu0
      %4976 = vmatprep.mubr.bf16.mxu0 0
      %4977 = vmatmul.mubr.bf16.gmra.mrb[0].mxu0 %v4809
      %v4978 = vpop.f32.mrb[0].mxu0
      %v4979 = vadd.f32 %v4838, %v4978
      %v4980 = vpop.f32.mrb[0].mxu0
      %v4981 = vpop.f32.mrb[0].mxu0
      %v4982 = vadd.f32 %v4838, %v4981
      %v4983 = vpop.f32.mrb[0].mxu0
      %4984 = vmatprep.mubr.bf16.mxu0 0
      %4985 = vmatmul.mubr.bf16.gmra.mrb[0].mxu0 %v4810
      %v4986 = vpop.f32.mrb[0].mxu0
      %v4987 = vadd.f32 %v4838, %v4986
      %v4988 = vpop.f32.mrb[0].mxu0
      %v4989 = vpop.f32.mrb[0].mxu0
      %v4990 = vadd.f32 %v4838, %v4989
      %v4991 = vpop.f32.mrb[0].mxu0
      %4992 = vmatprep.mubr.bf16.mxu0 0
      %4993 = vmatmul.mubr.bf16.gmra.mrb[0].mxu0 %v4811
      %v4994 = vpop.f32.mrb[0].mxu0
      %v4995 = vadd.f32 %v4838, %v4994
      %v4996 = vpop.f32.mrb[0].mxu0
      %v4997 = vpop.f32.mrb[0].mxu0
      %v4998 = vadd.f32 %v4838, %v4997
      %v4999 = vpop.f32.mrb[0].mxu0
      %5000 = vmatprep.mubr.bf16.mxu0 0
      %5001 = vmatmul.mubr.bf16.gmra.mrb[0].mxu0 %v4812
      %v5002 = vpop.f32.mrb[0].mxu0
      %v5003 = vadd.f32 %v4838, %v5002
      %v5004 = vpop.f32.mrb[0].mxu0
      %v5005 = vpop.f32.mrb[0].mxu0
      %v5006 = vadd.f32 %v4838, %v5005
      %v5007 = vpop.f32.mrb[0].mxu0
      %5008 = vmatprep.mubr.bf16.mxu0 0
      %5009 = vmatmul.mubr.bf16.gmra.mrb[0].mxu0 %v4813
      %v5010 = vpop.f32.mrb[0].mxu0
      %v5011 = vadd.f32 %v4838, %v5010
      %v5012 = vpop.f32.mrb[0].mxu0
      %v5013 = vpop.f32.mrb[0].mxu0
      %v5014 = vadd.f32 %v4838, %v5013
      %v5015 = vpop.f32.mrb[0].mxu0
      %5016 = vmatprep.mubr.bf16.mxu0 0
      %5017 = vmatmul.mubr.bf16.gmra.mrb[0].mxu0 %v4814
      %v5018 = vpop.f32.mrb[0].mxu0
      %v5019 = vadd.f32 %v4838, %v5018
      %v5020 = vpop.f32.mrb[0].mxu0
      %v5021 = vpop.f32.mrb[0].mxu0
      %v5022 = vadd.f32 %v4838, %v5021
      %v5023 = vpop.f32.mrb[0].mxu0
      %5024 = vmatprep.mubr.bf16.mxu0 0
      %5025 = vmatmul.mubr.bf16.gmra.mrb[0].mxu0 %v4815
      %v5026 = vpop.f32.mrb[0].mxu0
      %v5027 = vadd.f32 %v4838, %v5026
      %v5028 = vpop.f32.mrb[0].mxu0
      %v5029 = vpop.f32.mrb[0].mxu0
      %v5030 = vadd.f32 %v4838, %v5029
      %v5031 = vpop.f32.mrb[0].mxu0
      %5032 = vmatprep.mubr.bf16.mxu0 0
      %5033 = vmatmul.mubr.bf16.gmra.mrb[0].mxu0 %v4816
      %v5034 = vpop.f32.mrb[0].mxu0
      %v5035 = vadd.f32 %v4838, %v5034
      %v5036 = vpop.f32.mrb[0].mxu0
      %v5037 = vpop.f32.mrb[0].mxu0
      %v5038 = vadd.f32 %v4838, %v5037
      %v5039 = vpop.f32.mrb[0].mxu0
      %5040 = vmatprep.mubr.bf16.mxu0 0
      %5041 = vmatmul.mubr.bf16.gmra.mrb[0].mxu0 %v4817
      %v5042 = vpop.f32.mrb[0].mxu0
      %v5043 = vadd.f32 %v4838, %v5042
      %v5044 = vpop.f32.mrb[0].mxu0
      %v5045 = vpop.f32.mrb[0].mxu0
      %v5046 = vadd.f32 %v4838, %v5045
      %v5047 = vpop.f32.mrb[0].mxu0
      %5048 = vdwg.mxu0
      %v5049 = vmul.f32 %v4923, %v4923
      %v5050 = vmul.f32 %v4926, %v4926
      %v5051 = vmul.f32 %v4931, %v4931
      %v5052 = vmul.f32 %v4934, %v4934
      %v5053 = vmul.f32 %v4939, %v4939
      %v5054 = vmul.f32 %v4942, %v4942
      %v5055 = vmul.f32 %v4947, %v4947
      %v5056 = vmul.f32 %v4950, %v4950
      %v5057 = vmul.f32 %v4955, %v4955
      %v5058 = vmul.f32 %v4958, %v4958
      %v5059 = vmul.f32 %v4963, %v4963
      %v5060 = vmul.f32 %v4966, %v4966
      %v5061 = vmul.f32 %v4971, %v4971
      %v5062 = vmul.f32 %v4974, %v4974
      %v5063 = vmul.f32 %v4979, %v4979
      %v5064 = vmul.f32 %v4982, %v4982
      %v5065 = vmul.f32 %v4987, %v4987
      %v5066 = vmul.f32 %v4990, %v4990
      %v5067 = vmul.f32 %v4995, %v4995
      %v5068 = vmul.f32 %v4998, %v4998
      %v5069 = vmul.f32 %v5003, %v5003
      %v5070 = vmul.f32 %v5006, %v5006
      %v5071 = vmul.f32 %v5011, %v5011
      %v5072 = vmul.f32 %v5014, %v5014
      %v5073 = vmul.f32 %v5019, %v5019
      %v5074 = vmul.f32 %v5022, %v5022
      %v5075 = vmul.f32 %v5027, %v5027
      %v5076 = vmul.f32 %v5030, %v5030
      %v5077 = vmul.f32 %v5035, %v5035
      %v5078 = vmul.f32 %v5038, %v5038
      %v5079 = vmul.f32 %v5043, %v5043
      %v5080 = vmul.f32 %v5046, %v5046
      %v5081 = vmul.f32 %v4923, %v5049
      %v5082 = vmul.f32 %v4926, %v5050
      %v5083 = vmul.f32 %v4931, %v5051
      %v5084 = vmul.f32 %v4934, %v5052
      %v5085 = vmul.f32 %v4939, %v5053
      %v5086 = vmul.f32 %v4942, %v5054
      %v5087 = vmul.f32 %v4947, %v5055
      %v5088 = vmul.f32 %v4950, %v5056
      %v5089 = vmul.f32 %v4955, %v5057
      %v5090 = vmul.f32 %v4958, %v5058
      %v5091 = vmul.f32 %v4963, %v5059
      %v5092 = vmul.f32 %v4966, %v5060
      %v5093 = vmul.f32 %v4971, %v5061
      %v5094 = vmul.f32 %v4974, %v5062
      %v5095 = vmul.f32 %v4979, %v5063
      %v5096 = vmul.f32 %v4982, %v5064
      %v5097 = vmul.f32 %v4987, %v5065
      %v5098 = vmul.f32 %v4990, %v5066
      %v5099 = vmul.f32 %v4995, %v5067
      %v5100 = vmul.f32 %v4998, %v5068
      %v5101 = vmul.f32 %v5003, %v5069
      %v5102 = vmul.f32 %v5006, %v5070
      %v5103 = vmul.f32 %v5011, %v5071
      %v5104 = vmul.f32 %v5014, %v5072
      %v5105 = vmul.f32 %v5019, %v5073
      %v5106 = vmul.f32 %v5022, %v5074
      %v5107 = vmul.f32 %v5027, %v5075
      %v5108 = vmul.f32 %v5030, %v5076
      %v5109 = vmul.f32 %v5035, %v5077
      %v5110 = vmul.f32 %v5038, %v5078
      %v5111 = vmul.f32 %v5043, %v5079
      %v5112 = vmul.f32 %v5046, %v5080
      %v5113 = vmul.f32 %v5081, 0.044715
      %v5114 = vmul.f32 %v5082, 0.044715
      %v5115 = vmul.f32 %v5083, 0.044715
      %v5116 = vmul.f32 %v5084, 0.044715
      %v5117 = vmul.f32 %v5085, 0.044715
      %v5118 = vmul.f32 %v5086, 0.044715
      %v5119 = vmul.f32 %v5087, 0.044715
      %v5120 = vmul.f32 %v5088, 0.044715
      %v5121 = vmul.f32 %v5089, 0.044715
      %v5122 = vmul.f32 %v5090, 0.044715
      %v5123 = vmul.f32 %v5091, 0.044715
      %v5124 = vmul.f32 %v5092, 0.044715
      %v5125 = vmul.f32 %v5093, 0.044715
      %v5126 = vmul.f32 %v5094, 0.044715
      %v5127 = vmul.f32 %v5095, 0.044715
      %v5128 = vmul.f32 %v5096, 0.044715
      %v5129 = vmul.f32 %v5097, 0.044715
      %v5130 = vmul.f32 %v5098, 0.044715
      %v5131 = vmul.f32 %v5099, 0.044715
      %v5132 = vmul.f32 %v5100, 0.044715
      %v5133 = vmul.f32 %v5101, 0.044715
      %v5134 = vmul.f32 %v5102, 0.044715
      %v5135 = vmul.f32 %v5103, 0.044715
      %v5136 = vmul.f32 %v5104, 0.044715
      %v5137 = vmul.f32 %v5105, 0.044715
      %v5138 = vmul.f32 %v5106, 0.044715
      %v5139 = vmul.f32 %v5107, 0.044715
      %v5140 = vmul.f32 %v5108, 0.044715
      %v5141 = vmul.f32 %v5109, 0.044715
      %v5142 = vmul.f32 %v5110, 0.044715
      %v5143 = vmul.f32 %v5111, 0.044715
      %v5144 = vmul.f32 %v5112, 0.044715
      %v5145 = vadd.f32 %v4923, %v5113
      %v5146 = vadd.f32 %v4926, %v5114
      %v5147 = vadd.f32 %v4931, %v5115
      %v5148 = vadd.f32 %v4934, %v5116
      %v5149 = vadd.f32 %v4939, %v5117
      %v5150 = vadd.f32 %v4942, %v5118
      %v5151 = vadd.f32 %v4947, %v5119
      %v5152 = vadd.f32 %v4950, %v5120
      %v5153 = vadd.f32 %v4955, %v5121
      %v5154 = vadd.f32 %v4958, %v5122
      %v5155 = vadd.f32 %v4963, %v5123
      %v5156 = vadd.f32 %v4966, %v5124
      %v5157 = vadd.f32 %v4971, %v5125
      %v5158 = vadd.f32 %v4974, %v5126
      %v5159 = vadd.f32 %v4979, %v5127
      %v5160 = vadd.f32 %v4982, %v5128
      %v5161 = vadd.f32 %v4987, %v5129
      %v5162 = vadd.f32 %v4990, %v5130
      %v5163 = vadd.f32 %v4995, %v5131
      %v5164 = vadd.f32 %v4998, %v5132
      %v5165 = vadd.f32 %v5003, %v5133
      %v5166 = vadd.f32 %v5006, %v5134
      %v5167 = vadd.f32 %v5011, %v5135
      %v5168 = vadd.f32 %v5014, %v5136
      %v5169 = vadd.f32 %v5019, %v5137
      %v5170 = vadd.f32 %v5022, %v5138
      %v5171 = vadd.f32 %v5027, %v5139
      %v5172 = vadd.f32 %v5030, %v5140
      %v5173 = vadd.f32 %v5035, %v5141
      %v5174 = vadd.f32 %v5038, %v5142
      %v5175 = vadd.f32 %v5043, %v5143
      %v5176 = vadd.f32 %v5046, %v5144
      %v5177 = vmul.f32 %v5145, 0.7978846
      %v5178 = vmul.f32 %v5146, 0.7978846
      %v5179 = vmul.f32 %v5147, 0.7978846
      %v5180 = vmul.f32 %v5148, 0.7978846
      %v5181 = vmul.f32 %v5149, 0.7978846
      %v5182 = vmul.f32 %v5150, 0.7978846
      %v5183 = vmul.f32 %v5151, 0.7978846
      %v5184 = vmul.f32 %v5152, 0.7978846
      %v5185 = vmul.f32 %v5153, 0.7978846
      %v5186 = vmul.f32 %v5154, 0.7978846
      %v5187 = vmul.f32 %v5155, 0.7978846
      %v5188 = vmul.f32 %v5156, 0.7978846
      %v5189 = vmul.f32 %v5157, 0.7978846
      %v5190 = vmul.f32 %v5158, 0.7978846
      %v5191 = vmul.f32 %v5159, 0.7978846
      %v5192 = vmul.f32 %v5160, 0.7978846
      %v5193 = vmul.f32 %v5161, 0.7978846
      %v5194 = vmul.f32 %v5162, 0.7978846
      %v5195 = vmul.f32 %v5163, 0.7978846
      %v5196 = vmul.f32 %v5164, 0.7978846
      %v5197 = vmul.f32 %v5165, 0.7978846
      %v5198 = vmul.f32 %v5166, 0.7978846
      %v5199 = vmul.f32 %v5167, 0.7978846
      %v5200 = vmul.f32 %v5168, 0.7978846
      %v5201 = vmul.f32 %v5169, 0.7978846
      %v5202 = vmul.f32 %v5170, 0.7978846
      %v5203 = vmul.f32 %v5171, 0.7978846
      %v5204 = vmul.f32 %v5172, 0.7978846
      %v5205 = vmul.f32 %v5173, 0.7978846
      %v5206 = vmul.f32 %v5174, 0.7978846
      %v5207 = vmul.f32 %v5175, 0.7978846
      %v5208 = vmul.f32 %v5176, 0.7978846
      %v5209 = vtanh.pop %v5177
      %v5210 = vtanh.pop %v5178
      %v5211 = vtanh.pop %v5179
      %v5212 = vtanh.pop %v5180
      %v5213 = vtanh.pop %v5181
      %v5214 = vtanh.pop %v5182
      %v5215 = vtanh.pop %v5183
      %v5216 = vtanh.pop %v5184
      %v5217 = vtanh.pop %v5185
      %v5218 = vtanh.pop %v5186
      %v5219 = vtanh.pop %v5187
      %v5220 = vtanh.pop %v5188
      %v5221 = vtanh.pop %v5189
      %v5222 = vtanh.pop %v5190
      %v5223 = vtanh.pop %v5191
      %v5224 = vtanh.pop %v5192
      %v5225 = vtanh.pop %v5193
      %v5226 = vtanh.pop %v5194
      %v5227 = vtanh.pop %v5195
      %v5228 = vtanh.pop %v5196
      %v5229 = vtanh.pop %v5197
      %v5230 = vtanh.pop %v5198
      %v5231 = vtanh.pop %v5199
      %v5232 = vtanh.pop %v5200
      %v5233 = vtanh.pop %v5201
      %v5234 = vtanh.pop %v5202
      %v5235 = vtanh.pop %v5203
      %v5236 = vtanh.pop %v5204
      %v5237 = vtanh.pop %v5205
      %v5238 = vtanh.pop %v5206
      %v5239 = vtanh.pop %v5207
      %v5240 = vtanh.pop %v5208
      %v5241 = vadd.f32 %v5209, 1.0
      %v5242 = vadd.f32 %v5210, 1.0
      %v5243 = vadd.f32 %v5211, 1.0
      %v5244 = vadd.f32 %v5212, 1.0
      %v5245 = vadd.f32 %v5213, 1.0
      %v5246 = vadd.f32 %v5214, 1.0
      %v5247 = vadd.f32 %v5215, 1.0
      %v5248 = vadd.f32 %v5216, 1.0
      %v5249 = vadd.f32 %v5217, 1.0
      %v5250 = vadd.f32 %v5218, 1.0
      %v5251 = vadd.f32 %v5219, 1.0
      %v5252 = vadd.f32 %v5220, 1.0
      %v5253 = vadd.f32 %v5221, 1.0
      %v5254 = vadd.f32 %v5222, 1.0
      %v5255 = vadd.f32 %v5223, 1.0
      %v5256 = vadd.f32 %v5224, 1.0
      %v5257 = vadd.f32 %v5225, 1.0
      %v5258 = vadd.f32 %v5226, 1.0
      %v5259 = vadd.f32 %v5227, 1.0
      %v5260 = vadd.f32 %v5228, 1.0
      %v5261 = vadd.f32 %v5229, 1.0
      %v5262 = vadd.f32 %v5230, 1.0
      %v5263 = vadd.f32 %v5231, 1.0
      %v5264 = vadd.f32 %v5232, 1.0
      %v5265 = vadd.f32 %v5233, 1.0
      %v5266 = vadd.f32 %v5234, 1.0
      %v5267 = vadd.f32 %v5235, 1.0
      %v5268 = vadd.f32 %v5236, 1.0
      %v5269 = vadd.f32 %v5237, 1.0
      %v5270 = vadd.f32 %v5238, 1.0
      %v5271 = vadd.f32 %v5239, 1.0
      %v5272 = vadd.f32 %v5240, 1.0
      %v5273 = vmul.f32 %v5241, 0.5
      %v5274 = vmul.f32 %v5242, 0.5
      %v5275 = vmul.f32 %v5243, 0.5
      %v5276 = vmul.f32 %v5244, 0.5
      %v5277 = vmul.f32 %v5245, 0.5
      %v5278 = vmul.f32 %v5246, 0.5
      %v5279 = vmul.f32 %v5247, 0.5
      %v5280 = vmul.f32 %v5248, 0.5
      %v5281 = vmul.f32 %v5249, 0.5
      %v5282 = vmul.f32 %v5250, 0.5
      %v5283 = vmul.f32 %v5251, 0.5
      %v5284 = vmul.f32 %v5252, 0.5
      %v5285 = vmul.f32 %v5253, 0.5
      %v5286 = vmul.f32 %v5254, 0.5
      %v5287 = vmul.f32 %v5255, 0.5
      %v5288 = vmul.f32 %v5256, 0.5
      %v5289 = vmul.f32 %v5257, 0.5
      %v5290 = vmul.f32 %v5258, 0.5
      %v5291 = vmul.f32 %v5259, 0.5
      %v5292 = vmul.f32 %v5260, 0.5
      %v5293 = vmul.f32 %v5261, 0.5
      %v5294 = vmul.f32 %v5262, 0.5
      %v5295 = vmul.f32 %v5263, 0.5
      %v5296 = vmul.f32 %v5264, 0.5
      %v5297 = vmul.f32 %v5265, 0.5
      %v5298 = vmul.f32 %v5266, 0.5
      %v5299 = vmul.f32 %v5267, 0.5
      %v5300 = vmul.f32 %v5268, 0.5
      %v5301 = vmul.f32 %v5269, 0.5
      %v5302 = vmul.f32 %v5270, 0.5
      %v5303 = vmul.f32 %v5271, 0.5
      %v5304 = vmul.f32 %v5272, 0.5
      %v5305 = vmul.f32 %v4923, %v5273
      %v5306 = vmul.f32 %v4926, %v5274
      %v5307 = vmul.f32 %v4931, %v5275
      %v5308 = vmul.f32 %v4934, %v5276
      %v5309 = vmul.f32 %v4939, %v5277
      %v5310 = vmul.f32 %v4942, %v5278
      %v5311 = vmul.f32 %v4947, %v5279
      %v5312 = vmul.f32 %v4950, %v5280
      %v5313 = vmul.f32 %v4955, %v5281
      %v5314 = vmul.f32 %v4958, %v5282
      %v5315 = vmul.f32 %v4963, %v5283
      %v5316 = vmul.f32 %v4966, %v5284
      %v5317 = vmul.f32 %v4971, %v5285
      %v5318 = vmul.f32 %v4974, %v5286
      %v5319 = vmul.f32 %v4979, %v5287
      %v5320 = vmul.f32 %v4982, %v5288
      %v5321 = vmul.f32 %v4987, %v5289
      %v5322 = vmul.f32 %v4990, %v5290
      %v5323 = vmul.f32 %v4995, %v5291
      %v5324 = vmul.f32 %v4998, %v5292
      %v5325 = vmul.f32 %v5003, %v5293
      %v5326 = vmul.f32 %v5006, %v5294
      %v5327 = vmul.f32 %v5011, %v5295
      %v5328 = vmul.f32 %v5014, %v5296
      %v5329 = vmul.f32 %v5019, %v5297
      %v5330 = vmul.f32 %v5022, %v5298
      %v5331 = vmul.f32 %v5027, %v5299
      %v5332 = vmul.f32 %v5030, %v5300
      %v5333 = vmul.f32 %v5035, %v5301
      %v5334 = vmul.f32 %v5038, %v5302
      %v5335 = vmul.f32 %v5043, %v5303
      %v5336 = vmul.f32 %v5046, %v5304
      %v5337 = vpack.c.bf16 %v5306, %v5305
      %v5338 = vpack.c.bf16 %v5308, %v5307
      %v5339 = vpack.c.bf16 %v5310, %v5309
      %v5340 = vpack.c.bf16 %v5312, %v5311
      %v5341 = vpack.c.bf16 %v5314, %v5313
      %v5342 = vpack.c.bf16 %v5316, %v5315
      %v5343 = vpack.c.bf16 %v5318, %v5317
      %v5344 = vpack.c.bf16 %v5320, %v5319
      %v5345 = vpack.c.bf16 %v5322, %v5321
      %v5346 = vpack.c.bf16 %v5324, %v5323
      %v5347 = vpack.c.bf16 %v5326, %v5325
      %v5348 = vpack.c.bf16 %v5328, %v5327
      %v5349 = vpack.c.bf16 %v5330, %v5329
      %v5350 = vpack.c.bf16 %v5332, %v5331
      %v5351 = vpack.c.bf16 %v5334, %v5333
      %v5352 = vpack.c.bf16 %v5336, %v5335
      %v5353 = vld [vmem:[%s7] sm:$0xf]
      %v5354 = vld [vmem:[%s7 + $0x4] sm:$0xf]
      %v5355 = vld [vmem:[%s7 + $0x8] sm:$0xf]
      %v5356 = vld [vmem:[%s7 + $0xc] sm:$0xf]
      %v5357 = vld [vmem:[%s7 + $0x10] sm:$0xf]
      %v5358 = vld [vmem:[%s7 + $0x14] sm:$0xf]
      %v5359 = vld [vmem:[%s7 + $0x18] sm:$0xf]
      %v5360 = vld [vmem:[%s7 + $0x1c] sm:$0xf]
      %v5361 = vld [vmem:[%s7 + $0x20] sm:$0xf]
      %v5362 = vld [vmem:[%s7 + $0x24] sm:$0xf]
      %v5363 = vld [vmem:[%s7 + $0x28] sm:$0xf]
      %v5364 = vld [vmem:[%s7 + $0x2c] sm:$0xf]
      %v5365 = vld [vmem:[%s7 + $0x30] sm:$0xf]
      %v5366 = vld [vmem:[%s7 + $0x34] sm:$0xf]
      %v5367 = vld [vmem:[%s7 + $0x38] sm:$0xf]
      %v5368 = vld [vmem:[%s7 + $0x3c] sm:$0xf]
      %v5370 = vlaneseq
      %v5371 = vshrl.u32 %v5370, 7
      %v5372 = vsub.s32 0, %v5371
      %v5373 = vrot.slane %v4244, %v5372
      %v5391 = vunpack.c.l.b16 %v5353
      %v5392 = vunpack.c.l.b16 %v5354
      %v5393 = vunpack.c.l.b16 %v5355
      %v5394 = vunpack.c.l.b16 %v5356
      %v5395 = vunpack.c.l.b16 %v5357
      %v5396 = vunpack.c.l.b16 %v5358
      %v5397 = vunpack.c.l.b16 %v5359
      %v5398 = vunpack.c.l.b16 %v5360
      %v5399 = vunpack.c.l.b16 %v5361
      %v5400 = vunpack.c.l.b16 %v5362
      %v5401 = vunpack.c.l.b16 %v5363
      %v5402 = vunpack.c.l.b16 %v5364
      %v5403 = vunpack.c.l.b16 %v5365
      %v5404 = vunpack.c.l.b16 %v5366
      %v5405 = vunpack.c.l.b16 %v5367
      %v5406 = vunpack.c.l.b16 %v5368
      %v5407 = vpack.c.b16 %v5392, %v5391
      %v5408 = vpack.c.b16 %v5394, %v5393
      %v5409 = vpack.c.b16 %v5396, %v5395
      %v5410 = vpack.c.b16 %v5398, %v5397
      %v5411 = vpack.c.b16 %v5400, %v5399
      %v5412 = vpack.c.b16 %v5402, %v5401
      %v5413 = vpack.c.b16 %v5404, %v5403
      %v5414 = vpack.c.b16 %v5406, %v5405
      %5423 = vmatprep.subr.bf16.mxu0 0
      %5424 = vmatpush1.bf16.msra.mxu0 %v5407
      %5425 = vmatprep.subr.bf16.mxu0 0
      %5426 = vmatpush1.bf16.msra.mxu0 %v5408
      %5427 = vmatprep.subr.bf16.mxu0 0
      %5428 = vmatpush1.bf16.msra.mxu0 %v5409
      %5429 = vmatprep.subr.bf16.mxu0 0
      %5430 = vmatpush1.bf16.msra.mxu0 %v5410
      %5431 = vmatprep.subr.bf16.mxu0 0
      %5432 = vmatpush1.bf16.msra.mxu0 %v5411
      %5433 = vmatprep.subr.bf16.mxu0 0
      %5434 = vmatpush1.bf16.msra.mxu0 %v5412
      %5435 = vmatprep.subr.bf16.mxu0 0
      %5436 = vmatpush1.bf16.msra.mxu0 %v5413
      %5437 = vmatprep.subr.bf16.mxu0 0
      %5438 = vmatpush1.bf16.msra.mxu0 %v5414
      %5439 = vmatprep.subr.bf16.mxu0 0
      %5440 = vmatpush1.bf16.msra.mxu0 0
      %5441 = vmatprep.subr.bf16.mxu0 0
      %5442 = vmatpush1.bf16.msra.mxu0 0
      %5443 = vmatprep.subr.bf16.mxu0 0
      %5444 = vmatpush1.bf16.msra.mxu0 0
      %5445 = vmatprep.subr.bf16.mxu0 0
      %5446 = vmatpush1.bf16.msra.mxu0 0
      %5447 = vmatprep.subr.bf16.mxu0 0
      %5448 = vmatpush1.bf16.msra.mxu0 0
      %5449 = vmatprep.subr.bf16.mxu0 0
      %5450 = vmatpush1.bf16.msra.mxu0 0
      %5451 = vmatprep.subr.bf16.mxu0 0
      %5452 = vmatpush1.bf16.msra.mxu0 0
      %5453 = vmatprep.subr.bf16.mxu0 0
      %5454 = vmatpush1.bf16.msra.mxu0 0
      %5455 = vmatprep.mubr.bf16.mxu0 0
      %5456 = vmatmul.mubr.bf16.gmra.mrb[0].mxu0 %v5337
      %v5457 = vpop.f32.mrb[0].mxu0
      %v5458 = vadd.f32 %v5373, %v5457
      %v5459 = vpop.f32.mrb[0].mxu0
      %v5460 = vpop.f32.mrb[0].mxu0
      %v5461 = vadd.f32 %v5373, %v5460
      %v5462 = vpop.f32.mrb[0].mxu0
      %5463 = vmatprep.mubr.bf16.mxu0 0
      %5464 = vmatmul.mubr.bf16.gmra.mrb[0].mxu0 %v5338
      %v5465 = vpop.f32.mrb[0].mxu0
      %v5466 = vadd.f32 %v5373, %v5465
      %v5467 = vpop.f32.mrb[0].mxu0
      %v5468 = vpop.f32.mrb[0].mxu0
      %v5469 = vadd.f32 %v5373, %v5468
      %v5470 = vpop.f32.mrb[0].mxu0
      %5471 = vmatprep.mubr.bf16.mxu0 0
      %5472 = vmatmul.mubr.bf16.gmra.mrb[0].mxu0 %v5339
      %v5473 = vpop.f32.mrb[0].mxu0
      %v5474 = vadd.f32 %v5373, %v5473
      %v5475 = vpop.f32.mrb[0].mxu0
      %v5476 = vpop.f32.mrb[0].mxu0
      %v5477 = vadd.f32 %v5373, %v5476
      %v5478 = vpop.f32.mrb[0].mxu0
      %5479 = vmatprep.mubr.bf16.mxu0 0
      %5480 = vmatmul.mubr.bf16.gmra.mrb[0].mxu0 %v5340
      %v5481 = vpop.f32.mrb[0].mxu0
      %v5482 = vadd.f32 %v5373, %v5481
      %v5483 = vpop.f32.mrb[0].mxu0
      %v5484 = vpop.f32.mrb[0].mxu0
      %v5485 = vadd.f32 %v5373, %v5484
      %v5486 = vpop.f32.mrb[0].mxu0
      %5487 = vmatprep.mubr.bf16.mxu0 0
      %5488 = vmatmul.mubr.bf16.gmra.mrb[0].mxu0 %v5341
      %v5489 = vpop.f32.mrb[0].mxu0
      %v5490 = vadd.f32 %v5373, %v5489
      %v5491 = vpop.f32.mrb[0].mxu0
      %v5492 = vpop.f32.mrb[0].mxu0
      %v5493 = vadd.f32 %v5373, %v5492
      %v5494 = vpop.f32.mrb[0].mxu0
      %5495 = vmatprep.mubr.bf16.mxu0 0
      %5496 = vmatmul.mubr.bf16.gmra.mrb[0].mxu0 %v5342
      %v5497 = vpop.f32.mrb[0].mxu0
      %v5498 = vadd.f32 %v5373, %v5497
      %v5499 = vpop.f32.mrb[0].mxu0
      %v5500 = vpop.f32.mrb[0].mxu0
      %v5501 = vadd.f32 %v5373, %v5500
      %v5502 = vpop.f32.mrb[0].mxu0
      %5503 = vmatprep.mubr.bf16.mxu0 0
      %5504 = vmatmul.mubr.bf16.gmra.mrb[0].mxu0 %v5343
      %v5505 = vpop.f32.mrb[0].mxu0
      %v5506 = vadd.f32 %v5373, %v5505
      %v5507 = vpop.f32.mrb[0].mxu0
      %v5508 = vpop.f32.mrb[0].mxu0
      %v5509 = vadd.f32 %v5373, %v5508
      %v5510 = vpop.f32.mrb[0].mxu0
      %5511 = vmatprep.mubr.bf16.mxu0 0
      %5512 = vmatmul.mubr.bf16.gmra.mrb[0].mxu0 %v5344
      %v5513 = vpop.f32.mrb[0].mxu0
      %v5514 = vadd.f32 %v5373, %v5513
      %v5515 = vpop.f32.mrb[0].mxu0
      %v5516 = vpop.f32.mrb[0].mxu0
      %v5517 = vadd.f32 %v5373, %v5516
      %v5518 = vpop.f32.mrb[0].mxu0
      %5519 = vmatprep.mubr.bf16.mxu0 0
      %5520 = vmatmul.mubr.bf16.gmra.mrb[0].mxu0 %v5345
      %v5521 = vpop.f32.mrb[0].mxu0
      %v5522 = vadd.f32 %v5373, %v5521
      %v5523 = vpop.f32.mrb[0].mxu0
      %v5524 = vpop.f32.mrb[0].mxu0
      %v5525 = vadd.f32 %v5373, %v5524
      %v5526 = vpop.f32.mrb[0].mxu0
      %5527 = vmatprep.mubr.bf16.mxu0 0
      %5528 = vmatmul.mubr.bf16.gmra.mrb[0].mxu0 %v5346
      %v5529 = vpop.f32.mrb[0].mxu0
      %v5530 = vadd.f32 %v5373, %v5529
      %v5531 = vpop.f32.mrb[0].mxu0
      %v5532 = vpop.f32.mrb[0].mxu0
      %v5533 = vadd.f32 %v5373, %v5532
      %v5534 = vpop.f32.mrb[0].mxu0
      %5535 = vmatprep.mubr.bf16.mxu0 0
      %5536 = vmatmul.mubr.bf16.gmra.mrb[0].mxu0 %v5347
      %v5537 = vpop.f32.mrb[0].mxu0
      %v5538 = vadd.f32 %v5373, %v5537
      %v5539 = vpop.f32.mrb[0].mxu0
      %v5540 = vpop.f32.mrb[0].mxu0
      %v5541 = vadd.f32 %v5373, %v5540
      %v5542 = vpop.f32.mrb[0].mxu0
      %5543 = vmatprep.mubr.bf16.mxu0 0
      %5544 = vmatmul.mubr.bf16.gmra.mrb[0].mxu0 %v5348
      %v5545 = vpop.f32.mrb[0].mxu0
      %v5546 = vadd.f32 %v5373, %v5545
      %v5547 = vpop.f32.mrb[0].mxu0
      %v5548 = vpop.f32.mrb[0].mxu0
      %v5549 = vadd.f32 %v5373, %v5548
      %v5550 = vpop.f32.mrb[0].mxu0
      %5551 = vmatprep.mubr.bf16.mxu0 0
      %5552 = vmatmul.mubr.bf16.gmra.mrb[0].mxu0 %v5349
      %v5553 = vpop.f32.mrb[0].mxu0
      %v5554 = vadd.f32 %v5373, %v5553
      %v5555 = vpop.f32.mrb[0].mxu0
      %v5556 = vpop.f32.mrb[0].mxu0
      %v5557 = vadd.f32 %v5373, %v5556
      %v5558 = vpop.f32.mrb[0].mxu0
      %5559 = vmatprep.mubr.bf16.mxu0 0
      %5560 = vmatmul.mubr.bf16.gmra.mrb[0].mxu0 %v5350
      %v5561 = vpop.f32.mrb[0].mxu0
      %v5562 = vadd.f32 %v5373, %v5561
      %v5563 = vpop.f32.mrb[0].mxu0
      %v5564 = vpop.f32.mrb[0].mxu0
      %v5565 = vadd.f32 %v5373, %v5564
      %v5566 = vpop.f32.mrb[0].mxu0
      %5567 = vmatprep.mubr.bf16.mxu0 0
      %5568 = vmatmul.mubr.bf16.gmra.mrb[0].mxu0 %v5351
      %v5569 = vpop.f32.mrb[0].mxu0
      %v5570 = vadd.f32 %v5373, %v5569
      %v5571 = vpop.f32.mrb[0].mxu0
      %v5572 = vpop.f32.mrb[0].mxu0
      %v5573 = vadd.f32 %v5373, %v5572
      %v5574 = vpop.f32.mrb[0].mxu0
      %5575 = vmatprep.mubr.bf16.mxu0 0
      %5576 = vmatmul.mubr.bf16.gmra.mrb[0].mxu0 %v5352
      %v5577 = vpop.f32.mrb[0].mxu0
      %v5578 = vadd.f32 %v5373, %v5577
      %v5579 = vpop.f32.mrb[0].mxu0
      %v5580 = vpop.f32.mrb[0].mxu0
      %v5581 = vadd.f32 %v5373, %v5580
      %v5582 = vpop.f32.mrb[0].mxu0
      %5583 = vdwg.mxu0
      %v5584 = vld [vmem:[%s445] sm:$0xff]
      %v5585 = vld [vmem:[%s445 + $0x8] sm:$0xff]
      %v5586 = vld [vmem:[%s445 + $0x10] sm:$0xff]
      %v5587 = vld [vmem:[%s445 + $0x18] sm:$0xff]
      %v5588 = vld [vmem:[%s445 + $0x20] sm:$0xff]
      %v5589 = vld [vmem:[%s445 + $0x28] sm:$0xff]
      %v5590 = vld [vmem:[%s445 + $0x30] sm:$0xff]
      %v5591 = vld [vmem:[%s445 + $0x38] sm:$0xff]
      %v5592 = vld [vmem:[%s445 + $0x40] sm:$0xff]
      %v5593 = vld [vmem:[%s445 + $0x48] sm:$0xff]
      %v5594 = vld [vmem:[%s445 + $0x50] sm:$0xff]
      %v5595 = vld [vmem:[%s445 + $0x58] sm:$0xff]
      %v5596 = vld [vmem:[%s445 + $0x60] sm:$0xff]
      %v5597 = vld [vmem:[%s445 + $0x68] sm:$0xff]
      %v5598 = vld [vmem:[%s445 + $0x70] sm:$0xff]
      %v5599 = vld [vmem:[%s445 + $0x78] sm:$0xff]
      %v5600 = vld [vmem:[%s445 + $0x80] sm:$0xff]
      %v5601 = vld [vmem:[%s445 + $0x88] sm:$0xff]
      %v5602 = vld [vmem:[%s445 + $0x90] sm:$0xff]
      %v5603 = vld [vmem:[%s445 + $0x98] sm:$0xff]
      %v5604 = vld [vmem:[%s445 + $0xa0] sm:$0xff]
      %v5605 = vld [vmem:[%s445 + $0xa8] sm:$0xff]
      %v5606 = vld [vmem:[%s445 + $0xb0] sm:$0xff]
      %v5607 = vld [vmem:[%s445 + $0xb8] sm:$0xff]
      %v5608 = vld [vmem:[%s445 + $0xc0] sm:$0xff]
      %v5609 = vld [vmem:[%s445 + $0xc8] sm:$0xff]
      %v5610 = vld [vmem:[%s445 + $0xd0] sm:$0xff]
      %v5611 = vld [vmem:[%s445 + $0xd8] sm:$0xff]
      %v5612 = vld [vmem:[%s445 + $0xe0] sm:$0xff]
      %v5613 = vld [vmem:[%s445 + $0xe8] sm:$0xff]
      %v5614 = vld [vmem:[%s445 + $0xf0] sm:$0xff]
      %v5615 = vld [vmem:[%s445 + $0xf8] sm:$0xff]
      %v5617 = vlaneseq
      %v5618 = vshrl.u32 %v5617, 7
      %v5619 = vsub.s32 0, %v5618
      %v5620 = vrot.slane %v4245, %v5619
      %v5622 = vmul.f32 %v5620, %v5458
      %v5623 = vmul.f32 %v5620, %v5461
      %v5624 = vmul.f32 %v5620, %v5466
      %v5625 = vmul.f32 %v5620, %v5469
      %v5626 = vmul.f32 %v5620, %v5474
      %v5627 = vmul.f32 %v5620, %v5477
      %v5628 = vmul.f32 %v5620, %v5482
      %v5629 = vmul.f32 %v5620, %v5485
      %v5630 = vmul.f32 %v5620, %v5490
      %v5631 = vmul.f32 %v5620, %v5493
      %v5632 = vmul.f32 %v5620, %v5498
      %v5633 = vmul.f32 %v5620, %v5501
      %v5634 = vmul.f32 %v5620, %v5506
      %v5635 = vmul.f32 %v5620, %v5509
      %v5636 = vmul.f32 %v5620, %v5514
      %v5637 = vmul.f32 %v5620, %v5517
      %v5638 = vmul.f32 %v5620, %v5522
      %v5639 = vmul.f32 %v5620, %v5525
      %v5640 = vmul.f32 %v5620, %v5530
      %v5641 = vmul.f32 %v5620, %v5533
      %v5642 = vmul.f32 %v5620, %v5538
      %v5643 = vmul.f32 %v5620, %v5541
      %v5644 = vmul.f32 %v5620, %v5546
      %v5645 = vmul.f32 %v5620, %v5549
      %v5646 = vmul.f32 %v5620, %v5554
      %v5647 = vmul.f32 %v5620, %v5557
      %v5648 = vmul.f32 %v5620, %v5562
      %v5649 = vmul.f32 %v5620, %v5565
      %v5650 = vmul.f32 %v5620, %v5570
      %v5651 = vmul.f32 %v5620, %v5573
      %v5652 = vmul.f32 %v5620, %v5578
      %v5653 = vmul.f32 %v5620, %v5581
      %v5654 = vadd.f32 %v5584, %v5622
      %v5655 = vadd.f32 %v5585, %v5623
      %v5656 = vadd.f32 %v5586, %v5624
      %v5657 = vadd.f32 %v5587, %v5625
      %v5658 = vadd.f32 %v5588, %v5626
      %v5659 = vadd.f32 %v5589, %v5627
      %v5660 = vadd.f32 %v5590, %v5628
      %v5661 = vadd.f32 %v5591, %v5629
      %v5662 = vadd.f32 %v5592, %v5630
      %v5663 = vadd.f32 %v5593, %v5631
      %v5664 = vadd.f32 %v5594, %v5632
      %v5665 = vadd.f32 %v5595, %v5633
      %v5666 = vadd.f32 %v5596, %v5634
      %v5667 = vadd.f32 %v5597, %v5635
      %v5668 = vadd.f32 %v5598, %v5636
      %v5669 = vadd.f32 %v5599, %v5637
      %v5670 = vadd.f32 %v5600, %v5638
      %v5671 = vadd.f32 %v5601, %v5639
      %v5672 = vadd.f32 %v5602, %v5640
      %v5673 = vadd.f32 %v5603, %v5641
      %v5674 = vadd.f32 %v5604, %v5642
      %v5675 = vadd.f32 %v5605, %v5643
      %v5676 = vadd.f32 %v5606, %v5644
      %v5677 = vadd.f32 %v5607, %v5645
      %v5678 = vadd.f32 %v5608, %v5646
      %v5679 = vadd.f32 %v5609, %v5647
      %v5680 = vadd.f32 %v5610, %v5648
      %v5681 = vadd.f32 %v5611, %v5649
      %v5682 = vadd.f32 %v5612, %v5650
      %v5683 = vadd.f32 %v5613, %v5651
      %v5684 = vadd.f32 %v5614, %v5652
      %v5685 = vadd.f32 %v5615, %v5653
      %5686 = vst [vmem:[%s383] sm:$0xff] %v5654
      %5687 = vst [vmem:[%s383 + $0x8] sm:$0xff] %v5655
      %5688 = vst [vmem:[%s383 + $0x10] sm:$0xff] %v5656
      %5689 = vst [vmem:[%s383 + $0x18] sm:$0xff] %v5657
      %5690 = vst [vmem:[%s383 + $0x20] sm:$0xff] %v5658
      %5691 = vst [vmem:[%s383 + $0x28] sm:$0xff] %v5659
      %5692 = vst [vmem:[%s383 + $0x30] sm:$0xff] %v5660
      %5693 = vst [vmem:[%s383 + $0x38] sm:$0xff] %v5661
      %5694 = vst [vmem:[%s383 + $0x40] sm:$0xff] %v5662
      %5695 = vst [vmem:[%s383 + $0x48] sm:$0xff] %v5663
      %5696 = vst [vmem:[%s383 + $0x50] sm:$0xff] %v5664
      %5697 = vst [vmem:[%s383 + $0x58] sm:$0xff] %v5665
      %5698 = vst [vmem:[%s383 + $0x60] sm:$0xff] %v5666
      %5699 = vst [vmem:[%s383 + $0x68] sm:$0xff] %v5667
      %5700 = vst [vmem:[%s383 + $0x70] sm:$0xff] %v5668
      %5701 = vst [vmem:[%s383 + $0x78] sm:$0xff] %v5669
      %5702 = vst [vmem:[%s383 + $0x80] sm:$0xff] %v5670
      %5703 = vst [vmem:[%s383 + $0x88] sm:$0xff] %v5671
      %5704 = vst [vmem:[%s383 + $0x90] sm:$0xff] %v5672
      %5705 = vst [vmem:[%s383 + $0x98] sm:$0xff] %v5673
      %5706 = vst [vmem:[%s383 + $0xa0] sm:$0xff] %v5674
      %5707 = vst [vmem:[%s383 + $0xa8] sm:$0xff] %v5675
      %5708 = vst [vmem:[%s383 + $0xb0] sm:$0xff] %v5676
      %5709 = vst [vmem:[%s383 + $0xb8] sm:$0xff] %v5677
      %5710 = vst [vmem:[%s383 + $0xc0] sm:$0xff] %v5678
      %5711 = vst [vmem:[%s383 + $0xc8] sm:$0xff] %v5679
      %5712 = vst [vmem:[%s383 + $0xd0] sm:$0xff] %v5680
      %5713 = vst [vmem:[%s383 + $0xd8] sm:$0xff] %v5681
      %5714 = vst [vmem:[%s383 + $0xe0] sm:$0xff] %v5682
      %5715 = vst [vmem:[%s383 + $0xe8] sm:$0xff] %v5683
      %5716 = vst [vmem:[%s383 + $0xf0] sm:$0xff] %v5684
      %5717 = vst [vmem:[%s383 + $0xf8] sm:$0xff] %v5685
      %s5718 = smul.u32 16, %s26
      %p5719 = scmp.lt.s32.totalorder %s25, 1
      %s5720 = scalar_select %p5719, %s25, 1
      %p5721 = scmp.lt.s32.totalorder %s5718, 15
      %s5722 = scalar_select %p5721, %s5718, 15
      %s5723 = smul.addr %s5722, 2
      %s5724 = smul.addr %s5720, 32
      %s5725 = sadd.s32 %s5723, %s5724
      %s5726 = smul.addr %s5725, 8
      %s5727 = scalar_lea.vmem %s10, %s5726
      // Predicated region
      $region85: #{cnblock_forward.1} parent=59 // pred_check
        %p5728 = pneg %p268
      $region86: #{cnblock_forward.1} parent=59 // pred_check_branch
        %5730 = sbr.rel (%p5728) target = $region88
      $region87: #{cnblock_forward.1} parent=59 // pred_region
        %s5731 = smul.u32 16, %s26
      $region88: #{cnblock_forward.1} parent=59 // pred_fallthru
        _
    $region60: #{cnblock_forward.1} parent=5 // pred_fallthru
      _
    %p5732 = scmp.le.s32.totalorder 2, %s16
    // Predicated region
    $region89: #{cnblock_forward.1} parent=5 // pred_check
      %p5733 = pneg %p5732
    $region90: #{cnblock_forward.1} parent=5 // pred_check_branch
      %5735 = sbr.rel (%p5733) target = $region92
    $region91: #{cnblock_forward.1} parent=5 // pred_region
      %s5736 = ssub.s32 %s16, 2
      // Predicated region
      $region93: #{cnblock_forward.1} parent=91 // pred_check
        %p5737 = pneg %p274
      $region94: #{cnblock_forward.1} parent=91 // pred_check_branch
        %5739 = sbr.rel (%p5737) target = $region96
      $region95: #{cnblock_forward.1} parent=91 // pred_region
        %s5740 = smul.u32 16, %s28
        %p5741 = scmp.lt.s32.totalorder %s27, 1
        %s5742 = scalar_select %p5741, %s27, 1
        %p5743 = scmp.lt.s32.totalorder %s5740, 15
        %s5744 = scalar_select %p5743, %s5740, 15
        %s5745 = smul.addr %s5744, 2
        %s5746 = smul.addr %s5742, 32
        %s5747 = sadd.s32 %s5745, %s5746
        %s5748 = smul.addr %s5747, 8
        %s5749 = scalar_lea.vmem %s10, %s5748
      $region96: #{cnblock_forward.1} parent=91 // pred_fallthru
        _
    $region92: #{cnblock_forward.1} parent=5 // pred_fallthru
      _
  $region6: #{cnblock_forward.1} parent=0 // loop_footer
    %s20 = sadd.s32 1, %s16
  $region7: #{cnblock_forward.1} parent=0 // loop_footer_branch
    %15 = sbr.rel target = $region3
  $region8: #{cnblock_forward.1} parent=0 // loop_exit
    _

</llo_original>
